<compile_context>
chip_gen: v7x
topology: tpu7x:2x2x1
jax: 0.10.0
libtpu: 0.0.40
codegen_flags: <defaults>
</compile_context>

<pallas_src>
import functools

import jax
import jax.numpy as jnp
from jax.experimental import pallas as pl
from jax.experimental.pallas import tpu as pltpu


# ----------------------------------------------------------------------------
# In-kernel helpers (traced inside the fused decoder-layer kernel)
# ----------------------------------------------------------------------------
def _layer_norm(z, g, b, eps):
    mean = jnp.mean(z, axis=-1, keepdims=True)
    var = jnp.mean(jnp.square(z - mean), axis=-1, keepdims=True)
    return (z - mean) * jax.lax.rsqrt(var + eps) * g + b


def _node_ids(shape, dim, group, n_groups):
    # node_id = index // group, built from compares only (no vector int division,
    # which Mosaic may not lower).
    idx = jax.lax.broadcasted_iota(jnp.int32, shape, dim)
    nid = jnp.zeros(shape, jnp.int32)
    for g in range(1, n_groups):
        nid = nid + (idx >= g * group).astype(jnp.int32)
    return nid


def _node_block_mask(mq, mk, lq, lk):
    # Additive mask restricting attention to the same node (block-diagonal over
    # nodes).  Generated in-kernel — pure function of static shapes.
    n_nodes = mq // lq
    rn = _node_ids((mq, mk), 0, lq, n_nodes)
    cn = _node_ids((mq, mk), 1, lk, n_nodes)
    return jnp.where(rn == cn, 0.0, -1e30).astype(jnp.float32)


def _split_heads(t, n_heads):
    # [M, H*dk] -> [H, M, dk] via static lane slices + stack (avoids a risky
    # in-kernel major/sublane transpose).
    d = t.shape[-1]
    dk = d // n_heads
    return jnp.stack([t[:, h * dk:(h + 1) * dk] for h in range(n_heads)], axis=0)


def _merge_heads(t):
    # [H, M, dk] -> [M, H*dk]
    return jnp.concatenate([t[h] for h in range(t.shape[0])], axis=-1)


def _attention(q, k, vt, vg, n_heads, lq, lk):
    # q: [Mq, Dt], k/vt: [Mk, Dt], vg: [Mk, Dg] or None.
    # Batched-over-heads score / PV step: one dot_general each, no per-head matmuls.
    mq, d = q.shape
    mk = k.shape[0]
    dk = d // n_heads
    scale = 1.0 / (dk ** 0.5)
    qh = _split_heads(q, n_heads)
    kh = _split_heads(k, n_heads)
    vth = _split_heads(vt, n_heads)
    s = jnp.einsum("hqd,hkd->hqk", qh, kh, preferred_element_type=jnp.float32)
    s = s * scale + _node_block_mask(mq, mk, lq, lk)[None]
    s = s - jnp.max(s, axis=-1, keepdims=True)
    p = jnp.exp(s)
    p = p / jnp.sum(p, axis=-1, keepdims=True)
    ct = _merge_heads(jnp.einsum("hqk,hkd->hqd", p, vth,
                                 preferred_element_type=jnp.float32))
    if vg is None:
        return ct, None
    vgh = _split_heads(vg, n_heads)
    cg = _merge_heads(jnp.einsum("hqk,hkd->hqd", p, vgh,
                                 preferred_element_type=jnp.float32))
    return ct, cg


def _ffn(x, w1, b1, w2, b2, g, b, eps):
    h = jnp.maximum(jnp.dot(x, w1, preferred_element_type=jnp.float32) + b1, 0.0)
    y = jnp.dot(h, w2, preferred_element_type=jnp.float32) + b2
    return _layer_norm(x + y, g, b, eps)


# ----------------------------------------------------------------------------
# Fused decoder-layer kernel (one pallas_call per layer)
# ----------------------------------------------------------------------------
def _decoder_layer_kernel(
    dec_ref, enct_ref, encg_ref, supp_ref,
    sa_wqkv, sa_bqkv, sa_wo, sa_bo, sa_lng, sa_lnb,
    ca_wq, ca_bq, ca_wkv, ca_bkv, ca_wvg, ca_bvg,
    ca_wo, ca_bo, ca_wog, ca_bog,
    ca_lnt_g, ca_lnt_b, ca_lng_g, ca_lng_b,
    tf_w1, tf_b1, tf_w2, tf_b2, tf_lng, tf_lnb,
    gf_w1, gf_b1, gf_w2, gf_b2, gf_lng, gf_lnb,
    gc_w, gc_b, gc_lng, gc_lnb,
    time_out_ref, target_out_ref,
    *, n_heads, lq, lk, n_supports, order, eps):
    # TODO(synk): DecoderTimeAttention is not included in the provided source; it is
    # synthesized from its call signatures: time features drive the attention scores,
    # which are applied to time values (always) and target values (when provided);
    # residual + LayerNorm on the time path, LayerNorm only on the target path.
    x = dec_ref[0].astype(jnp.float32)       # [Mq, Dt]
    xkv = enct_ref[0].astype(jnp.float32)    # [Mk, Dt]
    xg = encg_ref[0].astype(jnp.float32)     # [Mk, Dg]
    dt = x.shape[-1]

    # ---- 1) self-attention (time path only) + add & LN ----------------------
    qkv = jnp.dot(x, sa_wqkv[...], preferred_element_type=jnp.float32) + sa_bqkv[...]
    q, k, v = qkv[:, :dt], qkv[:, dt:2 * dt], qkv[:, 2 * dt:]
    ct, _ = _attention(q, k, v, None, n_heads, lq, lq)
    z = jnp.dot(ct, sa_wo[...], preferred_element_type=jnp.float32) + sa_bo[...] + x
    self_out = _layer_norm(z, sa_lng[...], sa_lnb[...], eps)

    # ---- 2) cross-attention: time values + target values --------------------
    q = jnp.dot(self_out, ca_wq[...], preferred_element_type=jnp.float32) + ca_bq[...]
    kv = jnp.dot(xkv, ca_wkv[...], preferred_element_type=jnp.float32) + ca_bkv[...]
    k, vt = kv[:, :dt], kv[:, dt:]
    vg = jnp.dot(xg, ca_wvg[...], preferred_element_type=jnp.float32) + ca_bvg[...]
    ct, cg = _attention(q, k, vt, vg, n_heads, lq, lk)
    zt = jnp.dot(ct, ca_wo[...], preferred_element_type=jnp.float32) + ca_bo[...] + self_out
    zg = jnp.dot(cg, ca_wog[...], preferred_element_type=jnp.float32) + ca_bog[...]
    cross_t = _layer_norm(zt, ca_lnt_g[...], ca_lnt_b[...], eps)
    cross_g = _layer_norm(zg, ca_lng_g[...], ca_lng_b[...], eps)

    # ---- 3) position-wise FFNs (time & target paths) -------------------------
    time_out = _ffn(cross_t, tf_w1[...], tf_b1[...], tf_w2[...], tf_b2[...],
                    tf_lng[...], tf_lnb[...], eps)
    tgt = _ffn(cross_g, gf_w1[...], gf_b1[...], gf_w2[...], gf_b2[...],
               gf_lng[...], gf_lnb[...], eps)

    # ---- 4) GCN (all diffusion hops) + 1x1 conv + residual + LN ---------------
    # supp_ref[s] = kron(A_s^T, I_L): one lane-dense matmul per hop.  All hop
    # outputs are concatenated and contracted against the full w_mlp in ONE
    # K=(order*S+1)*Dg matmul.  Row-block order matches the PyTorch torch.cat
    # order: identity first, then support-major / hop-minor.
    hops = [tgt]
    for s in range(n_supports):
        a = supp_ref[s]                       # [Mq, Mq]
        xk = tgt
        for _ in range(order):
            xk = jnp.dot(a, xk, preferred_element_type=jnp.float32)
            hops.append(xk)
    h = jnp.concatenate(hops, axis=-1)        # [Mq, (order*S+1)*Dg]
    y = jnp.dot(h, gc_w[...], preferred_element_type=jnp.float32) + gc_b[...]
    target_out = _layer_norm(tgt + y, gc_lng[...], gc_lnb[...], eps)

    time_out_ref[0] = time_out.astype(time_out_ref.dtype)
    target_out_ref[0] = target_out.astype(target_out_ref.dtype)


def fused_decoder_layer(dec_time, enc_time, enc_target, supports_k, lp, n_heads,
                        order=2):
    """dec_time: [B,N,Lq,Dt], enc_time: [B,N,Lk,Dt], enc_target: [B,N,Lk,Dg],
    supports_k: [S, N*Lq, N*Lq] (kron-expanded)."""
    B, N, Lq, Dt = dec_time.shape
    Lk = enc_time.shape[2]
    Dg = enc_target.shape[-1]
    Mq, Mk = N * Lq, N * Lk
    S = int(supports_k.shape[0])
    sa, ca = lp["self_attn"], lp["cross_attn"]
    tf, gf, gc = lp["time_fc"], lp["target_fc"], lp["gconv"]
    Ci = gc["w_mlp"].shape[0]

    row = lambda v: v.reshape(1, -1)
    # Fused projections (one wide matmul instead of per-head / per-tensor slices).
    sa_wqkv = jnp.concatenate([sa["wq"], sa["wk"], sa["wv"]], axis=1)
    sa_bqkv = row(jnp.concatenate([sa["bq"], sa["bk"], sa["bv"]]))
    ca_wkv = jnp.concatenate([ca["wk"], ca["wv"]], axis=1)
    ca_bkv = row(jnp.concatenate([ca["bk"], ca["bv"]]))

    inputs = [
        dec_time.reshape(B, Mq, Dt),
        enc_time.reshape(B, Mk, Dt),
        enc_target.reshape(B, Mk, Dg),
        supports_k,
        sa_wqkv, sa_bqkv, sa["wo"], row(sa["bo"]), row(sa["ln_t_g"]), row(sa["ln_t_b"]),
        ca["wq"], row(ca["bq"]), ca_wkv, ca_bkv, ca["wvg"], row(ca["bvg"]),
        ca["wo"], row(ca["bo"]), ca["wog"], row(ca["bog"]),
        row(ca["ln_t_g"]), row(ca["ln_t_b"]), row(ca["ln_g_g"]), row(ca["ln_g_b"]),
        tf["w1"], row(tf["b1"]), tf["w2"], row(tf["b2"]), row(tf["ln_g"]), row(tf["ln_b"]),
        gf["w1"], row(gf["b1"]), gf["w2"], row(gf["b2"]), row(gf["ln_g"]), row(gf["ln_b"]),
        gc["w_mlp"], row(gc["b_mlp"]), row(lp["ln_g"]), row(lp["ln_b"]),
    ]

    batched = lambda shp: pl.BlockSpec(shp, lambda b: (b, 0, 0))

    def rep(a):
        if a.ndim == 3:
            return pl.BlockSpec(a.shape, lambda b: (0, 0, 0))
        return pl.BlockSpec(a.shape, lambda b: (0, 0))

    in_specs = ([batched((1, Mq, Dt)), batched((1, Mk, Dt)), batched((1, Mk, Dg))]
                + [rep(a) for a in inputs[3:]])

    # Advisory cost estimate so XLA schedules the custom call sensibly.
    flops_per_b = 2 * (
        Mq * Dt * 3 * Dt + 2 * Mq * Mq * Dt + Mq * Dt * Dt          # self-attn
        + Mq * Dt * Dt + Mk * Dt * 2 * Dt + Mk * Dg * Dg
        + Mq * Mk * Dt + 2 * Mq * Mk * Dg + Mq * Dt * Dt + Mq * Dg * Dg  # cross-attn
        + 2 * Mq * Dt * 4 * Dt + 2 * Mq * Dg * 4 * Dg               # both FFNs
        + S * order * Mq * Mq * Dg + Mq * Ci * Dg                   # GCN
    )
    bytes_acc = 4 * (sum(int(a.size) for a in inputs) + B * Mq * (Dt + Dg))
    cost = pl.CostEstimate(
        flops=int(B * flops_per_b),
        transcendentals=int(B * n_heads * Mq * (Mq + Mk)),
        bytes_accessed=int(bytes_acc),
    )

    time_out, target_out = pl.pallas_call(
        functools.partial(_decoder_layer_kernel, n_heads=n_heads, lq=Lq, lk=Lk,
                          n_supports=S, order=order, eps=1e-5),
        grid=(B,),
        in_specs=in_specs,
        out_specs=(batched((1, Mq, Dt)), batched((1, Mq, Dg))),
        out_shape=(jax.ShapeDtypeStruct((B, Mq, Dt), dec_time.dtype),
                   jax.ShapeDtypeStruct((B, Mq, Dg), dec_time.dtype)),
        compiler_params=pltpu.CompilerParams(dimension_semantics=("parallel",)),
        cost_estimate=cost,
    )(*inputs)
    return time_out.reshape(B, N, Lq, Dt), target_out.reshape(B, N, Lq, Dg)


# ----------------------------------------------------------------------------
# Plain-JAX glue under jit (everything too small for its own custom call)
# ----------------------------------------------------------------------------
def _build_supports(supports, nv1, nv2, seq_len):
    # Adaptive adjacency softmax(relu(nv1 @ nv2)) is a [N,10]x[10,N] matmul — far
    # too small for a custom call, so it stays in plain jnp.  Supports are folded
    # into stacked, pre-transposed kron(A^T, I_L) so each diffusion hop inside
    # the fused kernel is a single lane-dense matmul over the flattened [N*L] rows.
    # TODO(synk): for large N / seq_len replace the kron expansion with a per-hop
    # node-space matmul (A^T @ x reshaped to [N, L*D]) to avoid O((N*L)^2) memory.
    adp = jax.nn.softmax(jax.nn.relu(nv1 @ nv2), axis=1)
    all_s = list(supports) + [adp]
    eye = jnp.eye(seq_len, dtype=jnp.float32)
    return jnp.stack([jnp.kron(a.T, eye) for a in all_s])   # [S, N*L, N*L]


def decoder_forward(params, decoder_time, encoder_output_times, encoder_output_targets,
                    supports, *, cfg):
    B, P, N, Fc = decoder_time.shape
    ps = cfg["label_patch_size"]
    n_heads = cfg["n_heads"]
    n_patches = P // ps

    # TODO(synk): PatchEmbedding is not included in the provided source; implemented as
    # non-overlapping patches of size `label_patch_size` projected by a Linear (equivalent
    # to a Conv over time with kernel=stride=patch_size); the original transpose(2,3) is
    # folded in so the result is [B, N, n_patches, d_model].  Left to plain XLA (tiny).
    dt = decoder_time.transpose(0, 2, 3, 1)                               # [B,N,F,P]
    patches = dt.reshape(B, N, Fc, n_patches, ps).transpose(0, 1, 3, 2, 4)
    patches = patches.reshape(B, N, n_patches, Fc * ps)
    decoder_time_output = patches @ params["w_pe"] + params["b_pe"]       # [B,N,np,Dt]

    decoder_target_outputs = []
    self_attns, cross_attns = [], []          # faithful to the original: never appended
    for i, lp in enumerate(params["layers"]):
        enc_t = encoder_output_times[i] @ params["w_et"] + params["b_et"]     # plain XLA
        enc_g = encoder_output_targets[i] @ params["w_eg"] + params["b_eg"]   # plain XLA
        supports_k = _build_supports(supports, lp["nodevec1"], lp["nodevec2"], n_patches)
        decoder_time_output, decoder_target_output = fused_decoder_layer(
            decoder_time_output, enc_t, enc_g, supports_k, lp, n_heads)
        decoder_target_outputs.append(decoder_target_output)
    return self_attns, decoder_time_output, cross_attns, decoder_target_outputs


# ----------------------------------------------------------------------------
# Deterministic parameter initialization
# ----------------------------------------------------------------------------
def _dense(key, fan_in, fan_out, scale=0.1):
    kw, kb = jax.random.split(key)
    w = jax.random.normal(kw, (fan_in, fan_out), jnp.float32) * scale
    b = jax.random.normal(kb, (fan_out,), jnp.float32) * scale
    return w, b


def init_params(key, cfg, supports_len, order=2):
    Dt, Dg = cfg["decoder_time_d_model"], cfg["decoder_target_d_model"]
    Det, Deg = cfg["encoder_time_d_model"], cfg["encoder_target_d_model"]
    Fc, ps, N = cfg["time_channel"], cfg["label_patch_size"], cfg["num_nodes"]
    keys = iter(jax.random.split(key, 256))
    dense = lambda fi, fo: _dense(next(keys), fi, fo)

    params = {}
    params["w_et"], params["b_et"] = dense(Det, Dt)
    params["w_eg"], params["b_eg"] = dense(Deg, Dg)
    params["w_pe"], params["b_pe"] = dense(Fc * ps, Dt)

    def attn_params():
        p = {}
        p["wq"], p["bq"] = dense(Dt, Dt)
        p["wk"], p["bk"] = dense(Dt, Dt)
        p["wv"], p["bv"] = dense(Dt, Dt)
        p["wvg"], p["bvg"] = dense(Dg, Dg)
        p["wo"], p["bo"] = dense(Dt, Dt)
        p["wog"], p["bog"] = dense(Dg, Dg)
        p["ln_t_g"], p["ln_t_b"] = jnp.ones((Dt,), jnp.float32), jnp.zeros((Dt,), jnp.float32)
        p["ln_g_g"], p["ln_g_b"] = jnp.ones((Dg,), jnp.float32), jnp.zeros((Dg,), jnp.float32)
        return p

    def ffn_params(D):
        p = {}
        p["w1"], p["b1"] = dense(D, 4 * D)
        p["w2"], p["b2"] = dense(4 * D, D)
        p["ln_g"], p["ln_b"] = jnp.ones((D,), jnp.float32), jnp.zeros((D,), jnp.float32)
        return p

    layers = []
    for _ in range(cfg["n_layers"]):
        lp = {
            "self_attn": attn_params(),
            "cross_attn": attn_params(),
            "time_fc": ffn_params(Dt),
            "target_fc": ffn_params(Dg),
            "nodevec1": jax.random.normal(next(keys), (N, 10), jnp.float32),
            "nodevec2": jax.random.normal(next(keys), (10, N), jnp.float32),
        }
        ci = (order * supports_len + 1) * Dg
        gc = {}
        gc["w_mlp"], gc["b_mlp"] = dense(ci, Dg)
        lp["gconv"] = gc
        lp["ln_g"], lp["ln_b"] = jnp.ones((Dg,), jnp.float32), jnp.zeros((Dg,), jnp.float32)
        layers.append(lp)
    params["layers"] = layers
    return params


# ----------------------------------------------------------------------------
# Main
# ----------------------------------------------------------------------------
if __name__ == "__main__":
    cfg = dict(
        n_layers=2, label_patch_size=4, time_channel=3,
        encoder_time_d_model=16, encoder_target_d_model=16,
        decoder_time_d_model=16, decoder_target_d_model=16,
        num_nodes=4, n_heads=2,
    )
    B, pred_len, N, Fc = 2, 8, cfg["num_nodes"], cfg["time_channel"]
    n_patches_enc = 4

    key = jax.random.PRNGKey(0)
    k_in, k_p, k_s = jax.random.split(key, 3)
    k_dec, k_et, k_eg = jax.random.split(k_in, 3)

    decoder_time = jax.random.normal(k_dec, (B, pred_len, N, Fc), jnp.float32)
    encoder_output_times = tuple(
        jax.random.normal(jax.random.fold_in(k_et, i),
                          (B, N, n_patches_enc, cfg["encoder_time_d_model"]), jnp.float32)
        for i in range(cfg["n_layers"]))
    encoder_output_targets = tuple(
        jax.random.normal(jax.random.fold_in(k_eg, i),
                          (B, N, n_patches_enc, cfg["encoder_target_d_model"]), jnp.float32)
        for i in range(cfg["n_layers"]))
    supports = (
        jax.nn.softmax(jax.random.normal(jax.random.fold_in(k_s, 0), (N, N), jnp.float32), axis=1),
        jax.nn.softmax(jax.random.normal(jax.random.fold_in(k_s, 1), (N, N), jnp.float32), axis=1),
    )
    # gcn_bool=True, addaptadj=True -> supports_len = len(supports) + 1
    params = init_params(k_p, cfg, supports_len=len(supports) + 1)

    fwd = jax.jit(functools.partial(decoder_forward, cfg=cfg))
    self_attns, time_out, cross_attns, target_outs = fwd(
        params, decoder_time, encoder_output_times, encoder_output_targets, supports)

    jax.block_until_ready(time_out)
    for t in target_outs:
        jax.block_until_ready(t)

    n_patches = pred_len // cfg["label_patch_size"]
    assert time_out.shape == (B, N, n_patches, cfg["decoder_time_d_model"])
    assert len(target_outs) == cfg["n_layers"]
    assert target_outs[-1].shape == (B, N, n_patches, cfg["decoder_target_d_model"])
    assert bool(jnp.all(jnp.isfinite(time_out))) and bool(jnp.all(jnp.isfinite(target_outs[-1])))
    print("KERNEL_OK")
</pallas_src>

<mosaic_0001>
module attributes {stable_mosaic.version = 11 : i64} {
  func.func @_decoder_layer_kernel(%arg0: i32, %arg1: memref<1x8x16xf32, #tpu.memory_space<vmem>>, %arg2: memref<1x16x16xf32, #tpu.memory_space<vmem>>, %arg3: memref<1x16x16xf32, #tpu.memory_space<vmem>>, %arg4: memref<3x8x8xf32, #tpu.memory_space<vmem>>, %arg5: memref<16x48xf32, #tpu.memory_space<vmem>>, %arg6: memref<1x48xf32, #tpu.memory_space<vmem>>, %arg7: memref<16x16xf32, #tpu.memory_space<vmem>>, %arg8: memref<1x16xf32, #tpu.memory_space<vmem>>, %arg9: memref<1x16xf32, #tpu.memory_space<vmem>>, %arg10: memref<1x16xf32, #tpu.memory_space<vmem>>, %arg11: memref<16x16xf32, #tpu.memory_space<vmem>>, %arg12: memref<1x16xf32, #tpu.memory_space<vmem>>, %arg13: memref<16x32xf32, #tpu.memory_space<vmem>>, %arg14: memref<1x32xf32, #tpu.memory_space<vmem>>, %arg15: memref<16x16xf32, #tpu.memory_space<vmem>>, %arg16: memref<1x16xf32, #tpu.memory_space<vmem>>, %arg17: memref<16x16xf32, #tpu.memory_space<vmem>>, %arg18: memref<1x16xf32, #tpu.memory_space<vmem>>, %arg19: memref<16x16xf32, #tpu.memory_space<vmem>>, %arg20: memref<1x16xf32, #tpu.memory_space<vmem>>, %arg21: memref<1x16xf32, #tpu.memory_space<vmem>>, %arg22: memref<1x16xf32, #tpu.memory_space<vmem>>, %arg23: memref<1x16xf32, #tpu.memory_space<vmem>>, %arg24: memref<1x16xf32, #tpu.memory_space<vmem>>, %arg25: memref<16x64xf32, #tpu.memory_space<vmem>>, %arg26: memref<1x64xf32, #tpu.memory_space<vmem>>, %arg27: memref<64x16xf32, #tpu.memory_space<vmem>>, %arg28: memref<1x16xf32, #tpu.memory_space<vmem>>, %arg29: memref<1x16xf32, #tpu.memory_space<vmem>>, %arg30: memref<1x16xf32, #tpu.memory_space<vmem>>, %arg31: memref<16x64xf32, #tpu.memory_space<vmem>>, %arg32: memref<1x64xf32, #tpu.memory_space<vmem>>, %arg33: memref<64x16xf32, #tpu.memory_space<vmem>>, %arg34: memref<1x16xf32, #tpu.memory_space<vmem>>, %arg35: memref<1x16xf32, #tpu.memory_space<vmem>>, %arg36: memref<1x16xf32, #tpu.memory_space<vmem>>, %arg37: memref<112x16xf32, #tpu.memory_space<vmem>>, %arg38: memref<1x16xf32, #tpu.memory_space<vmem>>, %arg39: memref<1x16xf32, #tpu.memory_space<vmem>>, %arg40: memref<1x16xf32, #tpu.memory_space<vmem>>, %arg41: memref<1x8x16xf32, #tpu.memory_space<vmem>>, %arg42: memref<1x8x16xf32, #tpu.memory_space<vmem>>) attributes {dimension_semantics = [#tpu.dimension_semantics<parallel>], iteration_bounds = array<i64: 2>, scalar_prefetch = 0 : i64, scratch_operands = 0 : i64, tpu.core_type = #tpu.core_type<tc>, window_params = [{transform_indices = @transform_0, window_bounds = array<i64: 1, 8, 16>}, {transform_indices = @transform_1, window_bounds = array<i64: 1, 16, 16>}, {transform_indices = @transform_2, window_bounds = array<i64: 1, 16, 16>}, {pipeline_mode = #tpu.pipeline_mode<synchronous>, transform_indices = @transform_3, window_bounds = array<i64: 3, 8, 8>}, {pipeline_mode = #tpu.pipeline_mode<synchronous>, transform_indices = @transform_4, window_bounds = array<i64: 16, 48>}, {pipeline_mode = #tpu.pipeline_mode<synchronous>, transform_indices = @transform_5, window_bounds = array<i64: 1, 48>}, {pipeline_mode = #tpu.pipeline_mode<synchronous>, transform_indices = @transform_6, window_bounds = array<i64: 16, 16>}, {pipeline_mode = #tpu.pipeline_mode<synchronous>, transform_indices = @transform_7, window_bounds = array<i64: 1, 16>}, {pipeline_mode = #tpu.pipeline_mode<synchronous>, transform_indices = @transform_8, window_bounds = array<i64: 1, 16>}, {pipeline_mode = #tpu.pipeline_mode<synchronous>, transform_indices = @transform_9, window_bounds = array<i64: 1, 16>}, {pipeline_mode = #tpu.pipeline_mode<synchronous>, transform_indices = @transform_10, window_bounds = array<i64: 16, 16>}, {pipeline_mode = #tpu.pipeline_mode<synchronous>, transform_indices = @transform_11, window_bounds = array<i64: 1, 16>}, {pipeline_mode = #tpu.pipeline_mode<synchronous>, transform_indices = @transform_12, window_bounds = array<i64: 16, 32>}, {pipeline_mode = #tpu.pipeline_mode<synchronous>, transform_indices = @transform_13, window_bounds = array<i64: 1, 32>}, {pipeline_mode = #tpu.pipeline_mode<synchronous>, transform_indices = @transform_14, window_bounds = array<i64: 16, 16>}, {pipeline_mode = #tpu.pipeline_mode<synchronous>, transform_indices = @transform_15, window_bounds = array<i64: 1, 16>}, {pipeline_mode = #tpu.pipeline_mode<synchronous>, transform_indices = @transform_16, window_bounds = array<i64: 16, 16>}, {pipeline_mode = #tpu.pipeline_mode<synchronous>, transform_indices = @transform_17, window_bounds = array<i64: 1, 16>}, {pipeline_mode = #tpu.pipeline_mode<synchronous>, transform_indices = @transform_18, window_bounds = array<i64: 16, 16>}, {pipeline_mode = #tpu.pipeline_mode<synchronous>, transform_indices = @transform_19, window_bounds = array<i64: 1, 16>}, {pipeline_mode = #tpu.pipeline_mode<synchronous>, transform_indices = @transform_20, window_bounds = array<i64: 1, 16>}, {pipeline_mode = #tpu.pipeline_mode<synchronous>, transform_indices = @transform_21, window_bounds = array<i64: 1, 16>}, {pipeline_mode = #tpu.pipeline_mode<synchronous>, transform_indices = @transform_22, window_bounds = array<i64: 1, 16>}, {pipeline_mode = #tpu.pipeline_mode<synchronous>, transform_indices = @transform_23, window_bounds = array<i64: 1, 16>}, {pipeline_mode = #tpu.pipeline_mode<synchronous>, transform_indices = @transform_24, window_bounds = array<i64: 16, 64>}, {pipeline_mode = #tpu.pipeline_mode<synchronous>, transform_indices = @transform_25, window_bounds = array<i64: 1, 64>}, {pipeline_mode = #tpu.pipeline_mode<synchronous>, transform_indices = @transform_26, window_bounds = array<i64: 64, 16>}, {pipeline_mode = #tpu.pipeline_mode<synchronous>, transform_indices = @transform_27, window_bounds = array<i64: 1, 16>}, {pipeline_mode = #tpu.pipeline_mode<synchronous>, transform_indices = @transform_28, window_bounds = array<i64: 1, 16>}, {pipeline_mode = #tpu.pipeline_mode<synchronous>, transform_indices = @transform_29, window_bounds = array<i64: 1, 16>}, {pipeline_mode = #tpu.pipeline_mode<synchronous>, transform_indices = @transform_30, window_bounds = array<i64: 16, 64>}, {pipeline_mode = #tpu.pipeline_mode<synchronous>, transform_indices = @transform_31, window_bounds = array<i64: 1, 64>}, {pipeline_mode = #tpu.pipeline_mode<synchronous>, transform_indices = @transform_32, window_bounds = array<i64: 64, 16>}, {pipeline_mode = #tpu.pipeline_mode<synchronous>, transform_indices = @transform_33, window_bounds = array<i64: 1, 16>}, {pipeline_mode = #tpu.pipeline_mode<synchronous>, transform_indices = @transform_34, window_bounds = array<i64: 1, 16>}, {pipeline_mode = #tpu.pipeline_mode<synchronous>, transform_indices = @transform_35, window_bounds = array<i64: 1, 16>}, {pipeline_mode = #tpu.pipeline_mode<synchronous>, transform_indices = @transform_36, window_bounds = array<i64: 112, 16>}, {pipeline_mode = #tpu.pipeline_mode<synchronous>, transform_indices = @transform_37, window_bounds = array<i64: 1, 16>}, {pipeline_mode = #tpu.pipeline_mode<synchronous>, transform_indices = @transform_38, window_bounds = array<i64: 1, 16>}, {pipeline_mode = #tpu.pipeline_mode<synchronous>, transform_indices = @transform_39, window_bounds = array<i64: 1, 16>}, {transform_indices = @transform_40, window_bounds = array<i64: 1, 8, 16>}, {transform_indices = @transform_41, window_bounds = array<i64: 1, 8, 16>}]} {
    %c0 = arith.constant 0 : index
    %c0_0 = arith.constant 0 : index
    %c0_1 = arith.constant 0 : index
    %0 = vector.load %arg1[%c0, %c0_0, %c0_1] : memref<1x8x16xf32, #tpu.memory_space<vmem>>, vector<1x8x16xf32>
    %1 = vector.shape_cast %0 : vector<1x8x16xf32> to vector<8x16xf32>
    %c0_2 = arith.constant 0 : index
    %c0_3 = arith.constant 0 : index
    %c0_4 = arith.constant 0 : index
    %2 = vector.load %arg2[%c0_2, %c0_3, %c0_4] : memref<1x16x16xf32, #tpu.memory_space<vmem>>, vector<1x16x16xf32>
    %3 = vector.shape_cast %2 : vector<1x16x16xf32> to vector<16x16xf32>
    %c0_5 = arith.constant 0 : index
    %c0_6 = arith.constant 0 : index
    %c0_7 = arith.constant 0 : index
    %4 = vector.load %arg3[%c0_5, %c0_6, %c0_7] : memref<1x16x16xf32, #tpu.memory_space<vmem>>, vector<1x16x16xf32>
    %5 = vector.shape_cast %4 : vector<1x16x16xf32> to vector<16x16xf32>
    %c0_8 = arith.constant 0 : index
    %c0_9 = arith.constant 0 : index
    %6 = vector.load %arg5[%c0_8, %c0_9] : memref<16x48xf32, #tpu.memory_space<vmem>>, vector<16x48xf32>
    %cst = arith.constant dense<0.000000e+00> : vector<8x48xf32>
    %7 = tpu.matmul %1, %6, %cst {dimension_numbers = #tpu.dot_dimension_numbers<[1], [0], [0], [1], [0, 0, 1, 1], [], []>} : vector<8x16xf32>, vector<16x48xf32>, vector<8x48xf32> -> vector<8x48xf32>
    %c0_10 = arith.constant 0 : index
    %c0_11 = arith.constant 0 : index
    %8 = vector.load %arg6[%c0_10, %c0_11] : memref<1x48xf32, #tpu.memory_space<vmem>>, vector<1x48xf32>
    %9 = vector.broadcast %8 : vector<1x48xf32> to vector<8x48xf32>
    %10 = arith.addf %7, %9 : vector<8x48xf32>
    %11 = vector.extract_strided_slice %10 {offsets = [0, 0], sizes = [8, 16], strides = [1, 1]} : vector<8x48xf32> to vector<8x16xf32>
    %12 = vector.extract_strided_slice %10 {offsets = [0, 16], sizes = [8, 16], strides = [1, 1]} : vector<8x48xf32> to vector<8x16xf32>
    %13 = vector.extract_strided_slice %10 {offsets = [0, 32], sizes = [8, 16], strides = [1, 1]} : vector<8x48xf32> to vector<8x16xf32>
    %14 = vector.extract_strided_slice %11 {offsets = [0, 0], sizes = [8, 8], strides = [1, 1]} : vector<8x16xf32> to vector<8x8xf32>
    %15 = vector.extract_strided_slice %11 {offsets = [0, 8], sizes = [8, 8], strides = [1, 1]} : vector<8x16xf32> to vector<8x8xf32>
    %16 = vector.shape_cast %14 : vector<8x8xf32> to vector<1x8x8xf32>
    %17 = vector.shape_cast %15 : vector<8x8xf32> to vector<1x8x8xf32>
    %18 = tpu.concatenate %16, %17 in 0 : vector<1x8x8xf32>, vector<1x8x8xf32> -> vector<2x8x8xf32>
    %19 = vector.extract_strided_slice %12 {offsets = [0, 0], sizes = [8, 8], strides = [1, 1]} : vector<8x16xf32> to vector<8x8xf32>
    %20 = vector.extract_strided_slice %12 {offsets = [0, 8], sizes = [8, 8], strides = [1, 1]} : vector<8x16xf32> to vector<8x8xf32>
    %21 = vector.shape_cast %19 : vector<8x8xf32> to vector<1x8x8xf32>
    %22 = vector.shape_cast %20 : vector<8x8xf32> to vector<1x8x8xf32>
    %23 = tpu.concatenate %21, %22 in 0 : vector<1x8x8xf32>, vector<1x8x8xf32> -> vector<2x8x8xf32>
    %24 = vector.extract_strided_slice %13 {offsets = [0, 0], sizes = [8, 8], strides = [1, 1]} : vector<8x16xf32> to vector<8x8xf32>
    %25 = vector.extract_strided_slice %13 {offsets = [0, 8], sizes = [8, 8], strides = [1, 1]} : vector<8x16xf32> to vector<8x8xf32>
    %26 = vector.shape_cast %24 : vector<8x8xf32> to vector<1x8x8xf32>
    %27 = vector.shape_cast %25 : vector<8x8xf32> to vector<1x8x8xf32>
    %28 = tpu.concatenate %26, %27 in 0 : vector<1x8x8xf32>, vector<1x8x8xf32> -> vector<2x8x8xf32>
    "tpu.trace_start"() <{level = 10 : i32, message = "hqd,hkd->hqk"}> : () -> ()
    %cst_12 = arith.constant dense<0.000000e+00> : vector<2x8x8xf32>
    %29 = tpu.matmul %18, %23, %cst_12 {dimension_numbers = #tpu.dot_dimension_numbers<[2], [2], [1], [1], [0, 0, 0, 1, 1, 1], [0], [0]>} : vector<2x8x8xf32>, vector<2x8x8xf32>, vector<2x8x8xf32> -> vector<2x8x8xf32>
    "tpu.trace_stop"() : () -> ()
    %cst_13 = arith.constant 0.353553385 : f32
    %30 = vector.broadcast %cst_13 : f32 to vector<2x8x8xf32>
    %31 = arith.mulf %29, %30 : vector<2x8x8xf32>
    %32 = tpu.iota {dimensions = array<i32: 0>} : vector<8x8xi32>
    %c0_i32 = arith.constant 0 : i32
    %33 = vector.broadcast %c0_i32 : i32 to vector<8x8xi32>
    %c2_i32 = arith.constant 2 : i32
    %34 = vector.broadcast %c2_i32 : i32 to vector<8x8xi32>
    %35 = arith.cmpi sge, %32, %34 : vector<8x8xi32>
    %36 = arith.extui %35 : vector<8x8xi1> to vector<8x8xi32>
    %37 = arith.addi %33, %36 : vector<8x8xi32>
    %c4_i32 = arith.constant 4 : i32
    %38 = vector.broadcast %c4_i32 : i32 to vector<8x8xi32>
    %39 = arith.cmpi sge, %32, %38 : vector<8x8xi32>
    %40 = arith.extui %39 : vector<8x8xi1> to vector<8x8xi32>
    %41 = arith.addi %37, %40 : vector<8x8xi32>
    %c6_i32 = arith.constant 6 : i32
    %42 = vector.broadcast %c6_i32 : i32 to vector<8x8xi32>
    %43 = arith.cmpi sge, %32, %42 : vector<8x8xi32>
    %44 = arith.extui %43 : vector<8x8xi1> to vector<8x8xi32>
    %45 = arith.addi %41, %44 : vector<8x8xi32>
    %46 = tpu.iota {dimensions = array<i32: 1>} : vector<8x8xi32>
    %c0_i32_14 = arith.constant 0 : i32
    %47 = vector.broadcast %c0_i32_14 : i32 to vector<8x8xi32>
    %c2_i32_15 = arith.constant 2 : i32
    %48 = vector.broadcast %c2_i32_15 : i32 to vector<8x8xi32>
    %49 = arith.cmpi sge, %46, %48 : vector<8x8xi32>
    %50 = arith.extui %49 : vector<8x8xi1> to vector<8x8xi32>
    %51 = arith.addi %47, %50 : vector<8x8xi32>
    %c4_i32_16 = arith.constant 4 : i32
    %52 = vector.broadcast %c4_i32_16 : i32 to vector<8x8xi32>
    %53 = arith.cmpi sge, %46, %52 : vector<8x8xi32>
    %54 = arith.extui %53 : vector<8x8xi1> to vector<8x8xi32>
    %55 = arith.addi %51, %54 : vector<8x8xi32>
    %c6_i32_17 = arith.constant 6 : i32
    %56 = vector.broadcast %c6_i32_17 : i32 to vector<8x8xi32>
    %57 = arith.cmpi sge, %46, %56 : vector<8x8xi32>
    %58 = arith.extui %57 : vector<8x8xi1> to vector<8x8xi32>
    %59 = arith.addi %55, %58 : vector<8x8xi32>
    %60 = arith.cmpi eq, %45, %59 : vector<8x8xi32>
    %cst_18 = arith.constant 0.000000e+00 : f32
    %cst_19 = arith.constant -1.000000e+30 : f32
    %61 = vector.broadcast %cst_18 : f32 to vector<8x8xf32>
    %62 = vector.broadcast %cst_19 : f32 to vector<8x8xf32>
    %63 = arith.select %60, %61, %62 : vector<8x8xi1>, vector<8x8xf32>
    %64 = vector.shape_cast %63 : vector<8x8xf32> to vector<1x8x8xf32>
    %65 = vector.broadcast %64 : vector<1x8x8xf32> to vector<2x8x8xf32>
    %66 = arith.addf %31, %65 : vector<2x8x8xf32>
    %cst_20 = arith.constant dense<0xFF800000> : vector<2x8xf32>
    %67 = vector.multi_reduction <maximumf>, %66, %cst_20 [2] : vector<2x8x8xf32> to vector<2x8xf32>
    %68 = vector.shape_cast %67 : vector<2x8xf32> to vector<2x8x1xf32>
    %69 = vector.broadcast %68 : vector<2x8x1xf32> to vector<2x8x8xf32>
    %70 = arith.subf %66, %69 : vector<2x8x8xf32>
    %71 = math.exp %70 : vector<2x8x8xf32>
    %cst_21 = arith.constant dense<0.000000e+00> : vector<2x8xf32>
    %72 = vector.multi_reduction <add>, %71, %cst_21 [2] : vector<2x8x8xf32> to vector<2x8xf32>
    %73 = vector.shape_cast %72 : vector<2x8xf32> to vector<2x8x1xf32>
    %74 = vector.broadcast %73 : vector<2x8x1xf32> to vector<2x8x8xf32>
    %75 = arith.divf %71, %74 : vector<2x8x8xf32>
    "tpu.trace_start"() <{level = 10 : i32, message = "hqk,hkd->hqd"}> : () -> ()
    %cst_22 = arith.constant dense<0.000000e+00> : vector<2x8x8xf32>
    %76 = tpu.matmul %75, %28, %cst_22 {dimension_numbers = #tpu.dot_dimension_numbers<[2], [1], [1], [2], [0, 0, 0, 1, 1, 2], [0], [0]>} : vector<2x8x8xf32>, vector<2x8x8xf32>, vector<2x8x8xf32> -> vector<2x8x8xf32>
    "tpu.trace_stop"() : () -> ()
    %77 = vector.extract_strided_slice %76 {offsets = [0, 0, 0], sizes = [1, 8, 8], strides = [1, 1, 1]} : vector<2x8x8xf32> to vector<1x8x8xf32>
    %78 = vector.shape_cast %77 : vector<1x8x8xf32> to vector<8x8xf32>
    %79 = vector.extract_strided_slice %76 {offsets = [1, 0, 0], sizes = [1, 8, 8], strides = [1, 1, 1]} : vector<2x8x8xf32> to vector<1x8x8xf32>
    %80 = vector.shape_cast %79 : vector<1x8x8xf32> to vector<8x8xf32>
    %81 = tpu.concatenate %78, %80 in 1 : vector<8x8xf32>, vector<8x8xf32> -> vector<8x16xf32>
    %c0_23 = arith.constant 0 : index
    %c0_24 = arith.constant 0 : index
    %82 = vector.load %arg7[%c0_23, %c0_24] : memref<16x16xf32, #tpu.memory_space<vmem>>, vector<16x16xf32>
    %cst_25 = arith.constant dense<0.000000e+00> : vector<8x16xf32>
    %83 = tpu.matmul %81, %82, %cst_25 {dimension_numbers = #tpu.dot_dimension_numbers<[1], [0], [0], [1], [0, 0, 1, 1], [], []>} : vector<8x16xf32>, vector<16x16xf32>, vector<8x16xf32> -> vector<8x16xf32>
    %c0_26 = arith.constant 0 : index
    %c0_27 = arith.constant 0 : index
    %84 = vector.load %arg8[%c0_26, %c0_27] : memref<1x16xf32, #tpu.memory_space<vmem>>, vector<1x16xf32>
    %85 = vector.broadcast %84 : vector<1x16xf32> to vector<8x16xf32>
    %86 = arith.addf %83, %85 : vector<8x16xf32>
    %87 = arith.addf %86, %1 : vector<8x16xf32>
    %c0_28 = arith.constant 0 : index
    %c0_29 = arith.constant 0 : index
    %88 = vector.load %arg9[%c0_28, %c0_29] : memref<1x16xf32, #tpu.memory_space<vmem>>, vector<1x16xf32>
    %c0_30 = arith.constant 0 : index
    %c0_31 = arith.constant 0 : index
    %89 = vector.load %arg10[%c0_30, %c0_31] : memref<1x16xf32, #tpu.memory_space<vmem>>, vector<1x16xf32>
    %cst_32 = arith.constant dense<0.000000e+00> : vector<8xf32>
    %90 = vector.multi_reduction <add>, %87, %cst_32 [1] : vector<8x16xf32> to vector<8xf32>
    %91 = vector.shape_cast %90 : vector<8xf32> to vector<8x1xf32>
    %cst_33 = arith.constant 1.600000e+01 : f32
    %92 = vector.broadcast %cst_33 : f32 to vector<8x1xf32>
    %93 = arith.divf %91, %92 : vector<8x1xf32>
    %94 = vector.broadcast %93 : vector<8x1xf32> to vector<8x16xf32>
    %95 = arith.subf %87, %94 : vector<8x16xf32>
    %96 = arith.mulf %95, %95 : vector<8x16xf32>
    %cst_34 = arith.constant dense<0.000000e+00> : vector<8xf32>
    %97 = vector.multi_reduction <add>, %96, %cst_34 [1] : vector<8x16xf32> to vector<8xf32>
    %98 = vector.shape_cast %97 : vector<8xf32> to vector<8x1xf32>
    %cst_35 = arith.constant 1.600000e+01 : f32
    %99 = vector.broadcast %cst_35 : f32 to vector<8x1xf32>
    %100 = arith.divf %98, %99 : vector<8x1xf32>
    %101 = vector.broadcast %93 : vector<8x1xf32> to vector<8x16xf32>
    %102 = arith.subf %87, %101 : vector<8x16xf32>
    %cst_36 = arith.constant 9.99999974E-6 : f32
    %103 = vector.broadcast %cst_36 : f32 to vector<8x1xf32>
    %104 = arith.addf %100, %103 : vector<8x1xf32>
    %105 = math.rsqrt %104 : vector<8x1xf32>
    %106 = vector.broadcast %105 : vector<8x1xf32> to vector<8x16xf32>
    %107 = arith.mulf %102, %106 : vector<8x16xf32>
    %108 = vector.broadcast %88 : vector<1x16xf32> to vector<8x16xf32>
    %109 = arith.mulf %107, %108 : vector<8x16xf32>
    %110 = vector.broadcast %89 : vector<1x16xf32> to vector<8x16xf32>
    %111 = arith.addf %109, %110 : vector<8x16xf32>
    %c0_37 = arith.constant 0 : index
    %c0_38 = arith.constant 0 : index
    %112 = vector.load %arg11[%c0_37, %c0_38] : memref<16x16xf32, #tpu.memory_space<vmem>>, vector<16x16xf32>
    %cst_39 = arith.constant dense<0.000000e+00> : vector<8x16xf32>
    %113 = tpu.matmul %111, %112, %cst_39 {dimension_numbers = #tpu.dot_dimension_numbers<[1], [0], [0], [1], [0, 0, 1, 1], [], []>} : vector<8x16xf32>, vector<16x16xf32>, vector<8x16xf32> -> vector<8x16xf32>
    %c0_40 = arith.constant 0 : index
    %c0_41 = arith.constant 0 : index
    %114 = vector.load %arg12[%c0_40, %c0_41] : memref<1x16xf32, #tpu.memory_space<vmem>>, vector<1x16xf32>
    %115 = vector.broadcast %114 : vector<1x16xf32> to vector<8x16xf32>
    %116 = arith.addf %113, %115 : vector<8x16xf32>
    %c0_42 = arith.constant 0 : index
    %c0_43 = arith.constant 0 : index
    %117 = vector.load %arg13[%c0_42, %c0_43] : memref<16x32xf32, #tpu.memory_space<vmem>>, vector<16x32xf32>
    %cst_44 = arith.constant dense<0.000000e+00> : vector<16x32xf32>
    %118 = tpu.matmul %3, %117, %cst_44 {dimension_numbers = #tpu.dot_dimension_numbers<[1], [0], [0], [1], [0, 0, 1, 1], [], []>} : vector<16x16xf32>, vector<16x32xf32>, vector<16x32xf32> -> vector<16x32xf32>
    %c0_45 = arith.constant 0 : index
    %c0_46 = arith.constant 0 : index
    %119 = vector.load %arg14[%c0_45, %c0_46] : memref<1x32xf32, #tpu.memory_space<vmem>>, vector<1x32xf32>
    %120 = vector.broadcast %119 : vector<1x32xf32> to vector<16x32xf32>
    %121 = arith.addf %118, %120 : vector<16x32xf32>
    %122 = vector.extract_strided_slice %121 {offsets = [0, 0], sizes = [16, 16], strides = [1, 1]} : vector<16x32xf32> to vector<16x16xf32>
    %123 = vector.extract_strided_slice %121 {offsets = [0, 16], sizes = [16, 16], strides = [1, 1]} : vector<16x32xf32> to vector<16x16xf32>
    %c0_47 = arith.constant 0 : index
    %c0_48 = arith.constant 0 : index
    %124 = vector.load %arg15[%c0_47, %c0_48] : memref<16x16xf32, #tpu.memory_space<vmem>>, vector<16x16xf32>
    %cst_49 = arith.constant dense<0.000000e+00> : vector<16x16xf32>
    %125 = tpu.matmul %5, %124, %cst_49 {dimension_numbers = #tpu.dot_dimension_numbers<[1], [0], [0], [1], [0, 0, 1, 1], [], []>} : vector<16x16xf32>, vector<16x16xf32>, vector<16x16xf32> -> vector<16x16xf32>
    %c0_50 = arith.constant 0 : index
    %c0_51 = arith.constant 0 : index
    %126 = vector.load %arg16[%c0_50, %c0_51] : memref<1x16xf32, #tpu.memory_space<vmem>>, vector<1x16xf32>
    %127 = vector.broadcast %126 : vector<1x16xf32> to vector<16x16xf32>
    %128 = arith.addf %125, %127 : vector<16x16xf32>
    %129 = vector.extract_strided_slice %116 {offsets = [0, 0], sizes = [8, 8], strides = [1, 1]} : vector<8x16xf32> to vector<8x8xf32>
    %130 = vector.extract_strided_slice %116 {offsets = [0, 8], sizes = [8, 8], strides = [1, 1]} : vector<8x16xf32> to vector<8x8xf32>
    %131 = vector.shape_cast %129 : vector<8x8xf32> to vector<1x8x8xf32>
    %132 = vector.shape_cast %130 : vector<8x8xf32> to vector<1x8x8xf32>
    %133 = tpu.concatenate %131, %132 in 0 : vector<1x8x8xf32>, vector<1x8x8xf32> -> vector<2x8x8xf32>
    %134 = vector.extract_strided_slice %122 {offsets = [0, 0], sizes = [16, 8], strides = [1, 1]} : vector<16x16xf32> to vector<16x8xf32>
    %135 = vector.extract_strided_slice %122 {offsets = [0, 8], sizes = [16, 8], strides = [1, 1]} : vector<16x16xf32> to vector<16x8xf32>
    %136 = vector.shape_cast %134 : vector<16x8xf32> to vector<1x16x8xf32>
    %137 = vector.shape_cast %135 : vector<16x8xf32> to vector<1x16x8xf32>
    %138 = tpu.concatenate %136, %137 in 0 : vector<1x16x8xf32>, vector<1x16x8xf32> -> vector<2x16x8xf32>
    %139 = vector.extract_strided_slice %123 {offsets = [0, 0], sizes = [16, 8], strides = [1, 1]} : vector<16x16xf32> to vector<16x8xf32>
    %140 = vector.extract_strided_slice %123 {offsets = [0, 8], sizes = [16, 8], strides = [1, 1]} : vector<16x16xf32> to vector<16x8xf32>
    %141 = vector.shape_cast %139 : vector<16x8xf32> to vector<1x16x8xf32>
    %142 = vector.shape_cast %140 : vector<16x8xf32> to vector<1x16x8xf32>
    %143 = tpu.concatenate %141, %142 in 0 : vector<1x16x8xf32>, vector<1x16x8xf32> -> vector<2x16x8xf32>
    "tpu.trace_start"() <{level = 10 : i32, message = "hqd,hkd->hqk"}> : () -> ()
    %cst_52 = arith.constant dense<0.000000e+00> : vector<2x8x16xf32>
    %144 = tpu.matmul %133, %138, %cst_52 {dimension_numbers = #tpu.dot_dimension_numbers<[2], [2], [1], [1], [0, 0, 0, 1, 1, 1], [0], [0]>} : vector<2x8x8xf32>, vector<2x16x8xf32>, vector<2x8x16xf32> -> vector<2x8x16xf32>
    "tpu.trace_stop"() : () -> ()
    %cst_53 = arith.constant 0.353553385 : f32
    %145 = vector.broadcast %cst_53 : f32 to vector<2x8x16xf32>
    %146 = arith.mulf %144, %145 : vector<2x8x16xf32>
    %147 = tpu.iota {dimensions = array<i32: 0>} : vector<8x16xi32>
    %c0_i32_54 = arith.constant 0 : i32
    %148 = vector.broadcast %c0_i32_54 : i32 to vector<8x16xi32>
    %c2_i32_55 = arith.constant 2 : i32
    %149 = vector.broadcast %c2_i32_55 : i32 to vector<8x16xi32>
    %150 = arith.cmpi sge, %147, %149 : vector<8x16xi32>
    %151 = arith.extui %150 : vector<8x16xi1> to vector<8x16xi32>
    %152 = arith.addi %148, %151 : vector<8x16xi32>
    %c4_i32_56 = arith.constant 4 : i32
    %153 = vector.broadcast %c4_i32_56 : i32 to vector<8x16xi32>
    %154 = arith.cmpi sge, %147, %153 : vector<8x16xi32>
    %155 = arith.extui %154 : vector<8x16xi1> to vector<8x16xi32>
    %156 = arith.addi %152, %155 : vector<8x16xi32>
    %c6_i32_57 = arith.constant 6 : i32
    %157 = vector.broadcast %c6_i32_57 : i32 to vector<8x16xi32>
    %158 = arith.cmpi sge, %147, %157 : vector<8x16xi32>
    %159 = arith.extui %158 : vector<8x16xi1> to vector<8x16xi32>
    %160 = arith.addi %156, %159 : vector<8x16xi32>
    %161 = tpu.iota {dimensions = array<i32: 1>} : vector<8x16xi32>
    %c0_i32_58 = arith.constant 0 : i32
    %162 = vector.broadcast %c0_i32_58 : i32 to vector<8x16xi32>
    %c4_i32_59 = arith.constant 4 : i32
    %163 = vector.broadcast %c4_i32_59 : i32 to vector<8x16xi32>
    %164 = arith.cmpi sge, %161, %163 : vector<8x16xi32>
    %165 = arith.extui %164 : vector<8x16xi1> to vector<8x16xi32>
    %166 = arith.addi %162, %165 : vector<8x16xi32>
    %c8_i32 = arith.constant 8 : i32
    %167 = vector.broadcast %c8_i32 : i32 to vector<8x16xi32>
    %168 = arith.cmpi sge, %161, %167 : vector<8x16xi32>
    %169 = arith.extui %168 : vector<8x16xi1> to vector<8x16xi32>
    %170 = arith.addi %166, %169 : vector<8x16xi32>
    %c12_i32 = arith.constant 12 : i32
    %171 = vector.broadcast %c12_i32 : i32 to vector<8x16xi32>
    %172 = arith.cmpi sge, %161, %171 : vector<8x16xi32>
    %173 = arith.extui %172 : vector<8x16xi1> to vector<8x16xi32>
    %174 = arith.addi %170, %173 : vector<8x16xi32>
    %175 = arith.cmpi eq, %160, %174 : vector<8x16xi32>
    %cst_60 = arith.constant 0.000000e+00 : f32
    %cst_61 = arith.constant -1.000000e+30 : f32
    %176 = vector.broadcast %cst_60 : f32 to vector<8x16xf32>
    %177 = vector.broadcast %cst_61 : f32 to vector<8x16xf32>
    %178 = arith.select %175, %176, %177 : vector<8x16xi1>, vector<8x16xf32>
    %179 = vector.shape_cast %178 : vector<8x16xf32> to vector<1x8x16xf32>
    %180 = vector.broadcast %179 : vector<1x8x16xf32> to vector<2x8x16xf32>
    %181 = arith.addf %146, %180 : vector<2x8x16xf32>
    %cst_62 = arith.constant dense<0xFF800000> : vector<2x8xf32>
    %182 = vector.multi_reduction <maximumf>, %181, %cst_62 [2] : vector<2x8x16xf32> to vector<2x8xf32>
    %183 = vector.shape_cast %182 : vector<2x8xf32> to vector<2x8x1xf32>
    %184 = vector.broadcast %183 : vector<2x8x1xf32> to vector<2x8x16xf32>
    %185 = arith.subf %181, %184 : vector<2x8x16xf32>
    %186 = math.exp %185 : vector<2x8x16xf32>
    %cst_63 = arith.constant dense<0.000000e+00> : vector<2x8xf32>
    %187 = vector.multi_reduction <add>, %186, %cst_63 [2] : vector<2x8x16xf32> to vector<2x8xf32>
    %188 = vector.shape_cast %187 : vector<2x8xf32> to vector<2x8x1xf32>
    %189 = vector.broadcast %188 : vector<2x8x1xf32> to vector<2x8x16xf32>
    %190 = arith.divf %186, %189 : vector<2x8x16xf32>
    "tpu.trace_start"() <{level = 10 : i32, message = "hqk,hkd->hqd"}> : () -> ()
    %cst_64 = arith.constant dense<0.000000e+00> : vector<2x8x8xf32>
    %191 = tpu.matmul %190, %143, %cst_64 {dimension_numbers = #tpu.dot_dimension_numbers<[2], [1], [1], [2], [0, 0, 0, 1, 1, 2], [0], [0]>} : vector<2x8x16xf32>, vector<2x16x8xf32>, vector<2x8x8xf32> -> vector<2x8x8xf32>
    "tpu.trace_stop"() : () -> ()
    %192 = vector.extract_strided_slice %191 {offsets = [0, 0, 0], sizes = [1, 8, 8], strides = [1, 1, 1]} : vector<2x8x8xf32> to vector<1x8x8xf32>
    %193 = vector.shape_cast %192 : vector<1x8x8xf32> to vector<8x8xf32>
    %194 = vector.extract_strided_slice %191 {offsets = [1, 0, 0], sizes = [1, 8, 8], strides = [1, 1, 1]} : vector<2x8x8xf32> to vector<1x8x8xf32>
    %195 = vector.shape_cast %194 : vector<1x8x8xf32> to vector<8x8xf32>
    %196 = tpu.concatenate %193, %195 in 1 : vector<8x8xf32>, vector<8x8xf32> -> vector<8x16xf32>
    %197 = vector.extract_strided_slice %128 {offsets = [0, 0], sizes = [16, 8], strides = [1, 1]} : vector<16x16xf32> to vector<16x8xf32>
    %198 = vector.extract_strided_slice %128 {offsets = [0, 8], sizes = [16, 8], strides = [1, 1]} : vector<16x16xf32> to vector<16x8xf32>
    %199 = vector.shape_cast %197 : vector<16x8xf32> to vector<1x16x8xf32>
    %200 = vector.shape_cast %198 : vector<16x8xf32> to vector<1x16x8xf32>
    %201 = tpu.concatenate %199, %200 in 0 : vector<1x16x8xf32>, vector<1x16x8xf32> -> vector<2x16x8xf32>
    "tpu.trace_start"() <{level = 10 : i32, message = "hqk,hkd->hqd"}> : () -> ()
    %cst_65 = arith.constant dense<0.000000e+00> : vector<2x8x8xf32>
    %202 = tpu.matmul %190, %201, %cst_65 {dimension_numbers = #tpu.dot_dimension_numbers<[2], [1], [1], [2], [0, 0, 0, 1, 1, 2], [0], [0]>} : vector<2x8x16xf32>, vector<2x16x8xf32>, vector<2x8x8xf32> -> vector<2x8x8xf32>
    "tpu.trace_stop"() : () -> ()
    %203 = vector.extract_strided_slice %202 {offsets = [0, 0, 0], sizes = [1, 8, 8], strides = [1, 1, 1]} : vector<2x8x8xf32> to vector<1x8x8xf32>
    %204 = vector.shape_cast %203 : vector<1x8x8xf32> to vector<8x8xf32>
    %205 = vector.extract_strided_slice %202 {offsets = [1, 0, 0], sizes = [1, 8, 8], strides = [1, 1, 1]} : vector<2x8x8xf32> to vector<1x8x8xf32>
    %206 = vector.shape_cast %205 : vector<1x8x8xf32> to vector<8x8xf32>
    %207 = tpu.concatenate %204, %206 in 1 : vector<8x8xf32>, vector<8x8xf32> -> vector<8x16xf32>
    %c0_66 = arith.constant 0 : index
    %c0_67 = arith.constant 0 : index
    %208 = vector.load %arg17[%c0_66, %c0_67] : memref<16x16xf32, #tpu.memory_space<vmem>>, vector<16x16xf32>
    %cst_68 = arith.constant dense<0.000000e+00> : vector<8x16xf32>
    %209 = tpu.matmul %196, %208, %cst_68 {dimension_numbers = #tpu.dot_dimension_numbers<[1], [0], [0], [1], [0, 0, 1, 1], [], []>} : vector<8x16xf32>, vector<16x16xf32>, vector<8x16xf32> -> vector<8x16xf32>
    %c0_69 = arith.constant 0 : index
    %c0_70 = arith.constant 0 : index
    %210 = vector.load %arg18[%c0_69, %c0_70] : memref<1x16xf32, #tpu.memory_space<vmem>>, vector<1x16xf32>
    %211 = vector.broadcast %210 : vector<1x16xf32> to vector<8x16xf32>
    %212 = arith.addf %209, %211 : vector<8x16xf32>
    %213 = arith.addf %212, %111 : vector<8x16xf32>
    %c0_71 = arith.constant 0 : index
    %c0_72 = arith.constant 0 : index
    %214 = vector.load %arg19[%c0_71, %c0_72] : memref<16x16xf32, #tpu.memory_space<vmem>>, vector<16x16xf32>
    %cst_73 = arith.constant dense<0.000000e+00> : vector<8x16xf32>
    %215 = tpu.matmul %207, %214, %cst_73 {dimension_numbers = #tpu.dot_dimension_numbers<[1], [0], [0], [1], [0, 0, 1, 1], [], []>} : vector<8x16xf32>, vector<16x16xf32>, vector<8x16xf32> -> vector<8x16xf32>
    %c0_74 = arith.constant 0 : index
    %c0_75 = arith.constant 0 : index
    %216 = vector.load %arg20[%c0_74, %c0_75] : memref<1x16xf32, #tpu.memory_space<vmem>>, vector<1x16xf32>
    %217 = vector.broadcast %216 : vector<1x16xf32> to vector<8x16xf32>
    %218 = arith.addf %215, %217 : vector<8x16xf32>
    %c0_76 = arith.constant 0 : index
    %c0_77 = arith.constant 0 : index
    %219 = vector.load %arg21[%c0_76, %c0_77] : memref<1x16xf32, #tpu.memory_space<vmem>>, vector<1x16xf32>
    %c0_78 = arith.constant 0 : index
    %c0_79 = arith.constant 0 : index
    %220 = vector.load %arg22[%c0_78, %c0_79] : memref<1x16xf32, #tpu.memory_space<vmem>>, vector<1x16xf32>
    %cst_80 = arith.constant dense<0.000000e+00> : vector<8xf32>
    %221 = vector.multi_reduction <add>, %213, %cst_80 [1] : vector<8x16xf32> to vector<8xf32>
    %222 = vector.shape_cast %221 : vector<8xf32> to vector<8x1xf32>
    %cst_81 = arith.constant 1.600000e+01 : f32
    %223 = vector.broadcast %cst_81 : f32 to vector<8x1xf32>
    %224 = arith.divf %222, %223 : vector<8x1xf32>
    %225 = vector.broadcast %224 : vector<8x1xf32> to vector<8x16xf32>
    %226 = arith.subf %213, %225 : vector<8x16xf32>
    %227 = arith.mulf %226, %226 : vector<8x16xf32>
    %cst_82 = arith.constant dense<0.000000e+00> : vector<8xf32>
    %228 = vector.multi_reduction <add>, %227, %cst_82 [1] : vector<8x16xf32> to vector<8xf32>
    %229 = vector.shape_cast %228 : vector<8xf32> to vector<8x1xf32>
    %cst_83 = arith.constant 1.600000e+01 : f32
    %230 = vector.broadcast %cst_83 : f32 to vector<8x1xf32>
    %231 = arith.divf %229, %230 : vector<8x1xf32>
    %232 = vector.broadcast %224 : vector<8x1xf32> to vector<8x16xf32>
    %233 = arith.subf %213, %232 : vector<8x16xf32>
    %cst_84 = arith.constant 9.99999974E-6 : f32
    %234 = vector.broadcast %cst_84 : f32 to vector<8x1xf32>
    %235 = arith.addf %231, %234 : vector<8x1xf32>
    %236 = math.rsqrt %235 : vector<8x1xf32>
    %237 = vector.broadcast %236 : vector<8x1xf32> to vector<8x16xf32>
    %238 = arith.mulf %233, %237 : vector<8x16xf32>
    %239 = vector.broadcast %219 : vector<1x16xf32> to vector<8x16xf32>
    %240 = arith.mulf %238, %239 : vector<8x16xf32>
    %241 = vector.broadcast %220 : vector<1x16xf32> to vector<8x16xf32>
    %242 = arith.addf %240, %241 : vector<8x16xf32>
    %c0_85 = arith.constant 0 : index
    %c0_86 = arith.constant 0 : index
    %243 = vector.load %arg23[%c0_85, %c0_86] : memref<1x16xf32, #tpu.memory_space<vmem>>, vector<1x16xf32>
    %c0_87 = arith.constant 0 : index
    %c0_88 = arith.constant 0 : index
    %244 = vector.load %arg24[%c0_87, %c0_88] : memref<1x16xf32, #tpu.memory_space<vmem>>, vector<1x16xf32>
    %cst_89 = arith.constant dense<0.000000e+00> : vector<8xf32>
    %245 = vector.multi_reduction <add>, %218, %cst_89 [1] : vector<8x16xf32> to vector<8xf32>
    %246 = vector.shape_cast %245 : vector<8xf32> to vector<8x1xf32>
    %cst_90 = arith.constant 1.600000e+01 : f32
    %247 = vector.broadcast %cst_90 : f32 to vector<8x1xf32>
    %248 = arith.divf %246, %247 : vector<8x1xf32>
    %249 = vector.broadcast %248 : vector<8x1xf32> to vector<8x16xf32>
    %250 = arith.subf %218, %249 : vector<8x16xf32>
    %251 = arith.mulf %250, %250 : vector<8x16xf32>
    %cst_91 = arith.constant dense<0.000000e+00> : vector<8xf32>
    %252 = vector.multi_reduction <add>, %251, %cst_91 [1] : vector<8x16xf32> to vector<8xf32>
    %253 = vector.shape_cast %252 : vector<8xf32> to vector<8x1xf32>
    %cst_92 = arith.constant 1.600000e+01 : f32
    %254 = vector.broadcast %cst_92 : f32 to vector<8x1xf32>
    %255 = arith.divf %253, %254 : vector<8x1xf32>
    %256 = vector.broadcast %248 : vector<8x1xf32> to vector<8x16xf32>
    %257 = arith.subf %218, %256 : vector<8x16xf32>
    %cst_93 = arith.constant 9.99999974E-6 : f32
    %258 = vector.broadcast %cst_93 : f32 to vector<8x1xf32>
    %259 = arith.addf %255, %258 : vector<8x1xf32>
    %260 = math.rsqrt %259 : vector<8x1xf32>
    %261 = vector.broadcast %260 : vector<8x1xf32> to vector<8x16xf32>
    %262 = arith.mulf %257, %261 : vector<8x16xf32>
    %263 = vector.broadcast %243 : vector<1x16xf32> to vector<8x16xf32>
    %264 = arith.mulf %262, %263 : vector<8x16xf32>
    %265 = vector.broadcast %244 : vector<1x16xf32> to vector<8x16xf32>
    %266 = arith.addf %264, %265 : vector<8x16xf32>
    %c0_94 = arith.constant 0 : index
    %c0_95 = arith.constant 0 : index
    %267 = vector.load %arg25[%c0_94, %c0_95] : memref<16x64xf32, #tpu.memory_space<vmem>>, vector<16x64xf32>
    %c0_96 = arith.constant 0 : index
    %c0_97 = arith.constant 0 : index
    %268 = vector.load %arg26[%c0_96, %c0_97] : memref<1x64xf32, #tpu.memory_space<vmem>>, vector<1x64xf32>
    %c0_98 = arith.constant 0 : index
    %c0_99 = arith.constant 0 : index
    %269 = vector.load %arg27[%c0_98, %c0_99] : memref<64x16xf32, #tpu.memory_space<vmem>>, vector<64x16xf32>
    %c0_100 = arith.constant 0 : index
    %c0_101 = arith.constant 0 : index
    %270 = vector.load %arg28[%c0_100, %c0_101] : memref<1x16xf32, #tpu.memory_space<vmem>>, vector<1x16xf32>
    %c0_102 = arith.constant 0 : index
    %c0_103 = arith.constant 0 : index
    %271 = vector.load %arg29[%c0_102, %c0_103] : memref<1x16xf32, #tpu.memory_space<vmem>>, vector<1x16xf32>
    %c0_104 = arith.constant 0 : index
    %c0_105 = arith.constant 0 : index
    %272 = vector.load %arg30[%c0_104, %c0_105] : memref<1x16xf32, #tpu.memory_space<vmem>>, vector<1x16xf32>
    %cst_106 = arith.constant dense<0.000000e+00> : vector<8x64xf32>
    %273 = tpu.matmul %242, %267, %cst_106 {dimension_numbers = #tpu.dot_dimension_numbers<[1], [0], [0], [1], [0, 0, 1, 1], [], []>} : vector<8x16xf32>, vector<16x64xf32>, vector<8x64xf32> -> vector<8x64xf32>
    %274 = vector.broadcast %268 : vector<1x64xf32> to vector<8x64xf32>
    %275 = arith.addf %273, %274 : vector<8x64xf32>
    %cst_107 = arith.constant 0.000000e+00 : f32
    %276 = vector.broadcast %cst_107 : f32 to vector<8x64xf32>
    %277 = arith.maximumf %275, %276 : vector<8x64xf32>
    %cst_108 = arith.constant dense<0.000000e+00> : vector<8x16xf32>
    %278 = tpu.matmul %277, %269, %cst_108 {dimension_numbers = #tpu.dot_dimension_numbers<[1], [0], [0], [1], [0, 0, 1, 1], [], []>} : vector<8x64xf32>, vector<64x16xf32>, vector<8x16xf32> -> vector<8x16xf32>
    %279 = vector.broadcast %270 : vector<1x16xf32> to vector<8x16xf32>
    %280 = arith.addf %278, %279 : vector<8x16xf32>
    %281 = arith.addf %242, %280 : vector<8x16xf32>
    %cst_109 = arith.constant dense<0.000000e+00> : vector<8xf32>
    %282 = vector.multi_reduction <add>, %281, %cst_109 [1] : vector<8x16xf32> to vector<8xf32>
    %283 = vector.shape_cast %282 : vector<8xf32> to vector<8x1xf32>
    %cst_110 = arith.constant 1.600000e+01 : f32
    %284 = vector.broadcast %cst_110 : f32 to vector<8x1xf32>
    %285 = arith.divf %283, %284 : vector<8x1xf32>
    %286 = vector.broadcast %285 : vector<8x1xf32> to vector<8x16xf32>
    %287 = arith.subf %281, %286 : vector<8x16xf32>
    %288 = arith.mulf %287, %287 : vector<8x16xf32>
    %cst_111 = arith.constant dense<0.000000e+00> : vector<8xf32>
    %289 = vector.multi_reduction <add>, %288, %cst_111 [1] : vector<8x16xf32> to vector<8xf32>
    %290 = vector.shape_cast %289 : vector<8xf32> to vector<8x1xf32>
    %cst_112 = arith.constant 1.600000e+01 : f32
    %291 = vector.broadcast %cst_112 : f32 to vector<8x1xf32>
    %292 = arith.divf %290, %291 : vector<8x1xf32>
    %293 = vector.broadcast %285 : vector<8x1xf32> to vector<8x16xf32>
    %294 = arith.subf %281, %293 : vector<8x16xf32>
    %cst_113 = arith.constant 9.99999974E-6 : f32
    %295 = vector.broadcast %cst_113 : f32 to vector<8x1xf32>
    %296 = arith.addf %292, %295 : vector<8x1xf32>
    %297 = math.rsqrt %296 : vector<8x1xf32>
    %298 = vector.broadcast %297 : vector<8x1xf32> to vector<8x16xf32>
    %299 = arith.mulf %294, %298 : vector<8x16xf32>
    %300 = vector.broadcast %271 : vector<1x16xf32> to vector<8x16xf32>
    %301 = arith.mulf %299, %300 : vector<8x16xf32>
    %302 = vector.broadcast %272 : vector<1x16xf32> to vector<8x16xf32>
    %303 = arith.addf %301, %302 : vector<8x16xf32>
    %c0_114 = arith.constant 0 : index
    %c0_115 = arith.constant 0 : index
    %304 = vector.load %arg31[%c0_114, %c0_115] : memref<16x64xf32, #tpu.memory_space<vmem>>, vector<16x64xf32>
    %c0_116 = arith.constant 0 : index
    %c0_117 = arith.constant 0 : index
    %305 = vector.load %arg32[%c0_116, %c0_117] : memref<1x64xf32, #tpu.memory_space<vmem>>, vector<1x64xf32>
    %c0_118 = arith.constant 0 : index
    %c0_119 = arith.constant 0 : index
    %306 = vector.load %arg33[%c0_118, %c0_119] : memref<64x16xf32, #tpu.memory_space<vmem>>, vector<64x16xf32>
    %c0_120 = arith.constant 0 : index
    %c0_121 = arith.constant 0 : index
    %307 = vector.load %arg34[%c0_120, %c0_121] : memref<1x16xf32, #tpu.memory_space<vmem>>, vector<1x16xf32>
    %c0_122 = arith.constant 0 : index
    %c0_123 = arith.constant 0 : index
    %308 = vector.load %arg35[%c0_122, %c0_123] : memref<1x16xf32, #tpu.memory_space<vmem>>, vector<1x16xf32>
    %c0_124 = arith.constant 0 : index
    %c0_125 = arith.constant 0 : index
    %309 = vector.load %arg36[%c0_124, %c0_125] : memref<1x16xf32, #tpu.memory_space<vmem>>, vector<1x16xf32>
    %cst_126 = arith.constant dense<0.000000e+00> : vector<8x64xf32>
    %310 = tpu.matmul %266, %304, %cst_126 {dimension_numbers = #tpu.dot_dimension_numbers<[1], [0], [0], [1], [0, 0, 1, 1], [], []>} : vector<8x16xf32>, vector<16x64xf32>, vector<8x64xf32> -> vector<8x64xf32>
    %311 = vector.broadcast %305 : vector<1x64xf32> to vector<8x64xf32>
    %312 = arith.addf %310, %311 : vector<8x64xf32>
    %cst_127 = arith.constant 0.000000e+00 : f32
    %313 = vector.broadcast %cst_127 : f32 to vector<8x64xf32>
    %314 = arith.maximumf %312, %313 : vector<8x64xf32>
    %cst_128 = arith.constant dense<0.000000e+00> : vector<8x16xf32>
    %315 = tpu.matmul %314, %306, %cst_128 {dimension_numbers = #tpu.dot_dimension_numbers<[1], [0], [0], [1], [0, 0, 1, 1], [], []>} : vector<8x64xf32>, vector<64x16xf32>, vector<8x16xf32> -> vector<8x16xf32>
    %316 = vector.broadcast %307 : vector<1x16xf32> to vector<8x16xf32>
    %317 = arith.addf %315, %316 : vector<8x16xf32>
    %318 = arith.addf %266, %317 : vector<8x16xf32>
    %cst_129 = arith.constant dense<0.000000e+00> : vector<8xf32>
    %319 = vector.multi_reduction <add>, %318, %cst_129 [1] : vector<8x16xf32> to vector<8xf32>
    %320 = vector.shape_cast %319 : vector<8xf32> to vector<8x1xf32>
    %cst_130 = arith.constant 1.600000e+01 : f32
    %321 = vector.broadcast %cst_130 : f32 to vector<8x1xf32>
    %322 = arith.divf %320, %321 : vector<8x1xf32>
    %323 = vector.broadcast %322 : vector<8x1xf32> to vector<8x16xf32>
    %324 = arith.subf %318, %323 : vector<8x16xf32>
    %325 = arith.mulf %324, %324 : vector<8x16xf32>
    %cst_131 = arith.constant dense<0.000000e+00> : vector<8xf32>
    %326 = vector.multi_reduction <add>, %325, %cst_131 [1] : vector<8x16xf32> to vector<8xf32>
    %327 = vector.shape_cast %326 : vector<8xf32> to vector<8x1xf32>
    %cst_132 = arith.constant 1.600000e+01 : f32
    %328 = vector.broadcast %cst_132 : f32 to vector<8x1xf32>
    %329 = arith.divf %327, %328 : vector<8x1xf32>
    %330 = vector.broadcast %322 : vector<8x1xf32> to vector<8x16xf32>
    %331 = arith.subf %318, %330 : vector<8x16xf32>
    %cst_133 = arith.constant 9.99999974E-6 : f32
    %332 = vector.broadcast %cst_133 : f32 to vector<8x1xf32>
    %333 = arith.addf %329, %332 : vector<8x1xf32>
    %334 = math.rsqrt %333 : vector<8x1xf32>
    %335 = vector.broadcast %334 : vector<8x1xf32> to vector<8x16xf32>
    %336 = arith.mulf %331, %335 : vector<8x16xf32>
    %337 = vector.broadcast %308 : vector<1x16xf32> to vector<8x16xf32>
    %338 = arith.mulf %336, %337 : vector<8x16xf32>
    %339 = vector.broadcast %309 : vector<1x16xf32> to vector<8x16xf32>
    %340 = arith.addf %338, %339 : vector<8x16xf32>
    %c0_134 = arith.constant 0 : index
    %c0_135 = arith.constant 0 : index
    %c0_136 = arith.constant 0 : index
    %341 = vector.load %arg4[%c0_134, %c0_135, %c0_136] : memref<3x8x8xf32, #tpu.memory_space<vmem>>, vector<1x8x8xf32>
    %342 = vector.shape_cast %341 : vector<1x8x8xf32> to vector<8x8xf32>
    %cst_137 = arith.constant dense<0.000000e+00> : vector<8x16xf32>
    %343 = tpu.matmul %342, %340, %cst_137 {dimension_numbers = #tpu.dot_dimension_numbers<[1], [0], [0], [1], [0, 0, 1, 1], [], []>} : vector<8x8xf32>, vector<8x16xf32>, vector<8x16xf32> -> vector<8x16xf32>
    %cst_138 = arith.constant dense<0.000000e+00> : vector<8x16xf32>
    %344 = tpu.matmul %342, %343, %cst_138 {dimension_numbers = #tpu.dot_dimension_numbers<[1], [0], [0], [1], [0, 0, 1, 1], [], []>} : vector<8x8xf32>, vector<8x16xf32>, vector<8x16xf32> -> vector<8x16xf32>
    %c1 = arith.constant 1 : index
    %c0_139 = arith.constant 0 : index
    %c0_140 = arith.constant 0 : index
    %345 = vector.load %arg4[%c1, %c0_139, %c0_140] : memref<3x8x8xf32, #tpu.memory_space<vmem>>, vector<1x8x8xf32>
    %346 = vector.shape_cast %345 : vector<1x8x8xf32> to vector<8x8xf32>
    %cst_141 = arith.constant dense<0.000000e+00> : vector<8x16xf32>
    %347 = tpu.matmul %346, %340, %cst_141 {dimension_numbers = #tpu.dot_dimension_numbers<[1], [0], [0], [1], [0, 0, 1, 1], [], []>} : vector<8x8xf32>, vector<8x16xf32>, vector<8x16xf32> -> vector<8x16xf32>
    %cst_142 = arith.constant dense<0.000000e+00> : vector<8x16xf32>
    %348 = tpu.matmul %346, %347, %cst_142 {dimension_numbers = #tpu.dot_dimension_numbers<[1], [0], [0], [1], [0, 0, 1, 1], [], []>} : vector<8x8xf32>, vector<8x16xf32>, vector<8x16xf32> -> vector<8x16xf32>
    %c2 = arith.constant 2 : index
    %c0_143 = arith.constant 0 : index
    %c0_144 = arith.constant 0 : index
    %349 = vector.load %arg4[%c2, %c0_143, %c0_144] : memref<3x8x8xf32, #tpu.memory_space<vmem>>, vector<1x8x8xf32>
    %350 = vector.shape_cast %349 : vector<1x8x8xf32> to vector<8x8xf32>
    %cst_145 = arith.constant dense<0.000000e+00> : vector<8x16xf32>
    %351 = tpu.matmul %350, %340, %cst_145 {dimension_numbers = #tpu.dot_dimension_numbers<[1], [0], [0], [1], [0, 0, 1, 1], [], []>} : vector<8x8xf32>, vector<8x16xf32>, vector<8x16xf32> -> vector<8x16xf32>
    %cst_146 = arith.constant dense<0.000000e+00> : vector<8x16xf32>
    %352 = tpu.matmul %350, %351, %cst_146 {dimension_numbers = #tpu.dot_dimension_numbers<[1], [0], [0], [1], [0, 0, 1, 1], [], []>} : vector<8x8xf32>, vector<8x16xf32>, vector<8x16xf32> -> vector<8x16xf32>
    %353 = tpu.concatenate %340, %343, %344, %347, %348, %351, %352 in 1 : vector<8x16xf32>, vector<8x16xf32>, vector<8x16xf32>, vector<8x16xf32>, vector<8x16xf32>, vector<8x16xf32>, vector<8x16xf32> -> vector<8x112xf32>
    %c0_147 = arith.constant 0 : index
    %c0_148 = arith.constant 0 : index
    %354 = vector.load %arg37[%c0_147, %c0_148] : memref<112x16xf32, #tpu.memory_space<vmem>>, vector<112x16xf32>
    %cst_149 = arith.constant dense<0.000000e+00> : vector<8x16xf32>
    %355 = tpu.matmul %353, %354, %cst_149 {dimension_numbers = #tpu.dot_dimension_numbers<[1], [0], [0], [1], [0, 0, 1, 1], [], []>} : vector<8x112xf32>, vector<112x16xf32>, vector<8x16xf32> -> vector<8x16xf32>
    %c0_150 = arith.constant 0 : index
    %c0_151 = arith.constant 0 : index
    %356 = vector.load %arg38[%c0_150, %c0_151] : memref<1x16xf32, #tpu.memory_space<vmem>>, vector<1x16xf32>
    %357 = vector.broadcast %356 : vector<1x16xf32> to vector<8x16xf32>
    %358 = arith.addf %355, %357 : vector<8x16xf32>
    %359 = arith.addf %340, %358 : vector<8x16xf32>
    %c0_152 = arith.constant 0 : index
    %c0_153 = arith.constant 0 : index
    %360 = vector.load %arg39[%c0_152, %c0_153] : memref<1x16xf32, #tpu.memory_space<vmem>>, vector<1x16xf32>
    %c0_154 = arith.constant 0 : index
    %c0_155 = arith.constant 0 : index
    %361 = vector.load %arg40[%c0_154, %c0_155] : memref<1x16xf32, #tpu.memory_space<vmem>>, vector<1x16xf32>
    %cst_156 = arith.constant dense<0.000000e+00> : vector<8xf32>
    %362 = vector.multi_reduction <add>, %359, %cst_156 [1] : vector<8x16xf32> to vector<8xf32>
    %363 = vector.shape_cast %362 : vector<8xf32> to vector<8x1xf32>
    %cst_157 = arith.constant 1.600000e+01 : f32
    %364 = vector.broadcast %cst_157 : f32 to vector<8x1xf32>
    %365 = arith.divf %363, %364 : vector<8x1xf32>
    %366 = vector.broadcast %365 : vector<8x1xf32> to vector<8x16xf32>
    %367 = arith.subf %359, %366 : vector<8x16xf32>
    %368 = arith.mulf %367, %367 : vector<8x16xf32>
    %cst_158 = arith.constant dense<0.000000e+00> : vector<8xf32>
    %369 = vector.multi_reduction <add>, %368, %cst_158 [1] : vector<8x16xf32> to vector<8xf32>
    %370 = vector.shape_cast %369 : vector<8xf32> to vector<8x1xf32>
    %cst_159 = arith.constant 1.600000e+01 : f32
    %371 = vector.broadcast %cst_159 : f32 to vector<8x1xf32>
    %372 = arith.divf %370, %371 : vector<8x1xf32>
    %373 = vector.broadcast %365 : vector<8x1xf32> to vector<8x16xf32>
    %374 = arith.subf %359, %373 : vector<8x16xf32>
    %cst_160 = arith.constant 9.99999974E-6 : f32
    %375 = vector.broadcast %cst_160 : f32 to vector<8x1xf32>
    %376 = arith.addf %372, %375 : vector<8x1xf32>
    %377 = math.rsqrt %376 : vector<8x1xf32>
    %378 = vector.broadcast %377 : vector<8x1xf32> to vector<8x16xf32>
    %379 = arith.mulf %374, %378 : vector<8x16xf32>
    %380 = vector.broadcast %360 : vector<1x16xf32> to vector<8x16xf32>
    %381 = arith.mulf %379, %380 : vector<8x16xf32>
    %382 = vector.broadcast %361 : vector<1x16xf32> to vector<8x16xf32>
    %383 = arith.addf %381, %382 : vector<8x16xf32>
    %c0_161 = arith.constant 0 : index
    %c0_162 = arith.constant 0 : index
    %c0_163 = arith.constant 0 : index
    %384 = vector.load %arg41[%c0_161, %c0_162, %c0_163] : memref<1x8x16xf32, #tpu.memory_space<vmem>>, vector<1x8x16xf32>
    %385 = vector.shape_cast %384 : vector<1x8x16xf32> to vector<8x16xf32>
    %386 = vector.shape_cast %303 : vector<8x16xf32> to vector<1x8x16xf32>
    tpu.vector_store %arg41[%c0_161, %c0_162, %c0_163], %386 {strides = array<i32>} : memref<1x8x16xf32, #tpu.memory_space<vmem>>, vector<1x8x16xf32>,
    %c0_164 = arith.constant 0 : index
    %c0_165 = arith.constant 0 : index
    %c0_166 = arith.constant 0 : index
    %387 = vector.load %arg42[%c0_164, %c0_165, %c0_166] : memref<1x8x16xf32, #tpu.memory_space<vmem>>, vector<1x8x16xf32>
    %388 = vector.shape_cast %387 : vector<1x8x16xf32> to vector<8x16xf32>
    %389 = vector.shape_cast %383 : vector<8x16xf32> to vector<1x8x16xf32>
    tpu.vector_store %arg42[%c0_164, %c0_165, %c0_166], %389 {strides = array<i32>} : memref<1x8x16xf32, #tpu.memory_space<vmem>>, vector<1x8x16xf32>,
    return
  }
  func.func @transform_0(%arg0: i32) -> (i32, i32, i32) {
    %c0_i32 = arith.constant 0 : i32
    %c0_i32_0 = arith.constant 0 : i32
    %c0_i32_1 = arith.constant 0 : i32
    return %arg0, %c0_i32, %c0_i32_0 : i32, i32, i32
  }
  func.func @transform_1(%arg0: i32) -> (i32, i32, i32) {
    %c0_i32 = arith.constant 0 : i32
    %c0_i32_0 = arith.constant 0 : i32
    %c0_i32_1 = arith.constant 0 : i32
    return %arg0, %c0_i32, %c0_i32_0 : i32, i32, i32
  }
  func.func @transform_2(%arg0: i32) -> (i32, i32, i32) {
    %c0_i32 = arith.constant 0 : i32
    %c0_i32_0 = arith.constant 0 : i32
    %c0_i32_1 = arith.constant 0 : i32
    return %arg0, %c0_i32, %c0_i32_0 : i32, i32, i32
  }
  func.func @transform_3(%arg0: i32) -> (i32, i32, i32) {
    %c0_i32 = arith.constant 0 : i32
    %c0_i32_0 = arith.constant 0 : i32
    %c0_i32_1 = arith.constant 0 : i32
    %c0_i32_2 = arith.constant 0 : i32
    return %c0_i32, %c0_i32_0, %c0_i32_1 : i32, i32, i32
  }
  func.func @transform_4(%arg0: i32) -> (i32, i32) {
    %c0_i32 = arith.constant 0 : i32
    %c0_i32_0 = arith.constant 0 : i32
    %c0_i32_1 = arith.constant 0 : i32
    return %c0_i32, %c0_i32_0 : i32, i32
  }
  func.func @transform_5(%arg0: i32) -> (i32, i32) {
    %c0_i32 = arith.constant 0 : i32
    %c0_i32_0 = arith.constant 0 : i32
    %c0_i32_1 = arith.constant 0 : i32
    return %c0_i32, %c0_i32_0 : i32, i32
  }
  func.func @transform_6(%arg0: i32) -> (i32, i32) {
    %c0_i32 = arith.constant 0 : i32
    %c0_i32_0 = arith.constant 0 : i32
    %c0_i32_1 = arith.constant 0 : i32
    return %c0_i32, %c0_i32_0 : i32, i32
  }
  func.func @transform_7(%arg0: i32) -> (i32, i32) {
    %c0_i32 = arith.constant 0 : i32
    %c0_i32_0 = arith.constant 0 : i32
    %c0_i32_1 = arith.constant 0 : i32
    return %c0_i32, %c0_i32_0 : i32, i32
  }
  func.func @transform_8(%arg0: i32) -> (i32, i32) {
    %c0_i32 = arith.constant 0 : i32
    %c0_i32_0 = arith.constant 0 : i32
    %c0_i32_1 = arith.constant 0 : i32
    return %c0_i32, %c0_i32_0 : i32, i32
  }
  func.func @transform_9(%arg0: i32) -> (i32, i32) {
    %c0_i32 = arith.constant 0 : i32
    %c0_i32_0 = arith.constant 0 : i32
    %c0_i32_1 = arith.constant 0 : i32
    return %c0_i32, %c0_i32_0 : i32, i32
  }
  func.func @transform_10(%arg0: i32) -> (i32, i32) {
    %c0_i32 = arith.constant 0 : i32
    %c0_i32_0 = arith.constant 0 : i32
    %c0_i32_1 = arith.constant 0 : i32
    return %c0_i32, %c0_i32_0 : i32, i32
  }
  func.func @transform_11(%arg0: i32) -> (i32, i32) {
    %c0_i32 = arith.constant 0 : i32
    %c0_i32_0 = arith.constant 0 : i32
    %c0_i32_1 = arith.constant 0 : i32
    return %c0_i32, %c0_i32_0 : i32, i32
  }
  func.func @transform_12(%arg0: i32) -> (i32, i32) {
    %c0_i32 = arith.constant 0 : i32
    %c0_i32_0 = arith.constant 0 : i32
    %c0_i32_1 = arith.constant 0 : i32
    return %c0_i32, %c0_i32_0 : i32, i32
  }
  func.func @transform_13(%arg0: i32) -> (i32, i32) {
    %c0_i32 = arith.constant 0 : i32
    %c0_i32_0 = arith.constant 0 : i32
    %c0_i32_1 = arith.constant 0 : i32
    return %c0_i32, %c0_i32_0 : i32, i32
  }
  func.func @transform_14(%arg0: i32) -> (i32, i32) {
    %c0_i32 = arith.constant 0 : i32
    %c0_i32_0 = arith.constant 0 : i32
    %c0_i32_1 = arith.constant 0 : i32
    return %c0_i32, %c0_i32_0 : i32, i32
  }
  func.func @transform_15(%arg0: i32) -> (i32, i32) {
    %c0_i32 = arith.constant 0 : i32
    %c0_i32_0 = arith.constant 0 : i32
    %c0_i32_1 = arith.constant 0 : i32
    return %c0_i32, %c0_i32_0 : i32, i32
  }
  func.func @transform_16(%arg0: i32) -> (i32, i32) {
    %c0_i32 = arith.constant 0 : i32
    %c0_i32_0 = arith.constant 0 : i32
    %c0_i32_1 = arith.constant 0 : i32
    return %c0_i32, %c0_i32_0 : i32, i32
  }
  func.func @transform_17(%arg0: i32) -> (i32, i32) {
    %c0_i32 = arith.constant 0 : i32
    %c0_i32_0 = arith.constant 0 : i32
    %c0_i32_1 = arith.constant 0 : i32
    return %c0_i32, %c0_i32_0 : i32, i32
  }
  func.func @transform_18(%arg0: i32) -> (i32, i32) {
    %c0_i32 = arith.constant 0 : i32
    %c0_i32_0 = arith.constant 0 : i32
    %c0_i32_1 = arith.constant 0 : i32
    return %c0_i32, %c0_i32_0 : i32, i32
  }
  func.func @transform_19(%arg0: i32) -> (i32, i32) {
    %c0_i32 = arith.constant 0 : i32
    %c0_i32_0 = arith.constant 0 : i32
    %c0_i32_1 = arith.constant 0 : i32
    return %c0_i32, %c0_i32_0 : i32, i32
  }
  func.func @transform_20(%arg0: i32) -> (i32, i32) {
    %c0_i32 = arith.constant 0 : i32
    %c0_i32_0 = arith.constant 0 : i32
    %c0_i32_1 = arith.constant 0 : i32
    return %c0_i32, %c0_i32_0 : i32, i32
  }
  func.func @transform_21(%arg0: i32) -> (i32, i32) {
    %c0_i32 = arith.constant 0 : i32
    %c0_i32_0 = arith.constant 0 : i32
    %c0_i32_1 = arith.constant 0 : i32
    return %c0_i32, %c0_i32_0 : i32, i32
  }
  func.func @transform_22(%arg0: i32) -> (i32, i32) {
    %c0_i32 = arith.constant 0 : i32
    %c0_i32_0 = arith.constant 0 : i32
    %c0_i32_1 = arith.constant 0 : i32
    return %c0_i32, %c0_i32_0 : i32, i32
  }
  func.func @transform_23(%arg0: i32) -> (i32, i32) {
    %c0_i32 = arith.constant 0 : i32
    %c0_i32_0 = arith.constant 0 : i32
    %c0_i32_1 = arith.constant 0 : i32
    return %c0_i32, %c0_i32_0 : i32, i32
  }
  func.func @transform_24(%arg0: i32) -> (i32, i32) {
    %c0_i32 = arith.constant 0 : i32
    %c0_i32_0 = arith.constant 0 : i32
    %c0_i32_1 = arith.constant 0 : i32
    return %c0_i32, %c0_i32_0 : i32, i32
  }
  func.func @transform_25(%arg0: i32) -> (i32, i32) {
    %c0_i32 = arith.constant 0 : i32
    %c0_i32_0 = arith.constant 0 : i32
    %c0_i32_1 = arith.constant 0 : i32
    return %c0_i32, %c0_i32_0 : i32, i32
  }
  func.func @transform_26(%arg0: i32) -> (i32, i32) {
    %c0_i32 = arith.constant 0 : i32
    %c0_i32_0 = arith.constant 0 : i32
    %c0_i32_1 = arith.constant 0 : i32
    return %c0_i32, %c0_i32_0 : i32, i32
  }
  func.func @transform_27(%arg0: i32) -> (i32, i32) {
    %c0_i32 = arith.constant 0 : i32
    %c0_i32_0 = arith.constant 0 : i32
    %c0_i32_1 = arith.constant 0 : i32
    return %c0_i32, %c0_i32_0 : i32, i32
  }
  func.func @transform_28(%arg0: i32) -> (i32, i32) {
    %c0_i32 = arith.constant 0 : i32
    %c0_i32_0 = arith.constant 0 : i32
    %c0_i32_1 = arith.constant 0 : i32
    return %c0_i32, %c0_i32_0 : i32, i32
  }
  func.func @transform_29(%arg0: i32) -> (i32, i32) {
    %c0_i32 = arith.constant 0 : i32
    %c0_i32_0 = arith.constant 0 : i32
    %c0_i32_1 = arith.constant 0 : i32
    return %c0_i32, %c0_i32_0 : i32, i32
  }
  func.func @transform_30(%arg0: i32) -> (i32, i32) {
    %c0_i32 = arith.constant 0 : i32
    %c0_i32_0 = arith.constant 0 : i32
    %c0_i32_1 = arith.constant 0 : i32
    return %c0_i32, %c0_i32_0 : i32, i32
  }
  func.func @transform_31(%arg0: i32) -> (i32, i32) {
    %c0_i32 = arith.constant 0 : i32
    %c0_i32_0 = arith.constant 0 : i32
    %c0_i32_1 = arith.constant 0 : i32
    return %c0_i32, %c0_i32_0 : i32, i32
  }
  func.func @transform_32(%arg0: i32) -> (i32, i32) {
    %c0_i32 = arith.constant 0 : i32
    %c0_i32_0 = arith.constant 0 : i32
    %c0_i32_1 = arith.constant 0 : i32
    return %c0_i32, %c0_i32_0 : i32, i32
  }
  func.func @transform_33(%arg0: i32) -> (i32, i32) {
    %c0_i32 = arith.constant 0 : i32
    %c0_i32_0 = arith.constant 0 : i32
    %c0_i32_1 = arith.constant 0 : i32
    return %c0_i32, %c0_i32_0 : i32, i32
  }
  func.func @transform_34(%arg0: i32) -> (i32, i32) {
    %c0_i32 = arith.constant 0 : i32
    %c0_i32_0 = arith.constant 0 : i32
    %c0_i32_1 = arith.constant 0 : i32
    return %c0_i32, %c0_i32_0 : i32, i32
  }
  func.func @transform_35(%arg0: i32) -> (i32, i32) {
    %c0_i32 = arith.constant 0 : i32
    %c0_i32_0 = arith.constant 0 : i32
    %c0_i32_1 = arith.constant 0 : i32
    return %c0_i32, %c0_i32_0 : i32, i32
  }
  func.func @transform_36(%arg0: i32) -> (i32, i32) {
    %c0_i32 = arith.constant 0 : i32
    %c0_i32_0 = arith.constant 0 : i32
    %c0_i32_1 = arith.constant 0 : i32
    return %c0_i32, %c0_i32_0 : i32, i32
  }
  func.func @transform_37(%arg0: i32) -> (i32, i32) {
    %c0_i32 = arith.constant 0 : i32
    %c0_i32_0 = arith.constant 0 : i32
    %c0_i32_1 = arith.constant 0 : i32
    return %c0_i32, %c0_i32_0 : i32, i32
  }
  func.func @transform_38(%arg0: i32) -> (i32, i32) {
    %c0_i32 = arith.constant 0 : i32
    %c0_i32_0 = arith.constant 0 : i32
    %c0_i32_1 = arith.constant 0 : i32
    return %c0_i32, %c0_i32_0 : i32, i32
  }
  func.func @transform_39(%arg0: i32) -> (i32, i32) {
    %c0_i32 = arith.constant 0 : i32
    %c0_i32_0 = arith.constant 0 : i32
    %c0_i32_1 = arith.constant 0 : i32
    return %c0_i32, %c0_i32_0 : i32, i32
  }
  func.func @transform_40(%arg0: i32) -> (i32, i32, i32) {
    %c0_i32 = arith.constant 0 : i32
    %c0_i32_0 = arith.constant 0 : i32
    %c0_i32_1 = arith.constant 0 : i32
    return %arg0, %c0_i32, %c0_i32_0 : i32, i32, i32
  }
  func.func @transform_41(%arg0: i32) -> (i32, i32, i32) {
    %c0_i32 = arith.constant 0 : i32
    %c0_i32_0 = arith.constant 0 : i32
    %c0_i32_1 = arith.constant 0 : i32
    return %arg0, %c0_i32, %c0_i32_0 : i32, i32, i32
  }
}

module attributes {stable_mosaic.version = 11 : i64} {
  func.func @_decoder_layer_kernel(%arg0: i32, %arg1: memref<1x8x16xf32, #tpu.memory_space<vmem>>, %arg2: memref<1x16x16xf32, #tpu.memory_space<vmem>>, %arg3: memref<1x16x16xf32, #tpu.memory_space<vmem>>, %arg4: memref<3x8x8xf32, #tpu.memory_space<vmem>>, %arg5: memref<16x48xf32, #tpu.memory_space<vmem>>, %arg6: memref<1x48xf32, #tpu.memory_space<vmem>>, %arg7: memref<16x16xf32, #tpu.memory_space<vmem>>, %arg8: memref<1x16xf32, #tpu.memory_space<vmem>>, %arg9: memref<1x16xf32, #tpu.memory_space<vmem>>, %arg10: memref<1x16xf32, #tpu.memory_space<vmem>>, %arg11: memref<16x16xf32, #tpu.memory_space<vmem>>, %arg12: memref<1x16xf32, #tpu.memory_space<vmem>>, %arg13: memref<16x32xf32, #tpu.memory_space<vmem>>, %arg14: memref<1x32xf32, #tpu.memory_space<vmem>>, %arg15: memref<16x16xf32, #tpu.memory_space<vmem>>, %arg16: memref<1x16xf32, #tpu.memory_space<vmem>>, %arg17: memref<16x16xf32, #tpu.memory_space<vmem>>, %arg18: memref<1x16xf32, #tpu.memory_space<vmem>>, %arg19: memref<16x16xf32, #tpu.memory_space<vmem>>, %arg20: memref<1x16xf32, #tpu.memory_space<vmem>>, %arg21: memref<1x16xf32, #tpu.memory_space<vmem>>, %arg22: memref<1x16xf32, #tpu.memory_space<vmem>>, %arg23: memref<1x16xf32, #tpu.memory_space<vmem>>, %arg24: memref<1x16xf32, #tpu.memory_space<vmem>>, %arg25: memref<16x64xf32, #tpu.memory_space<vmem>>, %arg26: memref<1x64xf32, #tpu.memory_space<vmem>>, %arg27: memref<64x16xf32, #tpu.memory_space<vmem>>, %arg28: memref<1x16xf32, #tpu.memory_space<vmem>>, %arg29: memref<1x16xf32, #tpu.memory_space<vmem>>, %arg30: memref<1x16xf32, #tpu.memory_space<vmem>>, %arg31: memref<16x64xf32, #tpu.memory_space<vmem>>, %arg32: memref<1x64xf32, #tpu.memory_space<vmem>>, %arg33: memref<64x16xf32, #tpu.memory_space<vmem>>, %arg34: memref<1x16xf32, #tpu.memory_space<vmem>>, %arg35: memref<1x16xf32, #tpu.memory_space<vmem>>, %arg36: memref<1x16xf32, #tpu.memory_space<vmem>>, %arg37: memref<112x16xf32, #tpu.memory_space<vmem>>, %arg38: memref<1x16xf32, #tpu.memory_space<vmem>>, %arg39: memref<1x16xf32, #tpu.memory_space<vmem>>, %arg40: memref<1x16xf32, #tpu.memory_space<vmem>>, %arg41: memref<1x8x16xf32, #tpu.memory_space<vmem>>, %arg42: memref<1x8x16xf32, #tpu.memory_space<vmem>>) attributes {dimension_semantics = [#tpu.dimension_semantics<parallel>], iteration_bounds = array<i64: 2>, scalar_prefetch = 0 : i64, scratch_operands = 0 : i64, tpu.core_type = #tpu.core_type<tc>, window_params = [{transform_indices = @transform_0, window_bounds = array<i64: 1, 8, 16>}, {transform_indices = @transform_1, window_bounds = array<i64: 1, 16, 16>}, {transform_indices = @transform_2, window_bounds = array<i64: 1, 16, 16>}, {pipeline_mode = #tpu.pipeline_mode<synchronous>, transform_indices = @transform_3, window_bounds = array<i64: 3, 8, 8>}, {pipeline_mode = #tpu.pipeline_mode<synchronous>, transform_indices = @transform_4, window_bounds = array<i64: 16, 48>}, {pipeline_mode = #tpu.pipeline_mode<synchronous>, transform_indices = @transform_5, window_bounds = array<i64: 1, 48>}, {pipeline_mode = #tpu.pipeline_mode<synchronous>, transform_indices = @transform_6, window_bounds = array<i64: 16, 16>}, {pipeline_mode = #tpu.pipeline_mode<synchronous>, transform_indices = @transform_7, window_bounds = array<i64: 1, 16>}, {pipeline_mode = #tpu.pipeline_mode<synchronous>, transform_indices = @transform_8, window_bounds = array<i64: 1, 16>}, {pipeline_mode = #tpu.pipeline_mode<synchronous>, transform_indices = @transform_9, window_bounds = array<i64: 1, 16>}, {pipeline_mode = #tpu.pipeline_mode<synchronous>, transform_indices = @transform_10, window_bounds = array<i64: 16, 16>}, {pipeline_mode = #tpu.pipeline_mode<synchronous>, transform_indices = @transform_11, window_bounds = array<i64: 1, 16>}, {pipeline_mode = #tpu.pipeline_mode<synchronous>, transform_indices = @transform_12, window_bounds = array<i64: 16, 32>}, {pipeline_mode = #tpu.pipeline_mode<synchronous>, transform_indices = @transform_13, window_bounds = array<i64: 1, 32>}, {pipeline_mode = #tpu.pipeline_mode<synchronous>, transform_indices = @transform_14, window_bounds = array<i64: 16, 16>}, {pipeline_mode = #tpu.pipeline_mode<synchronous>, transform_indices = @transform_15, window_bounds = array<i64: 1, 16>}, {pipeline_mode = #tpu.pipeline_mode<synchronous>, transform_indices = @transform_16, window_bounds = array<i64: 16, 16>}, {pipeline_mode = #tpu.pipeline_mode<synchronous>, transform_indices = @transform_17, window_bounds = array<i64: 1, 16>}, {pipeline_mode = #tpu.pipeline_mode<synchronous>, transform_indices = @transform_18, window_bounds = array<i64: 16, 16>}, {pipeline_mode = #tpu.pipeline_mode<synchronous>, transform_indices = @transform_19, window_bounds = array<i64: 1, 16>}, {pipeline_mode = #tpu.pipeline_mode<synchronous>, transform_indices = @transform_20, window_bounds = array<i64: 1, 16>}, {pipeline_mode = #tpu.pipeline_mode<synchronous>, transform_indices = @transform_21, window_bounds = array<i64: 1, 16>}, {pipeline_mode = #tpu.pipeline_mode<synchronous>, transform_indices = @transform_22, window_bounds = array<i64: 1, 16>}, {pipeline_mode = #tpu.pipeline_mode<synchronous>, transform_indices = @transform_23, window_bounds = array<i64: 1, 16>}, {pipeline_mode = #tpu.pipeline_mode<synchronous>, transform_indices = @transform_24, window_bounds = array<i64: 16, 64>}, {pipeline_mode = #tpu.pipeline_mode<synchronous>, transform_indices = @transform_25, window_bounds = array<i64: 1, 64>}, {pipeline_mode = #tpu.pipeline_mode<synchronous>, transform_indices = @transform_26, window_bounds = array<i64: 64, 16>}, {pipeline_mode = #tpu.pipeline_mode<synchronous>, transform_indices = @transform_27, window_bounds = array<i64: 1, 16>}, {pipeline_mode = #tpu.pipeline_mode<synchronous>, transform_indices = @transform_28, window_bounds = array<i64: 1, 16>}, {pipeline_mode = #tpu.pipeline_mode<synchronous>, transform_indices = @transform_29, window_bounds = array<i64: 1, 16>}, {pipeline_mode = #tpu.pipeline_mode<synchronous>, transform_indices = @transform_30, window_bounds = array<i64: 16, 64>}, {pipeline_mode = #tpu.pipeline_mode<synchronous>, transform_indices = @transform_31, window_bounds = array<i64: 1, 64>}, {pipeline_mode = #tpu.pipeline_mode<synchronous>, transform_indices = @transform_32, window_bounds = array<i64: 64, 16>}, {pipeline_mode = #tpu.pipeline_mode<synchronous>, transform_indices = @transform_33, window_bounds = array<i64: 1, 16>}, {pipeline_mode = #tpu.pipeline_mode<synchronous>, transform_indices = @transform_34, window_bounds = array<i64: 1, 16>}, {pipeline_mode = #tpu.pipeline_mode<synchronous>, transform_indices = @transform_35, window_bounds = array<i64: 1, 16>}, {pipeline_mode = #tpu.pipeline_mode<synchronous>, transform_indices = @transform_36, window_bounds = array<i64: 112, 16>}, {pipeline_mode = #tpu.pipeline_mode<synchronous>, transform_indices = @transform_37, window_bounds = array<i64: 1, 16>}, {pipeline_mode = #tpu.pipeline_mode<synchronous>, transform_indices = @transform_38, window_bounds = array<i64: 1, 16>}, {pipeline_mode = #tpu.pipeline_mode<synchronous>, transform_indices = @transform_39, window_bounds = array<i64: 1, 16>}, {transform_indices = @transform_40, window_bounds = array<i64: 1, 8, 16>}, {transform_indices = @transform_41, window_bounds = array<i64: 1, 8, 16>}]} {
    %c0 = arith.constant 0 : index
    %c0_0 = arith.constant 0 : index
    %c0_1 = arith.constant 0 : index
    %0 = vector.load %arg1[%c0, %c0_0, %c0_1] : memref<1x8x16xf32, #tpu.memory_space<vmem>>, vector<1x8x16xf32>
    %1 = vector.shape_cast %0 : vector<1x8x16xf32> to vector<8x16xf32>
    %c0_2 = arith.constant 0 : index
    %c0_3 = arith.constant 0 : index
    %c0_4 = arith.constant 0 : index
    %2 = vector.load %arg2[%c0_2, %c0_3, %c0_4] : memref<1x16x16xf32, #tpu.memory_space<vmem>>, vector<1x16x16xf32>
    %3 = vector.shape_cast %2 : vector<1x16x16xf32> to vector<16x16xf32>
    %c0_5 = arith.constant 0 : index
    %c0_6 = arith.constant 0 : index
    %c0_7 = arith.constant 0 : index
    %4 = vector.load %arg3[%c0_5, %c0_6, %c0_7] : memref<1x16x16xf32, #tpu.memory_space<vmem>>, vector<1x16x16xf32>
    %5 = vector.shape_cast %4 : vector<1x16x16xf32> to vector<16x16xf32>
    %c0_8 = arith.constant 0 : index
    %c0_9 = arith.constant 0 : index
    %6 = vector.load %arg5[%c0_8, %c0_9] : memref<16x48xf32, #tpu.memory_space<vmem>>, vector<16x48xf32>
    %cst = arith.constant dense<0.000000e+00> : vector<8x48xf32>
    %7 = tpu.matmul %1, %6, %cst {dimension_numbers = #tpu.dot_dimension_numbers<[1], [0], [0], [1], [0, 0, 1, 1], [], []>} : vector<8x16xf32>, vector<16x48xf32>, vector<8x48xf32> -> vector<8x48xf32>
    %c0_10 = arith.constant 0 : index
    %c0_11 = arith.constant 0 : index
    %8 = vector.load %arg6[%c0_10, %c0_11] : memref<1x48xf32, #tpu.memory_space<vmem>>, vector<1x48xf32>
    %9 = vector.broadcast %8 : vector<1x48xf32> to vector<8x48xf32>
    %10 = arith.addf %7, %9 : vector<8x48xf32>
    %11 = vector.extract_strided_slice %10 {offsets = [0, 0], sizes = [8, 16], strides = [1, 1]} : vector<8x48xf32> to vector<8x16xf32>
    %12 = vector.extract_strided_slice %10 {offsets = [0, 16], sizes = [8, 16], strides = [1, 1]} : vector<8x48xf32> to vector<8x16xf32>
    %13 = vector.extract_strided_slice %10 {offsets = [0, 32], sizes = [8, 16], strides = [1, 1]} : vector<8x48xf32> to vector<8x16xf32>
    %14 = vector.extract_strided_slice %11 {offsets = [0, 0], sizes = [8, 8], strides = [1, 1]} : vector<8x16xf32> to vector<8x8xf32>
    %15 = vector.extract_strided_slice %11 {offsets = [0, 8], sizes = [8, 8], strides = [1, 1]} : vector<8x16xf32> to vector<8x8xf32>
    %16 = vector.shape_cast %14 : vector<8x8xf32> to vector<1x8x8xf32>
    %17 = vector.shape_cast %15 : vector<8x8xf32> to vector<1x8x8xf32>
    %18 = tpu.concatenate %16, %17 in 0 : vector<1x8x8xf32>, vector<1x8x8xf32> -> vector<2x8x8xf32>
    %19 = vector.extract_strided_slice %12 {offsets = [0, 0], sizes = [8, 8], strides = [1, 1]} : vector<8x16xf32> to vector<8x8xf32>
    %20 = vector.extract_strided_slice %12 {offsets = [0, 8], sizes = [8, 8], strides = [1, 1]} : vector<8x16xf32> to vector<8x8xf32>
    %21 = vector.shape_cast %19 : vector<8x8xf32> to vector<1x8x8xf32>
    %22 = vector.shape_cast %20 : vector<8x8xf32> to vector<1x8x8xf32>
    %23 = tpu.concatenate %21, %22 in 0 : vector<1x8x8xf32>, vector<1x8x8xf32> -> vector<2x8x8xf32>
    %24 = vector.extract_strided_slice %13 {offsets = [0, 0], sizes = [8, 8], strides = [1, 1]} : vector<8x16xf32> to vector<8x8xf32>
    %25 = vector.extract_strided_slice %13 {offsets = [0, 8], sizes = [8, 8], strides = [1, 1]} : vector<8x16xf32> to vector<8x8xf32>
    %26 = vector.shape_cast %24 : vector<8x8xf32> to vector<1x8x8xf32>
    %27 = vector.shape_cast %25 : vector<8x8xf32> to vector<1x8x8xf32>
    %28 = tpu.concatenate %26, %27 in 0 : vector<1x8x8xf32>, vector<1x8x8xf32> -> vector<2x8x8xf32>
    "tpu.trace_start"() <{level = 10 : i32, message = "hqd,hkd->hqk"}> : () -> ()
    %cst_12 = arith.constant dense<0.000000e+00> : vector<2x8x8xf32>
    %29 = tpu.matmul %18, %23, %cst_12 {dimension_numbers = #tpu.dot_dimension_numbers<[2], [2], [1], [1], [0, 0, 0, 1, 1, 1], [0], [0]>} : vector<2x8x8xf32>, vector<2x8x8xf32>, vector<2x8x8xf32> -> vector<2x8x8xf32>
    "tpu.trace_stop"() : () -> ()
    %cst_13 = arith.constant 0.353553385 : f32
    %30 = vector.broadcast %cst_13 : f32 to vector<2x8x8xf32>
    %31 = arith.mulf %29, %30 : vector<2x8x8xf32>
    %32 = tpu.iota {dimensions = array<i32: 0>} : vector<8x8xi32>
    %c0_i32 = arith.constant 0 : i32
    %33 = vector.broadcast %c0_i32 : i32 to vector<8x8xi32>
    %c2_i32 = arith.constant 2 : i32
    %34 = vector.broadcast %c2_i32 : i32 to vector<8x8xi32>
    %35 = arith.cmpi sge, %32, %34 : vector<8x8xi32>
    %36 = arith.extui %35 : vector<8x8xi1> to vector<8x8xi32>
    %37 = arith.addi %33, %36 : vector<8x8xi32>
    %c4_i32 = arith.constant 4 : i32
    %38 = vector.broadcast %c4_i32 : i32 to vector<8x8xi32>
    %39 = arith.cmpi sge, %32, %38 : vector<8x8xi32>
    %40 = arith.extui %39 : vector<8x8xi1> to vector<8x8xi32>
    %41 = arith.addi %37, %40 : vector<8x8xi32>
    %c6_i32 = arith.constant 6 : i32
    %42 = vector.broadcast %c6_i32 : i32 to vector<8x8xi32>
    %43 = arith.cmpi sge, %32, %42 : vector<8x8xi32>
    %44 = arith.extui %43 : vector<8x8xi1> to vector<8x8xi32>
    %45 = arith.addi %41, %44 : vector<8x8xi32>
    %46 = tpu.iota {dimensions = array<i32: 1>} : vector<8x8xi32>
    %c0_i32_14 = arith.constant 0 : i32
    %47 = vector.broadcast %c0_i32_14 : i32 to vector<8x8xi32>
    %c2_i32_15 = arith.constant 2 : i32
    %48 = vector.broadcast %c2_i32_15 : i32 to vector<8x8xi32>
    %49 = arith.cmpi sge, %46, %48 : vector<8x8xi32>
    %50 = arith.extui %49 : vector<8x8xi1> to vector<8x8xi32>
    %51 = arith.addi %47, %50 : vector<8x8xi32>
    %c4_i32_16 = arith.constant 4 : i32
    %52 = vector.broadcast %c4_i32_16 : i32 to vector<8x8xi32>
    %53 = arith.cmpi sge, %46, %52 : vector<8x8xi32>
    %54 = arith.extui %53 : vector<8x8xi1> to vector<8x8xi32>
    %55 = arith.addi %51, %54 : vector<8x8xi32>
    %c6_i32_17 = arith.constant 6 : i32
    %56 = vector.broadcast %c6_i32_17 : i32 to vector<8x8xi32>
    %57 = arith.cmpi sge, %46, %56 : vector<8x8xi32>
    %58 = arith.extui %57 : vector<8x8xi1> to vector<8x8xi32>
    %59 = arith.addi %55, %58 : vector<8x8xi32>
    %60 = arith.cmpi eq, %45, %59 : vector<8x8xi32>
    %cst_18 = arith.constant 0.000000e+00 : f32
    %cst_19 = arith.constant -1.000000e+30 : f32
    %61 = vector.broadcast %cst_18 : f32 to vector<8x8xf32>
    %62 = vector.broadcast %cst_19 : f32 to vector<8x8xf32>
    %63 = arith.select %60, %61, %62 : vector<8x8xi1>, vector<8x8xf32>
    %64 = vector.shape_cast %63 : vector<8x8xf32> to vector<1x8x8xf32>
    %65 = vector.broadcast %64 : vector<1x8x8xf32> to vector<2x8x8xf32>
    %66 = arith.addf %31, %65 : vector<2x8x8xf32>
    %cst_20 = arith.constant dense<0xFF800000> : vector<2x8xf32>
    %67 = vector.multi_reduction <maximumf>, %66, %cst_20 [2] : vector<2x8x8xf32> to vector<2x8xf32>
    %68 = vector.shape_cast %67 : vector<2x8xf32> to vector<2x8x1xf32>
    %69 = vector.broadcast %68 : vector<2x8x1xf32> to vector<2x8x8xf32>
    %70 = arith.subf %66, %69 : vector<2x8x8xf32>
    %71 = math.exp %70 : vector<2x8x8xf32>
    %cst_21 = arith.constant dense<0.000000e+00> : vector<2x8xf32>
    %72 = vector.multi_reduction <add>, %71, %cst_21 [2] : vector<2x8x8xf32> to vector<2x8xf32>
    %73 = vector.shape_cast %72 : vector<2x8xf32> to vector<2x8x1xf32>
    %74 = vector.broadcast %73 : vector<2x8x1xf32> to vector<2x8x8xf32>
    %75 = arith.divf %71, %74 : vector<2x8x8xf32>
    "tpu.trace_start"() <{level = 10 : i32, message = "hqk,hkd->hqd"}> : () -> ()
    %cst_22 = arith.constant dense<0.000000e+00> : vector<2x8x8xf32>
    %76 = tpu.matmul %75, %28, %cst_22 {dimension_numbers = #tpu.dot_dimension_numbers<[2], [1], [1], [2], [0, 0, 0, 1, 1, 2], [0], [0]>} : vector<2x8x8xf32>, vector<2x8x8xf32>, vector<2x8x8xf32> -> vector<2x8x8xf32>
    "tpu.trace_stop"() : () -> ()
    %77 = vector.extract_strided_slice %76 {offsets = [0, 0, 0], sizes = [1, 8, 8], strides = [1, 1, 1]} : vector<2x8x8xf32> to vector<1x8x8xf32>
    %78 = vector.shape_cast %77 : vector<1x8x8xf32> to vector<8x8xf32>
    %79 = vector.extract_strided_slice %76 {offsets = [1, 0, 0], sizes = [1, 8, 8], strides = [1, 1, 1]} : vector<2x8x8xf32> to vector<1x8x8xf32>
    %80 = vector.shape_cast %79 : vector<1x8x8xf32> to vector<8x8xf32>
    %81 = tpu.concatenate %78, %80 in 1 : vector<8x8xf32>, vector<8x8xf32> -> vector<8x16xf32>
    %c0_23 = arith.constant 0 : index
    %c0_24 = arith.constant 0 : index
    %82 = vector.load %arg7[%c0_23, %c0_24] : memref<16x16xf32, #tpu.memory_space<vmem>>, vector<16x16xf32>
    %cst_25 = arith.constant dense<0.000000e+00> : vector<8x16xf32>
    %83 = tpu.matmul %81, %82, %cst_25 {dimension_numbers = #tpu.dot_dimension_numbers<[1], [0], [0], [1], [0, 0, 1, 1], [], []>} : vector<8x16xf32>, vector<16x16xf32>, vector<8x16xf32> -> vector<8x16xf32>
    %c0_26 = arith.constant 0 : index
    %c0_27 = arith.constant 0 : index
    %84 = vector.load %arg8[%c0_26, %c0_27] : memref<1x16xf32, #tpu.memory_space<vmem>>, vector<1x16xf32>
    %85 = vector.broadcast %84 : vector<1x16xf32> to vector<8x16xf32>
    %86 = arith.addf %83, %85 : vector<8x16xf32>
    %87 = arith.addf %86, %1 : vector<8x16xf32>
    %c0_28 = arith.constant 0 : index
    %c0_29 = arith.constant 0 : index
    %88 = vector.load %arg9[%c0_28, %c0_29] : memref<1x16xf32, #tpu.memory_space<vmem>>, vector<1x16xf32>
    %c0_30 = arith.constant 0 : index
    %c0_31 = arith.constant 0 : index
    %89 = vector.load %arg10[%c0_30, %c0_31] : memref<1x16xf32, #tpu.memory_space<vmem>>, vector<1x16xf32>
    %cst_32 = arith.constant dense<0.000000e+00> : vector<8xf32>
    %90 = vector.multi_reduction <add>, %87, %cst_32 [1] : vector<8x16xf32> to vector<8xf32>
    %91 = vector.shape_cast %90 : vector<8xf32> to vector<8x1xf32>
    %cst_33 = arith.constant 1.600000e+01 : f32
    %92 = vector.broadcast %cst_33 : f32 to vector<8x1xf32>
    %93 = arith.divf %91, %92 : vector<8x1xf32>
    %94 = vector.broadcast %93 : vector<8x1xf32> to vector<8x16xf32>
    %95 = arith.subf %87, %94 : vector<8x16xf32>
    %96 = arith.mulf %95, %95 : vector<8x16xf32>
    %cst_34 = arith.constant dense<0.000000e+00> : vector<8xf32>
    %97 = vector.multi_reduction <add>, %96, %cst_34 [1] : vector<8x16xf32> to vector<8xf32>
    %98 = vector.shape_cast %97 : vector<8xf32> to vector<8x1xf32>
    %cst_35 = arith.constant 1.600000e+01 : f32
    %99 = vector.broadcast %cst_35 : f32 to vector<8x1xf32>
    %100 = arith.divf %98, %99 : vector<8x1xf32>
    %101 = vector.broadcast %93 : vector<8x1xf32> to vector<8x16xf32>
    %102 = arith.subf %87, %101 : vector<8x16xf32>
    %cst_36 = arith.constant 9.99999974E-6 : f32
    %103 = vector.broadcast %cst_36 : f32 to vector<8x1xf32>
    %104 = arith.addf %100, %103 : vector<8x1xf32>
    %105 = math.rsqrt %104 : vector<8x1xf32>
    %106 = vector.broadcast %105 : vector<8x1xf32> to vector<8x16xf32>
    %107 = arith.mulf %102, %106 : vector<8x16xf32>
    %108 = vector.broadcast %88 : vector<1x16xf32> to vector<8x16xf32>
    %109 = arith.mulf %107, %108 : vector<8x16xf32>
    %110 = vector.broadcast %89 : vector<1x16xf32> to vector<8x16xf32>
    %111 = arith.addf %109, %110 : vector<8x16xf32>
    %c0_37 = arith.constant 0 : index
    %c0_38 = arith.constant 0 : index
    %112 = vector.load %arg11[%c0_37, %c0_38] : memref<16x16xf32, #tpu.memory_space<vmem>>, vector<16x16xf32>
    %cst_39 = arith.constant dense<0.000000e+00> : vector<8x16xf32>
    %113 = tpu.matmul %111, %112, %cst_39 {dimension_numbers = #tpu.dot_dimension_numbers<[1], [0], [0], [1], [0, 0, 1, 1], [], []>} : vector<8x16xf32>, vector<16x16xf32>, vector<8x16xf32> -> vector<8x16xf32>
    %c0_40 = arith.constant 0 : index
    %c0_41 = arith.constant 0 : index
    %114 = vector.load %arg12[%c0_40, %c0_41] : memref<1x16xf32, #tpu.memory_space<vmem>>, vector<1x16xf32>
    %115 = vector.broadcast %114 : vector<1x16xf32> to vector<8x16xf32>
    %116 = arith.addf %113, %115 : vector<8x16xf32>
    %c0_42 = arith.constant 0 : index
    %c0_43 = arith.constant 0 : index
    %117 = vector.load %arg13[%c0_42, %c0_43] : memref<16x32xf32, #tpu.memory_space<vmem>>, vector<16x32xf32>
    %cst_44 = arith.constant dense<0.000000e+00> : vector<16x32xf32>
    %118 = tpu.matmul %3, %117, %cst_44 {dimension_numbers = #tpu.dot_dimension_numbers<[1], [0], [0], [1], [0, 0, 1, 1], [], []>} : vector<16x16xf32>, vector<16x32xf32>, vector<16x32xf32> -> vector<16x32xf32>
    %c0_45 = arith.constant 0 : index
    %c0_46 = arith.constant 0 : index
    %119 = vector.load %arg14[%c0_45, %c0_46] : memref<1x32xf32, #tpu.memory_space<vmem>>, vector<1x32xf32>
    %120 = vector.broadcast %119 : vector<1x32xf32> to vector<16x32xf32>
    %121 = arith.addf %118, %120 : vector<16x32xf32>
    %122 = vector.extract_strided_slice %121 {offsets = [0, 0], sizes = [16, 16], strides = [1, 1]} : vector<16x32xf32> to vector<16x16xf32>
    %123 = vector.extract_strided_slice %121 {offsets = [0, 16], sizes = [16, 16], strides = [1, 1]} : vector<16x32xf32> to vector<16x16xf32>
    %c0_47 = arith.constant 0 : index
    %c0_48 = arith.constant 0 : index
    %124 = vector.load %arg15[%c0_47, %c0_48] : memref<16x16xf32, #tpu.memory_space<vmem>>, vector<16x16xf32>
    %cst_49 = arith.constant dense<0.000000e+00> : vector<16x16xf32>
    %125 = tpu.matmul %5, %124, %cst_49 {dimension_numbers = #tpu.dot_dimension_numbers<[1], [0], [0], [1], [0, 0, 1, 1], [], []>} : vector<16x16xf32>, vector<16x16xf32>, vector<16x16xf32> -> vector<16x16xf32>
    %c0_50 = arith.constant 0 : index
    %c0_51 = arith.constant 0 : index
    %126 = vector.load %arg16[%c0_50, %c0_51] : memref<1x16xf32, #tpu.memory_space<vmem>>, vector<1x16xf32>
    %127 = vector.broadcast %126 : vector<1x16xf32> to vector<16x16xf32>
    %128 = arith.addf %125, %127 : vector<16x16xf32>
    %129 = vector.extract_strided_slice %116 {offsets = [0, 0], sizes = [8, 8], strides = [1, 1]} : vector<8x16xf32> to vector<8x8xf32>
    %130 = vector.extract_strided_slice %116 {offsets = [0, 8], sizes = [8, 8], strides = [1, 1]} : vector<8x16xf32> to vector<8x8xf32>
    %131 = vector.shape_cast %129 : vector<8x8xf32> to vector<1x8x8xf32>
    %132 = vector.shape_cast %130 : vector<8x8xf32> to vector<1x8x8xf32>
    %133 = tpu.concatenate %131, %132 in 0 : vector<1x8x8xf32>, vector<1x8x8xf32> -> vector<2x8x8xf32>
    %134 = vector.extract_strided_slice %122 {offsets = [0, 0], sizes = [16, 8], strides = [1, 1]} : vector<16x16xf32> to vector<16x8xf32>
    %135 = vector.extract_strided_slice %122 {offsets = [0, 8], sizes = [16, 8], strides = [1, 1]} : vector<16x16xf32> to vector<16x8xf32>
    %136 = vector.shape_cast %134 : vector<16x8xf32> to vector<1x16x8xf32>
    %137 = vector.shape_cast %135 : vector<16x8xf32> to vector<1x16x8xf32>
    %138 = tpu.concatenate %136, %137 in 0 : vector<1x16x8xf32>, vector<1x16x8xf32> -> vector<2x16x8xf32>
    %139 = vector.extract_strided_slice %123 {offsets = [0, 0], sizes = [16, 8], strides = [1, 1]} : vector<16x16xf32> to vector<16x8xf32>
    %140 = vector.extract_strided_slice %123 {offsets = [0, 8], sizes = [16, 8], strides = [1, 1]} : vector<16x16xf32> to vector<16x8xf32>
    %141 = vector.shape_cast %139 : vector<16x8xf32> to vector<1x16x8xf32>
    %142 = vector.shape_cast %140 : vector<16x8xf32> to vector<1x16x8xf32>
    %143 = tpu.concatenate %141, %142 in 0 : vector<1x16x8xf32>, vector<1x16x8xf32> -> vector<2x16x8xf32>
    "tpu.trace_start"() <{level = 10 : i32, message = "hqd,hkd->hqk"}> : () -> ()
    %cst_52 = arith.constant dense<0.000000e+00> : vector<2x8x16xf32>
    %144 = tpu.matmul %133, %138, %cst_52 {dimension_numbers = #tpu.dot_dimension_numbers<[2], [2], [1], [1], [0, 0, 0, 1, 1, 1], [0], [0]>} : vector<2x8x8xf32>, vector<2x16x8xf32>, vector<2x8x16xf32> -> vector<2x8x16xf32>
    "tpu.trace_stop"() : () -> ()
    %cst_53 = arith.constant 0.353553385 : f32
    %145 = vector.broadcast %cst_53 : f32 to vector<2x8x16xf32>
    %146 = arith.mulf %144, %145 : vector<2x8x16xf32>
    %147 = tpu.iota {dimensions = array<i32: 0>} : vector<8x16xi32>
    %c0_i32_54 = arith.constant 0 : i32
    %148 = vector.broadcast %c0_i32_54 : i32 to vector<8x16xi32>
    %c2_i32_55 = arith.constant 2 : i32
    %149 = vector.broadcast %c2_i32_55 : i32 to vector<8x16xi32>
    %150 = arith.cmpi sge, %147, %149 : vector<8x16xi32>
    %151 = arith.extui %150 : vector<8x16xi1> to vector<8x16xi32>
    %152 = arith.addi %148, %151 : vector<8x16xi32>
    %c4_i32_56 = arith.constant 4 : i32
    %153 = vector.broadcast %c4_i32_56 : i32 to vector<8x16xi32>
    %154 = arith.cmpi sge, %147, %153 : vector<8x16xi32>
    %155 = arith.extui %154 : vector<8x16xi1> to vector<8x16xi32>
    %156 = arith.addi %152, %155 : vector<8x16xi32>
    %c6_i32_57 = arith.constant 6 : i32
    %157 = vector.broadcast %c6_i32_57 : i32 to vector<8x16xi32>
    %158 = arith.cmpi sge, %147, %157 : vector<8x16xi32>
    %159 = arith.extui %158 : vector<8x16xi1> to vector<8x16xi32>
    %160 = arith.addi %156, %159 : vector<8x16xi32>
    %161 = tpu.iota {dimensions = array<i32: 1>} : vector<8x16xi32>
    %c0_i32_58 = arith.constant 0 : i32
    %162 = vector.broadcast %c0_i32_58 : i32 to vector<8x16xi32>
    %c4_i32_59 = arith.constant 4 : i32
    %163 = vector.broadcast %c4_i32_59 : i32 to vector<8x16xi32>
    %164 = arith.cmpi sge, %161, %163 : vector<8x16xi32>
    %165 = arith.extui %164 : vector<8x16xi1> to vector<8x16xi32>
    %166 = arith.addi %162, %165 : vector<8x16xi32>
    %c8_i32 = arith.constant 8 : i32
    %167 = vector.broadcast %c8_i32 : i32 to vector<8x16xi32>
    %168 = arith.cmpi sge, %161, %167 : vector<8x16xi32>
    %169 = arith.extui %168 : vector<8x16xi1> to vector<8x16xi32>
    %170 = arith.addi %166, %169 : vector<8x16xi32>
    %c12_i32 = arith.constant 12 : i32
    %171 = vector.broadcast %c12_i32 : i32 to vector<8x16xi32>
    %172 = arith.cmpi sge, %161, %171 : vector<8x16xi32>
    %173 = arith.extui %172 : vector<8x16xi1> to vector<8x16xi32>
    %174 = arith.addi %170, %173 : vector<8x16xi32>
    %175 = arith.cmpi eq, %160, %174 : vector<8x16xi32>
    %cst_60 = arith.constant 0.000000e+00 : f32
    %cst_61 = arith.constant -1.000000e+30 : f32
    %176 = vector.broadcast %cst_60 : f32 to vector<8x16xf32>
    %177 = vector.broadcast %cst_61 : f32 to vector<8x16xf32>
    %178 = arith.select %175, %176, %177 : vector<8x16xi1>, vector<8x16xf32>
    %179 = vector.shape_cast %178 : vector<8x16xf32> to vector<1x8x16xf32>
    %180 = vector.broadcast %179 : vector<1x8x16xf32> to vector<2x8x16xf32>
    %181 = arith.addf %146, %180 : vector<2x8x16xf32>
    %cst_62 = arith.constant dense<0xFF800000> : vector<2x8xf32>
    %182 = vector.multi_reduction <maximumf>, %181, %cst_62 [2] : vector<2x8x16xf32> to vector<2x8xf32>
    %183 = vector.shape_cast %182 : vector<2x8xf32> to vector<2x8x1xf32>
    %184 = vector.broadcast %183 : vector<2x8x1xf32> to vector<2x8x16xf32>
    %185 = arith.subf %181, %184 : vector<2x8x16xf32>
    %186 = math.exp %185 : vector<2x8x16xf32>
    %cst_63 = arith.constant dense<0.000000e+00> : vector<2x8xf32>
    %187 = vector.multi_reduction <add>, %186, %cst_63 [2] : vector<2x8x16xf32> to vector<2x8xf32>
    %188 = vector.shape_cast %187 : vector<2x8xf32> to vector<2x8x1xf32>
    %189 = vector.broadcast %188 : vector<2x8x1xf32> to vector<2x8x16xf32>
    %190 = arith.divf %186, %189 : vector<2x8x16xf32>
    "tpu.trace_start"() <{level = 10 : i32, message = "hqk,hkd->hqd"}> : () -> ()
    %cst_64 = arith.constant dense<0.000000e+00> : vector<2x8x8xf32>
    %191 = tpu.matmul %190, %143, %cst_64 {dimension_numbers = #tpu.dot_dimension_numbers<[2], [1], [1], [2], [0, 0, 0, 1, 1, 2], [0], [0]>} : vector<2x8x16xf32>, vector<2x16x8xf32>, vector<2x8x8xf32> -> vector<2x8x8xf32>
    "tpu.trace_stop"() : () -> ()
    %192 = vector.extract_strided_slice %191 {offsets = [0, 0, 0], sizes = [1, 8, 8], strides = [1, 1, 1]} : vector<2x8x8xf32> to vector<1x8x8xf32>
    %193 = vector.shape_cast %192 : vector<1x8x8xf32> to vector<8x8xf32>
    %194 = vector.extract_strided_slice %191 {offsets = [1, 0, 0], sizes = [1, 8, 8], strides = [1, 1, 1]} : vector<2x8x8xf32> to vector<1x8x8xf32>
    %195 = vector.shape_cast %194 : vector<1x8x8xf32> to vector<8x8xf32>
    %196 = tpu.concatenate %193, %195 in 1 : vector<8x8xf32>, vector<8x8xf32> -> vector<8x16xf32>
    %197 = vector.extract_strided_slice %128 {offsets = [0, 0], sizes = [16, 8], strides = [1, 1]} : vector<16x16xf32> to vector<16x8xf32>
    %198 = vector.extract_strided_slice %128 {offsets = [0, 8], sizes = [16, 8], strides = [1, 1]} : vector<16x16xf32> to vector<16x8xf32>
    %199 = vector.shape_cast %197 : vector<16x8xf32> to vector<1x16x8xf32>
    %200 = vector.shape_cast %198 : vector<16x8xf32> to vector<1x16x8xf32>
    %201 = tpu.concatenate %199, %200 in 0 : vector<1x16x8xf32>, vector<1x16x8xf32> -> vector<2x16x8xf32>
    "tpu.trace_start"() <{level = 10 : i32, message = "hqk,hkd->hqd"}> : () -> ()
    %cst_65 = arith.constant dense<0.000000e+00> : vector<2x8x8xf32>
    %202 = tpu.matmul %190, %201, %cst_65 {dimension_numbers = #tpu.dot_dimension_numbers<[2], [1], [1], [2], [0, 0, 0, 1, 1, 2], [0], [0]>} : vector<2x8x16xf32>, vector<2x16x8xf32>, vector<2x8x8xf32> -> vector<2x8x8xf32>
    "tpu.trace_stop"() : () -> ()
    %203 = vector.extract_strided_slice %202 {offsets = [0, 0, 0], sizes = [1, 8, 8], strides = [1, 1, 1]} : vector<2x8x8xf32> to vector<1x8x8xf32>
    %204 = vector.shape_cast %203 : vector<1x8x8xf32> to vector<8x8xf32>
    %205 = vector.extract_strided_slice %202 {offsets = [1, 0, 0], sizes = [1, 8, 8], strides = [1, 1, 1]} : vector<2x8x8xf32> to vector<1x8x8xf32>
    %206 = vector.shape_cast %205 : vector<1x8x8xf32> to vector<8x8xf32>
    %207 = tpu.concatenate %204, %206 in 1 : vector<8x8xf32>, vector<8x8xf32> -> vector<8x16xf32>
    %c0_66 = arith.constant 0 : index
    %c0_67 = arith.constant 0 : index
    %208 = vector.load %arg17[%c0_66, %c0_67] : memref<16x16xf32, #tpu.memory_space<vmem>>, vector<16x16xf32>
    %cst_68 = arith.constant dense<0.000000e+00> : vector<8x16xf32>
    %209 = tpu.matmul %196, %208, %cst_68 {dimension_numbers = #tpu.dot_dimension_numbers<[1], [0], [0], [1], [0, 0, 1, 1], [], []>} : vector<8x16xf32>, vector<16x16xf32>, vector<8x16xf32> -> vector<8x16xf32>
    %c0_69 = arith.constant 0 : index
    %c0_70 = arith.constant 0 : index
    %210 = vector.load %arg18[%c0_69, %c0_70] : memref<1x16xf32, #tpu.memory_space<vmem>>, vector<1x16xf32>
    %211 = vector.broadcast %210 : vector<1x16xf32> to vector<8x16xf32>
    %212 = arith.addf %209, %211 : vector<8x16xf32>
    %213 = arith.addf %212, %111 : vector<8x16xf32>
    %c0_71 = arith.constant 0 : index
    %c0_72 = arith.constant 0 : index
    %214 = vector.load %arg19[%c0_71, %c0_72] : memref<16x16xf32, #tpu.memory_space<vmem>>, vector<16x16xf32>
    %cst_73 = arith.constant dense<0.000000e+00> : vector<8x16xf32>
    %215 = tpu.matmul %207, %214, %cst_73 {dimension_numbers = #tpu.dot_dimension_numbers<[1], [0], [0], [1], [0, 0, 1, 1], [], []>} : vector<8x16xf32>, vector<16x16xf32>, vector<8x16xf32> -> vector<8x16xf32>
    %c0_74 = arith.constant 0 : index
    %c0_75 = arith.constant 0 : index
    %216 = vector.load %arg20[%c0_74, %c0_75] : memref<1x16xf32, #tpu.memory_space<vmem>>, vector<1x16xf32>
    %217 = vector.broadcast %216 : vector<1x16xf32> to vector<8x16xf32>
    %218 = arith.addf %215, %217 : vector<8x16xf32>
    %c0_76 = arith.constant 0 : index
    %c0_77 = arith.constant 0 : index
    %219 = vector.load %arg21[%c0_76, %c0_77] : memref<1x16xf32, #tpu.memory_space<vmem>>, vector<1x16xf32>
    %c0_78 = arith.constant 0 : index
    %c0_79 = arith.constant 0 : index
    %220 = vector.load %arg22[%c0_78, %c0_79] : memref<1x16xf32, #tpu.memory_space<vmem>>, vector<1x16xf32>
    %cst_80 = arith.constant dense<0.000000e+00> : vector<8xf32>
    %221 = vector.multi_reduction <add>, %213, %cst_80 [1] : vector<8x16xf32> to vector<8xf32>
    %222 = vector.shape_cast %221 : vector<8xf32> to vector<8x1xf32>
    %cst_81 = arith.constant 1.600000e+01 : f32
    %223 = vector.broadcast %cst_81 : f32 to vector<8x1xf32>
    %224 = arith.divf %222, %223 : vector<8x1xf32>
    %225 = vector.broadcast %224 : vector<8x1xf32> to vector<8x16xf32>
    %226 = arith.subf %213, %225 : vector<8x16xf32>
    %227 = arith.mulf %226, %226 : vector<8x16xf32>
    %cst_82 = arith.constant dense<0.000000e+00> : vector<8xf32>
    %228 = vector.multi_reduction <add>, %227, %cst_82 [1] : vector<8x16xf32> to vector<8xf32>
    %229 = vector.shape_cast %228 : vector<8xf32> to vector<8x1xf32>
    %cst_83 = arith.constant 1.600000e+01 : f32
    %230 = vector.broadcast %cst_83 : f32 to vector<8x1xf32>
    %231 = arith.divf %229, %230 : vector<8x1xf32>
    %232 = vector.broadcast %224 : vector<8x1xf32> to vector<8x16xf32>
    %233 = arith.subf %213, %232 : vector<8x16xf32>
    %cst_84 = arith.constant 9.99999974E-6 : f32
    %234 = vector.broadcast %cst_84 : f32 to vector<8x1xf32>
    %235 = arith.addf %231, %234 : vector<8x1xf32>
    %236 = math.rsqrt %235 : vector<8x1xf32>
    %237 = vector.broadcast %236 : vector<8x1xf32> to vector<8x16xf32>
    %238 = arith.mulf %233, %237 : vector<8x16xf32>
    %239 = vector.broadcast %219 : vector<1x16xf32> to vector<8x16xf32>
    %240 = arith.mulf %238, %239 : vector<8x16xf32>
    %241 = vector.broadcast %220 : vector<1x16xf32> to vector<8x16xf32>
    %242 = arith.addf %240, %241 : vector<8x16xf32>
    %c0_85 = arith.constant 0 : index
    %c0_86 = arith.constant 0 : index
    %243 = vector.load %arg23[%c0_85, %c0_86] : memref<1x16xf32, #tpu.memory_space<vmem>>, vector<1x16xf32>
    %c0_87 = arith.constant 0 : index
    %c0_88 = arith.constant 0 : index
    %244 = vector.load %arg24[%c0_87, %c0_88] : memref<1x16xf32, #tpu.memory_space<vmem>>, vector<1x16xf32>
    %cst_89 = arith.constant dense<0.000000e+00> : vector<8xf32>
    %245 = vector.multi_reduction <add>, %218, %cst_89 [1] : vector<8x16xf32> to vector<8xf32>
    %246 = vector.shape_cast %245 : vector<8xf32> to vector<8x1xf32>
    %cst_90 = arith.constant 1.600000e+01 : f32
    %247 = vector.broadcast %cst_90 : f32 to vector<8x1xf32>
    %248 = arith.divf %246, %247 : vector<8x1xf32>
    %249 = vector.broadcast %248 : vector<8x1xf32> to vector<8x16xf32>
    %250 = arith.subf %218, %249 : vector<8x16xf32>
    %251 = arith.mulf %250, %250 : vector<8x16xf32>
    %cst_91 = arith.constant dense<0.000000e+00> : vector<8xf32>
    %252 = vector.multi_reduction <add>, %251, %cst_91 [1] : vector<8x16xf32> to vector<8xf32>
    %253 = vector.shape_cast %252 : vector<8xf32> to vector<8x1xf32>
    %cst_92 = arith.constant 1.600000e+01 : f32
    %254 = vector.broadcast %cst_92 : f32 to vector<8x1xf32>
    %255 = arith.divf %253, %254 : vector<8x1xf32>
    %256 = vector.broadcast %248 : vector<8x1xf32> to vector<8x16xf32>
    %257 = arith.subf %218, %256 : vector<8x16xf32>
    %cst_93 = arith.constant 9.99999974E-6 : f32
    %258 = vector.broadcast %cst_93 : f32 to vector<8x1xf32>
    %259 = arith.addf %255, %258 : vector<8x1xf32>
    %260 = math.rsqrt %259 : vector<8x1xf32>
    %261 = vector.broadcast %260 : vector<8x1xf32> to vector<8x16xf32>
    %262 = arith.mulf %257, %261 : vector<8x16xf32>
    %263 = vector.broadcast %243 : vector<1x16xf32> to vector<8x16xf32>
    %264 = arith.mulf %262, %263 : vector<8x16xf32>
    %265 = vector.broadcast %244 : vector<1x16xf32> to vector<8x16xf32>
    %266 = arith.addf %264, %265 : vector<8x16xf32>
    %c0_94 = arith.constant 0 : index
    %c0_95 = arith.constant 0 : index
    %267 = vector.load %arg25[%c0_94, %c0_95] : memref<16x64xf32, #tpu.memory_space<vmem>>, vector<16x64xf32>
    %c0_96 = arith.constant 0 : index
    %c0_97 = arith.constant 0 : index
    %268 = vector.load %arg26[%c0_96, %c0_97] : memref<1x64xf32, #tpu.memory_space<vmem>>, vector<1x64xf32>
    %c0_98 = arith.constant 0 : index
    %c0_99 = arith.constant 0 : index
    %269 = vector.load %arg27[%c0_98, %c0_99] : memref<64x16xf32, #tpu.memory_space<vmem>>, vector<64x16xf32>
    %c0_100 = arith.constant 0 : index
    %c0_101 = arith.constant 0 : index
    %270 = vector.load %arg28[%c0_100, %c0_101] : memref<1x16xf32, #tpu.memory_space<vmem>>, vector<1x16xf32>
    %c0_102 = arith.constant 0 : index
    %c0_103 = arith.constant 0 : index
    %271 = vector.load %arg29[%c0_102, %c0_103] : memref<1x16xf32, #tpu.memory_space<vmem>>, vector<1x16xf32>
    %c0_104 = arith.constant 0 : index
    %c0_105 = arith.constant 0 : index
    %272 = vector.load %arg30[%c0_104, %c0_105] : memref<1x16xf32, #tpu.memory_space<vmem>>, vector<1x16xf32>
    %cst_106 = arith.constant dense<0.000000e+00> : vector<8x64xf32>
    %273 = tpu.matmul %242, %267, %cst_106 {dimension_numbers = #tpu.dot_dimension_numbers<[1], [0], [0], [1], [0, 0, 1, 1], [], []>} : vector<8x16xf32>, vector<16x64xf32>, vector<8x64xf32> -> vector<8x64xf32>
    %274 = vector.broadcast %268 : vector<1x64xf32> to vector<8x64xf32>
    %275 = arith.addf %273, %274 : vector<8x64xf32>
    %cst_107 = arith.constant 0.000000e+00 : f32
    %276 = vector.broadcast %cst_107 : f32 to vector<8x64xf32>
    %277 = arith.maximumf %275, %276 : vector<8x64xf32>
    %cst_108 = arith.constant dense<0.000000e+00> : vector<8x16xf32>
    %278 = tpu.matmul %277, %269, %cst_108 {dimension_numbers = #tpu.dot_dimension_numbers<[1], [0], [0], [1], [0, 0, 1, 1], [], []>} : vector<8x64xf32>, vector<64x16xf32>, vector<8x16xf32> -> vector<8x16xf32>
    %279 = vector.broadcast %270 : vector<1x16xf32> to vector<8x16xf32>
    %280 = arith.addf %278, %279 : vector<8x16xf32>
    %281 = arith.addf %242, %280 : vector<8x16xf32>
    %cst_109 = arith.constant dense<0.000000e+00> : vector<8xf32>
    %282 = vector.multi_reduction <add>, %281, %cst_109 [1] : vector<8x16xf32> to vector<8xf32>
    %283 = vector.shape_cast %282 : vector<8xf32> to vector<8x1xf32>
    %cst_110 = arith.constant 1.600000e+01 : f32
    %284 = vector.broadcast %cst_110 : f32 to vector<8x1xf32>
    %285 = arith.divf %283, %284 : vector<8x1xf32>
    %286 = vector.broadcast %285 : vector<8x1xf32> to vector<8x16xf32>
    %287 = arith.subf %281, %286 : vector<8x16xf32>
    %288 = arith.mulf %287, %287 : vector<8x16xf32>
    %cst_111 = arith.constant dense<0.000000e+00> : vector<8xf32>
    %289 = vector.multi_reduction <add>, %288, %cst_111 [1] : vector<8x16xf32> to vector<8xf32>
    %290 = vector.shape_cast %289 : vector<8xf32> to vector<8x1xf32>
    %cst_112 = arith.constant 1.600000e+01 : f32
    %291 = vector.broadcast %cst_112 : f32 to vector<8x1xf32>
    %292 = arith.divf %290, %291 : vector<8x1xf32>
    %293 = vector.broadcast %285 : vector<8x1xf32> to vector<8x16xf32>
    %294 = arith.subf %281, %293 : vector<8x16xf32>
    %cst_113 = arith.constant 9.99999974E-6 : f32
    %295 = vector.broadcast %cst_113 : f32 to vector<8x1xf32>
    %296 = arith.addf %292, %295 : vector<8x1xf32>
    %297 = math.rsqrt %296 : vector<8x1xf32>
    %298 = vector.broadcast %297 : vector<8x1xf32> to vector<8x16xf32>
    %299 = arith.mulf %294, %298 : vector<8x16xf32>
    %300 = vector.broadcast %271 : vector<1x16xf32> to vector<8x16xf32>
    %301 = arith.mulf %299, %300 : vector<8x16xf32>
    %302 = vector.broadcast %272 : vector<1x16xf32> to vector<8x16xf32>
    %303 = arith.addf %301, %302 : vector<8x16xf32>
    %c0_114 = arith.constant 0 : index
    %c0_115 = arith.constant 0 : index
    %304 = vector.load %arg31[%c0_114, %c0_115] : memref<16x64xf32, #tpu.memory_space<vmem>>, vector<16x64xf32>
    %c0_116 = arith.constant 0 : index
    %c0_117 = arith.constant 0 : index
    %305 = vector.load %arg32[%c0_116, %c0_117] : memref<1x64xf32, #tpu.memory_space<vmem>>, vector<1x64xf32>
    %c0_118 = arith.constant 0 : index
    %c0_119 = arith.constant 0 : index
    %306 = vector.load %arg33[%c0_118, %c0_119] : memref<64x16xf32, #tpu.memory_space<vmem>>, vector<64x16xf32>
    %c0_120 = arith.constant 0 : index
    %c0_121 = arith.constant 0 : index
    %307 = vector.load %arg34[%c0_120, %c0_121] : memref<1x16xf32, #tpu.memory_space<vmem>>, vector<1x16xf32>
    %c0_122 = arith.constant 0 : index
    %c0_123 = arith.constant 0 : index
    %308 = vector.load %arg35[%c0_122, %c0_123] : memref<1x16xf32, #tpu.memory_space<vmem>>, vector<1x16xf32>
    %c0_124 = arith.constant 0 : index
    %c0_125 = arith.constant 0 : index
    %309 = vector.load %arg36[%c0_124, %c0_125] : memref<1x16xf32, #tpu.memory_space<vmem>>, vector<1x16xf32>
    %cst_126 = arith.constant dense<0.000000e+00> : vector<8x64xf32>
    %310 = tpu.matmul %266, %304, %cst_126 {dimension_numbers = #tpu.dot_dimension_numbers<[1], [0], [0], [1], [0, 0, 1, 1], [], []>} : vector<8x16xf32>, vector<16x64xf32>, vector<8x64xf32> -> vector<8x64xf32>
    %311 = vector.broadcast %305 : vector<1x64xf32> to vector<8x64xf32>
    %312 = arith.addf %310, %311 : vector<8x64xf32>
    %cst_127 = arith.constant 0.000000e+00 : f32
    %313 = vector.broadcast %cst_127 : f32 to vector<8x64xf32>
    %314 = arith.maximumf %312, %313 : vector<8x64xf32>
    %cst_128 = arith.constant dense<0.000000e+00> : vector<8x16xf32>
    %315 = tpu.matmul %314, %306, %cst_128 {dimension_numbers = #tpu.dot_dimension_numbers<[1], [0], [0], [1], [0, 0, 1, 1], [], []>} : vector<8x64xf32>, vector<64x16xf32>, vector<8x16xf32> -> vector<8x16xf32>
    %316 = vector.broadcast %307 : vector<1x16xf32> to vector<8x16xf32>
    %317 = arith.addf %315, %316 : vector<8x16xf32>
    %318 = arith.addf %266, %317 : vector<8x16xf32>
    %cst_129 = arith.constant dense<0.000000e+00> : vector<8xf32>
    %319 = vector.multi_reduction <add>, %318, %cst_129 [1] : vector<8x16xf32> to vector<8xf32>
    %320 = vector.shape_cast %319 : vector<8xf32> to vector<8x1xf32>
    %cst_130 = arith.constant 1.600000e+01 : f32
    %321 = vector.broadcast %cst_130 : f32 to vector<8x1xf32>
    %322 = arith.divf %320, %321 : vector<8x1xf32>
    %323 = vector.broadcast %322 : vector<8x1xf32> to vector<8x16xf32>
    %324 = arith.subf %318, %323 : vector<8x16xf32>
    %325 = arith.mulf %324, %324 : vector<8x16xf32>
    %cst_131 = arith.constant dense<0.000000e+00> : vector<8xf32>
    %326 = vector.multi_reduction <add>, %325, %cst_131 [1] : vector<8x16xf32> to vector<8xf32>
    %327 = vector.shape_cast %326 : vector<8xf32> to vector<8x1xf32>
    %cst_132 = arith.constant 1.600000e+01 : f32
    %328 = vector.broadcast %cst_132 : f32 to vector<8x1xf32>
    %329 = arith.divf %327, %328 : vector<8x1xf32>
    %330 = vector.broadcast %322 : vector<8x1xf32> to vector<8x16xf32>
    %331 = arith.subf %318, %330 : vector<8x16xf32>
    %cst_133 = arith.constant 9.99999974E-6 : f32
    %332 = vector.broadcast %cst_133 : f32 to vector<8x1xf32>
    %333 = arith.addf %329, %332 : vector<8x1xf32>
    %334 = math.rsqrt %333 : vector<8x1xf32>
    %335 = vector.broadcast %334 : vector<8x1xf32> to vector<8x16xf32>
    %336 = arith.mulf %331, %335 : vector<8x16xf32>
    %337 = vector.broadcast %308 : vector<1x16xf32> to vector<8x16xf32>
    %338 = arith.mulf %336, %337 : vector<8x16xf32>
    %339 = vector.broadcast %309 : vector<1x16xf32> to vector<8x16xf32>
    %340 = arith.addf %338, %339 : vector<8x16xf32>
    %c0_134 = arith.constant 0 : index
    %c0_135 = arith.constant 0 : index
    %c0_136 = arith.constant 0 : index
    %341 = vector.load %arg4[%c0_134, %c0_135, %c0_136] : memref<3x8x8xf32, #tpu.memory_space<vmem>>, vector<1x8x8xf32>
    %342 = vector.shape_cast %341 : vector<1x8x8xf32> to vector<8x8xf32>
    %cst_137 = arith.constant dense<0.000000e+00> : vector<8x16xf32>
    %343 = tpu.matmul %342, %340, %cst_137 {dimension_numbers = #tpu.dot_dimension_numbers<[1], [0], [0], [1], [0, 0, 1, 1], [], []>} : vector<8x8xf32>, vector<8x16xf32>, vector<8x16xf32> -> vector<8x16xf32>
    %cst_138 = arith.constant dense<0.000000e+00> : vector<8x16xf32>
    %344 = tpu.matmul %342, %343, %cst_138 {dimension_numbers = #tpu.dot_dimension_numbers<[1], [0], [0], [1], [0, 0, 1, 1], [], []>} : vector<8x8xf32>, vector<8x16xf32>, vector<8x16xf32> -> vector<8x16xf32>
    %c1 = arith.constant 1 : index
    %c0_139 = arith.constant 0 : index
    %c0_140 = arith.constant 0 : index
    %345 = vector.load %arg4[%c1, %c0_139, %c0_140] : memref<3x8x8xf32, #tpu.memory_space<vmem>>, vector<1x8x8xf32>
    %346 = vector.shape_cast %345 : vector<1x8x8xf32> to vector<8x8xf32>
    %cst_141 = arith.constant dense<0.000000e+00> : vector<8x16xf32>
    %347 = tpu.matmul %346, %340, %cst_141 {dimension_numbers = #tpu.dot_dimension_numbers<[1], [0], [0], [1], [0, 0, 1, 1], [], []>} : vector<8x8xf32>, vector<8x16xf32>, vector<8x16xf32> -> vector<8x16xf32>
    %cst_142 = arith.constant dense<0.000000e+00> : vector<8x16xf32>
    %348 = tpu.matmul %346, %347, %cst_142 {dimension_numbers = #tpu.dot_dimension_numbers<[1], [0], [0], [1], [0, 0, 1, 1], [], []>} : vector<8x8xf32>, vector<8x16xf32>, vector<8x16xf32> -> vector<8x16xf32>
    %c2 = arith.constant 2 : index
    %c0_143 = arith.constant 0 : index
    %c0_144 = arith.constant 0 : index
    %349 = vector.load %arg4[%c2, %c0_143, %c0_144] : memref<3x8x8xf32, #tpu.memory_space<vmem>>, vector<1x8x8xf32>
    %350 = vector.shape_cast %349 : vector<1x8x8xf32> to vector<8x8xf32>
    %cst_145 = arith.constant dense<0.000000e+00> : vector<8x16xf32>
    %351 = tpu.matmul %350, %340, %cst_145 {dimension_numbers = #tpu.dot_dimension_numbers<[1], [0], [0], [1], [0, 0, 1, 1], [], []>} : vector<8x8xf32>, vector<8x16xf32>, vector<8x16xf32> -> vector<8x16xf32>
    %cst_146 = arith.constant dense<0.000000e+00> : vector<8x16xf32>
    %352 = tpu.matmul %350, %351, %cst_146 {dimension_numbers = #tpu.dot_dimension_numbers<[1], [0], [0], [1], [0, 0, 1, 1], [], []>} : vector<8x8xf32>, vector<8x16xf32>, vector<8x16xf32> -> vector<8x16xf32>
    %353 = tpu.concatenate %340, %343, %344, %347, %348, %351, %352 in 1 : vector<8x16xf32>, vector<8x16xf32>, vector<8x16xf32>, vector<8x16xf32>, vector<8x16xf32>, vector<8x16xf32>, vector<8x16xf32> -> vector<8x112xf32>
    %c0_147 = arith.constant 0 : index
    %c0_148 = arith.constant 0 : index
    %354 = vector.load %arg37[%c0_147, %c0_148] : memref<112x16xf32, #tpu.memory_space<vmem>>, vector<112x16xf32>
    %cst_149 = arith.constant dense<0.000000e+00> : vector<8x16xf32>
    %355 = tpu.matmul %353, %354, %cst_149 {dimension_numbers = #tpu.dot_dimension_numbers<[1], [0], [0], [1], [0, 0, 1, 1], [], []>} : vector<8x112xf32>, vector<112x16xf32>, vector<8x16xf32> -> vector<8x16xf32>
    %c0_150 = arith.constant 0 : index
    %c0_151 = arith.constant 0 : index
    %356 = vector.load %arg38[%c0_150, %c0_151] : memref<1x16xf32, #tpu.memory_space<vmem>>, vector<1x16xf32>
    %357 = vector.broadcast %356 : vector<1x16xf32> to vector<8x16xf32>
    %358 = arith.addf %355, %357 : vector<8x16xf32>
    %359 = arith.addf %340, %358 : vector<8x16xf32>
    %c0_152 = arith.constant 0 : index
    %c0_153 = arith.constant 0 : index
    %360 = vector.load %arg39[%c0_152, %c0_153] : memref<1x16xf32, #tpu.memory_space<vmem>>, vector<1x16xf32>
    %c0_154 = arith.constant 0 : index
    %c0_155 = arith.constant 0 : index
    %361 = vector.load %arg40[%c0_154, %c0_155] : memref<1x16xf32, #tpu.memory_space<vmem>>, vector<1x16xf32>
    %cst_156 = arith.constant dense<0.000000e+00> : vector<8xf32>
    %362 = vector.multi_reduction <add>, %359, %cst_156 [1] : vector<8x16xf32> to vector<8xf32>
    %363 = vector.shape_cast %362 : vector<8xf32> to vector<8x1xf32>
    %cst_157 = arith.constant 1.600000e+01 : f32
    %364 = vector.broadcast %cst_157 : f32 to vector<8x1xf32>
    %365 = arith.divf %363, %364 : vector<8x1xf32>
    %366 = vector.broadcast %365 : vector<8x1xf32> to vector<8x16xf32>
    %367 = arith.subf %359, %366 : vector<8x16xf32>
    %368 = arith.mulf %367, %367 : vector<8x16xf32>
    %cst_158 = arith.constant dense<0.000000e+00> : vector<8xf32>
    %369 = vector.multi_reduction <add>, %368, %cst_158 [1] : vector<8x16xf32> to vector<8xf32>
    %370 = vector.shape_cast %369 : vector<8xf32> to vector<8x1xf32>
    %cst_159 = arith.constant 1.600000e+01 : f32
    %371 = vector.broadcast %cst_159 : f32 to vector<8x1xf32>
    %372 = arith.divf %370, %371 : vector<8x1xf32>
    %373 = vector.broadcast %365 : vector<8x1xf32> to vector<8x16xf32>
    %374 = arith.subf %359, %373 : vector<8x16xf32>
    %cst_160 = arith.constant 9.99999974E-6 : f32
    %375 = vector.broadcast %cst_160 : f32 to vector<8x1xf32>
    %376 = arith.addf %372, %375 : vector<8x1xf32>
    %377 = math.rsqrt %376 : vector<8x1xf32>
    %378 = vector.broadcast %377 : vector<8x1xf32> to vector<8x16xf32>
    %379 = arith.mulf %374, %378 : vector<8x16xf32>
    %380 = vector.broadcast %360 : vector<1x16xf32> to vector<8x16xf32>
    %381 = arith.mulf %379, %380 : vector<8x16xf32>
    %382 = vector.broadcast %361 : vector<1x16xf32> to vector<8x16xf32>
    %383 = arith.addf %381, %382 : vector<8x16xf32>
    %c0_161 = arith.constant 0 : index
    %c0_162 = arith.constant 0 : index
    %c0_163 = arith.constant 0 : index
    %384 = vector.load %arg41[%c0_161, %c0_162, %c0_163] : memref<1x8x16xf32, #tpu.memory_space<vmem>>, vector<1x8x16xf32>
    %385 = vector.shape_cast %384 : vector<1x8x16xf32> to vector<8x16xf32>
    %386 = vector.shape_cast %303 : vector<8x16xf32> to vector<1x8x16xf32>
    tpu.vector_store %arg41[%c0_161, %c0_162, %c0_163], %386 {strides = array<i32>} : memref<1x8x16xf32, #tpu.memory_space<vmem>>, vector<1x8x16xf32>,
    %c0_164 = arith.constant 0 : index
    %c0_165 = arith.constant 0 : index
    %c0_166 = arith.constant 0 : index
    %387 = vector.load %arg42[%c0_164, %c0_165, %c0_166] : memref<1x8x16xf32, #tpu.memory_space<vmem>>, vector<1x8x16xf32>
    %388 = vector.shape_cast %387 : vector<1x8x16xf32> to vector<8x16xf32>
    %389 = vector.shape_cast %383 : vector<8x16xf32> to vector<1x8x16xf32>
    tpu.vector_store %arg42[%c0_164, %c0_165, %c0_166], %389 {strides = array<i32>} : memref<1x8x16xf32, #tpu.memory_space<vmem>>, vector<1x8x16xf32>,
    return
  }
  func.func @transform_0(%arg0: i32) -> (i32, i32, i32) {
    %c0_i32 = arith.constant 0 : i32
    %c0_i32_0 = arith.constant 0 : i32
    %c0_i32_1 = arith.constant 0 : i32
    return %arg0, %c0_i32, %c0_i32_0 : i32, i32, i32
  }
  func.func @transform_1(%arg0: i32) -> (i32, i32, i32) {
    %c0_i32 = arith.constant 0 : i32
    %c0_i32_0 = arith.constant 0 : i32
    %c0_i32_1 = arith.constant 0 : i32
    return %arg0, %c0_i32, %c0_i32_0 : i32, i32, i32
  }
  func.func @transform_2(%arg0: i32) -> (i32, i32, i32) {
    %c0_i32 = arith.constant 0 : i32
    %c0_i32_0 = arith.constant 0 : i32
    %c0_i32_1 = arith.constant 0 : i32
    return %arg0, %c0_i32, %c0_i32_0 : i32, i32, i32
  }
  func.func @transform_3(%arg0: i32) -> (i32, i32, i32) {
    %c0_i32 = arith.constant 0 : i32
    %c0_i32_0 = arith.constant 0 : i32
    %c0_i32_1 = arith.constant 0 : i32
    %c0_i32_2 = arith.constant 0 : i32
    return %c0_i32, %c0_i32_0, %c0_i32_1 : i32, i32, i32
  }
  func.func @transform_4(%arg0: i32) -> (i32, i32) {
    %c0_i32 = arith.constant 0 : i32
    %c0_i32_0 = arith.constant 0 : i32
    %c0_i32_1 = arith.constant 0 : i32
    return %c0_i32, %c0_i32_0 : i32, i32
  }
  func.func @transform_5(%arg0: i32) -> (i32, i32) {
    %c0_i32 = arith.constant 0 : i32
    %c0_i32_0 = arith.constant 0 : i32
    %c0_i32_1 = arith.constant 0 : i32
    return %c0_i32, %c0_i32_0 : i32, i32
  }
  func.func @transform_6(%arg0: i32) -> (i32, i32) {
    %c0_i32 = arith.constant 0 : i32
    %c0_i32_0 = arith.constant 0 : i32
    %c0_i32_1 = arith.constant 0 : i32
    return %c0_i32, %c0_i32_0 : i32, i32
  }
  func.func @transform_7(%arg0: i32) -> (i32, i32) {
    %c0_i32 = arith.constant 0 : i32
    %c0_i32_0 = arith.constant 0 : i32
    %c0_i32_1 = arith.constant 0 : i32
    return %c0_i32, %c0_i32_0 : i32, i32
  }
  func.func @transform_8(%arg0: i32) -> (i32, i32) {
    %c0_i32 = arith.constant 0 : i32
    %c0_i32_0 = arith.constant 0 : i32
    %c0_i32_1 = arith.constant 0 : i32
    return %c0_i32, %c0_i32_0 : i32, i32
  }
  func.func @transform_9(%arg0: i32) -> (i32, i32) {
    %c0_i32 = arith.constant 0 : i32
    %c0_i32_0 = arith.constant 0 : i32
    %c0_i32_1 = arith.constant 0 : i32
    return %c0_i32, %c0_i32_0 : i32, i32
  }
  func.func @transform_10(%arg0: i32) -> (i32, i32) {
    %c0_i32 = arith.constant 0 : i32
    %c0_i32_0 = arith.constant 0 : i32
    %c0_i32_1 = arith.constant 0 : i32
    return %c0_i32, %c0_i32_0 : i32, i32
  }
  func.func @transform_11(%arg0: i32) -> (i32, i32) {
    %c0_i32 = arith.constant 0 : i32
    %c0_i32_0 = arith.constant 0 : i32
    %c0_i32_1 = arith.constant 0 : i32
    return %c0_i32, %c0_i32_0 : i32, i32
  }
  func.func @transform_12(%arg0: i32) -> (i32, i32) {
    %c0_i32 = arith.constant 0 : i32
    %c0_i32_0 = arith.constant 0 : i32
    %c0_i32_1 = arith.constant 0 : i32
    return %c0_i32, %c0_i32_0 : i32, i32
  }
  func.func @transform_13(%arg0: i32) -> (i32, i32) {
    %c0_i32 = arith.constant 0 : i32
    %c0_i32_0 = arith.constant 0 : i32
    %c0_i32_1 = arith.constant 0 : i32
    return %c0_i32, %c0_i32_0 : i32, i32
  }
  func.func @transform_14(%arg0: i32) -> (i32, i32) {
    %c0_i32 = arith.constant 0 : i32
    %c0_i32_0 = arith.constant 0 : i32
    %c0_i32_1 = arith.constant 0 : i32
    return %c0_i32, %c0_i32_0 : i32, i32
  }
  func.func @transform_15(%arg0: i32) -> (i32, i32) {
    %c0_i32 = arith.constant 0 : i32
    %c0_i32_0 = arith.constant 0 : i32
    %c0_i32_1 = arith.constant 0 : i32
    return %c0_i32, %c0_i32_0 : i32, i32
  }
  func.func @transform_16(%arg0: i32) -> (i32, i32) {
    %c0_i32 = arith.constant 0 : i32
    %c0_i32_0 = arith.constant 0 : i32
    %c0_i32_1 = arith.constant 0 : i32
    return %c0_i32, %c0_i32_0 : i32, i32
  }
  func.func @transform_17(%arg0: i32) -> (i32, i32) {
    %c0_i32 = arith.constant 0 : i32
    %c0_i32_0 = arith.constant 0 : i32
    %c0_i32_1 = arith.constant 0 : i32
    return %c0_i32, %c0_i32_0 : i32, i32
  }
  func.func @transform_18(%arg0: i32) -> (i32, i32) {
    %c0_i32 = arith.constant 0 : i32
    %c0_i32_0 = arith.constant 0 : i32
    %c0_i32_1 = arith.constant 0 : i32
    return %c0_i32, %c0_i32_0 : i32, i32
  }
  func.func @transform_19(%arg0: i32) -> (i32, i32) {
    %c0_i32 = arith.constant 0 : i32
    %c0_i32_0 = arith.constant 0 : i32
    %c0_i32_1 = arith.constant 0 : i32
    return %c0_i32, %c0_i32_0 : i32, i32
  }
  func.func @transform_20(%arg0: i32) -> (i32, i32) {
    %c0_i32 = arith.constant 0 : i32
    %c0_i32_0 = arith.constant 0 : i32
    %c0_i32_1 = arith.constant 0 : i32
    return %c0_i32, %c0_i32_0 : i32, i32
  }
  func.func @transform_21(%arg0: i32) -> (i32, i32) {
    %c0_i32 = arith.constant 0 : i32
    %c0_i32_0 = arith.constant 0 : i32
    %c0_i32_1 = arith.constant 0 : i32
    return %c0_i32, %c0_i32_0 : i32, i32
  }
  func.func @transform_22(%arg0: i32) -> (i32, i32) {
    %c0_i32 = arith.constant 0 : i32
    %c0_i32_0 = arith.constant 0 : i32
    %c0_i32_1 = arith.constant 0 : i32
    return %c0_i32, %c0_i32_0 : i32, i32
  }
  func.func @transform_23(%arg0: i32) -> (i32, i32) {
    %c0_i32 = arith.constant 0 : i32
    %c0_i32_0 = arith.constant 0 : i32
    %c0_i32_1 = arith.constant 0 : i32
    return %c0_i32, %c0_i32_0 : i32, i32
  }
  func.func @transform_24(%arg0: i32) -> (i32, i32) {
    %c0_i32 = arith.constant 0 : i32
    %c0_i32_0 = arith.constant 0 : i32
    %c0_i32_1 = arith.constant 0 : i32
    return %c0_i32, %c0_i32_0 : i32, i32
  }
  func.func @transform_25(%arg0: i32) -> (i32, i32) {
    %c0_i32 = arith.constant 0 : i32
    %c0_i32_0 = arith.constant 0 : i32
    %c0_i32_1 = arith.constant 0 : i32
    return %c0_i32, %c0_i32_0 : i32, i32
  }
  func.func @transform_26(%arg0: i32) -> (i32, i32) {
    %c0_i32 = arith.constant 0 : i32
    %c0_i32_0 = arith.constant 0 : i32
    %c0_i32_1 = arith.constant 0 : i32
    return %c0_i32, %c0_i32_0 : i32, i32
  }
  func.func @transform_27(%arg0: i32) -> (i32, i32) {
    %c0_i32 = arith.constant 0 : i32
    %c0_i32_0 = arith.constant 0 : i32
    %c0_i32_1 = arith.constant 0 : i32
    return %c0_i32, %c0_i32_0 : i32, i32
  }
  func.func @transform_28(%arg0: i32) -> (i32, i32) {
    %c0_i32 = arith.constant 0 : i32
    %c0_i32_0 = arith.constant 0 : i32
    %c0_i32_1 = arith.constant 0 : i32
    return %c0_i32, %c0_i32_0 : i32, i32
  }
  func.func @transform_29(%arg0: i32) -> (i32, i32) {
    %c0_i32 = arith.constant 0 : i32
    %c0_i32_0 = arith.constant 0 : i32
    %c0_i32_1 = arith.constant 0 : i32
    return %c0_i32, %c0_i32_0 : i32, i32
  }
  func.func @transform_30(%arg0: i32) -> (i32, i32) {
    %c0_i32 = arith.constant 0 : i32
    %c0_i32_0 = arith.constant 0 : i32
    %c0_i32_1 = arith.constant 0 : i32
    return %c0_i32, %c0_i32_0 : i32, i32
  }
  func.func @transform_31(%arg0: i32) -> (i32, i32) {
    %c0_i32 = arith.constant 0 : i32
    %c0_i32_0 = arith.constant 0 : i32
    %c0_i32_1 = arith.constant 0 : i32
    return %c0_i32, %c0_i32_0 : i32, i32
  }
  func.func @transform_32(%arg0: i32) -> (i32, i32) {
    %c0_i32 = arith.constant 0 : i32
    %c0_i32_0 = arith.constant 0 : i32
    %c0_i32_1 = arith.constant 0 : i32
    return %c0_i32, %c0_i32_0 : i32, i32
  }
  func.func @transform_33(%arg0: i32) -> (i32, i32) {
    %c0_i32 = arith.constant 0 : i32
    %c0_i32_0 = arith.constant 0 : i32
    %c0_i32_1 = arith.constant 0 : i32
    return %c0_i32, %c0_i32_0 : i32, i32
  }
  func.func @transform_34(%arg0: i32) -> (i32, i32) {
    %c0_i32 = arith.constant 0 : i32
    %c0_i32_0 = arith.constant 0 : i32
    %c0_i32_1 = arith.constant 0 : i32
    return %c0_i32, %c0_i32_0 : i32, i32
  }
  func.func @transform_35(%arg0: i32) -> (i32, i32) {
    %c0_i32 = arith.constant 0 : i32
    %c0_i32_0 = arith.constant 0 : i32
    %c0_i32_1 = arith.constant 0 : i32
    return %c0_i32, %c0_i32_0 : i32, i32
  }
  func.func @transform_36(%arg0: i32) -> (i32, i32) {
    %c0_i32 = arith.constant 0 : i32
    %c0_i32_0 = arith.constant 0 : i32
    %c0_i32_1 = arith.constant 0 : i32
    return %c0_i32, %c0_i32_0 : i32, i32
  }
  func.func @transform_37(%arg0: i32) -> (i32, i32) {
    %c0_i32 = arith.constant 0 : i32
    %c0_i32_0 = arith.constant 0 : i32
    %c0_i32_1 = arith.constant 0 : i32
    return %c0_i32, %c0_i32_0 : i32, i32
  }
  func.func @transform_38(%arg0: i32) -> (i32, i32) {
    %c0_i32 = arith.constant 0 : i32
    %c0_i32_0 = arith.constant 0 : i32
    %c0_i32_1 = arith.constant 0 : i32
    return %c0_i32, %c0_i32_0 : i32, i32
  }
  func.func @transform_39(%arg0: i32) -> (i32, i32) {
    %c0_i32 = arith.constant 0 : i32
    %c0_i32_0 = arith.constant 0 : i32
    %c0_i32_1 = arith.constant 0 : i32
    return %c0_i32, %c0_i32_0 : i32, i32
  }
  func.func @transform_40(%arg0: i32) -> (i32, i32, i32) {
    %c0_i32 = arith.constant 0 : i32
    %c0_i32_0 = arith.constant 0 : i32
    %c0_i32_1 = arith.constant 0 : i32
    return %arg0, %c0_i32, %c0_i32_0 : i32, i32, i32
  }
  func.func @transform_41(%arg0: i32) -> (i32, i32, i32) {
    %c0_i32 = arith.constant 0 : i32
    %c0_i32_0 = arith.constant 0 : i32
    %c0_i32_1 = arith.constant 0 : i32
    return %arg0, %c0_i32, %c0_i32_0 : i32, i32, i32
  }
}

</mosaic_0001>

<llo_original>
// kernel: decoder_forward.2
$region0: #{decoder_forward.2}
  #allocation0 [shape = 'u32[]', space=smem, size = 0x4, offset = 0x4, fixed_abs, tag = 'smem constant byte address 0x4 - core index']
  #allocation1 [shape = 'u32[144,128]{1,0:T(1,128)}', space=vmem, size = 0x12000, scoped, tag = 'internal scratch']
  %s0 = inlined_call_operand.smem [shape: u32[42], index: -1, kind: input, shape index: {}]
  %s1 = sld [smem:[%s0]]
  %s2 = scalar_lea.smem %s0, 1
  %s3 = sld [smem:[%s2]]
  %s4 = scalar_lea.smem %s0, 2
  %s5 = sld [smem:[%s4]]
  %s6 = scalar_lea.smem %s0, 3
  %s7 = sld [smem:[%s6]]
  %s8 = scalar_lea.smem %s0, 4
  %s9 = sld [smem:[%s8]]
  %s10 = scalar_lea.smem %s0, 5
  %s11 = sld [smem:[%s10]]
  %s12 = scalar_lea.smem %s0, 6
  %s13 = sld [smem:[%s12]]
  %s14 = scalar_lea.smem %s0, 7
  %s15 = sld [smem:[%s14]]
  %s16 = scalar_lea.smem %s0, 8
  %s17 = sld [smem:[%s16]]
  %s18 = scalar_lea.smem %s0, 9
  %s19 = sld [smem:[%s18]]
  %s20 = scalar_lea.smem %s0, 10
  %s21 = sld [smem:[%s20]]
  %s22 = scalar_lea.smem %s0, 11
  %s23 = sld [smem:[%s22]]
  %s24 = scalar_lea.smem %s0, 12
  %s25 = sld [smem:[%s24]]
  %s26 = scalar_lea.smem %s0, 13
  %s27 = sld [smem:[%s26]]
  %s28 = scalar_lea.smem %s0, 14
  %s29 = sld [smem:[%s28]]
  %s30 = scalar_lea.smem %s0, 15
  %s31 = sld [smem:[%s30]]
  %s32 = scalar_lea.smem %s0, 16
  %s33 = sld [smem:[%s32]]
  %s34 = scalar_lea.smem %s0, 17
  %s35 = sld [smem:[%s34]]
  %s36 = scalar_lea.smem %s0, 18
  %s37 = sld [smem:[%s36]]
  %s38 = scalar_lea.smem %s0, 19
  %s39 = sld [smem:[%s38]]
  %s40 = scalar_lea.smem %s0, 20
  %s41 = sld [smem:[%s40]]
  %s42 = scalar_lea.smem %s0, 21
  %s43 = sld [smem:[%s42]]
  %s44 = scalar_lea.smem %s0, 22
  %s45 = sld [smem:[%s44]]
  %s46 = scalar_lea.smem %s0, 23
  %s47 = sld [smem:[%s46]]
  %s48 = scalar_lea.smem %s0, 24
  %s49 = sld [smem:[%s48]]
  %s50 = scalar_lea.smem %s0, 25
  %s51 = sld [smem:[%s50]]
  %s52 = scalar_lea.smem %s0, 26
  %s53 = sld [smem:[%s52]]
  %s54 = scalar_lea.smem %s0, 27
  %s55 = sld [smem:[%s54]]
  %s56 = scalar_lea.smem %s0, 28
  %s57 = sld [smem:[%s56]]
  %s58 = scalar_lea.smem %s0, 29
  %s59 = sld [smem:[%s58]]
  %s60 = scalar_lea.smem %s0, 30
  %s61 = sld [smem:[%s60]]
  %s62 = scalar_lea.smem %s0, 31
  %s63 = sld [smem:[%s62]]
  %s64 = scalar_lea.smem %s0, 32
  %s65 = sld [smem:[%s64]]
  %s66 = scalar_lea.smem %s0, 33
  %s67 = sld [smem:[%s66]]
  %s68 = scalar_lea.smem %s0, 34
  %s69 = sld [smem:[%s68]]
  %s70 = scalar_lea.smem %s0, 35
  %s71 = sld [smem:[%s70]]
  %s72 = scalar_lea.smem %s0, 36
  %s73 = sld [smem:[%s72]]
  %s74 = scalar_lea.smem %s0, 37
  %s75 = sld [smem:[%s74]]
  %s76 = scalar_lea.smem %s0, 38
  %s77 = sld [smem:[%s76]]
  %s78 = scalar_lea.smem %s0, 39
  %s79 = sld [smem:[%s78]]
  %s80 = scalar_lea.smem %s0, 40
  %s81 = sld [smem:[%s80]]
  %s82 = scalar_lea.smem %s0, 41
  %s83 = sld [smem:[%s82]]
  %84 = xla_tuple %s81, %s83
  %s85 = sld [smem:[#allocation0]]
  $region201: #{decoder_forward.2} parent=0
    _
  %s87 = ssub.s32 1, %s85
  %s88 = scalar_select 0, %s87, %s85
  $region1: #{decoder_forward.2} parent=0
    #allocation2 [shape = 'u8[8192]{0}', space=vmem, size = 0x2000, scoped, tag = 'output window, operand 1']
    #allocation3 [shape = 's32[2]{0}', space=sflag, size = 0x8, scoped, tag = 'scoped memory for decoder_forward.2']
    %89 = vsyncpa [#allocation3], 0
    %s90 = scalar_lea.sflag [#allocation3], 1
    %91 = vsyncpa %s90, 0
    loop: start=0, step=1, limit=4
    $region2: #{decoder_forward.2} parent=1 // loop_pre_header
      _
    $region3: #{decoder_forward.2} parent=1 // loop_header
      %s93 = sphi 0, %s97
      %p94 = scmp.ge.s32.totalorder %s93, 4
      %s103 = sphi 0, %s105
      %s106 = sphi 0, %s103
      %s107 = sphi 0, %s106
      %s123 = sphi 0, %s107
      %s129 = sphi 0, %s131
      %s132 = sphi 0, %s129
      %s133 = sphi 0, %s132
      %s149 = sphi 0, %s133
      %s155 = sphi 0, %s157
      %s158 = sphi 0, %s155
      %s159 = sphi 0, %s158
      %s175 = sphi 0, %s159
      %s179 = sphi 0, %s179
      %s181 = sphi 0, %s179
      %s182 = sphi 0, %s181
      %s196 = sphi 0, %s182
      %s200 = sphi 0, %s200
      %s202 = sphi 0, %s200
      %s203 = sphi 0, %s202
      %s217 = sphi 0, %s203
      %s221 = sphi 0, %s221
      %s223 = sphi 0, %s221
      %s224 = sphi 0, %s223
      %s238 = sphi 0, %s224
      %s242 = sphi 0, %s242
      %s244 = sphi 0, %s242
      %s245 = sphi 0, %s244
      %s259 = sphi 0, %s245
      %s263 = sphi 0, %s263
      %s265 = sphi 0, %s263
      %s266 = sphi 0, %s265
      %s280 = sphi 0, %s266
      %s284 = sphi 0, %s284
      %s286 = sphi 0, %s284
      %s287 = sphi 0, %s286
      %s301 = sphi 0, %s287
      %s305 = sphi 0, %s305
      %s307 = sphi 0, %s305
      %s308 = sphi 0, %s307
      %s322 = sphi 0, %s308
      %s326 = sphi 0, %s326
      %s328 = sphi 0, %s326
      %s329 = sphi 0, %s328
      %s343 = sphi 0, %s329
      %s347 = sphi 0, %s347
      %s349 = sphi 0, %s347
      %s350 = sphi 0, %s349
      %s364 = sphi 0, %s350
      %s368 = sphi 0, %s368
      %s370 = sphi 0, %s368
      %s371 = sphi 0, %s370
      %s385 = sphi 0, %s371
      %s389 = sphi 0, %s389
      %s391 = sphi 0, %s389
      %s392 = sphi 0, %s391
      %s406 = sphi 0, %s392
      %s410 = sphi 0, %s410
      %s412 = sphi 0, %s410
      %s413 = sphi 0, %s412
      %s427 = sphi 0, %s413
      %s431 = sphi 0, %s431
      %s433 = sphi 0, %s431
      %s434 = sphi 0, %s433
      %s448 = sphi 0, %s434
      %s452 = sphi 0, %s452
      %s454 = sphi 0, %s452
      %s455 = sphi 0, %s454
      %s469 = sphi 0, %s455
      %s473 = sphi 0, %s473
      %s475 = sphi 0, %s473
      %s476 = sphi 0, %s475
      %s490 = sphi 0, %s476
      %s494 = sphi 0, %s494
      %s496 = sphi 0, %s494
      %s497 = sphi 0, %s496
      %s511 = sphi 0, %s497
      %s515 = sphi 0, %s515
      %s517 = sphi 0, %s515
      %s518 = sphi 0, %s517
      %s532 = sphi 0, %s518
      %s536 = sphi 0, %s536
      %s538 = sphi 0, %s536
      %s539 = sphi 0, %s538
      %s553 = sphi 0, %s539
      %s557 = sphi 0, %s557
      %s559 = sphi 0, %s557
      %s560 = sphi 0, %s559
      %s574 = sphi 0, %s560
      %s578 = sphi 0, %s578
      %s580 = sphi 0, %s578
      %s581 = sphi 0, %s580
      %s595 = sphi 0, %s581
      %s599 = sphi 0, %s599
      %s601 = sphi 0, %s599
      %s602 = sphi 0, %s601
      %s616 = sphi 0, %s602
      %s620 = sphi 0, %s620
      %s622 = sphi 0, %s620
      %s623 = sphi 0, %s622
      %s637 = sphi 0, %s623
      %s641 = sphi 0, %s641
      %s643 = sphi 0, %s641
      %s644 = sphi 0, %s643
      %s658 = sphi 0, %s644
      %s662 = sphi 0, %s662
      %s664 = sphi 0, %s662
      %s665 = sphi 0, %s664
      %s679 = sphi 0, %s665
      %s683 = sphi 0, %s683
      %s685 = sphi 0, %s683
      %s686 = sphi 0, %s685
      %s700 = sphi 0, %s686
      %s704 = sphi 0, %s704
      %s706 = sphi 0, %s704
      %s707 = sphi 0, %s706
      %s721 = sphi 0, %s707
      %s725 = sphi 0, %s725
      %s727 = sphi 0, %s725
      %s728 = sphi 0, %s727
      %s742 = sphi 0, %s728
      %s746 = sphi 0, %s746
      %s748 = sphi 0, %s746
      %s749 = sphi 0, %s748
      %s763 = sphi 0, %s749
      %s767 = sphi 0, %s767
      %s769 = sphi 0, %s767
      %s770 = sphi 0, %s769
      %s784 = sphi 0, %s770
      %s788 = sphi 0, %s788
      %s790 = sphi 0, %s788
      %s791 = sphi 0, %s790
      %s805 = sphi 0, %s791
      %s809 = sphi 0, %s809
      %s811 = sphi 0, %s809
      %s812 = sphi 0, %s811
      %s826 = sphi 0, %s812
      %s830 = sphi 0, %s830
      %s832 = sphi 0, %s830
      %s833 = sphi 0, %s832
      %s847 = sphi 0, %s833
      %s851 = sphi 0, %s851
      %s853 = sphi 0, %s851
      %s854 = sphi 0, %s853
      %s868 = sphi 0, %s854
      %s872 = sphi 0, %s872
      %s874 = sphi 0, %s872
      %s875 = sphi 0, %s874
      %s889 = sphi 0, %s875
      %s893 = sphi 0, %s893
      %s895 = sphi 0, %s893
      %s896 = sphi 0, %s895
      %s910 = sphi 0, %s896
      %s914 = sphi 0, %s914
      %s916 = sphi 0, %s914
      %s917 = sphi 0, %s916
      %s931 = sphi 0, %s917
      %s935 = sphi 0, %s935
      %s937 = sphi 0, %s935
      %s938 = sphi 0, %s937
      %s952 = sphi 0, %s938
      %s958 = sphi 0, %s960
      %s961 = sphi 0, %s958
      %s962 = sphi 0, %s961
      %s978 = sphi 0, %s962
      %s984 = sphi 0, %s986
      %s987 = sphi 0, %s984
      %s988 = sphi 0, %s987
      %s1004 = sphi 0, %s988
    $region4: #{decoder_forward.2} parent=1 // loop_header_branch
      %96 = sbr.rel (%p94) target = $region8
    $region5: #{decoder_forward.2} parent=1 // loop_body
      %s98 = ssub.s32 %s93, 1
      %s99 = ssub.s32 %s93, 2
      %s100 = sadd.s32 %s93, 1
      %s101 = ssub.s32 %s93, %s100
      %p102 = scmp.eq.s32.totalorder %s101, 0
      %s104 = sadd.s32 %s103, 1
      %s105 = scalar_select %p102, %s103, %s104
      %p108 = pneg %p102
      %p109 = scmp.eq.s32.totalorder %s93, 1
      %p110 = por %p108, %p109
      %p111 = scmp.ne.s32.totalorder %s103, %s106
      %p112 = scmp.eq.s32.totalorder %s93, 0
      %p113 = por %p111, %p112
      %p114 = scmp.ne.s32.totalorder %s103, %s106
      %p115 = scmp.eq.s32.totalorder %s98, 1
      %p116 = por %p114, %p115
      %p117 = scmp.ne.s32.totalorder %s106, %s107
      %p118 = scmp.eq.s32.totalorder %s98, 0
      %p119 = por %p117, %p118
      %p120 = scmp.ne.s32.totalorder %s106, %s107
      %p121 = scmp.eq.s32.totalorder %s99, 1
      %p122 = por %p120, %p121
      %p124 = scmp.ne.s32.totalorder %s107, %s123
      %p125 = scmp.eq.s32.totalorder %s99, 0
      %p126 = por %p124, %p125
      %s127 = ssub.s32 %s93, %s100
      %p128 = scmp.eq.s32.totalorder %s127, 0
      %s130 = sadd.s32 %s129, 1
      %s131 = scalar_select %p128, %s129, %s130
      %p134 = pneg %p128
      %p135 = scmp.eq.s32.totalorder %s93, 1
      %p136 = por %p134, %p135
      %p137 = scmp.ne.s32.totalorder %s129, %s132
      %p138 = scmp.eq.s32.totalorder %s93, 0
      %p139 = por %p137, %p138
      %p140 = scmp.ne.s32.totalorder %s129, %s132
      %p141 = scmp.eq.s32.totalorder %s98, 1
      %p142 = por %p140, %p141
      %p143 = scmp.ne.s32.totalorder %s132, %s133
      %p144 = scmp.eq.s32.totalorder %s98, 0
      %p145 = por %p143, %p144
      %p146 = scmp.ne.s32.totalorder %s132, %s133
      %p147 = scmp.eq.s32.totalorder %s99, 1
      %p148 = por %p146, %p147
      %p150 = scmp.ne.s32.totalorder %s133, %s149
      %p151 = scmp.eq.s32.totalorder %s99, 0
      %p152 = por %p150, %p151
      %s153 = ssub.s32 %s93, %s100
      %p154 = scmp.eq.s32.totalorder %s153, 0
      %s156 = sadd.s32 %s155, 1
      %s157 = scalar_select %p154, %s155, %s156
      %p160 = pneg %p154
      %p161 = scmp.eq.s32.totalorder %s93, 1
      %p162 = por %p160, %p161
      %p163 = scmp.ne.s32.totalorder %s155, %s158
      %p164 = scmp.eq.s32.totalorder %s93, 0
      %p165 = por %p163, %p164
      %p166 = scmp.ne.s32.totalorder %s155, %s158
      %p167 = scmp.eq.s32.totalorder %s98, 1
      %p168 = por %p166, %p167
      %p169 = scmp.ne.s32.totalorder %s158, %s159
      %p170 = scmp.eq.s32.totalorder %s98, 0
      %p171 = por %p169, %p170
      %p172 = scmp.ne.s32.totalorder %s158, %s159
      %p173 = scmp.eq.s32.totalorder %s99, 1
      %p174 = por %p172, %p173
      %p176 = scmp.ne.s32.totalorder %s159, %s175
      %p177 = scmp.eq.s32.totalorder %s99, 0
      %p178 = por %p176, %p177
      %s180 = sadd.s32 %s179, 1
      %p183 = scmp.eq.s32.totalorder %s93, 1
      %p184 = scmp.ne.s32.totalorder %s179, %s181
      %p185 = scmp.eq.s32.totalorder %s93, 0
      %p186 = por %p184, %p185
      %p187 = scmp.ne.s32.totalorder %s179, %s181
      %p188 = scmp.eq.s32.totalorder %s98, 1
      %p189 = por %p187, %p188
      %p190 = scmp.ne.s32.totalorder %s181, %s182
      %p191 = scmp.eq.s32.totalorder %s98, 0
      %p192 = por %p190, %p191
      %p193 = scmp.ne.s32.totalorder %s181, %s182
      %p194 = scmp.eq.s32.totalorder %s99, 1
      %p195 = por %p193, %p194
      %p197 = scmp.ne.s32.totalorder %s182, %s196
      %p198 = scmp.eq.s32.totalorder %s99, 0
      %p199 = por %p197, %p198
      %s201 = sadd.s32 %s200, 1
      %p204 = scmp.eq.s32.totalorder %s93, 1
      %p205 = scmp.ne.s32.totalorder %s200, %s202
      %p206 = scmp.eq.s32.totalorder %s93, 0
      %p207 = por %p205, %p206
      %p208 = scmp.ne.s32.totalorder %s200, %s202
      %p209 = scmp.eq.s32.totalorder %s98, 1
      %p210 = por %p208, %p209
      %p211 = scmp.ne.s32.totalorder %s202, %s203
      %p212 = scmp.eq.s32.totalorder %s98, 0
      %p213 = por %p211, %p212
      %p214 = scmp.ne.s32.totalorder %s202, %s203
      %p215 = scmp.eq.s32.totalorder %s99, 1
      %p216 = por %p214, %p215
      %p218 = scmp.ne.s32.totalorder %s203, %s217
      %p219 = scmp.eq.s32.totalorder %s99, 0
      %p220 = por %p218, %p219
      %s222 = sadd.s32 %s221, 1
      %p225 = scmp.eq.s32.totalorder %s93, 1
      %p226 = scmp.ne.s32.totalorder %s221, %s223
      %p227 = scmp.eq.s32.totalorder %s93, 0
      %p228 = por %p226, %p227
      %p229 = scmp.ne.s32.totalorder %s221, %s223
      %p230 = scmp.eq.s32.totalorder %s98, 1
      %p231 = por %p229, %p230
      %p232 = scmp.ne.s32.totalorder %s223, %s224
      %p233 = scmp.eq.s32.totalorder %s98, 0
      %p234 = por %p232, %p233
      %p235 = scmp.ne.s32.totalorder %s223, %s224
      %p236 = scmp.eq.s32.totalorder %s99, 1
      %p237 = por %p235, %p236
      %p239 = scmp.ne.s32.totalorder %s224, %s238
      %p240 = scmp.eq.s32.totalorder %s99, 0
      %p241 = por %p239, %p240
      %s243 = sadd.s32 %s242, 1
      %p246 = scmp.eq.s32.totalorder %s93, 1
      %p247 = scmp.ne.s32.totalorder %s242, %s244
      %p248 = scmp.eq.s32.totalorder %s93, 0
      %p249 = por %p247, %p248
      %p250 = scmp.ne.s32.totalorder %s242, %s244
      %p251 = scmp.eq.s32.totalorder %s98, 1
      %p252 = por %p250, %p251
      %p253 = scmp.ne.s32.totalorder %s244, %s245
      %p254 = scmp.eq.s32.totalorder %s98, 0
      %p255 = por %p253, %p254
      %p256 = scmp.ne.s32.totalorder %s244, %s245
      %p257 = scmp.eq.s32.totalorder %s99, 1
      %p258 = por %p256, %p257
      %p260 = scmp.ne.s32.totalorder %s245, %s259
      %p261 = scmp.eq.s32.totalorder %s99, 0
      %p262 = por %p260, %p261
      %s264 = sadd.s32 %s263, 1
      %p267 = scmp.eq.s32.totalorder %s93, 1
      %p268 = scmp.ne.s32.totalorder %s263, %s265
      %p269 = scmp.eq.s32.totalorder %s93, 0
      %p270 = por %p268, %p269
      %p271 = scmp.ne.s32.totalorder %s263, %s265
      %p272 = scmp.eq.s32.totalorder %s98, 1
      %p273 = por %p271, %p272
      %p274 = scmp.ne.s32.totalorder %s265, %s266
      %p275 = scmp.eq.s32.totalorder %s98, 0
      %p276 = por %p274, %p275
      %p277 = scmp.ne.s32.totalorder %s265, %s266
      %p278 = scmp.eq.s32.totalorder %s99, 1
      %p279 = por %p277, %p278
      %p281 = scmp.ne.s32.totalorder %s266, %s280
      %p282 = scmp.eq.s32.totalorder %s99, 0
      %p283 = por %p281, %p282
      %s285 = sadd.s32 %s284, 1
      %p288 = scmp.eq.s32.totalorder %s93, 1
      %p289 = scmp.ne.s32.totalorder %s284, %s286
      %p290 = scmp.eq.s32.totalorder %s93, 0
      %p291 = por %p289, %p290
      %p292 = scmp.ne.s32.totalorder %s284, %s286
      %p293 = scmp.eq.s32.totalorder %s98, 1
      %p294 = por %p292, %p293
      %p295 = scmp.ne.s32.totalorder %s286, %s287
      %p296 = scmp.eq.s32.totalorder %s98, 0
      %p297 = por %p295, %p296
      %p298 = scmp.ne.s32.totalorder %s286, %s287
      %p299 = scmp.eq.s32.totalorder %s99, 1
      %p300 = por %p298, %p299
      %p302 = scmp.ne.s32.totalorder %s287, %s301
      %p303 = scmp.eq.s32.totalorder %s99, 0
      %p304 = por %p302, %p303
      %s306 = sadd.s32 %s305, 1
      %p309 = scmp.eq.s32.totalorder %s93, 1
      %p310 = scmp.ne.s32.totalorder %s305, %s307
      %p311 = scmp.eq.s32.totalorder %s93, 0
      %p312 = por %p310, %p311
      %p313 = scmp.ne.s32.totalorder %s305, %s307
      %p314 = scmp.eq.s32.totalorder %s98, 1
      %p315 = por %p313, %p314
      %p316 = scmp.ne.s32.totalorder %s307, %s308
      %p317 = scmp.eq.s32.totalorder %s98, 0
      %p318 = por %p316, %p317
      %p319 = scmp.ne.s32.totalorder %s307, %s308
      %p320 = scmp.eq.s32.totalorder %s99, 1
      %p321 = por %p319, %p320
      %p323 = scmp.ne.s32.totalorder %s308, %s322
      %p324 = scmp.eq.s32.totalorder %s99, 0
      %p325 = por %p323, %p324
      %s327 = sadd.s32 %s326, 1
      %p330 = scmp.eq.s32.totalorder %s93, 1
      %p331 = scmp.ne.s32.totalorder %s326, %s328
      %p332 = scmp.eq.s32.totalorder %s93, 0
      %p333 = por %p331, %p332
      %p334 = scmp.ne.s32.totalorder %s326, %s328
      %p335 = scmp.eq.s32.totalorder %s98, 1
      %p336 = por %p334, %p335
      %p337 = scmp.ne.s32.totalorder %s328, %s329
      %p338 = scmp.eq.s32.totalorder %s98, 0
      %p339 = por %p337, %p338
      %p340 = scmp.ne.s32.totalorder %s328, %s329
      %p341 = scmp.eq.s32.totalorder %s99, 1
      %p342 = por %p340, %p341
      %p344 = scmp.ne.s32.totalorder %s329, %s343
      %p345 = scmp.eq.s32.totalorder %s99, 0
      %p346 = por %p344, %p345
      %s348 = sadd.s32 %s347, 1
      %p351 = scmp.eq.s32.totalorder %s93, 1
      %p352 = scmp.ne.s32.totalorder %s347, %s349
      %p353 = scmp.eq.s32.totalorder %s93, 0
      %p354 = por %p352, %p353
      %p355 = scmp.ne.s32.totalorder %s347, %s349
      %p356 = scmp.eq.s32.totalorder %s98, 1
      %p357 = por %p355, %p356
      %p358 = scmp.ne.s32.totalorder %s349, %s350
      %p359 = scmp.eq.s32.totalorder %s98, 0
      %p360 = por %p358, %p359
      %p361 = scmp.ne.s32.totalorder %s349, %s350
      %p362 = scmp.eq.s32.totalorder %s99, 1
      %p363 = por %p361, %p362
      %p365 = scmp.ne.s32.totalorder %s350, %s364
      %p366 = scmp.eq.s32.totalorder %s99, 0
      %p367 = por %p365, %p366
      %s369 = sadd.s32 %s368, 1
      %p372 = scmp.eq.s32.totalorder %s93, 1
      %p373 = scmp.ne.s32.totalorder %s368, %s370
      %p374 = scmp.eq.s32.totalorder %s93, 0
      %p375 = por %p373, %p374
      %p376 = scmp.ne.s32.totalorder %s368, %s370
      %p377 = scmp.eq.s32.totalorder %s98, 1
      %p378 = por %p376, %p377
      %p379 = scmp.ne.s32.totalorder %s370, %s371
      %p380 = scmp.eq.s32.totalorder %s98, 0
      %p381 = por %p379, %p380
      %p382 = scmp.ne.s32.totalorder %s370, %s371
      %p383 = scmp.eq.s32.totalorder %s99, 1
      %p384 = por %p382, %p383
      %p386 = scmp.ne.s32.totalorder %s371, %s385
      %p387 = scmp.eq.s32.totalorder %s99, 0
      %p388 = por %p386, %p387
      %s390 = sadd.s32 %s389, 1
      %p393 = scmp.eq.s32.totalorder %s93, 1
      %p394 = scmp.ne.s32.totalorder %s389, %s391
      %p395 = scmp.eq.s32.totalorder %s93, 0
      %p396 = por %p394, %p395
      %p397 = scmp.ne.s32.totalorder %s389, %s391
      %p398 = scmp.eq.s32.totalorder %s98, 1
      %p399 = por %p397, %p398
      %p400 = scmp.ne.s32.totalorder %s391, %s392
      %p401 = scmp.eq.s32.totalorder %s98, 0
      %p402 = por %p400, %p401
      %p403 = scmp.ne.s32.totalorder %s391, %s392
      %p404 = scmp.eq.s32.totalorder %s99, 1
      %p405 = por %p403, %p404
      %p407 = scmp.ne.s32.totalorder %s392, %s406
      %p408 = scmp.eq.s32.totalorder %s99, 0
      %p409 = por %p407, %p408
      %s411 = sadd.s32 %s410, 1
      %p414 = scmp.eq.s32.totalorder %s93, 1
      %p415 = scmp.ne.s32.totalorder %s410, %s412
      %p416 = scmp.eq.s32.totalorder %s93, 0
      %p417 = por %p415, %p416
      %p418 = scmp.ne.s32.totalorder %s410, %s412
      %p419 = scmp.eq.s32.totalorder %s98, 1
      %p420 = por %p418, %p419
      %p421 = scmp.ne.s32.totalorder %s412, %s413
      %p422 = scmp.eq.s32.totalorder %s98, 0
      %p423 = por %p421, %p422
      %p424 = scmp.ne.s32.totalorder %s412, %s413
      %p425 = scmp.eq.s32.totalorder %s99, 1
      %p426 = por %p424, %p425
      %p428 = scmp.ne.s32.totalorder %s413, %s427
      %p429 = scmp.eq.s32.totalorder %s99, 0
      %p430 = por %p428, %p429
      %s432 = sadd.s32 %s431, 1
      %p435 = scmp.eq.s32.totalorder %s93, 1
      %p436 = scmp.ne.s32.totalorder %s431, %s433
      %p437 = scmp.eq.s32.totalorder %s93, 0
      %p438 = por %p436, %p437
      %p439 = scmp.ne.s32.totalorder %s431, %s433
      %p440 = scmp.eq.s32.totalorder %s98, 1
      %p441 = por %p439, %p440
      %p442 = scmp.ne.s32.totalorder %s433, %s434
      %p443 = scmp.eq.s32.totalorder %s98, 0
      %p444 = por %p442, %p443
      %p445 = scmp.ne.s32.totalorder %s433, %s434
      %p446 = scmp.eq.s32.totalorder %s99, 1
      %p447 = por %p445, %p446
      %p449 = scmp.ne.s32.totalorder %s434, %s448
      %p450 = scmp.eq.s32.totalorder %s99, 0
      %p451 = por %p449, %p450
      %s453 = sadd.s32 %s452, 1
      %p456 = scmp.eq.s32.totalorder %s93, 1
      %p457 = scmp.ne.s32.totalorder %s452, %s454
      %p458 = scmp.eq.s32.totalorder %s93, 0
      %p459 = por %p457, %p458
      %p460 = scmp.ne.s32.totalorder %s452, %s454
      %p461 = scmp.eq.s32.totalorder %s98, 1
      %p462 = por %p460, %p461
      %p463 = scmp.ne.s32.totalorder %s454, %s455
      %p464 = scmp.eq.s32.totalorder %s98, 0
      %p465 = por %p463, %p464
      %p466 = scmp.ne.s32.totalorder %s454, %s455
      %p467 = scmp.eq.s32.totalorder %s99, 1
      %p468 = por %p466, %p467
      %p470 = scmp.ne.s32.totalorder %s455, %s469
      %p471 = scmp.eq.s32.totalorder %s99, 0
      %p472 = por %p470, %p471
      %s474 = sadd.s32 %s473, 1
      %p477 = scmp.eq.s32.totalorder %s93, 1
      %p478 = scmp.ne.s32.totalorder %s473, %s475
      %p479 = scmp.eq.s32.totalorder %s93, 0
      %p480 = por %p478, %p479
      %p481 = scmp.ne.s32.totalorder %s473, %s475
      %p482 = scmp.eq.s32.totalorder %s98, 1
      %p483 = por %p481, %p482
      %p484 = scmp.ne.s32.totalorder %s475, %s476
      %p485 = scmp.eq.s32.totalorder %s98, 0
      %p486 = por %p484, %p485
      %p487 = scmp.ne.s32.totalorder %s475, %s476
      %p488 = scmp.eq.s32.totalorder %s99, 1
      %p489 = por %p487, %p488
      %p491 = scmp.ne.s32.totalorder %s476, %s490
      %p492 = scmp.eq.s32.totalorder %s99, 0
      %p493 = por %p491, %p492
      %s495 = sadd.s32 %s494, 1
      %p498 = scmp.eq.s32.totalorder %s93, 1
      %p499 = scmp.ne.s32.totalorder %s494, %s496
      %p500 = scmp.eq.s32.totalorder %s93, 0
      %p501 = por %p499, %p500
      %p502 = scmp.ne.s32.totalorder %s494, %s496
      %p503 = scmp.eq.s32.totalorder %s98, 1
      %p504 = por %p502, %p503
      %p505 = scmp.ne.s32.totalorder %s496, %s497
      %p506 = scmp.eq.s32.totalorder %s98, 0
      %p507 = por %p505, %p506
      %p508 = scmp.ne.s32.totalorder %s496, %s497
      %p509 = scmp.eq.s32.totalorder %s99, 1
      %p510 = por %p508, %p509
      %p512 = scmp.ne.s32.totalorder %s497, %s511
      %p513 = scmp.eq.s32.totalorder %s99, 0
      %p514 = por %p512, %p513
      %s516 = sadd.s32 %s515, 1
      %p519 = scmp.eq.s32.totalorder %s93, 1
      %p520 = scmp.ne.s32.totalorder %s515, %s517
      %p521 = scmp.eq.s32.totalorder %s93, 0
      %p522 = por %p520, %p521
      %p523 = scmp.ne.s32.totalorder %s515, %s517
      %p524 = scmp.eq.s32.totalorder %s98, 1
      %p525 = por %p523, %p524
      %p526 = scmp.ne.s32.totalorder %s517, %s518
      %p527 = scmp.eq.s32.totalorder %s98, 0
      %p528 = por %p526, %p527
      %p529 = scmp.ne.s32.totalorder %s517, %s518
      %p530 = scmp.eq.s32.totalorder %s99, 1
      %p531 = por %p529, %p530
      %p533 = scmp.ne.s32.totalorder %s518, %s532
      %p534 = scmp.eq.s32.totalorder %s99, 0
      %p535 = por %p533, %p534
      %s537 = sadd.s32 %s536, 1
      %p540 = scmp.eq.s32.totalorder %s93, 1
      %p541 = scmp.ne.s32.totalorder %s536, %s538
      %p542 = scmp.eq.s32.totalorder %s93, 0
      %p543 = por %p541, %p542
      %p544 = scmp.ne.s32.totalorder %s536, %s538
      %p545 = scmp.eq.s32.totalorder %s98, 1
      %p546 = por %p544, %p545
      %p547 = scmp.ne.s32.totalorder %s538, %s539
      %p548 = scmp.eq.s32.totalorder %s98, 0
      %p549 = por %p547, %p548
      %p550 = scmp.ne.s32.totalorder %s538, %s539
      %p551 = scmp.eq.s32.totalorder %s99, 1
      %p552 = por %p550, %p551
      %p554 = scmp.ne.s32.totalorder %s539, %s553
      %p555 = scmp.eq.s32.totalorder %s99, 0
      %p556 = por %p554, %p555
      %s558 = sadd.s32 %s557, 1
      %p561 = scmp.eq.s32.totalorder %s93, 1
      %p562 = scmp.ne.s32.totalorder %s557, %s559
      %p563 = scmp.eq.s32.totalorder %s93, 0
      %p564 = por %p562, %p563
      %p565 = scmp.ne.s32.totalorder %s557, %s559
      %p566 = scmp.eq.s32.totalorder %s98, 1
      %p567 = por %p565, %p566
      %p568 = scmp.ne.s32.totalorder %s559, %s560
      %p569 = scmp.eq.s32.totalorder %s98, 0
      %p570 = por %p568, %p569
      %p571 = scmp.ne.s32.totalorder %s559, %s560
      %p572 = scmp.eq.s32.totalorder %s99, 1
      %p573 = por %p571, %p572
      %p575 = scmp.ne.s32.totalorder %s560, %s574
      %p576 = scmp.eq.s32.totalorder %s99, 0
      %p577 = por %p575, %p576
      %s579 = sadd.s32 %s578, 1
      %p582 = scmp.eq.s32.totalorder %s93, 1
      %p583 = scmp.ne.s32.totalorder %s578, %s580
      %p584 = scmp.eq.s32.totalorder %s93, 0
      %p585 = por %p583, %p584
      %p586 = scmp.ne.s32.totalorder %s578, %s580
      %p587 = scmp.eq.s32.totalorder %s98, 1
      %p588 = por %p586, %p587
      %p589 = scmp.ne.s32.totalorder %s580, %s581
      %p590 = scmp.eq.s32.totalorder %s98, 0
      %p591 = por %p589, %p590
      %p592 = scmp.ne.s32.totalorder %s580, %s581
      %p593 = scmp.eq.s32.totalorder %s99, 1
      %p594 = por %p592, %p593
      %p596 = scmp.ne.s32.totalorder %s581, %s595
      %p597 = scmp.eq.s32.totalorder %s99, 0
      %p598 = por %p596, %p597
      %s600 = sadd.s32 %s599, 1
      %p603 = scmp.eq.s32.totalorder %s93, 1
      %p604 = scmp.ne.s32.totalorder %s599, %s601
      %p605 = scmp.eq.s32.totalorder %s93, 0
      %p606 = por %p604, %p605
      %p607 = scmp.ne.s32.totalorder %s599, %s601
      %p608 = scmp.eq.s32.totalorder %s98, 1
      %p609 = por %p607, %p608
      %p610 = scmp.ne.s32.totalorder %s601, %s602
      %p611 = scmp.eq.s32.totalorder %s98, 0
      %p612 = por %p610, %p611
      %p613 = scmp.ne.s32.totalorder %s601, %s602
      %p614 = scmp.eq.s32.totalorder %s99, 1
      %p615 = por %p613, %p614
      %p617 = scmp.ne.s32.totalorder %s602, %s616
      %p618 = scmp.eq.s32.totalorder %s99, 0
      %p619 = por %p617, %p618
      %s621 = sadd.s32 %s620, 1
      %p624 = scmp.eq.s32.totalorder %s93, 1
      %p625 = scmp.ne.s32.totalorder %s620, %s622
      %p626 = scmp.eq.s32.totalorder %s93, 0
      %p627 = por %p625, %p626
      %p628 = scmp.ne.s32.totalorder %s620, %s622
      %p629 = scmp.eq.s32.totalorder %s98, 1
      %p630 = por %p628, %p629
      %p631 = scmp.ne.s32.totalorder %s622, %s623
      %p632 = scmp.eq.s32.totalorder %s98, 0
      %p633 = por %p631, %p632
      %p634 = scmp.ne.s32.totalorder %s622, %s623
      %p635 = scmp.eq.s32.totalorder %s99, 1
      %p636 = por %p634, %p635
      %p638 = scmp.ne.s32.totalorder %s623, %s637
      %p639 = scmp.eq.s32.totalorder %s99, 0
      %p640 = por %p638, %p639
      %s642 = sadd.s32 %s641, 1
      %p645 = scmp.eq.s32.totalorder %s93, 1
      %p646 = scmp.ne.s32.totalorder %s641, %s643
      %p647 = scmp.eq.s32.totalorder %s93, 0
      %p648 = por %p646, %p647
      %p649 = scmp.ne.s32.totalorder %s641, %s643
      %p650 = scmp.eq.s32.totalorder %s98, 1
      %p651 = por %p649, %p650
      %p652 = scmp.ne.s32.totalorder %s643, %s644
      %p653 = scmp.eq.s32.totalorder %s98, 0
      %p654 = por %p652, %p653
      %p655 = scmp.ne.s32.totalorder %s643, %s644
      %p656 = scmp.eq.s32.totalorder %s99, 1
      %p657 = por %p655, %p656
      %p659 = scmp.ne.s32.totalorder %s644, %s658
      %p660 = scmp.eq.s32.totalorder %s99, 0
      %p661 = por %p659, %p660
      %s663 = sadd.s32 %s662, 1
      %p666 = scmp.eq.s32.totalorder %s93, 1
      %p667 = scmp.ne.s32.totalorder %s662, %s664
      %p668 = scmp.eq.s32.totalorder %s93, 0
      %p669 = por %p667, %p668
      %p670 = scmp.ne.s32.totalorder %s662, %s664
      %p671 = scmp.eq.s32.totalorder %s98, 1
      %p672 = por %p670, %p671
      %p673 = scmp.ne.s32.totalorder %s664, %s665
      %p674 = scmp.eq.s32.totalorder %s98, 0
      %p675 = por %p673, %p674
      %p676 = scmp.ne.s32.totalorder %s664, %s665
      %p677 = scmp.eq.s32.totalorder %s99, 1
      %p678 = por %p676, %p677
      %p680 = scmp.ne.s32.totalorder %s665, %s679
      %p681 = scmp.eq.s32.totalorder %s99, 0
      %p682 = por %p680, %p681
      %s684 = sadd.s32 %s683, 1
      %p687 = scmp.eq.s32.totalorder %s93, 1
      %p688 = scmp.ne.s32.totalorder %s683, %s685
      %p689 = scmp.eq.s32.totalorder %s93, 0
      %p690 = por %p688, %p689
      %p691 = scmp.ne.s32.totalorder %s683, %s685
      %p692 = scmp.eq.s32.totalorder %s98, 1
      %p693 = por %p691, %p692
      %p694 = scmp.ne.s32.totalorder %s685, %s686
      %p695 = scmp.eq.s32.totalorder %s98, 0
      %p696 = por %p694, %p695
      %p697 = scmp.ne.s32.totalorder %s685, %s686
      %p698 = scmp.eq.s32.totalorder %s99, 1
      %p699 = por %p697, %p698
      %p701 = scmp.ne.s32.totalorder %s686, %s700
      %p702 = scmp.eq.s32.totalorder %s99, 0
      %p703 = por %p701, %p702
      %s705 = sadd.s32 %s704, 1
      %p708 = scmp.eq.s32.totalorder %s93, 1
      %p709 = scmp.ne.s32.totalorder %s704, %s706
      %p710 = scmp.eq.s32.totalorder %s93, 0
      %p711 = por %p709, %p710
      %p712 = scmp.ne.s32.totalorder %s704, %s706
      %p713 = scmp.eq.s32.totalorder %s98, 1
      %p714 = por %p712, %p713
      %p715 = scmp.ne.s32.totalorder %s706, %s707
      %p716 = scmp.eq.s32.totalorder %s98, 0
      %p717 = por %p715, %p716
      %p718 = scmp.ne.s32.totalorder %s706, %s707
      %p719 = scmp.eq.s32.totalorder %s99, 1
      %p720 = por %p718, %p719
      %p722 = scmp.ne.s32.totalorder %s707, %s721
      %p723 = scmp.eq.s32.totalorder %s99, 0
      %p724 = por %p722, %p723
      %s726 = sadd.s32 %s725, 1
      %p729 = scmp.eq.s32.totalorder %s93, 1
      %p730 = scmp.ne.s32.totalorder %s725, %s727
      %p731 = scmp.eq.s32.totalorder %s93, 0
      %p732 = por %p730, %p731
      %p733 = scmp.ne.s32.totalorder %s725, %s727
      %p734 = scmp.eq.s32.totalorder %s98, 1
      %p735 = por %p733, %p734
      %p736 = scmp.ne.s32.totalorder %s727, %s728
      %p737 = scmp.eq.s32.totalorder %s98, 0
      %p738 = por %p736, %p737
      %p739 = scmp.ne.s32.totalorder %s727, %s728
      %p740 = scmp.eq.s32.totalorder %s99, 1
      %p741 = por %p739, %p740
      %p743 = scmp.ne.s32.totalorder %s728, %s742
      %p744 = scmp.eq.s32.totalorder %s99, 0
      %p745 = por %p743, %p744
      %s747 = sadd.s32 %s746, 1
      %p750 = scmp.eq.s32.totalorder %s93, 1
      %p751 = scmp.ne.s32.totalorder %s746, %s748
      %p752 = scmp.eq.s32.totalorder %s93, 0
      %p753 = por %p751, %p752
      %p754 = scmp.ne.s32.totalorder %s746, %s748
      %p755 = scmp.eq.s32.totalorder %s98, 1
      %p756 = por %p754, %p755
      %p757 = scmp.ne.s32.totalorder %s748, %s749
      %p758 = scmp.eq.s32.totalorder %s98, 0
      %p759 = por %p757, %p758
      %p760 = scmp.ne.s32.totalorder %s748, %s749
      %p761 = scmp.eq.s32.totalorder %s99, 1
      %p762 = por %p760, %p761
      %p764 = scmp.ne.s32.totalorder %s749, %s763
      %p765 = scmp.eq.s32.totalorder %s99, 0
      %p766 = por %p764, %p765
      %s768 = sadd.s32 %s767, 1
      %p771 = scmp.eq.s32.totalorder %s93, 1
      %p772 = scmp.ne.s32.totalorder %s767, %s769
      %p773 = scmp.eq.s32.totalorder %s93, 0
      %p774 = por %p772, %p773
      %p775 = scmp.ne.s32.totalorder %s767, %s769
      %p776 = scmp.eq.s32.totalorder %s98, 1
      %p777 = por %p775, %p776
      %p778 = scmp.ne.s32.totalorder %s769, %s770
      %p779 = scmp.eq.s32.totalorder %s98, 0
      %p780 = por %p778, %p779
      %p781 = scmp.ne.s32.totalorder %s769, %s770
      %p782 = scmp.eq.s32.totalorder %s99, 1
      %p783 = por %p781, %p782
      %p785 = scmp.ne.s32.totalorder %s770, %s784
      %p786 = scmp.eq.s32.totalorder %s99, 0
      %p787 = por %p785, %p786
      %s789 = sadd.s32 %s788, 1
      %p792 = scmp.eq.s32.totalorder %s93, 1
      %p793 = scmp.ne.s32.totalorder %s788, %s790
      %p794 = scmp.eq.s32.totalorder %s93, 0
      %p795 = por %p793, %p794
      %p796 = scmp.ne.s32.totalorder %s788, %s790
      %p797 = scmp.eq.s32.totalorder %s98, 1
      %p798 = por %p796, %p797
      %p799 = scmp.ne.s32.totalorder %s790, %s791
      %p800 = scmp.eq.s32.totalorder %s98, 0
      %p801 = por %p799, %p800
      %p802 = scmp.ne.s32.totalorder %s790, %s791
      %p803 = scmp.eq.s32.totalorder %s99, 1
      %p804 = por %p802, %p803
      %p806 = scmp.ne.s32.totalorder %s791, %s805
      %p807 = scmp.eq.s32.totalorder %s99, 0
      %p808 = por %p806, %p807
      %s810 = sadd.s32 %s809, 1
      %p813 = scmp.eq.s32.totalorder %s93, 1
      %p814 = scmp.ne.s32.totalorder %s809, %s811
      %p815 = scmp.eq.s32.totalorder %s93, 0
      %p816 = por %p814, %p815
      %p817 = scmp.ne.s32.totalorder %s809, %s811
      %p818 = scmp.eq.s32.totalorder %s98, 1
      %p819 = por %p817, %p818
      %p820 = scmp.ne.s32.totalorder %s811, %s812
      %p821 = scmp.eq.s32.totalorder %s98, 0
      %p822 = por %p820, %p821
      %p823 = scmp.ne.s32.totalorder %s811, %s812
      %p824 = scmp.eq.s32.totalorder %s99, 1
      %p825 = por %p823, %p824
      %p827 = scmp.ne.s32.totalorder %s812, %s826
      %p828 = scmp.eq.s32.totalorder %s99, 0
      %p829 = por %p827, %p828
      %s831 = sadd.s32 %s830, 1
      %p834 = scmp.eq.s32.totalorder %s93, 1
      %p835 = scmp.ne.s32.totalorder %s830, %s832
      %p836 = scmp.eq.s32.totalorder %s93, 0
      %p837 = por %p835, %p836
      %p838 = scmp.ne.s32.totalorder %s830, %s832
      %p839 = scmp.eq.s32.totalorder %s98, 1
      %p840 = por %p838, %p839
      %p841 = scmp.ne.s32.totalorder %s832, %s833
      %p842 = scmp.eq.s32.totalorder %s98, 0
      %p843 = por %p841, %p842
      %p844 = scmp.ne.s32.totalorder %s832, %s833
      %p845 = scmp.eq.s32.totalorder %s99, 1
      %p846 = por %p844, %p845
      %p848 = scmp.ne.s32.totalorder %s833, %s847
      %p849 = scmp.eq.s32.totalorder %s99, 0
      %p850 = por %p848, %p849
      %s852 = sadd.s32 %s851, 1
      %p855 = scmp.eq.s32.totalorder %s93, 1
      %p856 = scmp.ne.s32.totalorder %s851, %s853
      %p857 = scmp.eq.s32.totalorder %s93, 0
      %p858 = por %p856, %p857
      %p859 = scmp.ne.s32.totalorder %s851, %s853
      %p860 = scmp.eq.s32.totalorder %s98, 1
      %p861 = por %p859, %p860
      %p862 = scmp.ne.s32.totalorder %s853, %s854
      %p863 = scmp.eq.s32.totalorder %s98, 0
      %p864 = por %p862, %p863
      %p865 = scmp.ne.s32.totalorder %s853, %s854
      %p866 = scmp.eq.s32.totalorder %s99, 1
      %p867 = por %p865, %p866
      %p869 = scmp.ne.s32.totalorder %s854, %s868
      %p870 = scmp.eq.s32.totalorder %s99, 0
      %p871 = por %p869, %p870
      %s873 = sadd.s32 %s872, 1
      %p876 = scmp.eq.s32.totalorder %s93, 1
      %p877 = scmp.ne.s32.totalorder %s872, %s874
      %p878 = scmp.eq.s32.totalorder %s93, 0
      %p879 = por %p877, %p878
      %p880 = scmp.ne.s32.totalorder %s872, %s874
      %p881 = scmp.eq.s32.totalorder %s98, 1
      %p882 = por %p880, %p881
      %p883 = scmp.ne.s32.totalorder %s874, %s875
      %p884 = scmp.eq.s32.totalorder %s98, 0
      %p885 = por %p883, %p884
      %p886 = scmp.ne.s32.totalorder %s874, %s875
      %p887 = scmp.eq.s32.totalorder %s99, 1
      %p888 = por %p886, %p887
      %p890 = scmp.ne.s32.totalorder %s875, %s889
      %p891 = scmp.eq.s32.totalorder %s99, 0
      %p892 = por %p890, %p891
      %s894 = sadd.s32 %s893, 1
      %p897 = scmp.eq.s32.totalorder %s93, 1
      %p898 = scmp.ne.s32.totalorder %s893, %s895
      %p899 = scmp.eq.s32.totalorder %s93, 0
      %p900 = por %p898, %p899
      %p901 = scmp.ne.s32.totalorder %s893, %s895
      %p902 = scmp.eq.s32.totalorder %s98, 1
      %p903 = por %p901, %p902
      %p904 = scmp.ne.s32.totalorder %s895, %s896
      %p905 = scmp.eq.s32.totalorder %s98, 0
      %p906 = por %p904, %p905
      %p907 = scmp.ne.s32.totalorder %s895, %s896
      %p908 = scmp.eq.s32.totalorder %s99, 1
      %p909 = por %p907, %p908
      %p911 = scmp.ne.s32.totalorder %s896, %s910
      %p912 = scmp.eq.s32.totalorder %s99, 0
      %p913 = por %p911, %p912
      %s915 = sadd.s32 %s914, 1
      %p918 = scmp.eq.s32.totalorder %s93, 1
      %p919 = scmp.ne.s32.totalorder %s914, %s916
      %p920 = scmp.eq.s32.totalorder %s93, 0
      %p921 = por %p919, %p920
      %p922 = scmp.ne.s32.totalorder %s914, %s916
      %p923 = scmp.eq.s32.totalorder %s98, 1
      %p924 = por %p922, %p923
      %p925 = scmp.ne.s32.totalorder %s916, %s917
      %p926 = scmp.eq.s32.totalorder %s98, 0
      %p927 = por %p925, %p926
      %p928 = scmp.ne.s32.totalorder %s916, %s917
      %p929 = scmp.eq.s32.totalorder %s99, 1
      %p930 = por %p928, %p929
      %p932 = scmp.ne.s32.totalorder %s917, %s931
      %p933 = scmp.eq.s32.totalorder %s99, 0
      %p934 = por %p932, %p933
      %s936 = sadd.s32 %s935, 1
      %p939 = scmp.eq.s32.totalorder %s93, 1
      %p940 = scmp.ne.s32.totalorder %s935, %s937
      %p941 = scmp.eq.s32.totalorder %s93, 0
      %p942 = por %p940, %p941
      %p943 = scmp.ne.s32.totalorder %s935, %s937
      %p944 = scmp.eq.s32.totalorder %s98, 1
      %p945 = por %p943, %p944
      %p946 = scmp.ne.s32.totalorder %s937, %s938
      %p947 = scmp.eq.s32.totalorder %s98, 0
      %p948 = por %p946, %p947
      %p949 = scmp.ne.s32.totalorder %s937, %s938
      %p950 = scmp.eq.s32.totalorder %s99, 1
      %p951 = por %p949, %p950
      %p953 = scmp.ne.s32.totalorder %s938, %s952
      %p954 = scmp.eq.s32.totalorder %s99, 0
      %p955 = por %p953, %p954
      %s956 = ssub.s32 %s93, %s100
      %p957 = scmp.eq.s32.totalorder %s956, 0
      %s959 = sadd.s32 %s958, 1
      %s960 = scalar_select %p957, %s958, %s959
      %p963 = pneg %p957
      %p964 = scmp.eq.s32.totalorder %s93, 1
      %p965 = por %p963, %p964
      %p966 = scmp.ne.s32.totalorder %s958, %s961
      %p967 = scmp.eq.s32.totalorder %s93, 0
      %p968 = por %p966, %p967
      %p969 = scmp.ne.s32.totalorder %s958, %s961
      %p970 = scmp.eq.s32.totalorder %s98, 1
      %p971 = por %p969, %p970
      %p972 = scmp.ne.s32.totalorder %s961, %s962
      %p973 = scmp.eq.s32.totalorder %s98, 0
      %p974 = por %p972, %p973
      %p975 = scmp.ne.s32.totalorder %s961, %s962
      %p976 = scmp.eq.s32.totalorder %s99, 1
      %p977 = por %p975, %p976
      %p979 = scmp.ne.s32.totalorder %s962, %s978
      %p980 = scmp.eq.s32.totalorder %s99, 0
      %p981 = por %p979, %p980
      %s982 = ssub.s32 %s93, %s100
      %p983 = scmp.eq.s32.totalorder %s982, 0
      %s985 = sadd.s32 %s984, 1
      %s986 = scalar_select %p983, %s984, %s985
      %p989 = pneg %p983
      %p990 = scmp.eq.s32.totalorder %s93, 1
      %p991 = por %p989, %p990
      %p992 = scmp.ne.s32.totalorder %s984, %s987
      %p993 = scmp.eq.s32.totalorder %s93, 0
      %p994 = por %p992, %p993
      %p995 = scmp.ne.s32.totalorder %s984, %s987
      %p996 = scmp.eq.s32.totalorder %s98, 1
      %p997 = por %p995, %p996
      %p998 = scmp.ne.s32.totalorder %s987, %s988
      %p999 = scmp.eq.s32.totalorder %s98, 0
      %p1000 = por %p998, %p999
      %p1001 = scmp.ne.s32.totalorder %s987, %s988
      %p1002 = scmp.eq.s32.totalorder %s99, 1
      %p1003 = por %p1001, %p1002
      %p1005 = scmp.ne.s32.totalorder %s988, %s1004
      %p1006 = scmp.eq.s32.totalorder %s99, 0
      %p1007 = por %p1005, %p1006
      %p1008 = scmp.le.s32.totalorder 1, %s93
      %p1009 = scmp.lt.s32.totalorder %s93, 3
      %p1010 = pnand %p1008, %p1009
      %p1011 = pneg %p1010
      // Predicated region
      $region9: #{decoder_forward.2} parent=5 // pred_check
        _
      $region10: #{decoder_forward.2} parent=5 // pred_check_branch
        %1013 = sbr.rel (%p1010) target = $region12
      $region11: #{decoder_forward.2} parent=5 // pred_region
        %s1014 = ssub.s32 %s93, 1
        // Predicated region
        $region13: #{decoder_forward.2} parent=11 // pred_check
          %p1015 = pneg %p192
        $region14: #{decoder_forward.2} parent=11 // pred_check_branch
          %1017 = sbr.rel (%p1015) target = $region16
        $region15: #{decoder_forward.2} parent=11 // pred_region
          _
        $region16: #{decoder_forward.2} parent=11 // pred_fallthru
          _
        // Predicated region
        $region17: #{decoder_forward.2} parent=11 // pred_check
          %p1018 = pneg %p213
        $region18: #{decoder_forward.2} parent=11 // pred_check_branch
          %1020 = sbr.rel (%p1018) target = $region20
        $region19: #{decoder_forward.2} parent=11 // pred_region
          _
        $region20: #{decoder_forward.2} parent=11 // pred_fallthru
          _
        // Predicated region
        $region21: #{decoder_forward.2} parent=11 // pred_check
          %p1021 = pneg %p234
        $region22: #{decoder_forward.2} parent=11 // pred_check_branch
          %1023 = sbr.rel (%p1021) target = $region24
        $region23: #{decoder_forward.2} parent=11 // pred_region
          _
        $region24: #{decoder_forward.2} parent=11 // pred_fallthru
          _
        // Predicated region
        $region25: #{decoder_forward.2} parent=11 // pred_check
          %p1024 = pneg %p255
        $region26: #{decoder_forward.2} parent=11 // pred_check_branch
          %1026 = sbr.rel (%p1024) target = $region28
        $region27: #{decoder_forward.2} parent=11 // pred_region
          _
        $region28: #{decoder_forward.2} parent=11 // pred_fallthru
          _
        // Predicated region
        $region29: #{decoder_forward.2} parent=11 // pred_check
          %p1027 = pneg %p276
        $region30: #{decoder_forward.2} parent=11 // pred_check_branch
          %1029 = sbr.rel (%p1027) target = $region32
        $region31: #{decoder_forward.2} parent=11 // pred_region
          _
        $region32: #{decoder_forward.2} parent=11 // pred_fallthru
          _
        // Predicated region
        $region33: #{decoder_forward.2} parent=11 // pred_check
          %p1030 = pneg %p297
        $region34: #{decoder_forward.2} parent=11 // pred_check_branch
          %1032 = sbr.rel (%p1030) target = $region36
        $region35: #{decoder_forward.2} parent=11 // pred_region
          _
        $region36: #{decoder_forward.2} parent=11 // pred_fallthru
          _
        // Predicated region
        $region37: #{decoder_forward.2} parent=11 // pred_check
          %p1033 = pneg %p318
        $region38: #{decoder_forward.2} parent=11 // pred_check_branch
          %1035 = sbr.rel (%p1033) target = $region40
        $region39: #{decoder_forward.2} parent=11 // pred_region
          _
        $region40: #{decoder_forward.2} parent=11 // pred_fallthru
          _
        // Predicated region
        $region41: #{decoder_forward.2} parent=11 // pred_check
          %p1036 = pneg %p339
        $region42: #{decoder_forward.2} parent=11 // pred_check_branch
          %1038 = sbr.rel (%p1036) target = $region44
        $region43: #{decoder_forward.2} parent=11 // pred_region
          _
        $region44: #{decoder_forward.2} parent=11 // pred_fallthru
          _
        // Predicated region
        $region45: #{decoder_forward.2} parent=11 // pred_check
          %p1039 = pneg %p360
        $region46: #{decoder_forward.2} parent=11 // pred_check_branch
          %1041 = sbr.rel (%p1039) target = $region48
        $region47: #{decoder_forward.2} parent=11 // pred_region
          _
        $region48: #{decoder_forward.2} parent=11 // pred_fallthru
          _
        // Predicated region
        $region49: #{decoder_forward.2} parent=11 // pred_check
          %p1042 = pneg %p381
        $region50: #{decoder_forward.2} parent=11 // pred_check_branch
          %1044 = sbr.rel (%p1042) target = $region52
        $region51: #{decoder_forward.2} parent=11 // pred_region
          _
        $region52: #{decoder_forward.2} parent=11 // pred_fallthru
          _
        // Predicated region
        $region53: #{decoder_forward.2} parent=11 // pred_check
          %p1045 = pneg %p402
        $region54: #{decoder_forward.2} parent=11 // pred_check_branch
          %1047 = sbr.rel (%p1045) target = $region56
        $region55: #{decoder_forward.2} parent=11 // pred_region
          _
        $region56: #{decoder_forward.2} parent=11 // pred_fallthru
          _
        // Predicated region
        $region57: #{decoder_forward.2} parent=11 // pred_check
          %p1048 = pneg %p423
        $region58: #{decoder_forward.2} parent=11 // pred_check_branch
          %1050 = sbr.rel (%p1048) target = $region60
        $region59: #{decoder_forward.2} parent=11 // pred_region
          _
        $region60: #{decoder_forward.2} parent=11 // pred_fallthru
          _
        // Predicated region
        $region61: #{decoder_forward.2} parent=11 // pred_check
          %p1051 = pneg %p444
        $region62: #{decoder_forward.2} parent=11 // pred_check_branch
          %1053 = sbr.rel (%p1051) target = $region64
        $region63: #{decoder_forward.2} parent=11 // pred_region
          _
        $region64: #{decoder_forward.2} parent=11 // pred_fallthru
          _
        // Predicated region
        $region65: #{decoder_forward.2} parent=11 // pred_check
          %p1054 = pneg %p465
        $region66: #{decoder_forward.2} parent=11 // pred_check_branch
          %1056 = sbr.rel (%p1054) target = $region68
        $region67: #{decoder_forward.2} parent=11 // pred_region
          _
        $region68: #{decoder_forward.2} parent=11 // pred_fallthru
          _
        // Predicated region
        $region69: #{decoder_forward.2} parent=11 // pred_check
          %p1057 = pneg %p486
        $region70: #{decoder_forward.2} parent=11 // pred_check_branch
          %1059 = sbr.rel (%p1057) target = $region72
        $region71: #{decoder_forward.2} parent=11 // pred_region
          _
        $region72: #{decoder_forward.2} parent=11 // pred_fallthru
          _
        // Predicated region
        $region73: #{decoder_forward.2} parent=11 // pred_check
          %p1060 = pneg %p507
        $region74: #{decoder_forward.2} parent=11 // pred_check_branch
          %1062 = sbr.rel (%p1060) target = $region76
        $region75: #{decoder_forward.2} parent=11 // pred_region
          _
        $region76: #{decoder_forward.2} parent=11 // pred_fallthru
          _
        // Predicated region
        $region77: #{decoder_forward.2} parent=11 // pred_check
          %p1063 = pneg %p528
        $region78: #{decoder_forward.2} parent=11 // pred_check_branch
          %1065 = sbr.rel (%p1063) target = $region80
        $region79: #{decoder_forward.2} parent=11 // pred_region
          _
        $region80: #{decoder_forward.2} parent=11 // pred_fallthru
          _
        // Predicated region
        $region81: #{decoder_forward.2} parent=11 // pred_check
          %p1066 = pneg %p549
        $region82: #{decoder_forward.2} parent=11 // pred_check_branch
          %1068 = sbr.rel (%p1066) target = $region84
        $region83: #{decoder_forward.2} parent=11 // pred_region
          _
        $region84: #{decoder_forward.2} parent=11 // pred_fallthru
          _
        // Predicated region
        $region85: #{decoder_forward.2} parent=11 // pred_check
          %p1069 = pneg %p570
        $region86: #{decoder_forward.2} parent=11 // pred_check_branch
          %1071 = sbr.rel (%p1069) target = $region88
        $region87: #{decoder_forward.2} parent=11 // pred_region
          _
        $region88: #{decoder_forward.2} parent=11 // pred_fallthru
          _
        // Predicated region
        $region89: #{decoder_forward.2} parent=11 // pred_check
          %p1072 = pneg %p591
        $region90: #{decoder_forward.2} parent=11 // pred_check_branch
          %1074 = sbr.rel (%p1072) target = $region92
        $region91: #{decoder_forward.2} parent=11 // pred_region
          _
        $region92: #{decoder_forward.2} parent=11 // pred_fallthru
          _
        // Predicated region
        $region93: #{decoder_forward.2} parent=11 // pred_check
          %p1075 = pneg %p612
        $region94: #{decoder_forward.2} parent=11 // pred_check_branch
          %1077 = sbr.rel (%p1075) target = $region96
        $region95: #{decoder_forward.2} parent=11 // pred_region
          _
        $region96: #{decoder_forward.2} parent=11 // pred_fallthru
          _
        // Predicated region
        $region97: #{decoder_forward.2} parent=11 // pred_check
          %p1078 = pneg %p633
        $region98: #{decoder_forward.2} parent=11 // pred_check_branch
          %1080 = sbr.rel (%p1078) target = $region100
        $region99: #{decoder_forward.2} parent=11 // pred_region
          _
        $region100: #{decoder_forward.2} parent=11 // pred_fallthru
          _
        // Predicated region
        $region101: #{decoder_forward.2} parent=11 // pred_check
          %p1081 = pneg %p654
        $region102: #{decoder_forward.2} parent=11 // pred_check_branch
          %1083 = sbr.rel (%p1081) target = $region104
        $region103: #{decoder_forward.2} parent=11 // pred_region
          _
        $region104: #{decoder_forward.2} parent=11 // pred_fallthru
          _
        // Predicated region
        $region105: #{decoder_forward.2} parent=11 // pred_check
          %p1084 = pneg %p675
        $region106: #{decoder_forward.2} parent=11 // pred_check_branch
          %1086 = sbr.rel (%p1084) target = $region108
        $region107: #{decoder_forward.2} parent=11 // pred_region
          _
        $region108: #{decoder_forward.2} parent=11 // pred_fallthru
          _
        // Predicated region
        $region109: #{decoder_forward.2} parent=11 // pred_check
          %p1087 = pneg %p696
        $region110: #{decoder_forward.2} parent=11 // pred_check_branch
          %1089 = sbr.rel (%p1087) target = $region112
        $region111: #{decoder_forward.2} parent=11 // pred_region
          _
        $region112: #{decoder_forward.2} parent=11 // pred_fallthru
          _
        // Predicated region
        $region113: #{decoder_forward.2} parent=11 // pred_check
          %p1090 = pneg %p717
        $region114: #{decoder_forward.2} parent=11 // pred_check_branch
          %1092 = sbr.rel (%p1090) target = $region116
        $region115: #{decoder_forward.2} parent=11 // pred_region
          _
        $region116: #{decoder_forward.2} parent=11 // pred_fallthru
          _
        // Predicated region
        $region117: #{decoder_forward.2} parent=11 // pred_check
          %p1093 = pneg %p738
        $region118: #{decoder_forward.2} parent=11 // pred_check_branch
          %1095 = sbr.rel (%p1093) target = $region120
        $region119: #{decoder_forward.2} parent=11 // pred_region
          _
        $region120: #{decoder_forward.2} parent=11 // pred_fallthru
          _
        // Predicated region
        $region121: #{decoder_forward.2} parent=11 // pred_check
          %p1096 = pneg %p759
        $region122: #{decoder_forward.2} parent=11 // pred_check_branch
          %1098 = sbr.rel (%p1096) target = $region124
        $region123: #{decoder_forward.2} parent=11 // pred_region
          _
        $region124: #{decoder_forward.2} parent=11 // pred_fallthru
          _
        // Predicated region
        $region125: #{decoder_forward.2} parent=11 // pred_check
          %p1099 = pneg %p780
        $region126: #{decoder_forward.2} parent=11 // pred_check_branch
          %1101 = sbr.rel (%p1099) target = $region128
        $region127: #{decoder_forward.2} parent=11 // pred_region
          _
        $region128: #{decoder_forward.2} parent=11 // pred_fallthru
          _
        // Predicated region
        $region129: #{decoder_forward.2} parent=11 // pred_check
          %p1102 = pneg %p801
        $region130: #{decoder_forward.2} parent=11 // pred_check_branch
          %1104 = sbr.rel (%p1102) target = $region132
        $region131: #{decoder_forward.2} parent=11 // pred_region
          _
        $region132: #{decoder_forward.2} parent=11 // pred_fallthru
          _
        // Predicated region
        $region133: #{decoder_forward.2} parent=11 // pred_check
          %p1105 = pneg %p822
        $region134: #{decoder_forward.2} parent=11 // pred_check_branch
          %1107 = sbr.rel (%p1105) target = $region136
        $region135: #{decoder_forward.2} parent=11 // pred_region
          _
        $region136: #{decoder_forward.2} parent=11 // pred_fallthru
          _
        // Predicated region
        $region137: #{decoder_forward.2} parent=11 // pred_check
          %p1108 = pneg %p843
        $region138: #{decoder_forward.2} parent=11 // pred_check_branch
          %1110 = sbr.rel (%p1108) target = $region140
        $region139: #{decoder_forward.2} parent=11 // pred_region
          _
        $region140: #{decoder_forward.2} parent=11 // pred_fallthru
          _
        // Predicated region
        $region141: #{decoder_forward.2} parent=11 // pred_check
          %p1111 = pneg %p864
        $region142: #{decoder_forward.2} parent=11 // pred_check_branch
          %1113 = sbr.rel (%p1111) target = $region144
        $region143: #{decoder_forward.2} parent=11 // pred_region
          _
        $region144: #{decoder_forward.2} parent=11 // pred_fallthru
          _
        // Predicated region
        $region145: #{decoder_forward.2} parent=11 // pred_check
          %p1114 = pneg %p885
        $region146: #{decoder_forward.2} parent=11 // pred_check_branch
          %1116 = sbr.rel (%p1114) target = $region148
        $region147: #{decoder_forward.2} parent=11 // pred_region
          _
        $region148: #{decoder_forward.2} parent=11 // pred_fallthru
          _
        // Predicated region
        $region149: #{decoder_forward.2} parent=11 // pred_check
          %p1117 = pneg %p906
        $region150: #{decoder_forward.2} parent=11 // pred_check_branch
          %1119 = sbr.rel (%p1117) target = $region152
        $region151: #{decoder_forward.2} parent=11 // pred_region
          _
        $region152: #{decoder_forward.2} parent=11 // pred_fallthru
          _
        // Predicated region
        $region153: #{decoder_forward.2} parent=11 // pred_check
          %p1120 = pneg %p927
        $region154: #{decoder_forward.2} parent=11 // pred_check_branch
          %1122 = sbr.rel (%p1120) target = $region156
        $region155: #{decoder_forward.2} parent=11 // pred_region
          _
        $region156: #{decoder_forward.2} parent=11 // pred_fallthru
          _
        // Predicated region
        $region157: #{decoder_forward.2} parent=11 // pred_check
          %p1123 = pneg %p948
        $region158: #{decoder_forward.2} parent=11 // pred_check_branch
          %1125 = sbr.rel (%p1123) target = $region160
        $region159: #{decoder_forward.2} parent=11 // pred_region
          _
        $region160: #{decoder_forward.2} parent=11 // pred_fallthru
          _
      $region12: #{decoder_forward.2} parent=5 // pred_fallthru
        _
      %p1126 = scmp.lt.s32.totalorder %s93, 2
      // Predicated region
      $region161: #{decoder_forward.2} parent=5 // pred_check
        %p1127 = pneg %p1126
      $region162: #{decoder_forward.2} parent=5 // pred_check_branch
        %1129 = sbr.rel (%p1127) target = $region164
      $region163: #{decoder_forward.2} parent=5 // pred_region
        // Predicated region
        $region165: #{decoder_forward.2} parent=163 // pred_check
          %p1130 = pneg %p113
        $region166: #{decoder_forward.2} parent=163 // pred_check_branch
          %1132 = sbr.rel (%p1130) target = $region168
        $region167: #{decoder_forward.2} parent=163 // pred_region
          %p1133 = scmp.lt.s32.totalorder %s93, 1
          %s1134 = scalar_select %p1133, %s93, 1
          %s1135 = smul.addr %s1134, 8
          %s1136 = scalar_lea.vmem %s1, %s1135
        $region168: #{decoder_forward.2} parent=163 // pred_fallthru
          _
        // Predicated region
        $region169: #{decoder_forward.2} parent=163 // pred_check
          %p1137 = pneg %p139
        $region170: #{decoder_forward.2} parent=163 // pred_check_branch
          %1139 = sbr.rel (%p1137) target = $region172
        $region171: #{decoder_forward.2} parent=163 // pred_region
          %p1140 = scmp.lt.s32.totalorder %s93, 1
          %s1141 = scalar_select %p1140, %s93, 1
          %s1142 = smul.addr %s1141, 2
          %s1143 = smul.addr %s1142, 8
          %s1144 = scalar_lea.vmem %s3, %s1143
        $region172: #{decoder_forward.2} parent=163 // pred_fallthru
          _
        // Predicated region
        $region173: #{decoder_forward.2} parent=163 // pred_check
          %p1145 = pneg %p165
        $region174: #{decoder_forward.2} parent=163 // pred_check_branch
          %1147 = sbr.rel (%p1145) target = $region176
        $region175: #{decoder_forward.2} parent=163 // pred_region
          %p1148 = scmp.lt.s32.totalorder %s93, 1
          %s1149 = scalar_select %p1148, %s93, 1
          %s1150 = smul.addr %s1149, 2
          %s1151 = smul.addr %s1150, 8
          %s1152 = scalar_lea.vmem %s5, %s1151
        $region176: #{decoder_forward.2} parent=163 // pred_fallthru
          _
      $region164: #{decoder_forward.2} parent=5 // pred_fallthru
        _
      %p1153 = scmp.le.s32.totalorder 1, %s93
      %p1154 = scmp.lt.s32.totalorder %s93, 3
      %p1155 = pnand %p1153, %p1154
      %p1156 = pneg %p1155
      // Predicated region
      $region177: #{decoder_forward.2} parent=5 // pred_check
        _
      $region178: #{decoder_forward.2} parent=5 // pred_check_branch
        %1158 = sbr.rel (%p1155) target = $region180
      $region179: #{decoder_forward.2} parent=5 // pred_region
        %s1159 = ssub.s32 %s93, 1
        %p1160 = scmp.lt.s32.totalorder %s98, 1
        %s1161 = scalar_select %p1160, %s98, 1
        %s1162 = smul.addr %s1161, 8
        %s1163 = scalar_lea.vmem %s1, %s1162
        %p1164 = pneg %p119
        %p1165 = pneg %p116
        %p1166 = scmp.lt.s32.totalorder %s98, 1
        %s1167 = scalar_select %p1166, %s98, 1
        %s1168 = smul.addr %s1167, 2
        %s1169 = smul.addr %s1168, 8
        %s1170 = scalar_lea.vmem %s3, %s1169
        %p1171 = pneg %p145
        %p1172 = pneg %p142
        %p1173 = scmp.lt.s32.totalorder %s98, 1
        %s1174 = scalar_select %p1173, %s98, 1
        %s1175 = smul.addr %s1174, 2
        %s1176 = smul.addr %s1175, 8
        %s1177 = scalar_lea.vmem %s5, %s1176
        %p1178 = pneg %p171
        %p1179 = pneg %p168
        %p1180 = pneg %p192
        %p1181 = pneg %p189
        %p1182 = pneg %p213
        %p1183 = pneg %p210
        %p1184 = pneg %p234
        %p1185 = pneg %p231
        %p1186 = pneg %p255
        %p1187 = pneg %p252
        %p1188 = pneg %p276
        %p1189 = pneg %p273
        %p1190 = pneg %p297
        %p1191 = pneg %p294
        %p1192 = pneg %p318
        %p1193 = pneg %p315
        %p1194 = pneg %p339
        %p1195 = pneg %p336
        %p1196 = pneg %p360
        %p1197 = pneg %p357
        %p1198 = pneg %p381
        %p1199 = pneg %p378
        %p1200 = pneg %p402
        %p1201 = pneg %p399
        %p1202 = pneg %p423
        %p1203 = pneg %p420
        %p1204 = pneg %p444
        %p1205 = pneg %p441
        %p1206 = pneg %p465
        %p1207 = pneg %p462
        %p1208 = pneg %p486
        %p1209 = pneg %p483
        %p1210 = pneg %p507
        %p1211 = pneg %p504
        %p1212 = pneg %p528
        %p1213 = pneg %p525
        %p1214 = pneg %p549
        %p1215 = pneg %p546
        %p1216 = pneg %p570
        %p1217 = pneg %p567
        %p1218 = pneg %p591
        %p1219 = pneg %p588
        %p1220 = pneg %p612
        %p1221 = pneg %p609
        %p1222 = pneg %p633
        %p1223 = pneg %p630
        %p1224 = pneg %p654
        %p1225 = pneg %p651
        %p1226 = pneg %p675
        %p1227 = pneg %p672
        %p1228 = pneg %p696
        %p1229 = pneg %p693
        %p1230 = pneg %p717
        %p1231 = pneg %p714
        %p1232 = pneg %p738
        %p1233 = pneg %p735
        %p1234 = pneg %p759
        %p1235 = pneg %p756
        %p1236 = pneg %p780
        %p1237 = pneg %p777
        %p1238 = pneg %p801
        %p1239 = pneg %p798
        %p1240 = pneg %p822
        %p1241 = pneg %p819
        %p1242 = pneg %p843
        %p1243 = pneg %p840
        %p1244 = pneg %p864
        %p1245 = pneg %p861
        %p1246 = pneg %p885
        %p1247 = pneg %p882
        %p1248 = pneg %p906
        %p1249 = pneg %p903
        %p1250 = pneg %p927
        %p1251 = pneg %p924
        %p1252 = pneg %p948
        %p1253 = pneg %p945
        %p1254 = pneg %p974
        %p1255 = pneg %p971
        %p1256 = scmp.lt.s32.totalorder %s98, 1
        %s1257 = scalar_select %p1256, %s98, 1
        %s1258 = smul.addr %s1257, 8
        %s1259 = scalar_lea.vmem %s81, %s1258
        %p1260 = pneg %p1000
        %p1261 = pneg %p997
        %s1262 = sand.u32 %s987, 1
        %s1263 = scalar_lea.sflag [#allocation3], %s1262
        %s1264 = sand.u32 %s987, 1
        %s1265 = smul.addr %s1264, 8
        %s1266 = scalar_lea.vmem [#allocation2], %s1265
        %p1267 = scmp.lt.s32.totalorder %s98, 1
        %s1268 = scalar_select %p1267, %s98, 1
        %s1269 = smul.addr %s1268, 8
        %s1270 = scalar_lea.vmem %s1, %s1269
        %p1271 = scmp.lt.s32.totalorder %s98, 1
        %s1272 = scalar_select %p1271, %s98, 1
        %s1273 = smul.addr %s1272, 2
        %s1274 = smul.addr %s1273, 8
        %s1275 = scalar_lea.vmem %s3, %s1274
        %p1276 = scmp.lt.s32.totalorder %s98, 1
        %s1277 = scalar_select %p1276, %s98, 1
        %s1278 = smul.addr %s1277, 2
        %s1279 = smul.addr %s1278, 8
        %s1280 = scalar_lea.vmem %s5, %s1279
        %p1281 = scmp.lt.s32.totalorder %s98, 1
        %s1282 = scalar_select %p1281, %s98, 1
        %s1283 = smul.addr %s1282, 8
        %s1284 = scalar_lea.vmem %s81, %s1283
        %v1285 = vld [vmem:[%s1270] sm:$0xff]
        %v1286 = vld [vmem:[%s1275] sm:$0xff]
        %v1287 = vld [vmem:[%s1275 + $0x8] sm:$0xff]
        %v1288 = vld [vmem:[%s1280] sm:$0xff]
        %v1289 = vld [vmem:[%s1280 + $0x8] sm:$0xff]
        %v1290 = vld [vmem:[%s9] sm:$0xff]
        %v1291 = vld [vmem:[%s9 + $0x8] sm:$0xff]
        %v1292 = vld [vmem:[%s11] sm:$0x1]
        %v1294 = vlaneseq
        %v1295 = vshrl.u32 %v1294, 7
        %v1296 = vsub.s32 0, %v1295
        %v1297 = vrot.slane %v1292, %v1296
        %vm1299 = vcmask 130048
        %v1301 = vsel %vm1299, %v1285, 0
        %1303 = vmatprep.subr.mxu0 0.0
        %1304 = vmatpush1.msra.mxu0 %v1290
        %1305 = vmatprep.subr.mxu0 0.0
        %1306 = vmatpush1.msra.mxu0 %v1291
        %1307 = vmatprep.subr.mxu0 0.0
        %1308 = vmatpush1.msra.mxu0 0.0
        %1309 = vmatprep.subr.mxu0 0.0
        %1310 = vmatpush1.msra.mxu0 0.0
        %1311 = vmatprep.subr.mxu0 0.0
        %1312 = vmatpush1.msra.mxu0 0.0
        %1313 = vmatprep.subr.mxu0 0.0
        %1314 = vmatpush1.msra.mxu0 0.0
        %1315 = vmatprep.subr.mxu0 0.0
        %1316 = vmatpush1.msra.mxu0 0.0
        %1317 = vmatprep.subr.mxu0 0.0
        %1318 = vmatpush1.msra.mxu0 0.0
        %1319 = vmatprep.subr.mxu0 0.0
        %1320 = vmatpush1.msra.mxu0 0.0
        %1321 = vmatprep.subr.mxu0 0.0
        %1322 = vmatpush1.msra.mxu0 0.0
        %1323 = vmatprep.subr.mxu0 0.0
        %1324 = vmatpush1.msra.mxu0 0.0
        %1325 = vmatprep.subr.mxu0 0.0
        %1326 = vmatpush1.msra.mxu0 0.0
        %1327 = vmatprep.subr.mxu0 0.0
        %1328 = vmatpush1.msra.mxu0 0.0
        %1329 = vmatprep.subr.mxu0 0.0
        %1330 = vmatpush1.msra.mxu0 0.0
        %1331 = vmatprep.subr.mxu0 0.0
        %1332 = vmatpush1.msra.mxu0 0.0
        %1333 = vmatprep.subr.mxu0 0.0
        %1334 = vmatpush1.msra.mxu0 0.0
        %1335 = vmatprep.subr.mxu0 0.0
        %1336 = vmatpush1.msra.mxu0 0.0
        %1337 = vmatprep.subr.mxu0 0.0
        %1338 = vmatpush1.msra.mxu0 0.0
        %1339 = vmatprep.subr.mxu0 0.0
        %1340 = vmatpush1.msra.mxu0 0.0
        %1341 = vmatprep.subr.mxu0 0.0
        %1342 = vmatpush1.msra.mxu0 0.0
        %1343 = vmatprep.subr.mxu0 0.0
        %1344 = vmatpush1.msra.mxu0 0.0
        %1345 = vmatprep.subr.mxu0 0.0
        %1346 = vmatpush1.msra.mxu0 0.0
        %1347 = vmatprep.subr.mxu0 0.0
        %1348 = vmatpush1.msra.mxu0 0.0
        %1349 = vmatprep.subr.mxu0 0.0
        %1350 = vmatpush1.msra.mxu0 0.0
        %1351 = vmatprep.subr.mxu0 0.0
        %1352 = vmatpush1.msra.mxu0 0.0
        %1353 = vmatprep.subr.mxu0 0.0
        %1354 = vmatpush1.msra.mxu0 0.0
        %1355 = vmatprep.subr.mxu0 0.0
        %1356 = vmatpush1.msra.mxu0 0.0
        %1357 = vmatprep.subr.mxu0 0.0
        %1358 = vmatpush1.msra.mxu0 0.0
        %1359 = vmatprep.subr.mxu0 0.0
        %1360 = vmatpush1.msra.mxu0 0.0
        %1361 = vmatprep.subr.mxu0 0.0
        %1362 = vmatpush1.msra.mxu0 0.0
        %1363 = vmatprep.subr.mxu0 0.0
        %1364 = vmatpush1.msra.mxu0 0.0
        %1365 = vmatprep.subr.mxu0 0.0
        %1366 = vmatpush1.msra.mxu0 0.0
        %1367 = vmatprep.mubr.f32.mxu0 0.0
        %1368 = vmatmul.mubr.f32.gmra.mrb[0].mxu0 %v1301
        %v1369 = vpop.f32.mrb[0].mxu0
        %v1370 = vadd.f32 %v1297, %v1369
        %v1371 = vpop.f32.mrb[0].mxu0
        %1372 = vdwg.mxu0
        %1374 = vrot.lane.b32.xlu0 %v1370, 120
        %v1375 = vpop.permute.xlu0 %1374
        %1376 = vrot.lane.b32.xlu0 %v1370, 112
        %v1377 = vpop.permute.xlu0 %1376
        %vm1378 = vcmask 64512
        %v1379 = vsel %vm1378, %v1370, 0
        %v1381 = vsel %vm1378, %v1377, 0
        %1383 = vmatprep.subr.mxu0 0.0
        %1384 = vmatpush1.xpose.msra.mxu0 %v1381
        %1385 = vmatprep.subr.mxu0 0.0
        %1386 = vmatpush1.xpose.msra.mxu0 0.0
        %1387 = vmatprep.subr.mxu0 0.0
        %1388 = vmatpush1.xpose.msra.mxu0 0.0
        %1389 = vmatprep.subr.mxu0 0.0
        %1390 = vmatpush1.xpose.msra.mxu0 0.0
        %1391 = vmatprep.subr.mxu0 0.0
        %1392 = vmatpush1.xpose.msra.mxu0 0.0
        %1393 = vmatprep.subr.mxu0 0.0
        %1394 = vmatpush1.xpose.msra.mxu0 0.0
        %1395 = vmatprep.subr.mxu0 0.0
        %1396 = vmatpush1.xpose.msra.mxu0 0.0
        %1397 = vmatprep.subr.mxu0 0.0
        %1398 = vmatpush1.xpose.msra.mxu0 0.0
        %1399 = vmatprep.subr.mxu0 0.0
        %1400 = vmatpush1.xpose.msra.mxu0 0.0
        %1401 = vmatprep.subr.mxu0 0.0
        %1402 = vmatpush1.xpose.msra.mxu0 0.0
        %1403 = vmatprep.subr.mxu0 0.0
        %1404 = vmatpush1.xpose.msra.mxu0 0.0
        %1405 = vmatprep.subr.mxu0 0.0
        %1406 = vmatpush1.xpose.msra.mxu0 0.0
        %1407 = vmatprep.subr.mxu0 0.0
        %1408 = vmatpush1.xpose.msra.mxu0 0.0
        %1409 = vmatprep.subr.mxu0 0.0
        %1410 = vmatpush1.xpose.msra.mxu0 0.0
        %1411 = vmatprep.subr.mxu0 0.0
        %1412 = vmatpush1.xpose.msra.mxu0 0.0
        %1413 = vmatprep.subr.mxu0 0.0
        %1414 = vmatpush1.xpose.msra.mxu0 0.0
        %1415 = vmatprep.subr.mxu0 0.0
        %1416 = vmatpush1.xpose.msra.mxu0 0.0
        %1417 = vmatprep.subr.mxu0 0.0
        %1418 = vmatpush1.xpose.msra.mxu0 0.0
        %1419 = vmatprep.subr.mxu0 0.0
        %1420 = vmatpush1.xpose.msra.mxu0 0.0
        %1421 = vmatprep.subr.mxu0 0.0
        %1422 = vmatpush1.xpose.msra.mxu0 0.0
        %1423 = vmatprep.subr.mxu0 0.0
        %1424 = vmatpush1.xpose.msra.mxu0 0.0
        %1425 = vmatprep.subr.mxu0 0.0
        %1426 = vmatpush1.xpose.msra.mxu0 0.0
        %1427 = vmatprep.subr.mxu0 0.0
        %1428 = vmatpush1.xpose.msra.mxu0 0.0
        %1429 = vmatprep.subr.mxu0 0.0
        %1430 = vmatpush1.xpose.msra.mxu0 0.0
        %1431 = vmatprep.subr.mxu0 0.0
        %1432 = vmatpush1.xpose.msra.mxu0 0.0
        %1433 = vmatprep.subr.mxu0 0.0
        %1434 = vmatpush1.xpose.msra.mxu0 0.0
        %1435 = vmatprep.subr.mxu0 0.0
        %1436 = vmatpush1.xpose.msra.mxu0 0.0
        %1437 = vmatprep.subr.mxu0 0.0
        %1438 = vmatpush1.xpose.msra.mxu0 0.0
        %1439 = vmatprep.subr.mxu0 0.0
        %1440 = vmatpush1.xpose.msra.mxu0 0.0
        %1441 = vmatprep.subr.mxu0 0.0
        %1442 = vmatpush1.xpose.msra.mxu0 0.0
        %1443 = vmatprep.subr.mxu0 0.0
        %1444 = vmatpush1.xpose.msra.mxu0 0.0
        %1445 = vmatprep.subr.mxu0 0.0
        %1446 = vmatpush1.xpose.msra.mxu0 0.0
        %1447 = vmatprep.mubr.f32.mxu0 0.0
        %1448 = vmatmul.mubr.f32.gmra.mrb[0].mxu0 %v1379
        %v1449 = vpop.f32.mrb[0].mxu0
        %v1450 = vadd.f32 0.0, %v1449
        %v1451 = vpop.f32.mrb[0].mxu0
        %1452 = vdwg.mxu0
        %1453 = vrot.lane.b32.xlu0 %v1375, 112
        %v1454 = vpop.permute.xlu0 %1453
        %v1455 = vsel %vm1378, %v1375, 0
        %v1457 = vsel %vm1378, %v1454, 0
        %1459 = vmatprep.subr.mxu0 0.0
        %1460 = vmatpush1.xpose.msra.mxu0 %v1457
        %1461 = vmatprep.subr.mxu0 0.0
        %1462 = vmatpush1.xpose.msra.mxu0 0.0
        %1463 = vmatprep.subr.mxu0 0.0
        %1464 = vmatpush1.xpose.msra.mxu0 0.0
        %1465 = vmatprep.subr.mxu0 0.0
        %1466 = vmatpush1.xpose.msra.mxu0 0.0
        %1467 = vmatprep.subr.mxu0 0.0
        %1468 = vmatpush1.xpose.msra.mxu0 0.0
        %1469 = vmatprep.subr.mxu0 0.0
        %1470 = vmatpush1.xpose.msra.mxu0 0.0
        %1471 = vmatprep.subr.mxu0 0.0
        %1472 = vmatpush1.xpose.msra.mxu0 0.0
        %1473 = vmatprep.subr.mxu0 0.0
        %1474 = vmatpush1.xpose.msra.mxu0 0.0
        %1475 = vmatprep.subr.mxu0 0.0
        %1476 = vmatpush1.xpose.msra.mxu0 0.0
        %1477 = vmatprep.subr.mxu0 0.0
        %1478 = vmatpush1.xpose.msra.mxu0 0.0
        %1479 = vmatprep.subr.mxu0 0.0
        %1480 = vmatpush1.xpose.msra.mxu0 0.0
        %1481 = vmatprep.subr.mxu0 0.0
        %1482 = vmatpush1.xpose.msra.mxu0 0.0
        %1483 = vmatprep.subr.mxu0 0.0
        %1484 = vmatpush1.xpose.msra.mxu0 0.0
        %1485 = vmatprep.subr.mxu0 0.0
        %1486 = vmatpush1.xpose.msra.mxu0 0.0
        %1487 = vmatprep.subr.mxu0 0.0
        %1488 = vmatpush1.xpose.msra.mxu0 0.0
        %1489 = vmatprep.subr.mxu0 0.0
        %1490 = vmatpush1.xpose.msra.mxu0 0.0
        %1491 = vmatprep.subr.mxu0 0.0
        %1492 = vmatpush1.xpose.msra.mxu0 0.0
        %1493 = vmatprep.subr.mxu0 0.0
        %1494 = vmatpush1.xpose.msra.mxu0 0.0
        %1495 = vmatprep.subr.mxu0 0.0
        %1496 = vmatpush1.xpose.msra.mxu0 0.0
        %1497 = vmatprep.subr.mxu0 0.0
        %1498 = vmatpush1.xpose.msra.mxu0 0.0
        %1499 = vmatprep.subr.mxu0 0.0
        %1500 = vmatpush1.xpose.msra.mxu0 0.0
        %1501 = vmatprep.subr.mxu0 0.0
        %1502 = vmatpush1.xpose.msra.mxu0 0.0
        %1503 = vmatprep.subr.mxu0 0.0
        %1504 = vmatpush1.xpose.msra.mxu0 0.0
        %1505 = vmatprep.subr.mxu0 0.0
        %1506 = vmatpush1.xpose.msra.mxu0 0.0
        %1507 = vmatprep.subr.mxu0 0.0
        %1508 = vmatpush1.xpose.msra.mxu0 0.0
        %1509 = vmatprep.subr.mxu0 0.0
        %1510 = vmatpush1.xpose.msra.mxu0 0.0
        %1511 = vmatprep.subr.mxu0 0.0
        %1512 = vmatpush1.xpose.msra.mxu0 0.0
        %1513 = vmatprep.subr.mxu0 0.0
        %1514 = vmatpush1.xpose.msra.mxu0 0.0
        %1515 = vmatprep.subr.mxu0 0.0
        %1516 = vmatpush1.xpose.msra.mxu0 0.0
        %1517 = vmatprep.subr.mxu0 0.0
        %1518 = vmatpush1.xpose.msra.mxu0 0.0
        %1519 = vmatprep.subr.mxu0 0.0
        %1520 = vmatpush1.xpose.msra.mxu0 0.0
        %1521 = vmatprep.subr.mxu0 0.0
        %1522 = vmatpush1.xpose.msra.mxu0 0.0
        %1523 = vmatprep.mubr.f32.mxu0 0.0
        %1524 = vmatmul.mubr.f32.gmra.mrb[0].mxu0 %v1455
        %v1525 = vpop.f32.mrb[0].mxu0
        %v1526 = vadd.f32 0.0, %v1525
        %v1527 = vpop.f32.mrb[0].mxu0
        %1528 = vdwg.mxu0
        %v1529 = vmul.f32 %v1450, 0.35355338
        %v1530 = vmul.f32 %v1526, 0.35355338
        %v1531 = vlaneseq
        %v1532 = vshrl.u32 %v1531, 7
        %vm1533 = vcmp.ge.s32.totalorder %v1532, 2
        %v1534 = vsel %vm1533, 1, 0
        %vm1535 = vcmp.ge.s32.totalorder %v1532, 4
        %v1536 = vsel %vm1535, 1, 0
        %v1537 = vadd.s32 %v1534, %v1536
        %vm1538 = vcmp.ge.s32.totalorder %v1532, 6
        %v1539 = vsel %vm1538, 1, 0
        %v1540 = vadd.s32 %v1537, %v1539
        %v1541 = vlaneseq
        %v1542 = vand.u32 %v1541, 127
        %vm1543 = vcmp.ge.s32.totalorder %v1542, 2
        %v1544 = vsel %vm1543, 1, 0
        %vm1545 = vcmp.ge.s32.totalorder %v1542, 4
        %v1546 = vsel %vm1545, 1, 0
        %v1547 = vadd.s32 %v1544, %v1546
        %vm1548 = vcmp.ge.s32.totalorder %v1542, 6
        %v1549 = vsel %vm1548, 1, 0
        %v1550 = vadd.s32 %v1547, %v1549
        %vm1551 = vcmp.eq.s32.totalorder %v1540, %v1550
        %v1552 = vsel %vm1551, 0.0, -1e+30
        %v1553 = vadd.f32 %v1529, %v1552
        %v1554 = vadd.f32 %v1530, %v1552
        %v1555 = vsel %vm1378, %v1553, -inf
        %1556 = vmax.xlane.f32.xlu0 %v1555
        %v1557 = vpop.xlane.xlu0 %1556
        %v1558 = vsel %vm1378, %v1554, -inf
        %1559 = vmax.xlane.f32.xlu0 %v1558
        %v1560 = vpop.xlane.xlu0 %1559
        %v1561 = vsub.f32 %v1553, %v1557
        %v1562 = vsub.f32 %v1554, %v1560
        %v1563 = vmul.f32 %v1561, 1.442695
        %v1564 = vpow.pop %v1563
        %v1565 = vmul.f32 %v1562, 1.442695
        %v1566 = vpow.pop %v1565
        %v1567 = vsel %vm1378, %v1564, 0.0
        %1568 = vadd.xlane.f32.xlu0 %v1567
        %v1569 = vpop.xlane.xlu0 %1568
        %v1570 = vsel %vm1378, %v1566, 0.0
        %1571 = vadd.xlane.f32.xlu0 %v1570
        %v1572 = vpop.xlane.xlu0 %1571
        %v1573 = vrcp.pop %v1569
        %v1574 = vmul.f32 %v1564, %v1573
        %v1575 = vrcp.pop %v1572
        %v1576 = vmul.f32 %v1566, %v1575
        %1577 = vrot.lane.b32.xlu0 %v1370, 96
        %v1578 = vpop.permute.xlu0 %1577
        %v1581 = vsel %vm1378, %v1574, 0
        %1583 = vmatprep.subr.mxu0 0.0
        %1584 = vmatpush1.msra.mxu0 %v1578
        %1585 = vmatprep.subr.mxu0 0.0
        %1586 = vmatpush1.msra.mxu0 0.0
        %1587 = vmatprep.subr.mxu0 0.0
        %1588 = vmatpush1.msra.mxu0 0.0
        %1589 = vmatprep.subr.mxu0 0.0
        %1590 = vmatpush1.msra.mxu0 0.0
        %1591 = vmatprep.subr.mxu0 0.0
        %1592 = vmatpush1.msra.mxu0 0.0
        %1593 = vmatprep.subr.mxu0 0.0
        %1594 = vmatpush1.msra.mxu0 0.0
        %1595 = vmatprep.subr.mxu0 0.0
        %1596 = vmatpush1.msra.mxu0 0.0
        %1597 = vmatprep.subr.mxu0 0.0
        %1598 = vmatpush1.msra.mxu0 0.0
        %1599 = vmatprep.subr.mxu0 0.0
        %1600 = vmatpush1.msra.mxu0 0.0
        %1601 = vmatprep.subr.mxu0 0.0
        %1602 = vmatpush1.msra.mxu0 0.0
        %1603 = vmatprep.subr.mxu0 0.0
        %1604 = vmatpush1.msra.mxu0 0.0
        %1605 = vmatprep.subr.mxu0 0.0
        %1606 = vmatpush1.msra.mxu0 0.0
        %1607 = vmatprep.subr.mxu0 0.0
        %1608 = vmatpush1.msra.mxu0 0.0
        %1609 = vmatprep.subr.mxu0 0.0
        %1610 = vmatpush1.msra.mxu0 0.0
        %1611 = vmatprep.subr.mxu0 0.0
        %1612 = vmatpush1.msra.mxu0 0.0
        %1613 = vmatprep.subr.mxu0 0.0
        %1614 = vmatpush1.msra.mxu0 0.0
        %1615 = vmatprep.subr.mxu0 0.0
        %1616 = vmatpush1.msra.mxu0 0.0
        %1617 = vmatprep.subr.mxu0 0.0
        %1618 = vmatpush1.msra.mxu0 0.0
        %1619 = vmatprep.subr.mxu0 0.0
        %1620 = vmatpush1.msra.mxu0 0.0
        %1621 = vmatprep.subr.mxu0 0.0
        %1622 = vmatpush1.msra.mxu0 0.0
        %1623 = vmatprep.subr.mxu0 0.0
        %1624 = vmatpush1.msra.mxu0 0.0
        %1625 = vmatprep.subr.mxu0 0.0
        %1626 = vmatpush1.msra.mxu0 0.0
        %1627 = vmatprep.subr.mxu0 0.0
        %1628 = vmatpush1.msra.mxu0 0.0
        %1629 = vmatprep.subr.mxu0 0.0
        %1630 = vmatpush1.msra.mxu0 0.0
        %1631 = vmatprep.subr.mxu0 0.0
        %1632 = vmatpush1.msra.mxu0 0.0
        %1633 = vmatprep.subr.mxu0 0.0
        %1634 = vmatpush1.msra.mxu0 0.0
        %1635 = vmatprep.subr.mxu0 0.0
        %1636 = vmatpush1.msra.mxu0 0.0
        %1637 = vmatprep.subr.mxu0 0.0
        %1638 = vmatpush1.msra.mxu0 0.0
        %1639 = vmatprep.subr.mxu0 0.0
        %1640 = vmatpush1.msra.mxu0 0.0
        %1641 = vmatprep.subr.mxu0 0.0
        %1642 = vmatpush1.msra.mxu0 0.0
        %1643 = vmatprep.subr.mxu0 0.0
        %1644 = vmatpush1.msra.mxu0 0.0
        %1645 = vmatprep.subr.mxu0 0.0
        %1646 = vmatpush1.msra.mxu0 0.0
        %1647 = vmatprep.mubr.f32.mxu0 0.0
        %1648 = vmatmul.mubr.f32.gmra.mrb[0].mxu0 %v1581
        %v1649 = vpop.f32.mrb[0].mxu0
        %v1650 = vadd.f32 0.0, %v1649
        %v1651 = vpop.f32.mrb[0].mxu0
        %1652 = vdwg.mxu0
        %1653 = vrot.lane.b32.xlu0 %v1375, 96
        %v1654 = vpop.permute.xlu0 %1653
        %v1657 = vsel %vm1378, %v1576, 0
        %1659 = vmatprep.subr.mxu0 0.0
        %1660 = vmatpush1.msra.mxu0 %v1654
        %1661 = vmatprep.subr.mxu0 0.0
        %1662 = vmatpush1.msra.mxu0 0.0
        %1663 = vmatprep.subr.mxu0 0.0
        %1664 = vmatpush1.msra.mxu0 0.0
        %1665 = vmatprep.subr.mxu0 0.0
        %1666 = vmatpush1.msra.mxu0 0.0
        %1667 = vmatprep.subr.mxu0 0.0
        %1668 = vmatpush1.msra.mxu0 0.0
        %1669 = vmatprep.subr.mxu0 0.0
        %1670 = vmatpush1.msra.mxu0 0.0
        %1671 = vmatprep.subr.mxu0 0.0
        %1672 = vmatpush1.msra.mxu0 0.0
        %1673 = vmatprep.subr.mxu0 0.0
        %1674 = vmatpush1.msra.mxu0 0.0
        %1675 = vmatprep.subr.mxu0 0.0
        %1676 = vmatpush1.msra.mxu0 0.0
        %1677 = vmatprep.subr.mxu0 0.0
        %1678 = vmatpush1.msra.mxu0 0.0
        %1679 = vmatprep.subr.mxu0 0.0
        %1680 = vmatpush1.msra.mxu0 0.0
        %1681 = vmatprep.subr.mxu0 0.0
        %1682 = vmatpush1.msra.mxu0 0.0
        %1683 = vmatprep.subr.mxu0 0.0
        %1684 = vmatpush1.msra.mxu0 0.0
        %1685 = vmatprep.subr.mxu0 0.0
        %1686 = vmatpush1.msra.mxu0 0.0
        %1687 = vmatprep.subr.mxu0 0.0
        %1688 = vmatpush1.msra.mxu0 0.0
        %1689 = vmatprep.subr.mxu0 0.0
        %1690 = vmatpush1.msra.mxu0 0.0
        %1691 = vmatprep.subr.mxu0 0.0
        %1692 = vmatpush1.msra.mxu0 0.0
        %1693 = vmatprep.subr.mxu0 0.0
        %1694 = vmatpush1.msra.mxu0 0.0
        %1695 = vmatprep.subr.mxu0 0.0
        %1696 = vmatpush1.msra.mxu0 0.0
        %1697 = vmatprep.subr.mxu0 0.0
        %1698 = vmatpush1.msra.mxu0 0.0
        %1699 = vmatprep.subr.mxu0 0.0
        %1700 = vmatpush1.msra.mxu0 0.0
        %1701 = vmatprep.subr.mxu0 0.0
        %1702 = vmatpush1.msra.mxu0 0.0
        %1703 = vmatprep.subr.mxu0 0.0
        %1704 = vmatpush1.msra.mxu0 0.0
        %1705 = vmatprep.subr.mxu0 0.0
        %1706 = vmatpush1.msra.mxu0 0.0
        %1707 = vmatprep.subr.mxu0 0.0
        %1708 = vmatpush1.msra.mxu0 0.0
        %1709 = vmatprep.subr.mxu0 0.0
        %1710 = vmatpush1.msra.mxu0 0.0
        %1711 = vmatprep.subr.mxu0 0.0
        %1712 = vmatpush1.msra.mxu0 0.0
        %1713 = vmatprep.subr.mxu0 0.0
        %1714 = vmatpush1.msra.mxu0 0.0
        %1715 = vmatprep.subr.mxu0 0.0
        %1716 = vmatpush1.msra.mxu0 0.0
        %1717 = vmatprep.subr.mxu0 0.0
        %1718 = vmatpush1.msra.mxu0 0.0
        %1719 = vmatprep.subr.mxu0 0.0
        %1720 = vmatpush1.msra.mxu0 0.0
        %1721 = vmatprep.subr.mxu0 0.0
        %1722 = vmatpush1.msra.mxu0 0.0
        %1723 = vmatprep.mubr.f32.mxu0 0.0
        %1724 = vmatmul.mubr.f32.gmra.mrb[0].mxu0 %v1657
        %v1725 = vpop.f32.mrb[0].mxu0
        %v1726 = vadd.f32 0.0, %v1725
        %v1727 = vpop.f32.mrb[0].mxu0
        %1728 = vdwg.mxu0
        %1730 = vrot.lane.b32.xlu0 %v1726, 8
        %v1731 = vpop.permute.xlu0 %1730
        %v1733 = vsel %vm1378, %v1650, %v1731
        %v1734 = vld [vmem:[%s13] sm:$0xff]
        %v1735 = vld [vmem:[%s13 + $0x8] sm:$0xff]
        %v1736 = vld [vmem:[%s15] sm:$0x1]
        %v1738 = vlaneseq
        %v1739 = vshrl.u32 %v1738, 7
        %v1740 = vsub.s32 0, %v1739
        %v1741 = vrot.slane %v1736, %v1740
        %v1744 = vsel %vm1299, %v1733, 0
        %1746 = vmatprep.subr.mxu0 0.0
        %1747 = vmatpush1.msra.mxu0 %v1734
        %1748 = vmatprep.subr.mxu0 0.0
        %1749 = vmatpush1.msra.mxu0 %v1735
        %1750 = vmatprep.subr.mxu0 0.0
        %1751 = vmatpush1.msra.mxu0 0.0
        %1752 = vmatprep.subr.mxu0 0.0
        %1753 = vmatpush1.msra.mxu0 0.0
        %1754 = vmatprep.subr.mxu0 0.0
        %1755 = vmatpush1.msra.mxu0 0.0
        %1756 = vmatprep.subr.mxu0 0.0
        %1757 = vmatpush1.msra.mxu0 0.0
        %1758 = vmatprep.subr.mxu0 0.0
        %1759 = vmatpush1.msra.mxu0 0.0
        %1760 = vmatprep.subr.mxu0 0.0
        %1761 = vmatpush1.msra.mxu0 0.0
        %1762 = vmatprep.subr.mxu0 0.0
        %1763 = vmatpush1.msra.mxu0 0.0
        %1764 = vmatprep.subr.mxu0 0.0
        %1765 = vmatpush1.msra.mxu0 0.0
        %1766 = vmatprep.subr.mxu0 0.0
        %1767 = vmatpush1.msra.mxu0 0.0
        %1768 = vmatprep.subr.mxu0 0.0
        %1769 = vmatpush1.msra.mxu0 0.0
        %1770 = vmatprep.subr.mxu0 0.0
        %1771 = vmatpush1.msra.mxu0 0.0
        %1772 = vmatprep.subr.mxu0 0.0
        %1773 = vmatpush1.msra.mxu0 0.0
        %1774 = vmatprep.subr.mxu0 0.0
        %1775 = vmatpush1.msra.mxu0 0.0
        %1776 = vmatprep.subr.mxu0 0.0
        %1777 = vmatpush1.msra.mxu0 0.0
        %1778 = vmatprep.subr.mxu0 0.0
        %1779 = vmatpush1.msra.mxu0 0.0
        %1780 = vmatprep.subr.mxu0 0.0
        %1781 = vmatpush1.msra.mxu0 0.0
        %1782 = vmatprep.subr.mxu0 0.0
        %1783 = vmatpush1.msra.mxu0 0.0
        %1784 = vmatprep.subr.mxu0 0.0
        %1785 = vmatpush1.msra.mxu0 0.0
        %1786 = vmatprep.subr.mxu0 0.0
        %1787 = vmatpush1.msra.mxu0 0.0
        %1788 = vmatprep.subr.mxu0 0.0
        %1789 = vmatpush1.msra.mxu0 0.0
        %1790 = vmatprep.subr.mxu0 0.0
        %1791 = vmatpush1.msra.mxu0 0.0
        %1792 = vmatprep.subr.mxu0 0.0
        %1793 = vmatpush1.msra.mxu0 0.0
        %1794 = vmatprep.subr.mxu0 0.0
        %1795 = vmatpush1.msra.mxu0 0.0
        %1796 = vmatprep.subr.mxu0 0.0
        %1797 = vmatpush1.msra.mxu0 0.0
        %1798 = vmatprep.subr.mxu0 0.0
        %1799 = vmatpush1.msra.mxu0 0.0
        %1800 = vmatprep.subr.mxu0 0.0
        %1801 = vmatpush1.msra.mxu0 0.0
        %1802 = vmatprep.subr.mxu0 0.0
        %1803 = vmatpush1.msra.mxu0 0.0
        %1804 = vmatprep.subr.mxu0 0.0
        %1805 = vmatpush1.msra.mxu0 0.0
        %1806 = vmatprep.subr.mxu0 0.0
        %1807 = vmatpush1.msra.mxu0 0.0
        %1808 = vmatprep.subr.mxu0 0.0
        %1809 = vmatpush1.msra.mxu0 0.0
        %1810 = vmatprep.mubr.f32.mxu0 0.0
        %1811 = vmatmul.mubr.f32.gmra.mrb[0].mxu0 %v1744
        %v1812 = vpop.f32.mrb[0].mxu0
        %v1813 = vadd.f32 %v1741, %v1812
        %v1814 = vpop.f32.mrb[0].mxu0
        %1815 = vdwg.mxu0
        %v1816 = vadd.f32 %v1813, %v1285
        %v1817 = vld [vmem:[%s17] sm:$0x1]
        %v1818 = vld [vmem:[%s19] sm:$0x1]
        %v1819 = vsel %vm1299, %v1816, 0.0
        %1820 = vadd.xlane.f32.xlu0 %v1819
        %v1821 = vpop.xlane.xlu0 %1820
        %v1822 = vrcp.pop 16.0
        %v1823 = vmul.f32 %v1821, %v1822
        %v1824 = vsub.f32 %v1816, %v1823
        %v1825 = vmul.f32 %v1824, %v1824
        %v1826 = vsel %vm1299, %v1825, 0.0
        %1827 = vadd.xlane.f32.xlu0 %v1826
        %v1828 = vpop.xlane.xlu0 %1827
        %v1829 = vmul.f32 %v1828, %v1822
        %v1830 = vadd.f32 %v1829, 1e-05
        %v1831 = vrsqrt.pop %v1830
        %v1832 = vmul.f32 %v1824, %v1831
        %v1834 = vlaneseq
        %v1835 = vshrl.u32 %v1834, 7
        %v1836 = vsub.s32 0, %v1835
        %v1837 = vrot.slane %v1817, %v1836
        %v1839 = vmul.f32 %v1832, %v1837
        %v1841 = vlaneseq
        %v1842 = vshrl.u32 %v1841, 7
        %v1843 = vsub.s32 0, %v1842
        %v1844 = vrot.slane %v1818, %v1843
        %v1846 = vadd.f32 %v1839, %v1844
        %v1847 = vld [vmem:[%s21] sm:$0xff]
        %v1848 = vld [vmem:[%s21 + $0x8] sm:$0xff]
        %v1849 = vld [vmem:[%s23] sm:$0x1]
        %v1851 = vlaneseq
        %v1852 = vshrl.u32 %v1851, 7
        %v1853 = vsub.s32 0, %v1852
        %v1854 = vrot.slane %v1849, %v1853
        %v1857 = vsel %vm1299, %v1846, 0
        %1859 = vmatprep.subr.mxu0 0.0
        %1860 = vmatpush1.msra.mxu0 %v1847
        %1861 = vmatprep.subr.mxu0 0.0
        %1862 = vmatpush1.msra.mxu0 %v1848
        %1863 = vmatprep.subr.mxu0 0.0
        %1864 = vmatpush1.msra.mxu0 0.0
        %1865 = vmatprep.subr.mxu0 0.0
        %1866 = vmatpush1.msra.mxu0 0.0
        %1867 = vmatprep.subr.mxu0 0.0
        %1868 = vmatpush1.msra.mxu0 0.0
        %1869 = vmatprep.subr.mxu0 0.0
        %1870 = vmatpush1.msra.mxu0 0.0
        %1871 = vmatprep.subr.mxu0 0.0
        %1872 = vmatpush1.msra.mxu0 0.0
        %1873 = vmatprep.subr.mxu0 0.0
        %1874 = vmatpush1.msra.mxu0 0.0
        %1875 = vmatprep.subr.mxu0 0.0
        %1876 = vmatpush1.msra.mxu0 0.0
        %1877 = vmatprep.subr.mxu0 0.0
        %1878 = vmatpush1.msra.mxu0 0.0
        %1879 = vmatprep.subr.mxu0 0.0
        %1880 = vmatpush1.msra.mxu0 0.0
        %1881 = vmatprep.subr.mxu0 0.0
        %1882 = vmatpush1.msra.mxu0 0.0
        %1883 = vmatprep.subr.mxu0 0.0
        %1884 = vmatpush1.msra.mxu0 0.0
        %1885 = vmatprep.subr.mxu0 0.0
        %1886 = vmatpush1.msra.mxu0 0.0
        %1887 = vmatprep.subr.mxu0 0.0
        %1888 = vmatpush1.msra.mxu0 0.0
        %1889 = vmatprep.subr.mxu0 0.0
        %1890 = vmatpush1.msra.mxu0 0.0
        %1891 = vmatprep.subr.mxu0 0.0
        %1892 = vmatpush1.msra.mxu0 0.0
        %1893 = vmatprep.subr.mxu0 0.0
        %1894 = vmatpush1.msra.mxu0 0.0
        %1895 = vmatprep.subr.mxu0 0.0
        %1896 = vmatpush1.msra.mxu0 0.0
        %1897 = vmatprep.subr.mxu0 0.0
        %1898 = vmatpush1.msra.mxu0 0.0
        %1899 = vmatprep.subr.mxu0 0.0
        %1900 = vmatpush1.msra.mxu0 0.0
        %1901 = vmatprep.subr.mxu0 0.0
        %1902 = vmatpush1.msra.mxu0 0.0
        %1903 = vmatprep.subr.mxu0 0.0
        %1904 = vmatpush1.msra.mxu0 0.0
        %1905 = vmatprep.subr.mxu0 0.0
        %1906 = vmatpush1.msra.mxu0 0.0
        %1907 = vmatprep.subr.mxu0 0.0
        %1908 = vmatpush1.msra.mxu0 0.0
        %1909 = vmatprep.subr.mxu0 0.0
        %1910 = vmatpush1.msra.mxu0 0.0
        %1911 = vmatprep.subr.mxu0 0.0
        %1912 = vmatpush1.msra.mxu0 0.0
        %1913 = vmatprep.subr.mxu0 0.0
        %1914 = vmatpush1.msra.mxu0 0.0
        %1915 = vmatprep.subr.mxu0 0.0
        %1916 = vmatpush1.msra.mxu0 0.0
        %1917 = vmatprep.subr.mxu0 0.0
        %1918 = vmatpush1.msra.mxu0 0.0
        %1919 = vmatprep.subr.mxu0 0.0
        %1920 = vmatpush1.msra.mxu0 0.0
        %1921 = vmatprep.subr.mxu0 0.0
        %1922 = vmatpush1.msra.mxu0 0.0
        %1923 = vmatprep.mubr.f32.mxu0 0.0
        %1924 = vmatmul.mubr.f32.gmra.mrb[0].mxu0 %v1857
        %v1925 = vpop.f32.mrb[0].mxu0
        %v1926 = vadd.f32 %v1854, %v1925
        %v1927 = vpop.f32.mrb[0].mxu0
        %1928 = vdwg.mxu0
        %v1929 = vld [vmem:[%s25] sm:$0xff]
        %v1930 = vld [vmem:[%s25 + $0x8] sm:$0xff]
        %v1931 = vld [vmem:[%s27] sm:$0x1]
        %v1933 = vlaneseq
        %v1934 = vshrl.u32 %v1933, 7
        %v1935 = vsub.s32 0, %v1934
        %v1936 = vrot.slane %v1931, %v1935
        %v1939 = vsel %vm1299, %v1286, 0
        %v1942 = vsel %vm1299, %v1287, 0
        %1944 = vmatprep.subr.mxu0 0.0
        %1945 = vmatpush1.msra.mxu0 %v1929
        %1946 = vmatprep.subr.mxu0 0.0
        %1947 = vmatpush1.msra.mxu0 %v1930
        %1948 = vmatprep.subr.mxu0 0.0
        %1949 = vmatpush1.msra.mxu0 0.0
        %1950 = vmatprep.subr.mxu0 0.0
        %1951 = vmatpush1.msra.mxu0 0.0
        %1952 = vmatprep.subr.mxu0 0.0
        %1953 = vmatpush1.msra.mxu0 0.0
        %1954 = vmatprep.subr.mxu0 0.0
        %1955 = vmatpush1.msra.mxu0 0.0
        %1956 = vmatprep.subr.mxu0 0.0
        %1957 = vmatpush1.msra.mxu0 0.0
        %1958 = vmatprep.subr.mxu0 0.0
        %1959 = vmatpush1.msra.mxu0 0.0
        %1960 = vmatprep.subr.mxu0 0.0
        %1961 = vmatpush1.msra.mxu0 0.0
        %1962 = vmatprep.subr.mxu0 0.0
        %1963 = vmatpush1.msra.mxu0 0.0
        %1964 = vmatprep.subr.mxu0 0.0
        %1965 = vmatpush1.msra.mxu0 0.0
        %1966 = vmatprep.subr.mxu0 0.0
        %1967 = vmatpush1.msra.mxu0 0.0
        %1968 = vmatprep.subr.mxu0 0.0
        %1969 = vmatpush1.msra.mxu0 0.0
        %1970 = vmatprep.subr.mxu0 0.0
        %1971 = vmatpush1.msra.mxu0 0.0
        %1972 = vmatprep.subr.mxu0 0.0
        %1973 = vmatpush1.msra.mxu0 0.0
        %1974 = vmatprep.subr.mxu0 0.0
        %1975 = vmatpush1.msra.mxu0 0.0
        %1976 = vmatprep.subr.mxu0 0.0
        %1977 = vmatpush1.msra.mxu0 0.0
        %1978 = vmatprep.subr.mxu0 0.0
        %1979 = vmatpush1.msra.mxu0 0.0
        %1980 = vmatprep.subr.mxu0 0.0
        %1981 = vmatpush1.msra.mxu0 0.0
        %1982 = vmatprep.subr.mxu0 0.0
        %1983 = vmatpush1.msra.mxu0 0.0
        %1984 = vmatprep.subr.mxu0 0.0
        %1985 = vmatpush1.msra.mxu0 0.0
        %1986 = vmatprep.subr.mxu0 0.0
        %1987 = vmatpush1.msra.mxu0 0.0
        %1988 = vmatprep.subr.mxu0 0.0
        %1989 = vmatpush1.msra.mxu0 0.0
        %1990 = vmatprep.subr.mxu0 0.0
        %1991 = vmatpush1.msra.mxu0 0.0
        %1992 = vmatprep.subr.mxu0 0.0
        %1993 = vmatpush1.msra.mxu0 0.0
        %1994 = vmatprep.subr.mxu0 0.0
        %1995 = vmatpush1.msra.mxu0 0.0
        %1996 = vmatprep.subr.mxu0 0.0
        %1997 = vmatpush1.msra.mxu0 0.0
        %1998 = vmatprep.subr.mxu0 0.0
        %1999 = vmatpush1.msra.mxu0 0.0
        %2000 = vmatprep.subr.mxu0 0.0
        %2001 = vmatpush1.msra.mxu0 0.0
        %2002 = vmatprep.subr.mxu0 0.0
        %2003 = vmatpush1.msra.mxu0 0.0
        %2004 = vmatprep.subr.mxu0 0.0
        %2005 = vmatpush1.msra.mxu0 0.0
        %2006 = vmatprep.subr.mxu0 0.0
        %2007 = vmatpush1.msra.mxu0 0.0
        %2008 = vmatprep.mubr.f32.mxu0 0.0
        %2009 = vmatmul.mubr.f32.gmra.mrb[0].mxu0 %v1939
        %v2010 = vpop.f32.mrb[0].mxu0
        %v2011 = vadd.f32 %v1936, %v2010
        %v2012 = vpop.f32.mrb[0].mxu0
        %2013 = vmatprep.mubr.f32.mxu0 0.0
        %2014 = vmatmul.mubr.f32.gmra.mrb[0].mxu0 %v1942
        %v2015 = vpop.f32.mrb[0].mxu0
        %v2016 = vadd.f32 %v1936, %v2015
        %v2017 = vpop.f32.mrb[0].mxu0
        %2018 = vdwg.mxu0
        %v2019 = vld [vmem:[%s29] sm:$0xff]
        %v2020 = vld [vmem:[%s29 + $0x8] sm:$0xff]
        %v2021 = vld [vmem:[%s31] sm:$0x1]
        %v2023 = vlaneseq
        %v2024 = vshrl.u32 %v2023, 7
        %v2025 = vsub.s32 0, %v2024
        %v2026 = vrot.slane %v2021, %v2025
        %v2029 = vsel %vm1299, %v1288, 0
        %v2032 = vsel %vm1299, %v1289, 0
        %2034 = vmatprep.subr.mxu0 0.0
        %2035 = vmatpush1.msra.mxu0 %v2019
        %2036 = vmatprep.subr.mxu0 0.0
        %2037 = vmatpush1.msra.mxu0 %v2020
        %2038 = vmatprep.subr.mxu0 0.0
        %2039 = vmatpush1.msra.mxu0 0.0
        %2040 = vmatprep.subr.mxu0 0.0
        %2041 = vmatpush1.msra.mxu0 0.0
        %2042 = vmatprep.subr.mxu0 0.0
        %2043 = vmatpush1.msra.mxu0 0.0
        %2044 = vmatprep.subr.mxu0 0.0
        %2045 = vmatpush1.msra.mxu0 0.0
        %2046 = vmatprep.subr.mxu0 0.0
        %2047 = vmatpush1.msra.mxu0 0.0
        %2048 = vmatprep.subr.mxu0 0.0
        %2049 = vmatpush1.msra.mxu0 0.0
        %2050 = vmatprep.subr.mxu0 0.0
        %2051 = vmatpush1.msra.mxu0 0.0
        %2052 = vmatprep.subr.mxu0 0.0
        %2053 = vmatpush1.msra.mxu0 0.0
        %2054 = vmatprep.subr.mxu0 0.0
        %2055 = vmatpush1.msra.mxu0 0.0
        %2056 = vmatprep.subr.mxu0 0.0
        %2057 = vmatpush1.msra.mxu0 0.0
        %2058 = vmatprep.subr.mxu0 0.0
        %2059 = vmatpush1.msra.mxu0 0.0
        %2060 = vmatprep.subr.mxu0 0.0
        %2061 = vmatpush1.msra.mxu0 0.0
        %2062 = vmatprep.subr.mxu0 0.0
        %2063 = vmatpush1.msra.mxu0 0.0
        %2064 = vmatprep.subr.mxu0 0.0
        %2065 = vmatpush1.msra.mxu0 0.0
        %2066 = vmatprep.subr.mxu0 0.0
        %2067 = vmatpush1.msra.mxu0 0.0
        %2068 = vmatprep.subr.mxu0 0.0
        %2069 = vmatpush1.msra.mxu0 0.0
        %2070 = vmatprep.subr.mxu0 0.0
        %2071 = vmatpush1.msra.mxu0 0.0
        %2072 = vmatprep.subr.mxu0 0.0
        %2073 = vmatpush1.msra.mxu0 0.0
        %2074 = vmatprep.subr.mxu0 0.0
        %2075 = vmatpush1.msra.mxu0 0.0
        %2076 = vmatprep.subr.mxu0 0.0
        %2077 = vmatpush1.msra.mxu0 0.0
        %2078 = vmatprep.subr.mxu0 0.0
        %2079 = vmatpush1.msra.mxu0 0.0
        %2080 = vmatprep.subr.mxu0 0.0
        %2081 = vmatpush1.msra.mxu0 0.0
        %2082 = vmatprep.subr.mxu0 0.0
        %2083 = vmatpush1.msra.mxu0 0.0
        %2084 = vmatprep.subr.mxu0 0.0
        %2085 = vmatpush1.msra.mxu0 0.0
        %2086 = vmatprep.subr.mxu0 0.0
        %2087 = vmatpush1.msra.mxu0 0.0
        %2088 = vmatprep.subr.mxu0 0.0
        %2089 = vmatpush1.msra.mxu0 0.0
        %2090 = vmatprep.subr.mxu0 0.0
        %2091 = vmatpush1.msra.mxu0 0.0
        %2092 = vmatprep.subr.mxu0 0.0
        %2093 = vmatpush1.msra.mxu0 0.0
        %2094 = vmatprep.subr.mxu0 0.0
        %2095 = vmatpush1.msra.mxu0 0.0
        %2096 = vmatprep.subr.mxu0 0.0
        %2097 = vmatpush1.msra.mxu0 0.0
        %2098 = vmatprep.mubr.f32.mxu0 0.0
        %2099 = vmatmul.mubr.f32.gmra.mrb[0].mxu0 %v2029
        %v2100 = vpop.f32.mrb[0].mxu0
        %v2101 = vadd.f32 %v2026, %v2100
        %v2102 = vpop.f32.mrb[0].mxu0
        %2103 = vmatprep.mubr.f32.mxu0 0.0
        %2104 = vmatmul.mubr.f32.gmra.mrb[0].mxu0 %v2032
        %v2105 = vpop.f32.mrb[0].mxu0
        %v2106 = vadd.f32 %v2026, %v2105
        %v2107 = vpop.f32.mrb[0].mxu0
        %2108 = vdwg.mxu0
        %2110 = vrot.lane.b32.xlu0 %v1926, 120
        %v2111 = vpop.permute.xlu0 %2110
        %2114 = vrot.lane.b32.xlu0 %v2011, 120
        %v2115 = vpop.permute.xlu0 %2114
        %2116 = vrot.lane.b32.xlu0 %v2016, 120
        %v2117 = vpop.permute.xlu0 %2116
        %v2118 = vsel %vm1378, %v1926, 0
        %v2120 = vsel %vm1378, %v2011, 0
        %v2122 = vsel %vm1378, %v2016, 0
        %2124 = vmatprep.subr.mxu0 0.0
        %2125 = vmatpush1.xpose.msra.mxu0 %v2120
        %2126 = vmatprep.subr.mxu0 0.0
        %2127 = vmatpush1.xpose.msra.mxu0 %v2122
        %2128 = vmatprep.subr.mxu0 0.0
        %2129 = vmatpush1.xpose.msra.mxu0 0.0
        %2130 = vmatprep.subr.mxu0 0.0
        %2131 = vmatpush1.xpose.msra.mxu0 0.0
        %2132 = vmatprep.subr.mxu0 0.0
        %2133 = vmatpush1.xpose.msra.mxu0 0.0
        %2134 = vmatprep.subr.mxu0 0.0
        %2135 = vmatpush1.xpose.msra.mxu0 0.0
        %2136 = vmatprep.subr.mxu0 0.0
        %2137 = vmatpush1.xpose.msra.mxu0 0.0
        %2138 = vmatprep.subr.mxu0 0.0
        %2139 = vmatpush1.xpose.msra.mxu0 0.0
        %2140 = vmatprep.subr.mxu0 0.0
        %2141 = vmatpush1.xpose.msra.mxu0 0.0
        %2142 = vmatprep.subr.mxu0 0.0
        %2143 = vmatpush1.xpose.msra.mxu0 0.0
        %2144 = vmatprep.subr.mxu0 0.0
        %2145 = vmatpush1.xpose.msra.mxu0 0.0
        %2146 = vmatprep.subr.mxu0 0.0
        %2147 = vmatpush1.xpose.msra.mxu0 0.0
        %2148 = vmatprep.subr.mxu0 0.0
        %2149 = vmatpush1.xpose.msra.mxu0 0.0
        %2150 = vmatprep.subr.mxu0 0.0
        %2151 = vmatpush1.xpose.msra.mxu0 0.0
        %2152 = vmatprep.subr.mxu0 0.0
        %2153 = vmatpush1.xpose.msra.mxu0 0.0
        %2154 = vmatprep.subr.mxu0 0.0
        %2155 = vmatpush1.xpose.msra.mxu0 0.0
        %2156 = vmatprep.subr.mxu0 0.0
        %2157 = vmatpush1.xpose.msra.mxu0 0.0
        %2158 = vmatprep.subr.mxu0 0.0
        %2159 = vmatpush1.xpose.msra.mxu0 0.0
        %2160 = vmatprep.subr.mxu0 0.0
        %2161 = vmatpush1.xpose.msra.mxu0 0.0
        %2162 = vmatprep.subr.mxu0 0.0
        %2163 = vmatpush1.xpose.msra.mxu0 0.0
        %2164 = vmatprep.subr.mxu0 0.0
        %2165 = vmatpush1.xpose.msra.mxu0 0.0
        %2166 = vmatprep.subr.mxu0 0.0
        %2167 = vmatpush1.xpose.msra.mxu0 0.0
        %2168 = vmatprep.subr.mxu0 0.0
        %2169 = vmatpush1.xpose.msra.mxu0 0.0
        %2170 = vmatprep.subr.mxu0 0.0
        %2171 = vmatpush1.xpose.msra.mxu0 0.0
        %2172 = vmatprep.subr.mxu0 0.0
        %2173 = vmatpush1.xpose.msra.mxu0 0.0
        %2174 = vmatprep.subr.mxu0 0.0
        %2175 = vmatpush1.xpose.msra.mxu0 0.0
        %2176 = vmatprep.subr.mxu0 0.0
        %2177 = vmatpush1.xpose.msra.mxu0 0.0
        %2178 = vmatprep.subr.mxu0 0.0
        %2179 = vmatpush1.xpose.msra.mxu0 0.0
        %2180 = vmatprep.subr.mxu0 0.0
        %2181 = vmatpush1.xpose.msra.mxu0 0.0
        %2182 = vmatprep.subr.mxu0 0.0
        %2183 = vmatpush1.xpose.msra.mxu0 0.0
        %2184 = vmatprep.subr.mxu0 0.0
        %2185 = vmatpush1.xpose.msra.mxu0 0.0
        %2186 = vmatprep.subr.mxu0 0.0
        %2187 = vmatpush1.xpose.msra.mxu0 0.0
        %2188 = vmatprep.mubr.f32.mxu0 0.0
        %2189 = vmatmul.mubr.f32.gmra.mrb[0].mxu0 %v2118
        %v2190 = vpop.f32.mrb[0].mxu0
        %v2191 = vadd.f32 0.0, %v2190
        %v2192 = vpop.f32.mrb[0].mxu0
        %2193 = vdwg.mxu0
        %v2194 = vsel %vm1378, %v2111, 0
        %v2196 = vsel %vm1378, %v2115, 0
        %v2198 = vsel %vm1378, %v2117, 0
        %2200 = vmatprep.subr.mxu0 0.0
        %2201 = vmatpush1.xpose.msra.mxu0 %v2196
        %2202 = vmatprep.subr.mxu0 0.0
        %2203 = vmatpush1.xpose.msra.mxu0 %v2198
        %2204 = vmatprep.subr.mxu0 0.0
        %2205 = vmatpush1.xpose.msra.mxu0 0.0
        %2206 = vmatprep.subr.mxu0 0.0
        %2207 = vmatpush1.xpose.msra.mxu0 0.0
        %2208 = vmatprep.subr.mxu0 0.0
        %2209 = vmatpush1.xpose.msra.mxu0 0.0
        %2210 = vmatprep.subr.mxu0 0.0
        %2211 = vmatpush1.xpose.msra.mxu0 0.0
        %2212 = vmatprep.subr.mxu0 0.0
        %2213 = vmatpush1.xpose.msra.mxu0 0.0
        %2214 = vmatprep.subr.mxu0 0.0
        %2215 = vmatpush1.xpose.msra.mxu0 0.0
        %2216 = vmatprep.subr.mxu0 0.0
        %2217 = vmatpush1.xpose.msra.mxu0 0.0
        %2218 = vmatprep.subr.mxu0 0.0
        %2219 = vmatpush1.xpose.msra.mxu0 0.0
        %2220 = vmatprep.subr.mxu0 0.0
        %2221 = vmatpush1.xpose.msra.mxu0 0.0
        %2222 = vmatprep.subr.mxu0 0.0
        %2223 = vmatpush1.xpose.msra.mxu0 0.0
        %2224 = vmatprep.subr.mxu0 0.0
        %2225 = vmatpush1.xpose.msra.mxu0 0.0
        %2226 = vmatprep.subr.mxu0 0.0
        %2227 = vmatpush1.xpose.msra.mxu0 0.0
        %2228 = vmatprep.subr.mxu0 0.0
        %2229 = vmatpush1.xpose.msra.mxu0 0.0
        %2230 = vmatprep.subr.mxu0 0.0
        %2231 = vmatpush1.xpose.msra.mxu0 0.0
        %2232 = vmatprep.subr.mxu0 0.0
        %2233 = vmatpush1.xpose.msra.mxu0 0.0
        %2234 = vmatprep.subr.mxu0 0.0
        %2235 = vmatpush1.xpose.msra.mxu0 0.0
        %2236 = vmatprep.subr.mxu0 0.0
        %2237 = vmatpush1.xpose.msra.mxu0 0.0
        %2238 = vmatprep.subr.mxu0 0.0
        %2239 = vmatpush1.xpose.msra.mxu0 0.0
        %2240 = vmatprep.subr.mxu0 0.0
        %2241 = vmatpush1.xpose.msra.mxu0 0.0
        %2242 = vmatprep.subr.mxu0 0.0
        %2243 = vmatpush1.xpose.msra.mxu0 0.0
        %2244 = vmatprep.subr.mxu0 0.0
        %2245 = vmatpush1.xpose.msra.mxu0 0.0
        %2246 = vmatprep.subr.mxu0 0.0
        %2247 = vmatpush1.xpose.msra.mxu0 0.0
        %2248 = vmatprep.subr.mxu0 0.0
        %2249 = vmatpush1.xpose.msra.mxu0 0.0
        %2250 = vmatprep.subr.mxu0 0.0
        %2251 = vmatpush1.xpose.msra.mxu0 0.0
        %2252 = vmatprep.subr.mxu0 0.0
        %2253 = vmatpush1.xpose.msra.mxu0 0.0
        %2254 = vmatprep.subr.mxu0 0.0
        %2255 = vmatpush1.xpose.msra.mxu0 0.0
        %2256 = vmatprep.subr.mxu0 0.0
        %2257 = vmatpush1.xpose.msra.mxu0 0.0
        %2258 = vmatprep.subr.mxu0 0.0
        %2259 = vmatpush1.xpose.msra.mxu0 0.0
        %2260 = vmatprep.subr.mxu0 0.0
        %2261 = vmatpush1.xpose.msra.mxu0 0.0
        %2262 = vmatprep.subr.mxu0 0.0
        %2263 = vmatpush1.xpose.msra.mxu0 0.0
        %2264 = vmatprep.mubr.f32.mxu0 0.0
        %2265 = vmatmul.mubr.f32.gmra.mrb[0].mxu0 %v2194
        %v2266 = vpop.f32.mrb[0].mxu0
        %v2267 = vadd.f32 0.0, %v2266
        %v2268 = vpop.f32.mrb[0].mxu0
        %2269 = vdwg.mxu0
        %v2270 = vmul.f32 %v2191, 0.35355338
        %v2271 = vmul.f32 %v2267, 0.35355338
        %vm2272 = vcmp.ge.s32.totalorder %v1542, 8
        %v2273 = vsel %vm2272, 1, 0
        %v2274 = vadd.s32 %v1546, %v2273
        %vm2275 = vcmp.ge.s32.totalorder %v1542, 12
        %v2276 = vsel %vm2275, 1, 0
        %v2277 = vadd.s32 %v2274, %v2276
        %vm2278 = vcmp.eq.s32.totalorder %v1540, %v2277
        %v2279 = vsel %vm2278, 0.0, -1e+30
        %v2280 = vadd.f32 %v2270, %v2279
        %v2281 = vadd.f32 %v2271, %v2279
        %v2282 = vsel %vm1299, %v2280, -inf
        %2283 = vmax.xlane.f32.xlu0 %v2282
        %v2284 = vpop.xlane.xlu0 %2283
        %v2285 = vsel %vm1299, %v2281, -inf
        %2286 = vmax.xlane.f32.xlu0 %v2285
        %v2287 = vpop.xlane.xlu0 %2286
        %v2288 = vsub.f32 %v2280, %v2284
        %v2289 = vsub.f32 %v2281, %v2287
        %v2290 = vmul.f32 %v2288, 1.442695
        %v2291 = vpow.pop %v2290
        %v2292 = vmul.f32 %v2289, 1.442695
        %v2293 = vpow.pop %v2292
        %v2294 = vsel %vm1299, %v2291, 0.0
        %2295 = vadd.xlane.f32.xlu0 %v2294
        %v2296 = vpop.xlane.xlu0 %2295
        %v2297 = vsel %vm1299, %v2293, 0.0
        %2298 = vadd.xlane.f32.xlu0 %v2297
        %v2299 = vpop.xlane.xlu0 %2298
        %v2300 = vrcp.pop %v2296
        %v2301 = vmul.f32 %v2291, %v2300
        %v2302 = vrcp.pop %v2299
        %v2303 = vmul.f32 %v2293, %v2302
        %2304 = vrot.lane.b32.xlu0 %v2011, 112
        %v2305 = vpop.permute.xlu0 %2304
        %2306 = vrot.lane.b32.xlu0 %v2016, 112
        %v2307 = vpop.permute.xlu0 %2306
        %v2311 = vsel %vm1299, %v2301, 0
        %2313 = vmatprep.subr.mxu0 0.0
        %2314 = vmatpush1.msra.mxu0 %v2305
        %2315 = vmatprep.subr.mxu0 0.0
        %2316 = vmatpush1.msra.mxu0 %v2307
        %2317 = vmatprep.subr.mxu0 0.0
        %2318 = vmatpush1.msra.mxu0 0.0
        %2319 = vmatprep.subr.mxu0 0.0
        %2320 = vmatpush1.msra.mxu0 0.0
        %2321 = vmatprep.subr.mxu0 0.0
        %2322 = vmatpush1.msra.mxu0 0.0
        %2323 = vmatprep.subr.mxu0 0.0
        %2324 = vmatpush1.msra.mxu0 0.0
        %2325 = vmatprep.subr.mxu0 0.0
        %2326 = vmatpush1.msra.mxu0 0.0
        %2327 = vmatprep.subr.mxu0 0.0
        %2328 = vmatpush1.msra.mxu0 0.0
        %2329 = vmatprep.subr.mxu0 0.0
        %2330 = vmatpush1.msra.mxu0 0.0
        %2331 = vmatprep.subr.mxu0 0.0
        %2332 = vmatpush1.msra.mxu0 0.0
        %2333 = vmatprep.subr.mxu0 0.0
        %2334 = vmatpush1.msra.mxu0 0.0
        %2335 = vmatprep.subr.mxu0 0.0
        %2336 = vmatpush1.msra.mxu0 0.0
        %2337 = vmatprep.subr.mxu0 0.0
        %2338 = vmatpush1.msra.mxu0 0.0
        %2339 = vmatprep.subr.mxu0 0.0
        %2340 = vmatpush1.msra.mxu0 0.0
        %2341 = vmatprep.subr.mxu0 0.0
        %2342 = vmatpush1.msra.mxu0 0.0
        %2343 = vmatprep.subr.mxu0 0.0
        %2344 = vmatpush1.msra.mxu0 0.0
        %2345 = vmatprep.subr.mxu0 0.0
        %2346 = vmatpush1.msra.mxu0 0.0
        %2347 = vmatprep.subr.mxu0 0.0
        %2348 = vmatpush1.msra.mxu0 0.0
        %2349 = vmatprep.subr.mxu0 0.0
        %2350 = vmatpush1.msra.mxu0 0.0
        %2351 = vmatprep.subr.mxu0 0.0
        %2352 = vmatpush1.msra.mxu0 0.0
        %2353 = vmatprep.subr.mxu0 0.0
        %2354 = vmatpush1.msra.mxu0 0.0
        %2355 = vmatprep.subr.mxu0 0.0
        %2356 = vmatpush1.msra.mxu0 0.0
        %2357 = vmatprep.subr.mxu0 0.0
        %2358 = vmatpush1.msra.mxu0 0.0
        %2359 = vmatprep.subr.mxu0 0.0
        %2360 = vmatpush1.msra.mxu0 0.0
        %2361 = vmatprep.subr.mxu0 0.0
        %2362 = vmatpush1.msra.mxu0 0.0
        %2363 = vmatprep.subr.mxu0 0.0
        %2364 = vmatpush1.msra.mxu0 0.0
        %2365 = vmatprep.subr.mxu0 0.0
        %2366 = vmatpush1.msra.mxu0 0.0
        %2367 = vmatprep.subr.mxu0 0.0
        %2368 = vmatpush1.msra.mxu0 0.0
        %2369 = vmatprep.subr.mxu0 0.0
        %2370 = vmatpush1.msra.mxu0 0.0
        %2371 = vmatprep.subr.mxu0 0.0
        %2372 = vmatpush1.msra.mxu0 0.0
        %2373 = vmatprep.subr.mxu0 0.0
        %2374 = vmatpush1.msra.mxu0 0.0
        %2375 = vmatprep.subr.mxu0 0.0
        %2376 = vmatpush1.msra.mxu0 0.0
        %2377 = vmatprep.mubr.f32.mxu0 0.0
        %2378 = vmatmul.mubr.f32.gmra.mrb[0].mxu0 %v2311
        %v2379 = vpop.f32.mrb[0].mxu0
        %v2380 = vadd.f32 0.0, %v2379
        %v2381 = vpop.f32.mrb[0].mxu0
        %2382 = vdwg.mxu0
        %2383 = vrot.lane.b32.xlu0 %v2115, 112
        %v2384 = vpop.permute.xlu0 %2383
        %2385 = vrot.lane.b32.xlu0 %v2117, 112
        %v2386 = vpop.permute.xlu0 %2385
        %v2390 = vsel %vm1299, %v2303, 0
        %2392 = vmatprep.subr.mxu0 0.0
        %2393 = vmatpush1.msra.mxu0 %v2384
        %2394 = vmatprep.subr.mxu0 0.0
        %2395 = vmatpush1.msra.mxu0 %v2386
        %2396 = vmatprep.subr.mxu0 0.0
        %2397 = vmatpush1.msra.mxu0 0.0
        %2398 = vmatprep.subr.mxu0 0.0
        %2399 = vmatpush1.msra.mxu0 0.0
        %2400 = vmatprep.subr.mxu0 0.0
        %2401 = vmatpush1.msra.mxu0 0.0
        %2402 = vmatprep.subr.mxu0 0.0
        %2403 = vmatpush1.msra.mxu0 0.0
        %2404 = vmatprep.subr.mxu0 0.0
        %2405 = vmatpush1.msra.mxu0 0.0
        %2406 = vmatprep.subr.mxu0 0.0
        %2407 = vmatpush1.msra.mxu0 0.0
        %2408 = vmatprep.subr.mxu0 0.0
        %2409 = vmatpush1.msra.mxu0 0.0
        %2410 = vmatprep.subr.mxu0 0.0
        %2411 = vmatpush1.msra.mxu0 0.0
        %2412 = vmatprep.subr.mxu0 0.0
        %2413 = vmatpush1.msra.mxu0 0.0
        %2414 = vmatprep.subr.mxu0 0.0
        %2415 = vmatpush1.msra.mxu0 0.0
        %2416 = vmatprep.subr.mxu0 0.0
        %2417 = vmatpush1.msra.mxu0 0.0
        %2418 = vmatprep.subr.mxu0 0.0
        %2419 = vmatpush1.msra.mxu0 0.0
        %2420 = vmatprep.subr.mxu0 0.0
        %2421 = vmatpush1.msra.mxu0 0.0
        %2422 = vmatprep.subr.mxu0 0.0
        %2423 = vmatpush1.msra.mxu0 0.0
        %2424 = vmatprep.subr.mxu0 0.0
        %2425 = vmatpush1.msra.mxu0 0.0
        %2426 = vmatprep.subr.mxu0 0.0
        %2427 = vmatpush1.msra.mxu0 0.0
        %2428 = vmatprep.subr.mxu0 0.0
        %2429 = vmatpush1.msra.mxu0 0.0
        %2430 = vmatprep.subr.mxu0 0.0
        %2431 = vmatpush1.msra.mxu0 0.0
        %2432 = vmatprep.subr.mxu0 0.0
        %2433 = vmatpush1.msra.mxu0 0.0
        %2434 = vmatprep.subr.mxu0 0.0
        %2435 = vmatpush1.msra.mxu0 0.0
        %2436 = vmatprep.subr.mxu0 0.0
        %2437 = vmatpush1.msra.mxu0 0.0
        %2438 = vmatprep.subr.mxu0 0.0
        %2439 = vmatpush1.msra.mxu0 0.0
        %2440 = vmatprep.subr.mxu0 0.0
        %2441 = vmatpush1.msra.mxu0 0.0
        %2442 = vmatprep.subr.mxu0 0.0
        %2443 = vmatpush1.msra.mxu0 0.0
        %2444 = vmatprep.subr.mxu0 0.0
        %2445 = vmatpush1.msra.mxu0 0.0
        %2446 = vmatprep.subr.mxu0 0.0
        %2447 = vmatpush1.msra.mxu0 0.0
        %2448 = vmatprep.subr.mxu0 0.0
        %2449 = vmatpush1.msra.mxu0 0.0
        %2450 = vmatprep.subr.mxu0 0.0
        %2451 = vmatpush1.msra.mxu0 0.0
        %2452 = vmatprep.subr.mxu0 0.0
        %2453 = vmatpush1.msra.mxu0 0.0
        %2454 = vmatprep.subr.mxu0 0.0
        %2455 = vmatpush1.msra.mxu0 0.0
        %2456 = vmatprep.mubr.f32.mxu0 0.0
        %2457 = vmatmul.mubr.f32.gmra.mrb[0].mxu0 %v2390
        %v2458 = vpop.f32.mrb[0].mxu0
        %v2459 = vadd.f32 0.0, %v2458
        %v2460 = vpop.f32.mrb[0].mxu0
        %2461 = vdwg.mxu0
        %2463 = vrot.lane.b32.xlu0 %v2459, 8
        %v2464 = vpop.permute.xlu0 %2463
        %v2466 = vsel %vm1378, %v2380, %v2464
        %2469 = vrot.lane.b32.xlu0 %v2101, 120
        %v2470 = vpop.permute.xlu0 %2469
        %2471 = vrot.lane.b32.xlu0 %v2106, 120
        %v2472 = vpop.permute.xlu0 %2471
        %2475 = vmatprep.subr.mxu0 0.0
        %2476 = vmatpush1.msra.mxu0 %v2101
        %2477 = vmatprep.subr.mxu0 0.0
        %2478 = vmatpush1.msra.mxu0 %v2106
        %2479 = vmatprep.subr.mxu0 0.0
        %2480 = vmatpush1.msra.mxu0 0.0
        %2481 = vmatprep.subr.mxu0 0.0
        %2482 = vmatpush1.msra.mxu0 0.0
        %2483 = vmatprep.subr.mxu0 0.0
        %2484 = vmatpush1.msra.mxu0 0.0
        %2485 = vmatprep.subr.mxu0 0.0
        %2486 = vmatpush1.msra.mxu0 0.0
        %2487 = vmatprep.subr.mxu0 0.0
        %2488 = vmatpush1.msra.mxu0 0.0
        %2489 = vmatprep.subr.mxu0 0.0
        %2490 = vmatpush1.msra.mxu0 0.0
        %2491 = vmatprep.subr.mxu0 0.0
        %2492 = vmatpush1.msra.mxu0 0.0
        %2493 = vmatprep.subr.mxu0 0.0
        %2494 = vmatpush1.msra.mxu0 0.0
        %2495 = vmatprep.subr.mxu0 0.0
        %2496 = vmatpush1.msra.mxu0 0.0
        %2497 = vmatprep.subr.mxu0 0.0
        %2498 = vmatpush1.msra.mxu0 0.0
        %2499 = vmatprep.subr.mxu0 0.0
        %2500 = vmatpush1.msra.mxu0 0.0
        %2501 = vmatprep.subr.mxu0 0.0
        %2502 = vmatpush1.msra.mxu0 0.0
        %2503 = vmatprep.subr.mxu0 0.0
        %2504 = vmatpush1.msra.mxu0 0.0
        %2505 = vmatprep.subr.mxu0 0.0
        %2506 = vmatpush1.msra.mxu0 0.0
        %2507 = vmatprep.subr.mxu0 0.0
        %2508 = vmatpush1.msra.mxu0 0.0
        %2509 = vmatprep.subr.mxu0 0.0
        %2510 = vmatpush1.msra.mxu0 0.0
        %2511 = vmatprep.subr.mxu0 0.0
        %2512 = vmatpush1.msra.mxu0 0.0
        %2513 = vmatprep.subr.mxu0 0.0
        %2514 = vmatpush1.msra.mxu0 0.0
        %2515 = vmatprep.subr.mxu0 0.0
        %2516 = vmatpush1.msra.mxu0 0.0
        %2517 = vmatprep.subr.mxu0 0.0
        %2518 = vmatpush1.msra.mxu0 0.0
        %2519 = vmatprep.subr.mxu0 0.0
        %2520 = vmatpush1.msra.mxu0 0.0
        %2521 = vmatprep.subr.mxu0 0.0
        %2522 = vmatpush1.msra.mxu0 0.0
        %2523 = vmatprep.subr.mxu0 0.0
        %2524 = vmatpush1.msra.mxu0 0.0
        %2525 = vmatprep.subr.mxu0 0.0
        %2526 = vmatpush1.msra.mxu0 0.0
        %2527 = vmatprep.subr.mxu0 0.0
        %2528 = vmatpush1.msra.mxu0 0.0
        %2529 = vmatprep.subr.mxu0 0.0
        %2530 = vmatpush1.msra.mxu0 0.0
        %2531 = vmatprep.subr.mxu0 0.0
        %2532 = vmatpush1.msra.mxu0 0.0
        %2533 = vmatprep.subr.mxu0 0.0
        %2534 = vmatpush1.msra.mxu0 0.0
        %2535 = vmatprep.subr.mxu0 0.0
        %2536 = vmatpush1.msra.mxu0 0.0
        %2537 = vmatprep.subr.mxu0 0.0
        %2538 = vmatpush1.msra.mxu0 0.0
        %2539 = vmatprep.mubr.f32.mxu0 0.0
        %2540 = vmatmul.mubr.f32.gmra.mrb[0].mxu0 %v2311
        %v2541 = vpop.f32.mrb[0].mxu0
        %v2542 = vadd.f32 0.0, %v2541
        %v2543 = vpop.f32.mrb[0].mxu0
        %2544 = vdwg.mxu0
        %2545 = vmatprep.subr.mxu0 0.0
        %2546 = vmatpush1.msra.mxu0 %v2470
        %2547 = vmatprep.subr.mxu0 0.0
        %2548 = vmatpush1.msra.mxu0 %v2472
        %2549 = vmatprep.subr.mxu0 0.0
        %2550 = vmatpush1.msra.mxu0 0.0
        %2551 = vmatprep.subr.mxu0 0.0
        %2552 = vmatpush1.msra.mxu0 0.0
        %2553 = vmatprep.subr.mxu0 0.0
        %2554 = vmatpush1.msra.mxu0 0.0
        %2555 = vmatprep.subr.mxu0 0.0
        %2556 = vmatpush1.msra.mxu0 0.0
        %2557 = vmatprep.subr.mxu0 0.0
        %2558 = vmatpush1.msra.mxu0 0.0
        %2559 = vmatprep.subr.mxu0 0.0
        %2560 = vmatpush1.msra.mxu0 0.0
        %2561 = vmatprep.subr.mxu0 0.0
        %2562 = vmatpush1.msra.mxu0 0.0
        %2563 = vmatprep.subr.mxu0 0.0
        %2564 = vmatpush1.msra.mxu0 0.0
        %2565 = vmatprep.subr.mxu0 0.0
        %2566 = vmatpush1.msra.mxu0 0.0
        %2567 = vmatprep.subr.mxu0 0.0
        %2568 = vmatpush1.msra.mxu0 0.0
        %2569 = vmatprep.subr.mxu0 0.0
        %2570 = vmatpush1.msra.mxu0 0.0
        %2571 = vmatprep.subr.mxu0 0.0
        %2572 = vmatpush1.msra.mxu0 0.0
        %2573 = vmatprep.subr.mxu0 0.0
        %2574 = vmatpush1.msra.mxu0 0.0
        %2575 = vmatprep.subr.mxu0 0.0
        %2576 = vmatpush1.msra.mxu0 0.0
        %2577 = vmatprep.subr.mxu0 0.0
        %2578 = vmatpush1.msra.mxu0 0.0
        %2579 = vmatprep.subr.mxu0 0.0
        %2580 = vmatpush1.msra.mxu0 0.0
        %2581 = vmatprep.subr.mxu0 0.0
        %2582 = vmatpush1.msra.mxu0 0.0
        %2583 = vmatprep.subr.mxu0 0.0
        %2584 = vmatpush1.msra.mxu0 0.0
        %2585 = vmatprep.subr.mxu0 0.0
        %2586 = vmatpush1.msra.mxu0 0.0
        %2587 = vmatprep.subr.mxu0 0.0
        %2588 = vmatpush1.msra.mxu0 0.0
        %2589 = vmatprep.subr.mxu0 0.0
        %2590 = vmatpush1.msra.mxu0 0.0
        %2591 = vmatprep.subr.mxu0 0.0
        %2592 = vmatpush1.msra.mxu0 0.0
        %2593 = vmatprep.subr.mxu0 0.0
        %2594 = vmatpush1.msra.mxu0 0.0
        %2595 = vmatprep.subr.mxu0 0.0
        %2596 = vmatpush1.msra.mxu0 0.0
        %2597 = vmatprep.subr.mxu0 0.0
        %2598 = vmatpush1.msra.mxu0 0.0
        %2599 = vmatprep.subr.mxu0 0.0
        %2600 = vmatpush1.msra.mxu0 0.0
        %2601 = vmatprep.subr.mxu0 0.0
        %2602 = vmatpush1.msra.mxu0 0.0
        %2603 = vmatprep.subr.mxu0 0.0
        %2604 = vmatpush1.msra.mxu0 0.0
        %2605 = vmatprep.subr.mxu0 0.0
        %2606 = vmatpush1.msra.mxu0 0.0
        %2607 = vmatprep.subr.mxu0 0.0
        %2608 = vmatpush1.msra.mxu0 0.0
        %2609 = vmatprep.mubr.f32.mxu0 0.0
        %2610 = vmatmul.mubr.f32.gmra.mrb[0].mxu0 %v2390
        %v2611 = vpop.f32.mrb[0].mxu0
        %v2612 = vadd.f32 0.0, %v2611
        %v2613 = vpop.f32.mrb[0].mxu0
        %2614 = vdwg.mxu0
        %2616 = vrot.lane.b32.xlu0 %v2612, 8
        %v2617 = vpop.permute.xlu0 %2616
        %v2619 = vsel %vm1378, %v2542, %v2617
        %v2620 = vld [vmem:[%s33] sm:$0xff]
        %v2621 = vld [vmem:[%s33 + $0x8] sm:$0xff]
        %v2622 = vld [vmem:[%s35] sm:$0x1]
        %v2624 = vlaneseq
        %v2625 = vshrl.u32 %v2624, 7
        %v2626 = vsub.s32 0, %v2625
        %v2627 = vrot.slane %v2622, %v2626
        %v2630 = vsel %vm1299, %v2466, 0
        %2632 = vmatprep.subr.mxu0 0.0
        %2633 = vmatpush1.msra.mxu0 %v2620
        %2634 = vmatprep.subr.mxu0 0.0
        %2635 = vmatpush1.msra.mxu0 %v2621
        %2636 = vmatprep.subr.mxu0 0.0
        %2637 = vmatpush1.msra.mxu0 0.0
        %2638 = vmatprep.subr.mxu0 0.0
        %2639 = vmatpush1.msra.mxu0 0.0
        %2640 = vmatprep.subr.mxu0 0.0
        %2641 = vmatpush1.msra.mxu0 0.0
        %2642 = vmatprep.subr.mxu0 0.0
        %2643 = vmatpush1.msra.mxu0 0.0
        %2644 = vmatprep.subr.mxu0 0.0
        %2645 = vmatpush1.msra.mxu0 0.0
        %2646 = vmatprep.subr.mxu0 0.0
        %2647 = vmatpush1.msra.mxu0 0.0
        %2648 = vmatprep.subr.mxu0 0.0
        %2649 = vmatpush1.msra.mxu0 0.0
        %2650 = vmatprep.subr.mxu0 0.0
        %2651 = vmatpush1.msra.mxu0 0.0
        %2652 = vmatprep.subr.mxu0 0.0
        %2653 = vmatpush1.msra.mxu0 0.0
        %2654 = vmatprep.subr.mxu0 0.0
        %2655 = vmatpush1.msra.mxu0 0.0
        %2656 = vmatprep.subr.mxu0 0.0
        %2657 = vmatpush1.msra.mxu0 0.0
        %2658 = vmatprep.subr.mxu0 0.0
        %2659 = vmatpush1.msra.mxu0 0.0
        %2660 = vmatprep.subr.mxu0 0.0
        %2661 = vmatpush1.msra.mxu0 0.0
        %2662 = vmatprep.subr.mxu0 0.0
        %2663 = vmatpush1.msra.mxu0 0.0
        %2664 = vmatprep.subr.mxu0 0.0
        %2665 = vmatpush1.msra.mxu0 0.0
        %2666 = vmatprep.subr.mxu0 0.0
        %2667 = vmatpush1.msra.mxu0 0.0
        %2668 = vmatprep.subr.mxu0 0.0
        %2669 = vmatpush1.msra.mxu0 0.0
        %2670 = vmatprep.subr.mxu0 0.0
        %2671 = vmatpush1.msra.mxu0 0.0
        %2672 = vmatprep.subr.mxu0 0.0
        %2673 = vmatpush1.msra.mxu0 0.0
        %2674 = vmatprep.subr.mxu0 0.0
        %2675 = vmatpush1.msra.mxu0 0.0
        %2676 = vmatprep.subr.mxu0 0.0
        %2677 = vmatpush1.msra.mxu0 0.0
        %2678 = vmatprep.subr.mxu0 0.0
        %2679 = vmatpush1.msra.mxu0 0.0
        %2680 = vmatprep.subr.mxu0 0.0
        %2681 = vmatpush1.msra.mxu0 0.0
        %2682 = vmatprep.subr.mxu0 0.0
        %2683 = vmatpush1.msra.mxu0 0.0
        %2684 = vmatprep.subr.mxu0 0.0
        %2685 = vmatpush1.msra.mxu0 0.0
        %2686 = vmatprep.subr.mxu0 0.0
        %2687 = vmatpush1.msra.mxu0 0.0
        %2688 = vmatprep.subr.mxu0 0.0
        %2689 = vmatpush1.msra.mxu0 0.0
        %2690 = vmatprep.subr.mxu0 0.0
        %2691 = vmatpush1.msra.mxu0 0.0
        %2692 = vmatprep.subr.mxu0 0.0
        %2693 = vmatpush1.msra.mxu0 0.0
        %2694 = vmatprep.subr.mxu0 0.0
        %2695 = vmatpush1.msra.mxu0 0.0
        %2696 = vmatprep.mubr.f32.mxu0 0.0
        %2697 = vmatmul.mubr.f32.gmra.mrb[0].mxu0 %v2630
        %v2698 = vpop.f32.mrb[0].mxu0
        %v2699 = vadd.f32 %v2627, %v2698
        %v2700 = vpop.f32.mrb[0].mxu0
        %2701 = vdwg.mxu0
        %v2702 = vadd.f32 %v2699, %v1846
        %v2703 = vld [vmem:[%s37] sm:$0xff]
        %v2704 = vld [vmem:[%s37 + $0x8] sm:$0xff]
        %v2705 = vld [vmem:[%s39] sm:$0x1]
        %v2707 = vlaneseq
        %v2708 = vshrl.u32 %v2707, 7
        %v2709 = vsub.s32 0, %v2708
        %v2710 = vrot.slane %v2705, %v2709
        %v2713 = vsel %vm1299, %v2619, 0
        %2715 = vmatprep.subr.mxu0 0.0
        %2716 = vmatpush1.msra.mxu0 %v2703
        %2717 = vmatprep.subr.mxu0 0.0
        %2718 = vmatpush1.msra.mxu0 %v2704
        %2719 = vmatprep.subr.mxu0 0.0
        %2720 = vmatpush1.msra.mxu0 0.0
        %2721 = vmatprep.subr.mxu0 0.0
        %2722 = vmatpush1.msra.mxu0 0.0
        %2723 = vmatprep.subr.mxu0 0.0
        %2724 = vmatpush1.msra.mxu0 0.0
        %2725 = vmatprep.subr.mxu0 0.0
        %2726 = vmatpush1.msra.mxu0 0.0
        %2727 = vmatprep.subr.mxu0 0.0
        %2728 = vmatpush1.msra.mxu0 0.0
        %2729 = vmatprep.subr.mxu0 0.0
        %2730 = vmatpush1.msra.mxu0 0.0
        %2731 = vmatprep.subr.mxu0 0.0
        %2732 = vmatpush1.msra.mxu0 0.0
        %2733 = vmatprep.subr.mxu0 0.0
        %2734 = vmatpush1.msra.mxu0 0.0
        %2735 = vmatprep.subr.mxu0 0.0
        %2736 = vmatpush1.msra.mxu0 0.0
        %2737 = vmatprep.subr.mxu0 0.0
        %2738 = vmatpush1.msra.mxu0 0.0
        %2739 = vmatprep.subr.mxu0 0.0
        %2740 = vmatpush1.msra.mxu0 0.0
        %2741 = vmatprep.subr.mxu0 0.0
        %2742 = vmatpush1.msra.mxu0 0.0
        %2743 = vmatprep.subr.mxu0 0.0
        %2744 = vmatpush1.msra.mxu0 0.0
        %2745 = vmatprep.subr.mxu0 0.0
        %2746 = vmatpush1.msra.mxu0 0.0
        %2747 = vmatprep.subr.mxu0 0.0
        %2748 = vmatpush1.msra.mxu0 0.0
        %2749 = vmatprep.subr.mxu0 0.0
        %2750 = vmatpush1.msra.mxu0 0.0
        %2751 = vmatprep.subr.mxu0 0.0
        %2752 = vmatpush1.msra.mxu0 0.0
        %2753 = vmatprep.subr.mxu0 0.0
        %2754 = vmatpush1.msra.mxu0 0.0
        %2755 = vmatprep.subr.mxu0 0.0
        %2756 = vmatpush1.msra.mxu0 0.0
        %2757 = vmatprep.subr.mxu0 0.0
        %2758 = vmatpush1.msra.mxu0 0.0
        %2759 = vmatprep.subr.mxu0 0.0
        %2760 = vmatpush1.msra.mxu0 0.0
        %2761 = vmatprep.subr.mxu0 0.0
        %2762 = vmatpush1.msra.mxu0 0.0
        %2763 = vmatprep.subr.mxu0 0.0
        %2764 = vmatpush1.msra.mxu0 0.0
        %2765 = vmatprep.subr.mxu0 0.0
        %2766 = vmatpush1.msra.mxu0 0.0
        %2767 = vmatprep.subr.mxu0 0.0
        %2768 = vmatpush1.msra.mxu0 0.0
        %2769 = vmatprep.subr.mxu0 0.0
        %2770 = vmatpush1.msra.mxu0 0.0
        %2771 = vmatprep.subr.mxu0 0.0
        %2772 = vmatpush1.msra.mxu0 0.0
        %2773 = vmatprep.subr.mxu0 0.0
        %2774 = vmatpush1.msra.mxu0 0.0
        %2775 = vmatprep.subr.mxu0 0.0
        %2776 = vmatpush1.msra.mxu0 0.0
        %2777 = vmatprep.subr.mxu0 0.0
        %2778 = vmatpush1.msra.mxu0 0.0
        %2779 = vmatprep.mubr.f32.mxu0 0.0
        %2780 = vmatmul.mubr.f32.gmra.mrb[0].mxu0 %v2713
        %v2781 = vpop.f32.mrb[0].mxu0
        %v2782 = vadd.f32 %v2710, %v2781
        %v2783 = vpop.f32.mrb[0].mxu0
        %2784 = vdwg.mxu0
        %v2785 = vld [vmem:[%s41] sm:$0x1]
        %v2786 = vld [vmem:[%s43] sm:$0x1]
        %v2787 = vsel %vm1299, %v2702, 0.0
        %2788 = vadd.xlane.f32.xlu0 %v2787
        %v2789 = vpop.xlane.xlu0 %2788
        %v2790 = vmul.f32 %v2789, %v1822
        %v2791 = vsub.f32 %v2702, %v2790
        %v2792 = vmul.f32 %v2791, %v2791
        %v2793 = vsel %vm1299, %v2792, 0.0
        %2794 = vadd.xlane.f32.xlu0 %v2793
        %v2795 = vpop.xlane.xlu0 %2794
        %v2796 = vmul.f32 %v2795, %v1822
        %v2797 = vadd.f32 %v2796, 1e-05
        %v2798 = vrsqrt.pop %v2797
        %v2799 = vmul.f32 %v2791, %v2798
        %v2801 = vlaneseq
        %v2802 = vshrl.u32 %v2801, 7
        %v2803 = vsub.s32 0, %v2802
        %v2804 = vrot.slane %v2785, %v2803
        %v2806 = vmul.f32 %v2799, %v2804
        %v2808 = vlaneseq
        %v2809 = vshrl.u32 %v2808, 7
        %v2810 = vsub.s32 0, %v2809
        %v2811 = vrot.slane %v2786, %v2810
        %v2813 = vadd.f32 %v2806, %v2811
        %v2814 = vld [vmem:[%s45] sm:$0x1]
        %v2815 = vld [vmem:[%s47] sm:$0x1]
        %v2816 = vsel %vm1299, %v2782, 0.0
        %2817 = vadd.xlane.f32.xlu0 %v2816
        %v2818 = vpop.xlane.xlu0 %2817
        %v2819 = vmul.f32 %v2818, %v1822
        %v2820 = vsub.f32 %v2782, %v2819
        %v2821 = vmul.f32 %v2820, %v2820
        %v2822 = vsel %vm1299, %v2821, 0.0
        %2823 = vadd.xlane.f32.xlu0 %v2822
        %v2824 = vpop.xlane.xlu0 %2823
        %v2825 = vmul.f32 %v2824, %v1822
        %v2826 = vadd.f32 %v2825, 1e-05
        %v2827 = vrsqrt.pop %v2826
        %v2828 = vmul.f32 %v2820, %v2827
        %v2830 = vlaneseq
        %v2831 = vshrl.u32 %v2830, 7
        %v2832 = vsub.s32 0, %v2831
        %v2833 = vrot.slane %v2814, %v2832
        %v2835 = vmul.f32 %v2828, %v2833
        %v2837 = vlaneseq
        %v2838 = vshrl.u32 %v2837, 7
        %v2839 = vsub.s32 0, %v2838
        %v2840 = vrot.slane %v2815, %v2839
        %v2842 = vadd.f32 %v2835, %v2840
        %v2843 = vld [vmem:[%s49] sm:$0xff]
        %v2844 = vld [vmem:[%s49 + $0x8] sm:$0xff]
        %v2845 = vld [vmem:[%s51] sm:$0x1]
        %v2846 = vld [vmem:[%s53] sm:$0xff]
        %v2847 = vld [vmem:[%s53 + $0x8] sm:$0xff]
        %v2848 = vld [vmem:[%s53 + $0x10] sm:$0xff]
        %v2849 = vld [vmem:[%s53 + $0x18] sm:$0xff]
        %v2850 = vld [vmem:[%s53 + $0x20] sm:$0xff]
        %v2851 = vld [vmem:[%s53 + $0x28] sm:$0xff]
        %v2852 = vld [vmem:[%s53 + $0x30] sm:$0xff]
        %v2853 = vld [vmem:[%s53 + $0x38] sm:$0xff]
        %v2854 = vld [vmem:[%s55] sm:$0x1]
        %v2855 = vld [vmem:[%s57] sm:$0x1]
        %v2856 = vld [vmem:[%s59] sm:$0x1]
        %v2858 = vlaneseq
        %v2859 = vshrl.u32 %v2858, 7
        %v2860 = vsub.s32 0, %v2859
        %v2861 = vrot.slane %v2845, %v2860
        %v2864 = vsel %vm1299, %v2813, 0
        %2866 = vmatprep.subr.mxu0 0.0
        %2867 = vmatpush1.msra.mxu0 %v2843
        %2868 = vmatprep.subr.mxu0 0.0
        %2869 = vmatpush1.msra.mxu0 %v2844
        %2870 = vmatprep.subr.mxu0 0.0
        %2871 = vmatpush1.msra.mxu0 0.0
        %2872 = vmatprep.subr.mxu0 0.0
        %2873 = vmatpush1.msra.mxu0 0.0
        %2874 = vmatprep.subr.mxu0 0.0
        %2875 = vmatpush1.msra.mxu0 0.0
        %2876 = vmatprep.subr.mxu0 0.0
        %2877 = vmatpush1.msra.mxu0 0.0
        %2878 = vmatprep.subr.mxu0 0.0
        %2879 = vmatpush1.msra.mxu0 0.0
        %2880 = vmatprep.subr.mxu0 0.0
        %2881 = vmatpush1.msra.mxu0 0.0
        %2882 = vmatprep.subr.mxu0 0.0
        %2883 = vmatpush1.msra.mxu0 0.0
        %2884 = vmatprep.subr.mxu0 0.0
        %2885 = vmatpush1.msra.mxu0 0.0
        %2886 = vmatprep.subr.mxu0 0.0
        %2887 = vmatpush1.msra.mxu0 0.0
        %2888 = vmatprep.subr.mxu0 0.0
        %2889 = vmatpush1.msra.mxu0 0.0
        %2890 = vmatprep.subr.mxu0 0.0
        %2891 = vmatpush1.msra.mxu0 0.0
        %2892 = vmatprep.subr.mxu0 0.0
        %2893 = vmatpush1.msra.mxu0 0.0
        %2894 = vmatprep.subr.mxu0 0.0
        %2895 = vmatpush1.msra.mxu0 0.0
        %2896 = vmatprep.subr.mxu0 0.0
        %2897 = vmatpush1.msra.mxu0 0.0
        %2898 = vmatprep.subr.mxu0 0.0
        %2899 = vmatpush1.msra.mxu0 0.0
        %2900 = vmatprep.subr.mxu0 0.0
        %2901 = vmatpush1.msra.mxu0 0.0
        %2902 = vmatprep.subr.mxu0 0.0
        %2903 = vmatpush1.msra.mxu0 0.0
        %2904 = vmatprep.subr.mxu0 0.0
        %2905 = vmatpush1.msra.mxu0 0.0
        %2906 = vmatprep.subr.mxu0 0.0
        %2907 = vmatpush1.msra.mxu0 0.0
        %2908 = vmatprep.subr.mxu0 0.0
        %2909 = vmatpush1.msra.mxu0 0.0
        %2910 = vmatprep.subr.mxu0 0.0
        %2911 = vmatpush1.msra.mxu0 0.0
        %2912 = vmatprep.subr.mxu0 0.0
        %2913 = vmatpush1.msra.mxu0 0.0
        %2914 = vmatprep.subr.mxu0 0.0
        %2915 = vmatpush1.msra.mxu0 0.0
        %2916 = vmatprep.subr.mxu0 0.0
        %2917 = vmatpush1.msra.mxu0 0.0
        %2918 = vmatprep.subr.mxu0 0.0
        %2919 = vmatpush1.msra.mxu0 0.0
        %2920 = vmatprep.subr.mxu0 0.0
        %2921 = vmatpush1.msra.mxu0 0.0
        %2922 = vmatprep.subr.mxu0 0.0
        %2923 = vmatpush1.msra.mxu0 0.0
        %2924 = vmatprep.subr.mxu0 0.0
        %2925 = vmatpush1.msra.mxu0 0.0
        %2926 = vmatprep.subr.mxu0 0.0
        %2927 = vmatpush1.msra.mxu0 0.0
        %2928 = vmatprep.subr.mxu0 0.0
        %2929 = vmatpush1.msra.mxu0 0.0
        %2930 = vmatprep.mubr.f32.mxu0 0.0
        %2931 = vmatmul.mubr.f32.gmra.mrb[0].mxu0 %v2864
        %v2932 = vpop.f32.mrb[0].mxu0
        %v2933 = vadd.f32 %v2861, %v2932
        %v2934 = vpop.f32.mrb[0].mxu0
        %2935 = vdwg.mxu0
        %v2936 = vmax.f32 %v2933, 0.0
        %v2938 = vlaneseq
        %v2939 = vshrl.u32 %v2938, 7
        %v2940 = vsub.s32 0, %v2939
        %v2941 = vrot.slane %v2854, %v2940
        %vm2943 = vcmask 523264
        %v2945 = vsel %vm2943, %v2936, 0
        %2947 = vmatprep.subr.mxu0 0.0
        %2948 = vmatpush1.msra.mxu0 %v2846
        %2949 = vmatprep.subr.mxu0 0.0
        %2950 = vmatpush1.msra.mxu0 %v2847
        %2951 = vmatprep.subr.mxu0 0.0
        %2952 = vmatpush1.msra.mxu0 %v2848
        %2953 = vmatprep.subr.mxu0 0.0
        %2954 = vmatpush1.msra.mxu0 %v2849
        %2955 = vmatprep.subr.mxu0 0.0
        %2956 = vmatpush1.msra.mxu0 %v2850
        %2957 = vmatprep.subr.mxu0 0.0
        %2958 = vmatpush1.msra.mxu0 %v2851
        %2959 = vmatprep.subr.mxu0 0.0
        %2960 = vmatpush1.msra.mxu0 %v2852
        %2961 = vmatprep.subr.mxu0 0.0
        %2962 = vmatpush1.msra.mxu0 %v2853
        %2963 = vmatprep.subr.mxu0 0.0
        %2964 = vmatpush1.msra.mxu0 0.0
        %2965 = vmatprep.subr.mxu0 0.0
        %2966 = vmatpush1.msra.mxu0 0.0
        %2967 = vmatprep.subr.mxu0 0.0
        %2968 = vmatpush1.msra.mxu0 0.0
        %2969 = vmatprep.subr.mxu0 0.0
        %2970 = vmatpush1.msra.mxu0 0.0
        %2971 = vmatprep.subr.mxu0 0.0
        %2972 = vmatpush1.msra.mxu0 0.0
        %2973 = vmatprep.subr.mxu0 0.0
        %2974 = vmatpush1.msra.mxu0 0.0
        %2975 = vmatprep.subr.mxu0 0.0
        %2976 = vmatpush1.msra.mxu0 0.0
        %2977 = vmatprep.subr.mxu0 0.0
        %2978 = vmatpush1.msra.mxu0 0.0
        %2979 = vmatprep.subr.mxu0 0.0
        %2980 = vmatpush1.msra.mxu0 0.0
        %2981 = vmatprep.subr.mxu0 0.0
        %2982 = vmatpush1.msra.mxu0 0.0
        %2983 = vmatprep.subr.mxu0 0.0
        %2984 = vmatpush1.msra.mxu0 0.0
        %2985 = vmatprep.subr.mxu0 0.0
        %2986 = vmatpush1.msra.mxu0 0.0
        %2987 = vmatprep.subr.mxu0 0.0
        %2988 = vmatpush1.msra.mxu0 0.0
        %2989 = vmatprep.subr.mxu0 0.0
        %2990 = vmatpush1.msra.mxu0 0.0
        %2991 = vmatprep.subr.mxu0 0.0
        %2992 = vmatpush1.msra.mxu0 0.0
        %2993 = vmatprep.subr.mxu0 0.0
        %2994 = vmatpush1.msra.mxu0 0.0
        %2995 = vmatprep.subr.mxu0 0.0
        %2996 = vmatpush1.msra.mxu0 0.0
        %2997 = vmatprep.subr.mxu0 0.0
        %2998 = vmatpush1.msra.mxu0 0.0
        %2999 = vmatprep.subr.mxu0 0.0
        %3000 = vmatpush1.msra.mxu0 0.0
        %3001 = vmatprep.subr.mxu0 0.0
        %3002 = vmatpush1.msra.mxu0 0.0
        %3003 = vmatprep.subr.mxu0 0.0
        %3004 = vmatpush1.msra.mxu0 0.0
        %3005 = vmatprep.subr.mxu0 0.0
        %3006 = vmatpush1.msra.mxu0 0.0
        %3007 = vmatprep.subr.mxu0 0.0
        %3008 = vmatpush1.msra.mxu0 0.0
        %3009 = vmatprep.subr.mxu0 0.0
        %3010 = vmatpush1.msra.mxu0 0.0
        %3011 = vmatprep.mubr.f32.mxu0 0.0
        %3012 = vmatmul.mubr.f32.gmra.mrb[0].mxu0 %v2945
        %v3013 = vpop.f32.mrb[0].mxu0
        %v3014 = vadd.f32 %v2941, %v3013
        %v3015 = vpop.f32.mrb[0].mxu0
        %3016 = vdwg.mxu0
        %v3017 = vadd.f32 %v2813, %v3014
        %v3018 = vsel %vm1299, %v3017, 0.0
        %3019 = vadd.xlane.f32.xlu0 %v3018
        %v3020 = vpop.xlane.xlu0 %3019
        %v3021 = vmul.f32 %v3020, %v1822
        %v3022 = vsub.f32 %v3017, %v3021
        %v3023 = vmul.f32 %v3022, %v3022
        %v3024 = vsel %vm1299, %v3023, 0.0
        %3025 = vadd.xlane.f32.xlu0 %v3024
        %v3026 = vpop.xlane.xlu0 %3025
        %v3027 = vmul.f32 %v3026, %v1822
        %v3028 = vadd.f32 %v3027, 1e-05
        %v3029 = vrsqrt.pop %v3028
        %v3030 = vmul.f32 %v3022, %v3029
        %v3032 = vlaneseq
        %v3033 = vshrl.u32 %v3032, 7
        %v3034 = vsub.s32 0, %v3033
        %v3035 = vrot.slane %v2855, %v3034
        %v3037 = vmul.f32 %v3030, %v3035
        %v3039 = vlaneseq
        %v3040 = vshrl.u32 %v3039, 7
        %v3041 = vsub.s32 0, %v3040
        %v3042 = vrot.slane %v2856, %v3041
        %v3044 = vadd.f32 %v3037, %v3042
        %v3045 = vld [vmem:[%s61] sm:$0xff]
        %v3046 = vld [vmem:[%s61 + $0x8] sm:$0xff]
        %v3047 = vld [vmem:[%s63] sm:$0x1]
        %v3048 = vld [vmem:[%s65] sm:$0xff]
        %v3049 = vld [vmem:[%s65 + $0x8] sm:$0xff]
        %v3050 = vld [vmem:[%s65 + $0x10] sm:$0xff]
        %v3051 = vld [vmem:[%s65 + $0x18] sm:$0xff]
        %v3052 = vld [vmem:[%s65 + $0x20] sm:$0xff]
        %v3053 = vld [vmem:[%s65 + $0x28] sm:$0xff]
        %v3054 = vld [vmem:[%s65 + $0x30] sm:$0xff]
        %v3055 = vld [vmem:[%s65 + $0x38] sm:$0xff]
        %v3056 = vld [vmem:[%s67] sm:$0x1]
        %v3057 = vld [vmem:[%s69] sm:$0x1]
        %v3058 = vld [vmem:[%s71] sm:$0x1]
        %v3060 = vlaneseq
        %v3061 = vshrl.u32 %v3060, 7
        %v3062 = vsub.s32 0, %v3061
        %v3063 = vrot.slane %v3047, %v3062
        %v3066 = vsel %vm1299, %v2842, 0
        %3068 = vmatprep.subr.mxu0 0.0
        %3069 = vmatpush1.msra.mxu0 %v3045
        %3070 = vmatprep.subr.mxu0 0.0
        %3071 = vmatpush1.msra.mxu0 %v3046
        %3072 = vmatprep.subr.mxu0 0.0
        %3073 = vmatpush1.msra.mxu0 0.0
        %3074 = vmatprep.subr.mxu0 0.0
        %3075 = vmatpush1.msra.mxu0 0.0
        %3076 = vmatprep.subr.mxu0 0.0
        %3077 = vmatpush1.msra.mxu0 0.0
        %3078 = vmatprep.subr.mxu0 0.0
        %3079 = vmatpush1.msra.mxu0 0.0
        %3080 = vmatprep.subr.mxu0 0.0
        %3081 = vmatpush1.msra.mxu0 0.0
        %3082 = vmatprep.subr.mxu0 0.0
        %3083 = vmatpush1.msra.mxu0 0.0
        %3084 = vmatprep.subr.mxu0 0.0
        %3085 = vmatpush1.msra.mxu0 0.0
        %3086 = vmatprep.subr.mxu0 0.0
        %3087 = vmatpush1.msra.mxu0 0.0
        %3088 = vmatprep.subr.mxu0 0.0
        %3089 = vmatpush1.msra.mxu0 0.0
        %3090 = vmatprep.subr.mxu0 0.0
        %3091 = vmatpush1.msra.mxu0 0.0
        %3092 = vmatprep.subr.mxu0 0.0
        %3093 = vmatpush1.msra.mxu0 0.0
        %3094 = vmatprep.subr.mxu0 0.0
        %3095 = vmatpush1.msra.mxu0 0.0
        %3096 = vmatprep.subr.mxu0 0.0
        %3097 = vmatpush1.msra.mxu0 0.0
        %3098 = vmatprep.subr.mxu0 0.0
        %3099 = vmatpush1.msra.mxu0 0.0
        %3100 = vmatprep.subr.mxu0 0.0
        %3101 = vmatpush1.msra.mxu0 0.0
        %3102 = vmatprep.subr.mxu0 0.0
        %3103 = vmatpush1.msra.mxu0 0.0
        %3104 = vmatprep.subr.mxu0 0.0
        %3105 = vmatpush1.msra.mxu0 0.0
        %3106 = vmatprep.subr.mxu0 0.0
        %3107 = vmatpush1.msra.mxu0 0.0
        %3108 = vmatprep.subr.mxu0 0.0
        %3109 = vmatpush1.msra.mxu0 0.0
        %3110 = vmatprep.subr.mxu0 0.0
        %3111 = vmatpush1.msra.mxu0 0.0
        %3112 = vmatprep.subr.mxu0 0.0
        %3113 = vmatpush1.msra.mxu0 0.0
        %3114 = vmatprep.subr.mxu0 0.0
        %3115 = vmatpush1.msra.mxu0 0.0
        %3116 = vmatprep.subr.mxu0 0.0
        %3117 = vmatpush1.msra.mxu0 0.0
        %3118 = vmatprep.subr.mxu0 0.0
        %3119 = vmatpush1.msra.mxu0 0.0
        %3120 = vmatprep.subr.mxu0 0.0
        %3121 = vmatpush1.msra.mxu0 0.0
        %3122 = vmatprep.subr.mxu0 0.0
        %3123 = vmatpush1.msra.mxu0 0.0
        %3124 = vmatprep.subr.mxu0 0.0
        %3125 = vmatpush1.msra.mxu0 0.0
        %3126 = vmatprep.subr.mxu0 0.0
        %3127 = vmatpush1.msra.mxu0 0.0
        %3128 = vmatprep.subr.mxu0 0.0
        %3129 = vmatpush1.msra.mxu0 0.0
        %3130 = vmatprep.subr.mxu0 0.0
        %3131 = vmatpush1.msra.mxu0 0.0
        %3132 = vmatprep.mubr.f32.mxu0 0.0
        %3133 = vmatmul.mubr.f32.gmra.mrb[0].mxu0 %v3066
        %v3134 = vpop.f32.mrb[0].mxu0
        %v3135 = vadd.f32 %v3063, %v3134
        %v3136 = vpop.f32.mrb[0].mxu0
        %3137 = vdwg.mxu0
        %v3138 = vmax.f32 %v3135, 0.0
        %v3140 = vlaneseq
        %v3141 = vshrl.u32 %v3140, 7
        %v3142 = vsub.s32 0, %v3141
        %v3143 = vrot.slane %v3056, %v3142
        %v3146 = vsel %vm2943, %v3138, 0
        %3148 = vmatprep.subr.mxu0 0.0
        %3149 = vmatpush1.msra.mxu0 %v3048
        %3150 = vmatprep.subr.mxu0 0.0
        %3151 = vmatpush1.msra.mxu0 %v3049
        %3152 = vmatprep.subr.mxu0 0.0
        %3153 = vmatpush1.msra.mxu0 %v3050
        %3154 = vmatprep.subr.mxu0 0.0
        %3155 = vmatpush1.msra.mxu0 %v3051
        %3156 = vmatprep.subr.mxu0 0.0
        %3157 = vmatpush1.msra.mxu0 %v3052
        %3158 = vmatprep.subr.mxu0 0.0
        %3159 = vmatpush1.msra.mxu0 %v3053
        %3160 = vmatprep.subr.mxu0 0.0
        %3161 = vmatpush1.msra.mxu0 %v3054
        %3162 = vmatprep.subr.mxu0 0.0
        %3163 = vmatpush1.msra.mxu0 %v3055
        %3164 = vmatprep.subr.mxu0 0.0
        %3165 = vmatpush1.msra.mxu0 0.0
        %3166 = vmatprep.subr.mxu0 0.0
        %3167 = vmatpush1.msra.mxu0 0.0
        %3168 = vmatprep.subr.mxu0 0.0
        %3169 = vmatpush1.msra.mxu0 0.0
        %3170 = vmatprep.subr.mxu0 0.0
        %3171 = vmatpush1.msra.mxu0 0.0
        %3172 = vmatprep.subr.mxu0 0.0
        %3173 = vmatpush1.msra.mxu0 0.0
        %3174 = vmatprep.subr.mxu0 0.0
        %3175 = vmatpush1.msra.mxu0 0.0
        %3176 = vmatprep.subr.mxu0 0.0
        %3177 = vmatpush1.msra.mxu0 0.0
        %3178 = vmatprep.subr.mxu0 0.0
        %3179 = vmatpush1.msra.mxu0 0.0
        %3180 = vmatprep.subr.mxu0 0.0
        %3181 = vmatpush1.msra.mxu0 0.0
        %3182 = vmatprep.subr.mxu0 0.0
        %3183 = vmatpush1.msra.mxu0 0.0
        %3184 = vmatprep.subr.mxu0 0.0
        %3185 = vmatpush1.msra.mxu0 0.0
        %3186 = vmatprep.subr.mxu0 0.0
        %3187 = vmatpush1.msra.mxu0 0.0
        %3188 = vmatprep.subr.mxu0 0.0
        %3189 = vmatpush1.msra.mxu0 0.0
        %3190 = vmatprep.subr.mxu0 0.0
        %3191 = vmatpush1.msra.mxu0 0.0
        %3192 = vmatprep.subr.mxu0 0.0
        %3193 = vmatpush1.msra.mxu0 0.0
        %3194 = vmatprep.subr.mxu0 0.0
        %3195 = vmatpush1.msra.mxu0 0.0
        %3196 = vmatprep.subr.mxu0 0.0
        %3197 = vmatpush1.msra.mxu0 0.0
        %3198 = vmatprep.subr.mxu0 0.0
        %3199 = vmatpush1.msra.mxu0 0.0
        %3200 = vmatprep.subr.mxu0 0.0
        %3201 = vmatpush1.msra.mxu0 0.0
        %3202 = vmatprep.subr.mxu0 0.0
        %3203 = vmatpush1.msra.mxu0 0.0
        %3204 = vmatprep.subr.mxu0 0.0
        %3205 = vmatpush1.msra.mxu0 0.0
        %3206 = vmatprep.subr.mxu0 0.0
        %3207 = vmatpush1.msra.mxu0 0.0
        %3208 = vmatprep.subr.mxu0 0.0
        %3209 = vmatpush1.msra.mxu0 0.0
        %3210 = vmatprep.subr.mxu0 0.0
        %3211 = vmatpush1.msra.mxu0 0.0
        %3212 = vmatprep.mubr.f32.mxu0 0.0
        %3213 = vmatmul.mubr.f32.gmra.mrb[0].mxu0 %v3146
        %v3214 = vpop.f32.mrb[0].mxu0
        %v3215 = vadd.f32 %v3143, %v3214
        %v3216 = vpop.f32.mrb[0].mxu0
        %3217 = vdwg.mxu0
        %v3218 = vadd.f32 %v2842, %v3215
        %v3219 = vsel %vm1299, %v3218, 0.0
        %3220 = vadd.xlane.f32.xlu0 %v3219
        %v3221 = vpop.xlane.xlu0 %3220
        %v3222 = vmul.f32 %v3221, %v1822
        %v3223 = vsub.f32 %v3218, %v3222
        %v3224 = vmul.f32 %v3223, %v3223
        %v3225 = vsel %vm1299, %v3224, 0.0
        %3226 = vadd.xlane.f32.xlu0 %v3225
        %v3227 = vpop.xlane.xlu0 %3226
        %v3228 = vmul.f32 %v3227, %v1822
        %v3229 = vadd.f32 %v3228, 1e-05
        %v3230 = vrsqrt.pop %v3229
        %v3231 = vmul.f32 %v3223, %v3230
        %v3233 = vlaneseq
        %v3234 = vshrl.u32 %v3233, 7
        %v3235 = vsub.s32 0, %v3234
        %v3236 = vrot.slane %v3057, %v3235
        %v3238 = vmul.f32 %v3231, %v3236
        %v3240 = vlaneseq
        %v3241 = vshrl.u32 %v3240, 7
        %v3242 = vsub.s32 0, %v3241
        %v3243 = vrot.slane %v3058, %v3242
        %v3245 = vadd.f32 %v3238, %v3243
        %v3246 = vld [vmem:[%s7] sm:$0xff]
        %v3248 = vsel %vm1378, %v3246, 0
        %3250 = vmatprep.subr.mxu0 0.0
        %3251 = vmatpush1.msra.mxu0 %v3245
        %3252 = vmatprep.subr.mxu0 0.0
        %3253 = vmatpush1.msra.mxu0 0.0
        %3254 = vmatprep.subr.mxu0 0.0
        %3255 = vmatpush1.msra.mxu0 0.0
        %3256 = vmatprep.subr.mxu0 0.0
        %3257 = vmatpush1.msra.mxu0 0.0
        %3258 = vmatprep.subr.mxu0 0.0
        %3259 = vmatpush1.msra.mxu0 0.0
        %3260 = vmatprep.subr.mxu0 0.0
        %3261 = vmatpush1.msra.mxu0 0.0
        %3262 = vmatprep.subr.mxu0 0.0
        %3263 = vmatpush1.msra.mxu0 0.0
        %3264 = vmatprep.subr.mxu0 0.0
        %3265 = vmatpush1.msra.mxu0 0.0
        %3266 = vmatprep.subr.mxu0 0.0
        %3267 = vmatpush1.msra.mxu0 0.0
        %3268 = vmatprep.subr.mxu0 0.0
        %3269 = vmatpush1.msra.mxu0 0.0
        %3270 = vmatprep.subr.mxu0 0.0
        %3271 = vmatpush1.msra.mxu0 0.0
        %3272 = vmatprep.subr.mxu0 0.0
        %3273 = vmatpush1.msra.mxu0 0.0
        %3274 = vmatprep.subr.mxu0 0.0
        %3275 = vmatpush1.msra.mxu0 0.0
        %3276 = vmatprep.subr.mxu0 0.0
        %3277 = vmatpush1.msra.mxu0 0.0
        %3278 = vmatprep.subr.mxu0 0.0
        %3279 = vmatpush1.msra.mxu0 0.0
        %3280 = vmatprep.subr.mxu0 0.0
        %3281 = vmatpush1.msra.mxu0 0.0
        %3282 = vmatprep.subr.mxu0 0.0
        %3283 = vmatpush1.msra.mxu0 0.0
        %3284 = vmatprep.subr.mxu0 0.0
        %3285 = vmatpush1.msra.mxu0 0.0
        %3286 = vmatprep.subr.mxu0 0.0
        %3287 = vmatpush1.msra.mxu0 0.0
        %3288 = vmatprep.subr.mxu0 0.0
        %3289 = vmatpush1.msra.mxu0 0.0
        %3290 = vmatprep.subr.mxu0 0.0
        %3291 = vmatpush1.msra.mxu0 0.0
        %3292 = vmatprep.subr.mxu0 0.0
        %3293 = vmatpush1.msra.mxu0 0.0
        %3294 = vmatprep.subr.mxu0 0.0
        %3295 = vmatpush1.msra.mxu0 0.0
        %3296 = vmatprep.subr.mxu0 0.0
        %3297 = vmatpush1.msra.mxu0 0.0
        %3298 = vmatprep.subr.mxu0 0.0
        %3299 = vmatpush1.msra.mxu0 0.0
        %3300 = vmatprep.subr.mxu0 0.0
        %3301 = vmatpush1.msra.mxu0 0.0
        %3302 = vmatprep.subr.mxu0 0.0
        %3303 = vmatpush1.msra.mxu0 0.0
        %3304 = vmatprep.subr.mxu0 0.0
        %3305 = vmatpush1.msra.mxu0 0.0
        %3306 = vmatprep.subr.mxu0 0.0
        %3307 = vmatpush1.msra.mxu0 0.0
        %3308 = vmatprep.subr.mxu0 0.0
        %3309 = vmatpush1.msra.mxu0 0.0
        %3310 = vmatprep.subr.mxu0 0.0
        %3311 = vmatpush1.msra.mxu0 0.0
        %3312 = vmatprep.subr.mxu0 0.0
        %3313 = vmatpush1.msra.mxu0 0.0
        %3314 = vmatprep.mubr.f32.mxu0 0.0
        %3315 = vmatmul.mubr.f32.gmra.mrb[0].mxu0 %v3248
        %v3316 = vpop.f32.mrb[0].mxu0
        %v3317 = vadd.f32 0.0, %v3316
        %v3318 = vpop.f32.mrb[0].mxu0
        %3319 = vdwg.mxu0
        %3320 = vmatprep.subr.mxu0 0.0
        %3321 = vmatpush1.msra.mxu0 %v3317
        %3322 = vmatprep.subr.mxu0 0.0
        %3323 = vmatpush1.msra.mxu0 0.0
        %3324 = vmatprep.subr.mxu0 0.0
        %3325 = vmatpush1.msra.mxu0 0.0
        %3326 = vmatprep.subr.mxu0 0.0
        %3327 = vmatpush1.msra.mxu0 0.0
        %3328 = vmatprep.subr.mxu0 0.0
        %3329 = vmatpush1.msra.mxu0 0.0
        %3330 = vmatprep.subr.mxu0 0.0
        %3331 = vmatpush1.msra.mxu0 0.0
        %3332 = vmatprep.subr.mxu0 0.0
        %3333 = vmatpush1.msra.mxu0 0.0
        %3334 = vmatprep.subr.mxu0 0.0
        %3335 = vmatpush1.msra.mxu0 0.0
        %3336 = vmatprep.subr.mxu0 0.0
        %3337 = vmatpush1.msra.mxu0 0.0
        %3338 = vmatprep.subr.mxu0 0.0
        %3339 = vmatpush1.msra.mxu0 0.0
        %3340 = vmatprep.subr.mxu0 0.0
        %3341 = vmatpush1.msra.mxu0 0.0
        %3342 = vmatprep.subr.mxu0 0.0
        %3343 = vmatpush1.msra.mxu0 0.0
        %3344 = vmatprep.subr.mxu0 0.0
        %3345 = vmatpush1.msra.mxu0 0.0
        %3346 = vmatprep.subr.mxu0 0.0
        %3347 = vmatpush1.msra.mxu0 0.0
        %3348 = vmatprep.subr.mxu0 0.0
        %3349 = vmatpush1.msra.mxu0 0.0
        %3350 = vmatprep.subr.mxu0 0.0
        %3351 = vmatpush1.msra.mxu0 0.0
        %3352 = vmatprep.subr.mxu0 0.0
        %3353 = vmatpush1.msra.mxu0 0.0
        %3354 = vmatprep.subr.mxu0 0.0
        %3355 = vmatpush1.msra.mxu0 0.0
        %3356 = vmatprep.subr.mxu0 0.0
        %3357 = vmatpush1.msra.mxu0 0.0
        %3358 = vmatprep.subr.mxu0 0.0
        %3359 = vmatpush1.msra.mxu0 0.0
        %3360 = vmatprep.subr.mxu0 0.0
        %3361 = vmatpush1.msra.mxu0 0.0
        %3362 = vmatprep.subr.mxu0 0.0
        %3363 = vmatpush1.msra.mxu0 0.0
        %3364 = vmatprep.subr.mxu0 0.0
        %3365 = vmatpush1.msra.mxu0 0.0
        %3366 = vmatprep.subr.mxu0 0.0
        %3367 = vmatpush1.msra.mxu0 0.0
        %3368 = vmatprep.subr.mxu0 0.0
        %3369 = vmatpush1.msra.mxu0 0.0
        %3370 = vmatprep.subr.mxu0 0.0
        %3371 = vmatpush1.msra.mxu0 0.0
        %3372 = vmatprep.subr.mxu0 0.0
        %3373 = vmatpush1.msra.mxu0 0.0
        %3374 = vmatprep.subr.mxu0 0.0
        %3375 = vmatpush1.msra.mxu0 0.0
        %3376 = vmatprep.subr.mxu0 0.0
        %3377 = vmatpush1.msra.mxu0 0.0
        %3378 = vmatprep.subr.mxu0 0.0
        %3379 = vmatpush1.msra.mxu0 0.0
        %3380 = vmatprep.subr.mxu0 0.0
        %3381 = vmatpush1.msra.mxu0 0.0
        %3382 = vmatprep.subr.mxu0 0.0
        %3383 = vmatpush1.msra.mxu0 0.0
        %3384 = vmatprep.mubr.f32.mxu0 0.0
        %3385 = vmatmul.mubr.f32.gmra.mrb[0].mxu0 %v3248
        %v3386 = vpop.f32.mrb[0].mxu0
        %v3387 = vadd.f32 0.0, %v3386
        %v3388 = vpop.f32.mrb[0].mxu0
        %3389 = vdwg.mxu0
        %s3390 = scalar_lea.vmem %s7, 8
        %v3391 = vld [vmem:[%s3390] sm:$0xff]
        %v3393 = vsel %vm1378, %v3391, 0
        %3395 = vmatprep.subr.mxu0 0.0
        %3396 = vmatpush1.msra.mxu0 %v3245
        %3397 = vmatprep.subr.mxu0 0.0
        %3398 = vmatpush1.msra.mxu0 0.0
        %3399 = vmatprep.subr.mxu0 0.0
        %3400 = vmatpush1.msra.mxu0 0.0
        %3401 = vmatprep.subr.mxu0 0.0
        %3402 = vmatpush1.msra.mxu0 0.0
        %3403 = vmatprep.subr.mxu0 0.0
        %3404 = vmatpush1.msra.mxu0 0.0
        %3405 = vmatprep.subr.mxu0 0.0
        %3406 = vmatpush1.msra.mxu0 0.0
        %3407 = vmatprep.subr.mxu0 0.0
        %3408 = vmatpush1.msra.mxu0 0.0
        %3409 = vmatprep.subr.mxu0 0.0
        %3410 = vmatpush1.msra.mxu0 0.0
        %3411 = vmatprep.subr.mxu0 0.0
        %3412 = vmatpush1.msra.mxu0 0.0
        %3413 = vmatprep.subr.mxu0 0.0
        %3414 = vmatpush1.msra.mxu0 0.0
        %3415 = vmatprep.subr.mxu0 0.0
        %3416 = vmatpush1.msra.mxu0 0.0
        %3417 = vmatprep.subr.mxu0 0.0
        %3418 = vmatpush1.msra.mxu0 0.0
        %3419 = vmatprep.subr.mxu0 0.0
        %3420 = vmatpush1.msra.mxu0 0.0
        %3421 = vmatprep.subr.mxu0 0.0
        %3422 = vmatpush1.msra.mxu0 0.0
        %3423 = vmatprep.subr.mxu0 0.0
        %3424 = vmatpush1.msra.mxu0 0.0
        %3425 = vmatprep.subr.mxu0 0.0
        %3426 = vmatpush1.msra.mxu0 0.0
        %3427 = vmatprep.subr.mxu0 0.0
        %3428 = vmatpush1.msra.mxu0 0.0
        %3429 = vmatprep.subr.mxu0 0.0
        %3430 = vmatpush1.msra.mxu0 0.0
        %3431 = vmatprep.subr.mxu0 0.0
        %3432 = vmatpush1.msra.mxu0 0.0
        %3433 = vmatprep.subr.mxu0 0.0
        %3434 = vmatpush1.msra.mxu0 0.0
        %3435 = vmatprep.subr.mxu0 0.0
        %3436 = vmatpush1.msra.mxu0 0.0
        %3437 = vmatprep.subr.mxu0 0.0
        %3438 = vmatpush1.msra.mxu0 0.0
        %3439 = vmatprep.subr.mxu0 0.0
        %3440 = vmatpush1.msra.mxu0 0.0
        %3441 = vmatprep.subr.mxu0 0.0
        %3442 = vmatpush1.msra.mxu0 0.0
        %3443 = vmatprep.subr.mxu0 0.0
        %3444 = vmatpush1.msra.mxu0 0.0
        %3445 = vmatprep.subr.mxu0 0.0
        %3446 = vmatpush1.msra.mxu0 0.0
        %3447 = vmatprep.subr.mxu0 0.0
        %3448 = vmatpush1.msra.mxu0 0.0
        %3449 = vmatprep.subr.mxu0 0.0
        %3450 = vmatpush1.msra.mxu0 0.0
        %3451 = vmatprep.subr.mxu0 0.0
        %3452 = vmatpush1.msra.mxu0 0.0
        %3453 = vmatprep.subr.mxu0 0.0
        %3454 = vmatpush1.msra.mxu0 0.0
        %3455 = vmatprep.subr.mxu0 0.0
        %3456 = vmatpush1.msra.mxu0 0.0
        %3457 = vmatprep.subr.mxu0 0.0
        %3458 = vmatpush1.msra.mxu0 0.0
        %3459 = vmatprep.mubr.f32.mxu0 0.0
        %3460 = vmatmul.mubr.f32.gmra.mrb[0].mxu0 %v3393
        %v3461 = vpop.f32.mrb[0].mxu0
        %v3462 = vadd.f32 0.0, %v3461
        %v3463 = vpop.f32.mrb[0].mxu0
        %3464 = vdwg.mxu0
        %3465 = vmatprep.subr.mxu0 0.0
        %3466 = vmatpush1.msra.mxu0 %v3462
        %3467 = vmatprep.subr.mxu0 0.0
        %3468 = vmatpush1.msra.mxu0 0.0
        %3469 = vmatprep.subr.mxu0 0.0
        %3470 = vmatpush1.msra.mxu0 0.0
        %3471 = vmatprep.subr.mxu0 0.0
        %3472 = vmatpush1.msra.mxu0 0.0
        %3473 = vmatprep.subr.mxu0 0.0
        %3474 = vmatpush1.msra.mxu0 0.0
        %3475 = vmatprep.subr.mxu0 0.0
        %3476 = vmatpush1.msra.mxu0 0.0
        %3477 = vmatprep.subr.mxu0 0.0
        %3478 = vmatpush1.msra.mxu0 0.0
        %3479 = vmatprep.subr.mxu0 0.0
        %3480 = vmatpush1.msra.mxu0 0.0
        %3481 = vmatprep.subr.mxu0 0.0
        %3482 = vmatpush1.msra.mxu0 0.0
        %3483 = vmatprep.subr.mxu0 0.0
        %3484 = vmatpush1.msra.mxu0 0.0
        %3485 = vmatprep.subr.mxu0 0.0
        %3486 = vmatpush1.msra.mxu0 0.0
        %3487 = vmatprep.subr.mxu0 0.0
        %3488 = vmatpush1.msra.mxu0 0.0
        %3489 = vmatprep.subr.mxu0 0.0
        %3490 = vmatpush1.msra.mxu0 0.0
        %3491 = vmatprep.subr.mxu0 0.0
        %3492 = vmatpush1.msra.mxu0 0.0
        %3493 = vmatprep.subr.mxu0 0.0
        %3494 = vmatpush1.msra.mxu0 0.0
        %3495 = vmatprep.subr.mxu0 0.0
        %3496 = vmatpush1.msra.mxu0 0.0
        %3497 = vmatprep.subr.mxu0 0.0
        %3498 = vmatpush1.msra.mxu0 0.0
        %3499 = vmatprep.subr.mxu0 0.0
        %3500 = vmatpush1.msra.mxu0 0.0
        %3501 = vmatprep.subr.mxu0 0.0
        %3502 = vmatpush1.msra.mxu0 0.0
        %3503 = vmatprep.subr.mxu0 0.0
        %3504 = vmatpush1.msra.mxu0 0.0
        %3505 = vmatprep.subr.mxu0 0.0
        %3506 = vmatpush1.msra.mxu0 0.0
        %3507 = vmatprep.subr.mxu0 0.0
        %3508 = vmatpush1.msra.mxu0 0.0
        %3509 = vmatprep.subr.mxu0 0.0
        %3510 = vmatpush1.msra.mxu0 0.0
        %3511 = vmatprep.subr.mxu0 0.0
        %3512 = vmatpush1.msra.mxu0 0.0
        %3513 = vmatprep.subr.mxu0 0.0
        %3514 = vmatpush1.msra.mxu0 0.0
        %3515 = vmatprep.subr.mxu0 0.0
        %3516 = vmatpush1.msra.mxu0 0.0
        %3517 = vmatprep.subr.mxu0 0.0
        %3518 = vmatpush1.msra.mxu0 0.0
        %3519 = vmatprep.subr.mxu0 0.0
        %3520 = vmatpush1.msra.mxu0 0.0
        %3521 = vmatprep.subr.mxu0 0.0
        %3522 = vmatpush1.msra.mxu0 0.0
        %3523 = vmatprep.subr.mxu0 0.0
        %3524 = vmatpush1.msra.mxu0 0.0
        %3525 = vmatprep.subr.mxu0 0.0
        %3526 = vmatpush1.msra.mxu0 0.0
        %3527 = vmatprep.subr.mxu0 0.0
        %3528 = vmatpush1.msra.mxu0 0.0
        %3529 = vmatprep.mubr.f32.mxu0 0.0
        %3530 = vmatmul.mubr.f32.gmra.mrb[0].mxu0 %v3393
        %v3531 = vpop.f32.mrb[0].mxu0
        %v3532 = vadd.f32 0.0, %v3531
        %v3533 = vpop.f32.mrb[0].mxu0
        %3534 = vdwg.mxu0
        %s3535 = scalar_lea.vmem %s7, 16
        %v3536 = vld [vmem:[%s3535] sm:$0xff]
        %v3538 = vsel %vm1378, %v3536, 0
        %3540 = vmatprep.subr.mxu0 0.0
        %3541 = vmatpush1.msra.mxu0 %v3245
        %3542 = vmatprep.subr.mxu0 0.0
        %3543 = vmatpush1.msra.mxu0 0.0
        %3544 = vmatprep.subr.mxu0 0.0
        %3545 = vmatpush1.msra.mxu0 0.0
        %3546 = vmatprep.subr.mxu0 0.0
        %3547 = vmatpush1.msra.mxu0 0.0
        %3548 = vmatprep.subr.mxu0 0.0
        %3549 = vmatpush1.msra.mxu0 0.0
        %3550 = vmatprep.subr.mxu0 0.0
        %3551 = vmatpush1.msra.mxu0 0.0
        %3552 = vmatprep.subr.mxu0 0.0
        %3553 = vmatpush1.msra.mxu0 0.0
        %3554 = vmatprep.subr.mxu0 0.0
        %3555 = vmatpush1.msra.mxu0 0.0
        %3556 = vmatprep.subr.mxu0 0.0
        %3557 = vmatpush1.msra.mxu0 0.0
        %3558 = vmatprep.subr.mxu0 0.0
        %3559 = vmatpush1.msra.mxu0 0.0
        %3560 = vmatprep.subr.mxu0 0.0
        %3561 = vmatpush1.msra.mxu0 0.0
        %3562 = vmatprep.subr.mxu0 0.0
        %3563 = vmatpush1.msra.mxu0 0.0
        %3564 = vmatprep.subr.mxu0 0.0
        %3565 = vmatpush1.msra.mxu0 0.0
        %3566 = vmatprep.subr.mxu0 0.0
        %3567 = vmatpush1.msra.mxu0 0.0
        %3568 = vmatprep.subr.mxu0 0.0
        %3569 = vmatpush1.msra.mxu0 0.0
        %3570 = vmatprep.subr.mxu0 0.0
        %3571 = vmatpush1.msra.mxu0 0.0
        %3572 = vmatprep.subr.mxu0 0.0
        %3573 = vmatpush1.msra.mxu0 0.0
        %3574 = vmatprep.subr.mxu0 0.0
        %3575 = vmatpush1.msra.mxu0 0.0
        %3576 = vmatprep.subr.mxu0 0.0
        %3577 = vmatpush1.msra.mxu0 0.0
        %3578 = vmatprep.subr.mxu0 0.0
        %3579 = vmatpush1.msra.mxu0 0.0
        %3580 = vmatprep.subr.mxu0 0.0
        %3581 = vmatpush1.msra.mxu0 0.0
        %3582 = vmatprep.subr.mxu0 0.0
        %3583 = vmatpush1.msra.mxu0 0.0
        %3584 = vmatprep.subr.mxu0 0.0
        %3585 = vmatpush1.msra.mxu0 0.0
        %3586 = vmatprep.subr.mxu0 0.0
        %3587 = vmatpush1.msra.mxu0 0.0
        %3588 = vmatprep.subr.mxu0 0.0
        %3589 = vmatpush1.msra.mxu0 0.0
        %3590 = vmatprep.subr.mxu0 0.0
        %3591 = vmatpush1.msra.mxu0 0.0
        %3592 = vmatprep.subr.mxu0 0.0
        %3593 = vmatpush1.msra.mxu0 0.0
        %3594 = vmatprep.subr.mxu0 0.0
        %3595 = vmatpush1.msra.mxu0 0.0
        %3596 = vmatprep.subr.mxu0 0.0
        %3597 = vmatpush1.msra.mxu0 0.0
        %3598 = vmatprep.subr.mxu0 0.0
        %3599 = vmatpush1.msra.mxu0 0.0
        %3600 = vmatprep.subr.mxu0 0.0
        %3601 = vmatpush1.msra.mxu0 0.0
        %3602 = vmatprep.subr.mxu0 0.0
        %3603 = vmatpush1.msra.mxu0 0.0
        %3604 = vmatprep.mubr.f32.mxu0 0.0
        %3605 = vmatmul.mubr.f32.gmra.mrb[0].mxu0 %v3538
        %v3606 = vpop.f32.mrb[0].mxu0
        %v3607 = vadd.f32 0.0, %v3606
        %v3608 = vpop.f32.mrb[0].mxu0
        %3609 = vdwg.mxu0
        %3610 = vmatprep.subr.mxu0 0.0
        %3611 = vmatpush1.msra.mxu0 %v3607
        %3612 = vmatprep.subr.mxu0 0.0
        %3613 = vmatpush1.msra.mxu0 0.0
        %3614 = vmatprep.subr.mxu0 0.0
        %3615 = vmatpush1.msra.mxu0 0.0
        %3616 = vmatprep.subr.mxu0 0.0
        %3617 = vmatpush1.msra.mxu0 0.0
        %3618 = vmatprep.subr.mxu0 0.0
        %3619 = vmatpush1.msra.mxu0 0.0
        %3620 = vmatprep.subr.mxu0 0.0
        %3621 = vmatpush1.msra.mxu0 0.0
        %3622 = vmatprep.subr.mxu0 0.0
        %3623 = vmatpush1.msra.mxu0 0.0
        %3624 = vmatprep.subr.mxu0 0.0
        %3625 = vmatpush1.msra.mxu0 0.0
        %3626 = vmatprep.subr.mxu0 0.0
        %3627 = vmatpush1.msra.mxu0 0.0
        %3628 = vmatprep.subr.mxu0 0.0
        %3629 = vmatpush1.msra.mxu0 0.0
        %3630 = vmatprep.subr.mxu0 0.0
        %3631 = vmatpush1.msra.mxu0 0.0
        %3632 = vmatprep.subr.mxu0 0.0
        %3633 = vmatpush1.msra.mxu0 0.0
        %3634 = vmatprep.subr.mxu0 0.0
        %3635 = vmatpush1.msra.mxu0 0.0
        %3636 = vmatprep.subr.mxu0 0.0
        %3637 = vmatpush1.msra.mxu0 0.0
        %3638 = vmatprep.subr.mxu0 0.0
        %3639 = vmatpush1.msra.mxu0 0.0
        %3640 = vmatprep.subr.mxu0 0.0
        %3641 = vmatpush1.msra.mxu0 0.0
        %3642 = vmatprep.subr.mxu0 0.0
        %3643 = vmatpush1.msra.mxu0 0.0
        %3644 = vmatprep.subr.mxu0 0.0
        %3645 = vmatpush1.msra.mxu0 0.0
        %3646 = vmatprep.subr.mxu0 0.0
        %3647 = vmatpush1.msra.mxu0 0.0
        %3648 = vmatprep.subr.mxu0 0.0
        %3649 = vmatpush1.msra.mxu0 0.0
        %3650 = vmatprep.subr.mxu0 0.0
        %3651 = vmatpush1.msra.mxu0 0.0
        %3652 = vmatprep.subr.mxu0 0.0
        %3653 = vmatpush1.msra.mxu0 0.0
        %3654 = vmatprep.subr.mxu0 0.0
        %3655 = vmatpush1.msra.mxu0 0.0
        %3656 = vmatprep.subr.mxu0 0.0
        %3657 = vmatpush1.msra.mxu0 0.0
        %3658 = vmatprep.subr.mxu0 0.0
        %3659 = vmatpush1.msra.mxu0 0.0
        %3660 = vmatprep.subr.mxu0 0.0
        %3661 = vmatpush1.msra.mxu0 0.0
        %3662 = vmatprep.subr.mxu0 0.0
        %3663 = vmatpush1.msra.mxu0 0.0
        %3664 = vmatprep.subr.mxu0 0.0
        %3665 = vmatpush1.msra.mxu0 0.0
        %3666 = vmatprep.subr.mxu0 0.0
        %3667 = vmatpush1.msra.mxu0 0.0
        %3668 = vmatprep.subr.mxu0 0.0
        %3669 = vmatpush1.msra.mxu0 0.0
        %3670 = vmatprep.subr.mxu0 0.0
        %3671 = vmatpush1.msra.mxu0 0.0
        %3672 = vmatprep.subr.mxu0 0.0
        %3673 = vmatpush1.msra.mxu0 0.0
        %3674 = vmatprep.mubr.f32.mxu0 0.0
        %3675 = vmatmul.mubr.f32.gmra.mrb[0].mxu0 %v3538
        %v3676 = vpop.f32.mrb[0].mxu0
        %v3677 = vadd.f32 0.0, %v3676
        %v3678 = vpop.f32.mrb[0].mxu0
        %3679 = vdwg.mxu0
        %3681 = vrot.lane.b32.xlu0 %v3317, 16
        %v3682 = vpop.permute.xlu0 %3681
        %3685 = vrot.lane.b32.xlu0 %v3387, 32
        %v3686 = vpop.permute.xlu0 %3685
        %3689 = vrot.lane.b32.xlu0 %v3462, 48
        %v3690 = vpop.permute.xlu0 %3689
        %3693 = vrot.lane.b32.xlu0 %v3532, 64
        %v3694 = vpop.permute.xlu0 %3693
        %3697 = vrot.lane.b32.xlu0 %v3607, 80
        %v3698 = vpop.permute.xlu0 %3697
        %3701 = vrot.lane.b32.xlu0 %v3677, 96
        %v3702 = vpop.permute.xlu0 %3701
        %v3704 = vsel %vm1299, %v3245, %v3682
        %vm3705 = vcmask 261120
        %v3706 = vsel %vm3705, %v3704, %v3686
        %vm3707 = vcmask 392192
        %v3708 = vsel %vm3707, %v3706, %v3690
        %v3709 = vsel %vm2943, %v3708, %v3694
        %vm3710 = vcmask 654336
        %v3711 = vsel %vm3710, %v3709, %v3698
        %vm3712 = vcmask 785408
        %v3713 = vsel %vm3712, %v3711, %v3702
        %v3714 = vld [vmem:[%s73] sm:$0xff]
        %v3715 = vld [vmem:[%s73 + $0x8] sm:$0xff]
        %v3716 = vld [vmem:[%s73 + $0x10] sm:$0xff]
        %v3717 = vld [vmem:[%s73 + $0x18] sm:$0xff]
        %v3718 = vld [vmem:[%s73 + $0x20] sm:$0xff]
        %v3719 = vld [vmem:[%s73 + $0x28] sm:$0xff]
        %v3720 = vld [vmem:[%s73 + $0x30] sm:$0xff]
        %v3721 = vld [vmem:[%s73 + $0x38] sm:$0xff]
        %v3722 = vld [vmem:[%s73 + $0x40] sm:$0xff]
        %v3723 = vld [vmem:[%s73 + $0x48] sm:$0xff]
        %v3724 = vld [vmem:[%s73 + $0x50] sm:$0xff]
        %v3725 = vld [vmem:[%s73 + $0x58] sm:$0xff]
        %v3726 = vld [vmem:[%s73 + $0x60] sm:$0xff]
        %v3727 = vld [vmem:[%s73 + $0x68] sm:$0xff]
        %v3728 = vld [vmem:[%s75] sm:$0x1]
        %v3730 = vlaneseq
        %v3731 = vshrl.u32 %v3730, 7
        %v3732 = vsub.s32 0, %v3731
        %v3733 = vrot.slane %v3728, %v3732
        %vm3735 = vcmask 916480
        %v3737 = vsel %vm3735, %v3713, 0
        %3739 = vmatprep.subr.mxu0 0.0
        %3740 = vmatpush1.msra.mxu0 %v3714
        %3741 = vmatprep.subr.mxu0 0.0
        %3742 = vmatpush1.msra.mxu0 %v3715
        %3743 = vmatprep.subr.mxu0 0.0
        %3744 = vmatpush1.msra.mxu0 %v3716
        %3745 = vmatprep.subr.mxu0 0.0
        %3746 = vmatpush1.msra.mxu0 %v3717
        %3747 = vmatprep.subr.mxu0 0.0
        %3748 = vmatpush1.msra.mxu0 %v3718
        %3749 = vmatprep.subr.mxu0 0.0
        %3750 = vmatpush1.msra.mxu0 %v3719
        %3751 = vmatprep.subr.mxu0 0.0
        %3752 = vmatpush1.msra.mxu0 %v3720
        %3753 = vmatprep.subr.mxu0 0.0
        %3754 = vmatpush1.msra.mxu0 %v3721
        %3755 = vmatprep.subr.mxu0 0.0
        %3756 = vmatpush1.msra.mxu0 %v3722
        %3757 = vmatprep.subr.mxu0 0.0
        %3758 = vmatpush1.msra.mxu0 %v3723
        %3759 = vmatprep.subr.mxu0 0.0
        %3760 = vmatpush1.msra.mxu0 %v3724
        %3761 = vmatprep.subr.mxu0 0.0
        %3762 = vmatpush1.msra.mxu0 %v3725
        %3763 = vmatprep.subr.mxu0 0.0
        %3764 = vmatpush1.msra.mxu0 %v3726
        %3765 = vmatprep.subr.mxu0 0.0
        %3766 = vmatpush1.msra.mxu0 %v3727
        %3767 = vmatprep.subr.mxu0 0.0
        %3768 = vmatpush1.msra.mxu0 0.0
        %3769 = vmatprep.subr.mxu0 0.0
        %3770 = vmatpush1.msra.mxu0 0.0
        %3771 = vmatprep.subr.mxu0 0.0
        %3772 = vmatpush1.msra.mxu0 0.0
        %3773 = vmatprep.subr.mxu0 0.0
        %3774 = vmatpush1.msra.mxu0 0.0
        %3775 = vmatprep.subr.mxu0 0.0
        %3776 = vmatpush1.msra.mxu0 0.0
        %3777 = vmatprep.subr.mxu0 0.0
        %3778 = vmatpush1.msra.mxu0 0.0
        %3779 = vmatprep.subr.mxu0 0.0
        %3780 = vmatpush1.msra.mxu0 0.0
        %3781 = vmatprep.subr.mxu0 0.0
        %3782 = vmatpush1.msra.mxu0 0.0
        %3783 = vmatprep.subr.mxu0 0.0
        %3784 = vmatpush1.msra.mxu0 0.0
        %3785 = vmatprep.subr.mxu0 0.0
        %3786 = vmatpush1.msra.mxu0 0.0
        %3787 = vmatprep.subr.mxu0 0.0
        %3788 = vmatpush1.msra.mxu0 0.0
        %3789 = vmatprep.subr.mxu0 0.0
        %3790 = vmatpush1.msra.mxu0 0.0
        %3791 = vmatprep.subr.mxu0 0.0
        %3792 = vmatpush1.msra.mxu0 0.0
        %3793 = vmatprep.subr.mxu0 0.0
        %3794 = vmatpush1.msra.mxu0 0.0
        %3795 = vmatprep.subr.mxu0 0.0
        %3796 = vmatpush1.msra.mxu0 0.0
        %3797 = vmatprep.subr.mxu0 0.0
        %3798 = vmatpush1.msra.mxu0 0.0
        %3799 = vmatprep.subr.mxu0 0.0
        %3800 = vmatpush1.msra.mxu0 0.0
        %3801 = vmatprep.subr.mxu0 0.0
        %3802 = vmatpush1.msra.mxu0 0.0
        %3803 = vmatprep.mubr.f32.mxu0 0.0
        %3804 = vmatmul.mubr.f32.gmra.mrb[0].mxu0 %v3737
        %v3805 = vpop.f32.mrb[0].mxu0
        %v3806 = vadd.f32 %v3733, %v3805
        %v3807 = vpop.f32.mrb[0].mxu0
        %3808 = vdwg.mxu0
        %v3809 = vadd.f32 %v3245, %v3806
        %v3810 = vld [vmem:[%s77] sm:$0x1]
        %v3811 = vld [vmem:[%s79] sm:$0x1]
        %v3812 = vsel %vm1299, %v3809, 0.0
        %3813 = vadd.xlane.f32.xlu0 %v3812
        %v3814 = vpop.xlane.xlu0 %3813
        %v3815 = vmul.f32 %v3814, %v1822
        %v3816 = vsub.f32 %v3809, %v3815
        %v3817 = vmul.f32 %v3816, %v3816
        %v3818 = vsel %vm1299, %v3817, 0.0
        %3819 = vadd.xlane.f32.xlu0 %v3818
        %v3820 = vpop.xlane.xlu0 %3819
        %v3821 = vmul.f32 %v3820, %v1822
        %v3822 = vadd.f32 %v3821, 1e-05
        %v3823 = vrsqrt.pop %v3822
        %v3824 = vmul.f32 %v3816, %v3823
        %v3826 = vlaneseq
        %v3827 = vshrl.u32 %v3826, 7
        %v3828 = vsub.s32 0, %v3827
        %v3829 = vrot.slane %v3810, %v3828
        %v3831 = vmul.f32 %v3824, %v3829
        %v3833 = vlaneseq
        %v3834 = vshrl.u32 %v3833, 7
        %v3835 = vsub.s32 0, %v3834
        %v3836 = vrot.slane %v3811, %v3835
        %v3838 = vadd.f32 %v3831, %v3836
        %3839 = vst.msk [vmem:[%s1284] sm:$0xff] %vm1299, %v3044
        %3840 = vst.msk [vmem:[%s1266] sm:$0xff] %vm1299, %v3838
        %p3841 = scmp.lt.s32.totalorder %s98, 1
        %s3842 = scalar_select %p3841, %s98, 1
        %s3843 = smul.addr %s3842, 8
        %s3844 = scalar_lea.vmem %s81, %s3843
        %s3845 = sand.u32 %s987, 1
        %s3846 = scalar_lea.sflag [#allocation3], %s3845
        %s3847 = sand.u32 %s987, 1
        %s3848 = smul.addr %s3847, 8
        %s3849 = scalar_lea.vmem [#allocation2], %s3848
        // Predicated region
        $region181: #{decoder_forward.2} parent=179 // pred_check
          %p3850 = pneg %p971
        $region182: #{decoder_forward.2} parent=179 // pred_check_branch
          %3852 = sbr.rel (%p3850) target = $region184
        $region183: #{decoder_forward.2} parent=179 // pred_region
          _
        $region184: #{decoder_forward.2} parent=179 // pred_fallthru
          _
        // Predicated region
        $region185: #{decoder_forward.2} parent=179 // pred_check
          %p3853 = pneg %p997
        $region186: #{decoder_forward.2} parent=179 // pred_check_branch
          %3855 = sbr.rel (%p3853) target = $region188
        $region187: #{decoder_forward.2} parent=179 // pred_region
          %s3857 = ssub.s32 128, 128
          %3858 = vsyncadd %s3846, %s3857
          %s3859 = smul.addr %s98, 128
          %s3860 = scalar_lea.hbm %s83, %s3859
          %s3862 = sshll.u32 %s3849, 4
          %s3863 = int_to_ptr.vmem [resolvable:$true] %s3862
          %3865 = dma.vmem_to_hbm [thread:$0]  %s3863, 128, %s3860, %s3846
        $region188: #{decoder_forward.2} parent=179 // pred_fallthru
          _
      $region180: #{decoder_forward.2} parent=5 // pred_fallthru
        _
      %p3866 = scmp.le.s32.totalorder 2, %s93
      // Predicated region
      $region189: #{decoder_forward.2} parent=5 // pred_check
        %p3867 = pneg %p3866
      $region190: #{decoder_forward.2} parent=5 // pred_check_branch
        %3869 = sbr.rel (%p3867) target = $region192
      $region191: #{decoder_forward.2} parent=5 // pred_region
        %s3870 = ssub.s32 %s93, 2
        // Predicated region
        $region193: #{decoder_forward.2} parent=191 // pred_check
          %p3871 = pneg %p977
        $region194: #{decoder_forward.2} parent=191 // pred_check_branch
          %3873 = sbr.rel (%p3871) target = $region196
        $region195: #{decoder_forward.2} parent=191 // pred_region
          %p3874 = scmp.lt.s32.totalorder %s99, 1
          %s3875 = scalar_select %p3874, %s99, 1
          %s3876 = smul.addr %s3875, 8
          %s3877 = scalar_lea.vmem %s81, %s3876
        $region196: #{decoder_forward.2} parent=191 // pred_fallthru
          _
        // Predicated region
        $region197: #{decoder_forward.2} parent=191 // pred_check
          %p3878 = pneg %p1003
        $region198: #{decoder_forward.2} parent=191 // pred_check_branch
          %3880 = sbr.rel (%p3878) target = $region200
        $region199: #{decoder_forward.2} parent=191 // pred_region
          %s3881 = sand.u32 %s988, 1
          %s3882 = scalar_lea.sflag [#allocation3], %s3881
          %s3883 = sand.u32 %s988, 1
          %s3884 = smul.addr %s3883, 8
          %s3885 = scalar_lea.vmem [#allocation2], %s3884
          %3886 = dma.done %s3882, 128
        $region200: #{decoder_forward.2} parent=191 // pred_fallthru
          _
      $region192: #{decoder_forward.2} parent=5 // pred_fallthru
        _
    $region6: #{decoder_forward.2} parent=1 // loop_footer
      %s97 = sadd.s32 1, %s93
    $region7: #{decoder_forward.2} parent=1 // loop_footer_branch
      %92 = sbr.rel target = $region3
    $region8: #{decoder_forward.2} parent=1 // loop_exit
      _
    %3887 = vsyncpa [#allocation3], 1
    %s3888 = scalar_lea.sflag [#allocation3], 1
    %3889 = vsyncpa %s3888, 1

// kernel: decoder_forward.3
$region0: #{decoder_forward.3}
  #allocation0 [shape = 'u32[]', space=smem, size = 0x4, offset = 0x4, fixed_abs, tag = 'smem constant byte address 0x4 - core index']
  #allocation1 [shape = 'u32[144,128]{1,0:T(1,128)}', space=vmem, size = 0x12000, scoped, tag = 'internal scratch']
  %s0 = inlined_call_operand.smem [shape: u32[42], index: -1, kind: input, shape index: {}]
  %s1 = sld [smem:[%s0]]
  %s2 = scalar_lea.smem %s0, 1
  %s3 = sld [smem:[%s2]]
  %s4 = scalar_lea.smem %s0, 2
  %s5 = sld [smem:[%s4]]
  %s6 = scalar_lea.smem %s0, 3
  %s7 = sld [smem:[%s6]]
  %s8 = scalar_lea.smem %s0, 4
  %s9 = sld [smem:[%s8]]
  %s10 = scalar_lea.smem %s0, 5
  %s11 = sld [smem:[%s10]]
  %s12 = scalar_lea.smem %s0, 6
  %s13 = sld [smem:[%s12]]
  %s14 = scalar_lea.smem %s0, 7
  %s15 = sld [smem:[%s14]]
  %s16 = scalar_lea.smem %s0, 8
  %s17 = sld [smem:[%s16]]
  %s18 = scalar_lea.smem %s0, 9
  %s19 = sld [smem:[%s18]]
  %s20 = scalar_lea.smem %s0, 10
  %s21 = sld [smem:[%s20]]
  %s22 = scalar_lea.smem %s0, 11
  %s23 = sld [smem:[%s22]]
  %s24 = scalar_lea.smem %s0, 12
  %s25 = sld [smem:[%s24]]
  %s26 = scalar_lea.smem %s0, 13
  %s27 = sld [smem:[%s26]]
  %s28 = scalar_lea.smem %s0, 14
  %s29 = sld [smem:[%s28]]
  %s30 = scalar_lea.smem %s0, 15
  %s31 = sld [smem:[%s30]]
  %s32 = scalar_lea.smem %s0, 16
  %s33 = sld [smem:[%s32]]
  %s34 = scalar_lea.smem %s0, 17
  %s35 = sld [smem:[%s34]]
  %s36 = scalar_lea.smem %s0, 18
  %s37 = sld [smem:[%s36]]
  %s38 = scalar_lea.smem %s0, 19
  %s39 = sld [smem:[%s38]]
  %s40 = scalar_lea.smem %s0, 20
  %s41 = sld [smem:[%s40]]
  %s42 = scalar_lea.smem %s0, 21
  %s43 = sld [smem:[%s42]]
  %s44 = scalar_lea.smem %s0, 22
  %s45 = sld [smem:[%s44]]
  %s46 = scalar_lea.smem %s0, 23
  %s47 = sld [smem:[%s46]]
  %s48 = scalar_lea.smem %s0, 24
  %s49 = sld [smem:[%s48]]
  %s50 = scalar_lea.smem %s0, 25
  %s51 = sld [smem:[%s50]]
  %s52 = scalar_lea.smem %s0, 26
  %s53 = sld [smem:[%s52]]
  %s54 = scalar_lea.smem %s0, 27
  %s55 = sld [smem:[%s54]]
  %s56 = scalar_lea.smem %s0, 28
  %s57 = sld [smem:[%s56]]
  %s58 = scalar_lea.smem %s0, 29
  %s59 = sld [smem:[%s58]]
  %s60 = scalar_lea.smem %s0, 30
  %s61 = sld [smem:[%s60]]
  %s62 = scalar_lea.smem %s0, 31
  %s63 = sld [smem:[%s62]]
  %s64 = scalar_lea.smem %s0, 32
  %s65 = sld [smem:[%s64]]
  %s66 = scalar_lea.smem %s0, 33
  %s67 = sld [smem:[%s66]]
  %s68 = scalar_lea.smem %s0, 34
  %s69 = sld [smem:[%s68]]
  %s70 = scalar_lea.smem %s0, 35
  %s71 = sld [smem:[%s70]]
  %s72 = scalar_lea.smem %s0, 36
  %s73 = sld [smem:[%s72]]
  %s74 = scalar_lea.smem %s0, 37
  %s75 = sld [smem:[%s74]]
  %s76 = scalar_lea.smem %s0, 38
  %s77 = sld [smem:[%s76]]
  %s78 = scalar_lea.smem %s0, 39
  %s79 = sld [smem:[%s78]]
  %s80 = scalar_lea.smem %s0, 40
  %s81 = sld [smem:[%s80]]
  %s82 = scalar_lea.smem %s0, 41
  %s83 = sld [smem:[%s82]]
  %84 = xla_tuple %s81, %s83
  %s85 = sld [smem:[#allocation0]]
  $region201: #{decoder_forward.3} parent=0
    _
  %s87 = ssub.s32 1, %s85
  %s88 = scalar_select 0, %s87, %s85
  $region1: #{decoder_forward.3} parent=0
    #allocation2 [shape = 'u8[8192]{0}', space=vmem, size = 0x2000, scoped, tag = 'output window, operand 0']
    #allocation3 [shape = 's32[2]{0}', space=sflag, size = 0x8, scoped, tag = 'scoped memory for decoder_forward.3']
    #allocation4 [shape = 'u8[8192]{0}', space=vmem, size = 0x2000, scoped, tag = 'output window, operand 1']
    #allocation5 [shape = 's32[2]{0}', space=sflag, size = 0x8, scoped, tag = 'scoped memory for decoder_forward.3']
    %89 = vsyncpa [#allocation3], 0
    %s90 = scalar_lea.sflag [#allocation3], 1
    %91 = vsyncpa %s90, 0
    %92 = vsyncpa [#allocation5], 0
    %s93 = scalar_lea.sflag [#allocation5], 1
    %94 = vsyncpa %s93, 0
    loop: start=0, step=1, limit=4
    $region2: #{decoder_forward.3} parent=1 // loop_pre_header
      _
    $region3: #{decoder_forward.3} parent=1 // loop_header
      %s96 = sphi 0, %s100
      %p97 = scmp.ge.s32.totalorder %s96, 4
      %s106 = sphi 0, %s108
      %s109 = sphi 0, %s106
      %s110 = sphi 0, %s109
      %s126 = sphi 0, %s110
      %s132 = sphi 0, %s134
      %s135 = sphi 0, %s132
      %s136 = sphi 0, %s135
      %s152 = sphi 0, %s136
      %s158 = sphi 0, %s160
      %s161 = sphi 0, %s158
      %s162 = sphi 0, %s161
      %s178 = sphi 0, %s162
      %s182 = sphi 0, %s182
      %s184 = sphi 0, %s182
      %s185 = sphi 0, %s184
      %s199 = sphi 0, %s185
      %s203 = sphi 0, %s203
      %s205 = sphi 0, %s203
      %s206 = sphi 0, %s205
      %s220 = sphi 0, %s206
      %s224 = sphi 0, %s224
      %s226 = sphi 0, %s224
      %s227 = sphi 0, %s226
      %s241 = sphi 0, %s227
      %s245 = sphi 0, %s245
      %s247 = sphi 0, %s245
      %s248 = sphi 0, %s247
      %s262 = sphi 0, %s248
      %s266 = sphi 0, %s266
      %s268 = sphi 0, %s266
      %s269 = sphi 0, %s268
      %s283 = sphi 0, %s269
      %s287 = sphi 0, %s287
      %s289 = sphi 0, %s287
      %s290 = sphi 0, %s289
      %s304 = sphi 0, %s290
      %s308 = sphi 0, %s308
      %s310 = sphi 0, %s308
      %s311 = sphi 0, %s310
      %s325 = sphi 0, %s311
      %s329 = sphi 0, %s329
      %s331 = sphi 0, %s329
      %s332 = sphi 0, %s331
      %s346 = sphi 0, %s332
      %s350 = sphi 0, %s350
      %s352 = sphi 0, %s350
      %s353 = sphi 0, %s352
      %s367 = sphi 0, %s353
      %s371 = sphi 0, %s371
      %s373 = sphi 0, %s371
      %s374 = sphi 0, %s373
      %s388 = sphi 0, %s374
      %s392 = sphi 0, %s392
      %s394 = sphi 0, %s392
      %s395 = sphi 0, %s394
      %s409 = sphi 0, %s395
      %s413 = sphi 0, %s413
      %s415 = sphi 0, %s413
      %s416 = sphi 0, %s415
      %s430 = sphi 0, %s416
      %s434 = sphi 0, %s434
      %s436 = sphi 0, %s434
      %s437 = sphi 0, %s436
      %s451 = sphi 0, %s437
      %s455 = sphi 0, %s455
      %s457 = sphi 0, %s455
      %s458 = sphi 0, %s457
      %s472 = sphi 0, %s458
      %s476 = sphi 0, %s476
      %s478 = sphi 0, %s476
      %s479 = sphi 0, %s478
      %s493 = sphi 0, %s479
      %s497 = sphi 0, %s497
      %s499 = sphi 0, %s497
      %s500 = sphi 0, %s499
      %s514 = sphi 0, %s500
      %s518 = sphi 0, %s518
      %s520 = sphi 0, %s518
      %s521 = sphi 0, %s520
      %s535 = sphi 0, %s521
      %s539 = sphi 0, %s539
      %s541 = sphi 0, %s539
      %s542 = sphi 0, %s541
      %s556 = sphi 0, %s542
      %s560 = sphi 0, %s560
      %s562 = sphi 0, %s560
      %s563 = sphi 0, %s562
      %s577 = sphi 0, %s563
      %s581 = sphi 0, %s581
      %s583 = sphi 0, %s581
      %s584 = sphi 0, %s583
      %s598 = sphi 0, %s584
      %s602 = sphi 0, %s602
      %s604 = sphi 0, %s602
      %s605 = sphi 0, %s604
      %s619 = sphi 0, %s605
      %s623 = sphi 0, %s623
      %s625 = sphi 0, %s623
      %s626 = sphi 0, %s625
      %s640 = sphi 0, %s626
      %s644 = sphi 0, %s644
      %s646 = sphi 0, %s644
      %s647 = sphi 0, %s646
      %s661 = sphi 0, %s647
      %s665 = sphi 0, %s665
      %s667 = sphi 0, %s665
      %s668 = sphi 0, %s667
      %s682 = sphi 0, %s668
      %s686 = sphi 0, %s686
      %s688 = sphi 0, %s686
      %s689 = sphi 0, %s688
      %s703 = sphi 0, %s689
      %s707 = sphi 0, %s707
      %s709 = sphi 0, %s707
      %s710 = sphi 0, %s709
      %s724 = sphi 0, %s710
      %s728 = sphi 0, %s728
      %s730 = sphi 0, %s728
      %s731 = sphi 0, %s730
      %s745 = sphi 0, %s731
      %s749 = sphi 0, %s749
      %s751 = sphi 0, %s749
      %s752 = sphi 0, %s751
      %s766 = sphi 0, %s752
      %s770 = sphi 0, %s770
      %s772 = sphi 0, %s770
      %s773 = sphi 0, %s772
      %s787 = sphi 0, %s773
      %s791 = sphi 0, %s791
      %s793 = sphi 0, %s791
      %s794 = sphi 0, %s793
      %s808 = sphi 0, %s794
      %s812 = sphi 0, %s812
      %s814 = sphi 0, %s812
      %s815 = sphi 0, %s814
      %s829 = sphi 0, %s815
      %s833 = sphi 0, %s833
      %s835 = sphi 0, %s833
      %s836 = sphi 0, %s835
      %s850 = sphi 0, %s836
      %s854 = sphi 0, %s854
      %s856 = sphi 0, %s854
      %s857 = sphi 0, %s856
      %s871 = sphi 0, %s857
      %s875 = sphi 0, %s875
      %s877 = sphi 0, %s875
      %s878 = sphi 0, %s877
      %s892 = sphi 0, %s878
      %s896 = sphi 0, %s896
      %s898 = sphi 0, %s896
      %s899 = sphi 0, %s898
      %s913 = sphi 0, %s899
      %s917 = sphi 0, %s917
      %s919 = sphi 0, %s917
      %s920 = sphi 0, %s919
      %s934 = sphi 0, %s920
      %s938 = sphi 0, %s938
      %s940 = sphi 0, %s938
      %s941 = sphi 0, %s940
      %s955 = sphi 0, %s941
      %s961 = sphi 0, %s963
      %s964 = sphi 0, %s961
      %s965 = sphi 0, %s964
      %s981 = sphi 0, %s965
      %s987 = sphi 0, %s989
      %s990 = sphi 0, %s987
      %s991 = sphi 0, %s990
      %s1007 = sphi 0, %s991
    $region4: #{decoder_forward.3} parent=1 // loop_header_branch
      %99 = sbr.rel (%p97) target = $region8
    $region5: #{decoder_forward.3} parent=1 // loop_body
      %s101 = ssub.s32 %s96, 1
      %s102 = ssub.s32 %s96, 2
      %s103 = sadd.s32 %s96, 1
      %s104 = ssub.s32 %s96, %s103
      %p105 = scmp.eq.s32.totalorder %s104, 0
      %s107 = sadd.s32 %s106, 1
      %s108 = scalar_select %p105, %s106, %s107
      %p111 = pneg %p105
      %p112 = scmp.eq.s32.totalorder %s96, 1
      %p113 = por %p111, %p112
      %p114 = scmp.ne.s32.totalorder %s106, %s109
      %p115 = scmp.eq.s32.totalorder %s96, 0
      %p116 = por %p114, %p115
      %p117 = scmp.ne.s32.totalorder %s106, %s109
      %p118 = scmp.eq.s32.totalorder %s101, 1
      %p119 = por %p117, %p118
      %p120 = scmp.ne.s32.totalorder %s109, %s110
      %p121 = scmp.eq.s32.totalorder %s101, 0
      %p122 = por %p120, %p121
      %p123 = scmp.ne.s32.totalorder %s109, %s110
      %p124 = scmp.eq.s32.totalorder %s102, 1
      %p125 = por %p123, %p124
      %p127 = scmp.ne.s32.totalorder %s110, %s126
      %p128 = scmp.eq.s32.totalorder %s102, 0
      %p129 = por %p127, %p128
      %s130 = ssub.s32 %s96, %s103
      %p131 = scmp.eq.s32.totalorder %s130, 0
      %s133 = sadd.s32 %s132, 1
      %s134 = scalar_select %p131, %s132, %s133
      %p137 = pneg %p131
      %p138 = scmp.eq.s32.totalorder %s96, 1
      %p139 = por %p137, %p138
      %p140 = scmp.ne.s32.totalorder %s132, %s135
      %p141 = scmp.eq.s32.totalorder %s96, 0
      %p142 = por %p140, %p141
      %p143 = scmp.ne.s32.totalorder %s132, %s135
      %p144 = scmp.eq.s32.totalorder %s101, 1
      %p145 = por %p143, %p144
      %p146 = scmp.ne.s32.totalorder %s135, %s136
      %p147 = scmp.eq.s32.totalorder %s101, 0
      %p148 = por %p146, %p147
      %p149 = scmp.ne.s32.totalorder %s135, %s136
      %p150 = scmp.eq.s32.totalorder %s102, 1
      %p151 = por %p149, %p150
      %p153 = scmp.ne.s32.totalorder %s136, %s152
      %p154 = scmp.eq.s32.totalorder %s102, 0
      %p155 = por %p153, %p154
      %s156 = ssub.s32 %s96, %s103
      %p157 = scmp.eq.s32.totalorder %s156, 0
      %s159 = sadd.s32 %s158, 1
      %s160 = scalar_select %p157, %s158, %s159
      %p163 = pneg %p157
      %p164 = scmp.eq.s32.totalorder %s96, 1
      %p165 = por %p163, %p164
      %p166 = scmp.ne.s32.totalorder %s158, %s161
      %p167 = scmp.eq.s32.totalorder %s96, 0
      %p168 = por %p166, %p167
      %p169 = scmp.ne.s32.totalorder %s158, %s161
      %p170 = scmp.eq.s32.totalorder %s101, 1
      %p171 = por %p169, %p170
      %p172 = scmp.ne.s32.totalorder %s161, %s162
      %p173 = scmp.eq.s32.totalorder %s101, 0
      %p174 = por %p172, %p173
      %p175 = scmp.ne.s32.totalorder %s161, %s162
      %p176 = scmp.eq.s32.totalorder %s102, 1
      %p177 = por %p175, %p176
      %p179 = scmp.ne.s32.totalorder %s162, %s178
      %p180 = scmp.eq.s32.totalorder %s102, 0
      %p181 = por %p179, %p180
      %s183 = sadd.s32 %s182, 1
      %p186 = scmp.eq.s32.totalorder %s96, 1
      %p187 = scmp.ne.s32.totalorder %s182, %s184
      %p188 = scmp.eq.s32.totalorder %s96, 0
      %p189 = por %p187, %p188
      %p190 = scmp.ne.s32.totalorder %s182, %s184
      %p191 = scmp.eq.s32.totalorder %s101, 1
      %p192 = por %p190, %p191
      %p193 = scmp.ne.s32.totalorder %s184, %s185
      %p194 = scmp.eq.s32.totalorder %s101, 0
      %p195 = por %p193, %p194
      %p196 = scmp.ne.s32.totalorder %s184, %s185
      %p197 = scmp.eq.s32.totalorder %s102, 1
      %p198 = por %p196, %p197
      %p200 = scmp.ne.s32.totalorder %s185, %s199
      %p201 = scmp.eq.s32.totalorder %s102, 0
      %p202 = por %p200, %p201
      %s204 = sadd.s32 %s203, 1
      %p207 = scmp.eq.s32.totalorder %s96, 1
      %p208 = scmp.ne.s32.totalorder %s203, %s205
      %p209 = scmp.eq.s32.totalorder %s96, 0
      %p210 = por %p208, %p209
      %p211 = scmp.ne.s32.totalorder %s203, %s205
      %p212 = scmp.eq.s32.totalorder %s101, 1
      %p213 = por %p211, %p212
      %p214 = scmp.ne.s32.totalorder %s205, %s206
      %p215 = scmp.eq.s32.totalorder %s101, 0
      %p216 = por %p214, %p215
      %p217 = scmp.ne.s32.totalorder %s205, %s206
      %p218 = scmp.eq.s32.totalorder %s102, 1
      %p219 = por %p217, %p218
      %p221 = scmp.ne.s32.totalorder %s206, %s220
      %p222 = scmp.eq.s32.totalorder %s102, 0
      %p223 = por %p221, %p222
      %s225 = sadd.s32 %s224, 1
      %p228 = scmp.eq.s32.totalorder %s96, 1
      %p229 = scmp.ne.s32.totalorder %s224, %s226
      %p230 = scmp.eq.s32.totalorder %s96, 0
      %p231 = por %p229, %p230
      %p232 = scmp.ne.s32.totalorder %s224, %s226
      %p233 = scmp.eq.s32.totalorder %s101, 1
      %p234 = por %p232, %p233
      %p235 = scmp.ne.s32.totalorder %s226, %s227
      %p236 = scmp.eq.s32.totalorder %s101, 0
      %p237 = por %p235, %p236
      %p238 = scmp.ne.s32.totalorder %s226, %s227
      %p239 = scmp.eq.s32.totalorder %s102, 1
      %p240 = por %p238, %p239
      %p242 = scmp.ne.s32.totalorder %s227, %s241
      %p243 = scmp.eq.s32.totalorder %s102, 0
      %p244 = por %p242, %p243
      %s246 = sadd.s32 %s245, 1
      %p249 = scmp.eq.s32.totalorder %s96, 1
      %p250 = scmp.ne.s32.totalorder %s245, %s247
      %p251 = scmp.eq.s32.totalorder %s96, 0
      %p252 = por %p250, %p251
      %p253 = scmp.ne.s32.totalorder %s245, %s247
      %p254 = scmp.eq.s32.totalorder %s101, 1
      %p255 = por %p253, %p254
      %p256 = scmp.ne.s32.totalorder %s247, %s248
      %p257 = scmp.eq.s32.totalorder %s101, 0
      %p258 = por %p256, %p257
      %p259 = scmp.ne.s32.totalorder %s247, %s248
      %p260 = scmp.eq.s32.totalorder %s102, 1
      %p261 = por %p259, %p260
      %p263 = scmp.ne.s32.totalorder %s248, %s262
      %p264 = scmp.eq.s32.totalorder %s102, 0
      %p265 = por %p263, %p264
      %s267 = sadd.s32 %s266, 1
      %p270 = scmp.eq.s32.totalorder %s96, 1
      %p271 = scmp.ne.s32.totalorder %s266, %s268
      %p272 = scmp.eq.s32.totalorder %s96, 0
      %p273 = por %p271, %p272
      %p274 = scmp.ne.s32.totalorder %s266, %s268
      %p275 = scmp.eq.s32.totalorder %s101, 1
      %p276 = por %p274, %p275
      %p277 = scmp.ne.s32.totalorder %s268, %s269
      %p278 = scmp.eq.s32.totalorder %s101, 0
      %p279 = por %p277, %p278
      %p280 = scmp.ne.s32.totalorder %s268, %s269
      %p281 = scmp.eq.s32.totalorder %s102, 1
      %p282 = por %p280, %p281
      %p284 = scmp.ne.s32.totalorder %s269, %s283
      %p285 = scmp.eq.s32.totalorder %s102, 0
      %p286 = por %p284, %p285
      %s288 = sadd.s32 %s287, 1
      %p291 = scmp.eq.s32.totalorder %s96, 1
      %p292 = scmp.ne.s32.totalorder %s287, %s289
      %p293 = scmp.eq.s32.totalorder %s96, 0
      %p294 = por %p292, %p293
      %p295 = scmp.ne.s32.totalorder %s287, %s289
      %p296 = scmp.eq.s32.totalorder %s101, 1
      %p297 = por %p295, %p296
      %p298 = scmp.ne.s32.totalorder %s289, %s290
      %p299 = scmp.eq.s32.totalorder %s101, 0
      %p300 = por %p298, %p299
      %p301 = scmp.ne.s32.totalorder %s289, %s290
      %p302 = scmp.eq.s32.totalorder %s102, 1
      %p303 = por %p301, %p302
      %p305 = scmp.ne.s32.totalorder %s290, %s304
      %p306 = scmp.eq.s32.totalorder %s102, 0
      %p307 = por %p305, %p306
      %s309 = sadd.s32 %s308, 1
      %p312 = scmp.eq.s32.totalorder %s96, 1
      %p313 = scmp.ne.s32.totalorder %s308, %s310
      %p314 = scmp.eq.s32.totalorder %s96, 0
      %p315 = por %p313, %p314
      %p316 = scmp.ne.s32.totalorder %s308, %s310
      %p317 = scmp.eq.s32.totalorder %s101, 1
      %p318 = por %p316, %p317
      %p319 = scmp.ne.s32.totalorder %s310, %s311
      %p320 = scmp.eq.s32.totalorder %s101, 0
      %p321 = por %p319, %p320
      %p322 = scmp.ne.s32.totalorder %s310, %s311
      %p323 = scmp.eq.s32.totalorder %s102, 1
      %p324 = por %p322, %p323
      %p326 = scmp.ne.s32.totalorder %s311, %s325
      %p327 = scmp.eq.s32.totalorder %s102, 0
      %p328 = por %p326, %p327
      %s330 = sadd.s32 %s329, 1
      %p333 = scmp.eq.s32.totalorder %s96, 1
      %p334 = scmp.ne.s32.totalorder %s329, %s331
      %p335 = scmp.eq.s32.totalorder %s96, 0
      %p336 = por %p334, %p335
      %p337 = scmp.ne.s32.totalorder %s329, %s331
      %p338 = scmp.eq.s32.totalorder %s101, 1
      %p339 = por %p337, %p338
      %p340 = scmp.ne.s32.totalorder %s331, %s332
      %p341 = scmp.eq.s32.totalorder %s101, 0
      %p342 = por %p340, %p341
      %p343 = scmp.ne.s32.totalorder %s331, %s332
      %p344 = scmp.eq.s32.totalorder %s102, 1
      %p345 = por %p343, %p344
      %p347 = scmp.ne.s32.totalorder %s332, %s346
      %p348 = scmp.eq.s32.totalorder %s102, 0
      %p349 = por %p347, %p348
      %s351 = sadd.s32 %s350, 1
      %p354 = scmp.eq.s32.totalorder %s96, 1
      %p355 = scmp.ne.s32.totalorder %s350, %s352
      %p356 = scmp.eq.s32.totalorder %s96, 0
      %p357 = por %p355, %p356
      %p358 = scmp.ne.s32.totalorder %s350, %s352
      %p359 = scmp.eq.s32.totalorder %s101, 1
      %p360 = por %p358, %p359
      %p361 = scmp.ne.s32.totalorder %s352, %s353
      %p362 = scmp.eq.s32.totalorder %s101, 0
      %p363 = por %p361, %p362
      %p364 = scmp.ne.s32.totalorder %s352, %s353
      %p365 = scmp.eq.s32.totalorder %s102, 1
      %p366 = por %p364, %p365
      %p368 = scmp.ne.s32.totalorder %s353, %s367
      %p369 = scmp.eq.s32.totalorder %s102, 0
      %p370 = por %p368, %p369
      %s372 = sadd.s32 %s371, 1
      %p375 = scmp.eq.s32.totalorder %s96, 1
      %p376 = scmp.ne.s32.totalorder %s371, %s373
      %p377 = scmp.eq.s32.totalorder %s96, 0
      %p378 = por %p376, %p377
      %p379 = scmp.ne.s32.totalorder %s371, %s373
      %p380 = scmp.eq.s32.totalorder %s101, 1
      %p381 = por %p379, %p380
      %p382 = scmp.ne.s32.totalorder %s373, %s374
      %p383 = scmp.eq.s32.totalorder %s101, 0
      %p384 = por %p382, %p383
      %p385 = scmp.ne.s32.totalorder %s373, %s374
      %p386 = scmp.eq.s32.totalorder %s102, 1
      %p387 = por %p385, %p386
      %p389 = scmp.ne.s32.totalorder %s374, %s388
      %p390 = scmp.eq.s32.totalorder %s102, 0
      %p391 = por %p389, %p390
      %s393 = sadd.s32 %s392, 1
      %p396 = scmp.eq.s32.totalorder %s96, 1
      %p397 = scmp.ne.s32.totalorder %s392, %s394
      %p398 = scmp.eq.s32.totalorder %s96, 0
      %p399 = por %p397, %p398
      %p400 = scmp.ne.s32.totalorder %s392, %s394
      %p401 = scmp.eq.s32.totalorder %s101, 1
      %p402 = por %p400, %p401
      %p403 = scmp.ne.s32.totalorder %s394, %s395
      %p404 = scmp.eq.s32.totalorder %s101, 0
      %p405 = por %p403, %p404
      %p406 = scmp.ne.s32.totalorder %s394, %s395
      %p407 = scmp.eq.s32.totalorder %s102, 1
      %p408 = por %p406, %p407
      %p410 = scmp.ne.s32.totalorder %s395, %s409
      %p411 = scmp.eq.s32.totalorder %s102, 0
      %p412 = por %p410, %p411
      %s414 = sadd.s32 %s413, 1
      %p417 = scmp.eq.s32.totalorder %s96, 1
      %p418 = scmp.ne.s32.totalorder %s413, %s415
      %p419 = scmp.eq.s32.totalorder %s96, 0
      %p420 = por %p418, %p419
      %p421 = scmp.ne.s32.totalorder %s413, %s415
      %p422 = scmp.eq.s32.totalorder %s101, 1
      %p423 = por %p421, %p422
      %p424 = scmp.ne.s32.totalorder %s415, %s416
      %p425 = scmp.eq.s32.totalorder %s101, 0
      %p426 = por %p424, %p425
      %p427 = scmp.ne.s32.totalorder %s415, %s416
      %p428 = scmp.eq.s32.totalorder %s102, 1
      %p429 = por %p427, %p428
      %p431 = scmp.ne.s32.totalorder %s416, %s430
      %p432 = scmp.eq.s32.totalorder %s102, 0
      %p433 = por %p431, %p432
      %s435 = sadd.s32 %s434, 1
      %p438 = scmp.eq.s32.totalorder %s96, 1
      %p439 = scmp.ne.s32.totalorder %s434, %s436
      %p440 = scmp.eq.s32.totalorder %s96, 0
      %p441 = por %p439, %p440
      %p442 = scmp.ne.s32.totalorder %s434, %s436
      %p443 = scmp.eq.s32.totalorder %s101, 1
      %p444 = por %p442, %p443
      %p445 = scmp.ne.s32.totalorder %s436, %s437
      %p446 = scmp.eq.s32.totalorder %s101, 0
      %p447 = por %p445, %p446
      %p448 = scmp.ne.s32.totalorder %s436, %s437
      %p449 = scmp.eq.s32.totalorder %s102, 1
      %p450 = por %p448, %p449
      %p452 = scmp.ne.s32.totalorder %s437, %s451
      %p453 = scmp.eq.s32.totalorder %s102, 0
      %p454 = por %p452, %p453
      %s456 = sadd.s32 %s455, 1
      %p459 = scmp.eq.s32.totalorder %s96, 1
      %p460 = scmp.ne.s32.totalorder %s455, %s457
      %p461 = scmp.eq.s32.totalorder %s96, 0
      %p462 = por %p460, %p461
      %p463 = scmp.ne.s32.totalorder %s455, %s457
      %p464 = scmp.eq.s32.totalorder %s101, 1
      %p465 = por %p463, %p464
      %p466 = scmp.ne.s32.totalorder %s457, %s458
      %p467 = scmp.eq.s32.totalorder %s101, 0
      %p468 = por %p466, %p467
      %p469 = scmp.ne.s32.totalorder %s457, %s458
      %p470 = scmp.eq.s32.totalorder %s102, 1
      %p471 = por %p469, %p470
      %p473 = scmp.ne.s32.totalorder %s458, %s472
      %p474 = scmp.eq.s32.totalorder %s102, 0
      %p475 = por %p473, %p474
      %s477 = sadd.s32 %s476, 1
      %p480 = scmp.eq.s32.totalorder %s96, 1
      %p481 = scmp.ne.s32.totalorder %s476, %s478
      %p482 = scmp.eq.s32.totalorder %s96, 0
      %p483 = por %p481, %p482
      %p484 = scmp.ne.s32.totalorder %s476, %s478
      %p485 = scmp.eq.s32.totalorder %s101, 1
      %p486 = por %p484, %p485
      %p487 = scmp.ne.s32.totalorder %s478, %s479
      %p488 = scmp.eq.s32.totalorder %s101, 0
      %p489 = por %p487, %p488
      %p490 = scmp.ne.s32.totalorder %s478, %s479
      %p491 = scmp.eq.s32.totalorder %s102, 1
      %p492 = por %p490, %p491
      %p494 = scmp.ne.s32.totalorder %s479, %s493
      %p495 = scmp.eq.s32.totalorder %s102, 0
      %p496 = por %p494, %p495
      %s498 = sadd.s32 %s497, 1
      %p501 = scmp.eq.s32.totalorder %s96, 1
      %p502 = scmp.ne.s32.totalorder %s497, %s499
      %p503 = scmp.eq.s32.totalorder %s96, 0
      %p504 = por %p502, %p503
      %p505 = scmp.ne.s32.totalorder %s497, %s499
      %p506 = scmp.eq.s32.totalorder %s101, 1
      %p507 = por %p505, %p506
      %p508 = scmp.ne.s32.totalorder %s499, %s500
      %p509 = scmp.eq.s32.totalorder %s101, 0
      %p510 = por %p508, %p509
      %p511 = scmp.ne.s32.totalorder %s499, %s500
      %p512 = scmp.eq.s32.totalorder %s102, 1
      %p513 = por %p511, %p512
      %p515 = scmp.ne.s32.totalorder %s500, %s514
      %p516 = scmp.eq.s32.totalorder %s102, 0
      %p517 = por %p515, %p516
      %s519 = sadd.s32 %s518, 1
      %p522 = scmp.eq.s32.totalorder %s96, 1
      %p523 = scmp.ne.s32.totalorder %s518, %s520
      %p524 = scmp.eq.s32.totalorder %s96, 0
      %p525 = por %p523, %p524
      %p526 = scmp.ne.s32.totalorder %s518, %s520
      %p527 = scmp.eq.s32.totalorder %s101, 1
      %p528 = por %p526, %p527
      %p529 = scmp.ne.s32.totalorder %s520, %s521
      %p530 = scmp.eq.s32.totalorder %s101, 0
      %p531 = por %p529, %p530
      %p532 = scmp.ne.s32.totalorder %s520, %s521
      %p533 = scmp.eq.s32.totalorder %s102, 1
      %p534 = por %p532, %p533
      %p536 = scmp.ne.s32.totalorder %s521, %s535
      %p537 = scmp.eq.s32.totalorder %s102, 0
      %p538 = por %p536, %p537
      %s540 = sadd.s32 %s539, 1
      %p543 = scmp.eq.s32.totalorder %s96, 1
      %p544 = scmp.ne.s32.totalorder %s539, %s541
      %p545 = scmp.eq.s32.totalorder %s96, 0
      %p546 = por %p544, %p545
      %p547 = scmp.ne.s32.totalorder %s539, %s541
      %p548 = scmp.eq.s32.totalorder %s101, 1
      %p549 = por %p547, %p548
      %p550 = scmp.ne.s32.totalorder %s541, %s542
      %p551 = scmp.eq.s32.totalorder %s101, 0
      %p552 = por %p550, %p551
      %p553 = scmp.ne.s32.totalorder %s541, %s542
      %p554 = scmp.eq.s32.totalorder %s102, 1
      %p555 = por %p553, %p554
      %p557 = scmp.ne.s32.totalorder %s542, %s556
      %p558 = scmp.eq.s32.totalorder %s102, 0
      %p559 = por %p557, %p558
      %s561 = sadd.s32 %s560, 1
      %p564 = scmp.eq.s32.totalorder %s96, 1
      %p565 = scmp.ne.s32.totalorder %s560, %s562
      %p566 = scmp.eq.s32.totalorder %s96, 0
      %p567 = por %p565, %p566
      %p568 = scmp.ne.s32.totalorder %s560, %s562
      %p569 = scmp.eq.s32.totalorder %s101, 1
      %p570 = por %p568, %p569
      %p571 = scmp.ne.s32.totalorder %s562, %s563
      %p572 = scmp.eq.s32.totalorder %s101, 0
      %p573 = por %p571, %p572
      %p574 = scmp.ne.s32.totalorder %s562, %s563
      %p575 = scmp.eq.s32.totalorder %s102, 1
      %p576 = por %p574, %p575
      %p578 = scmp.ne.s32.totalorder %s563, %s577
      %p579 = scmp.eq.s32.totalorder %s102, 0
      %p580 = por %p578, %p579
      %s582 = sadd.s32 %s581, 1
      %p585 = scmp.eq.s32.totalorder %s96, 1
      %p586 = scmp.ne.s32.totalorder %s581, %s583
      %p587 = scmp.eq.s32.totalorder %s96, 0
      %p588 = por %p586, %p587
      %p589 = scmp.ne.s32.totalorder %s581, %s583
      %p590 = scmp.eq.s32.totalorder %s101, 1
      %p591 = por %p589, %p590
      %p592 = scmp.ne.s32.totalorder %s583, %s584
      %p593 = scmp.eq.s32.totalorder %s101, 0
      %p594 = por %p592, %p593
      %p595 = scmp.ne.s32.totalorder %s583, %s584
      %p596 = scmp.eq.s32.totalorder %s102, 1
      %p597 = por %p595, %p596
      %p599 = scmp.ne.s32.totalorder %s584, %s598
      %p600 = scmp.eq.s32.totalorder %s102, 0
      %p601 = por %p599, %p600
      %s603 = sadd.s32 %s602, 1
      %p606 = scmp.eq.s32.totalorder %s96, 1
      %p607 = scmp.ne.s32.totalorder %s602, %s604
      %p608 = scmp.eq.s32.totalorder %s96, 0
      %p609 = por %p607, %p608
      %p610 = scmp.ne.s32.totalorder %s602, %s604
      %p611 = scmp.eq.s32.totalorder %s101, 1
      %p612 = por %p610, %p611
      %p613 = scmp.ne.s32.totalorder %s604, %s605
      %p614 = scmp.eq.s32.totalorder %s101, 0
      %p615 = por %p613, %p614
      %p616 = scmp.ne.s32.totalorder %s604, %s605
      %p617 = scmp.eq.s32.totalorder %s102, 1
      %p618 = por %p616, %p617
      %p620 = scmp.ne.s32.totalorder %s605, %s619
      %p621 = scmp.eq.s32.totalorder %s102, 0
      %p622 = por %p620, %p621
      %s624 = sadd.s32 %s623, 1
      %p627 = scmp.eq.s32.totalorder %s96, 1
      %p628 = scmp.ne.s32.totalorder %s623, %s625
      %p629 = scmp.eq.s32.totalorder %s96, 0
      %p630 = por %p628, %p629
      %p631 = scmp.ne.s32.totalorder %s623, %s625
      %p632 = scmp.eq.s32.totalorder %s101, 1
      %p633 = por %p631, %p632
      %p634 = scmp.ne.s32.totalorder %s625, %s626
      %p635 = scmp.eq.s32.totalorder %s101, 0
      %p636 = por %p634, %p635
      %p637 = scmp.ne.s32.totalorder %s625, %s626
      %p638 = scmp.eq.s32.totalorder %s102, 1
      %p639 = por %p637, %p638
      %p641 = scmp.ne.s32.totalorder %s626, %s640
      %p642 = scmp.eq.s32.totalorder %s102, 0
      %p643 = por %p641, %p642
      %s645 = sadd.s32 %s644, 1
      %p648 = scmp.eq.s32.totalorder %s96, 1
      %p649 = scmp.ne.s32.totalorder %s644, %s646
      %p650 = scmp.eq.s32.totalorder %s96, 0
      %p651 = por %p649, %p650
      %p652 = scmp.ne.s32.totalorder %s644, %s646
      %p653 = scmp.eq.s32.totalorder %s101, 1
      %p654 = por %p652, %p653
      %p655 = scmp.ne.s32.totalorder %s646, %s647
      %p656 = scmp.eq.s32.totalorder %s101, 0
      %p657 = por %p655, %p656
      %p658 = scmp.ne.s32.totalorder %s646, %s647
      %p659 = scmp.eq.s32.totalorder %s102, 1
      %p660 = por %p658, %p659
      %p662 = scmp.ne.s32.totalorder %s647, %s661
      %p663 = scmp.eq.s32.totalorder %s102, 0
      %p664 = por %p662, %p663
      %s666 = sadd.s32 %s665, 1
      %p669 = scmp.eq.s32.totalorder %s96, 1
      %p670 = scmp.ne.s32.totalorder %s665, %s667
      %p671 = scmp.eq.s32.totalorder %s96, 0
      %p672 = por %p670, %p671
      %p673 = scmp.ne.s32.totalorder %s665, %s667
      %p674 = scmp.eq.s32.totalorder %s101, 1
      %p675 = por %p673, %p674
      %p676 = scmp.ne.s32.totalorder %s667, %s668
      %p677 = scmp.eq.s32.totalorder %s101, 0
      %p678 = por %p676, %p677
      %p679 = scmp.ne.s32.totalorder %s667, %s668
      %p680 = scmp.eq.s32.totalorder %s102, 1
      %p681 = por %p679, %p680
      %p683 = scmp.ne.s32.totalorder %s668, %s682
      %p684 = scmp.eq.s32.totalorder %s102, 0
      %p685 = por %p683, %p684
      %s687 = sadd.s32 %s686, 1
      %p690 = scmp.eq.s32.totalorder %s96, 1
      %p691 = scmp.ne.s32.totalorder %s686, %s688
      %p692 = scmp.eq.s32.totalorder %s96, 0
      %p693 = por %p691, %p692
      %p694 = scmp.ne.s32.totalorder %s686, %s688
      %p695 = scmp.eq.s32.totalorder %s101, 1
      %p696 = por %p694, %p695
      %p697 = scmp.ne.s32.totalorder %s688, %s689
      %p698 = scmp.eq.s32.totalorder %s101, 0
      %p699 = por %p697, %p698
      %p700 = scmp.ne.s32.totalorder %s688, %s689
      %p701 = scmp.eq.s32.totalorder %s102, 1
      %p702 = por %p700, %p701
      %p704 = scmp.ne.s32.totalorder %s689, %s703
      %p705 = scmp.eq.s32.totalorder %s102, 0
      %p706 = por %p704, %p705
      %s708 = sadd.s32 %s707, 1
      %p711 = scmp.eq.s32.totalorder %s96, 1
      %p712 = scmp.ne.s32.totalorder %s707, %s709
      %p713 = scmp.eq.s32.totalorder %s96, 0
      %p714 = por %p712, %p713
      %p715 = scmp.ne.s32.totalorder %s707, %s709
      %p716 = scmp.eq.s32.totalorder %s101, 1
      %p717 = por %p715, %p716
      %p718 = scmp.ne.s32.totalorder %s709, %s710
      %p719 = scmp.eq.s32.totalorder %s101, 0
      %p720 = por %p718, %p719
      %p721 = scmp.ne.s32.totalorder %s709, %s710
      %p722 = scmp.eq.s32.totalorder %s102, 1
      %p723 = por %p721, %p722
      %p725 = scmp.ne.s32.totalorder %s710, %s724
      %p726 = scmp.eq.s32.totalorder %s102, 0
      %p727 = por %p725, %p726
      %s729 = sadd.s32 %s728, 1
      %p732 = scmp.eq.s32.totalorder %s96, 1
      %p733 = scmp.ne.s32.totalorder %s728, %s730
      %p734 = scmp.eq.s32.totalorder %s96, 0
      %p735 = por %p733, %p734
      %p736 = scmp.ne.s32.totalorder %s728, %s730
      %p737 = scmp.eq.s32.totalorder %s101, 1
      %p738 = por %p736, %p737
      %p739 = scmp.ne.s32.totalorder %s730, %s731
      %p740 = scmp.eq.s32.totalorder %s101, 0
      %p741 = por %p739, %p740
      %p742 = scmp.ne.s32.totalorder %s730, %s731
      %p743 = scmp.eq.s32.totalorder %s102, 1
      %p744 = por %p742, %p743
      %p746 = scmp.ne.s32.totalorder %s731, %s745
      %p747 = scmp.eq.s32.totalorder %s102, 0
      %p748 = por %p746, %p747
      %s750 = sadd.s32 %s749, 1
      %p753 = scmp.eq.s32.totalorder %s96, 1
      %p754 = scmp.ne.s32.totalorder %s749, %s751
      %p755 = scmp.eq.s32.totalorder %s96, 0
      %p756 = por %p754, %p755
      %p757 = scmp.ne.s32.totalorder %s749, %s751
      %p758 = scmp.eq.s32.totalorder %s101, 1
      %p759 = por %p757, %p758
      %p760 = scmp.ne.s32.totalorder %s751, %s752
      %p761 = scmp.eq.s32.totalorder %s101, 0
      %p762 = por %p760, %p761
      %p763 = scmp.ne.s32.totalorder %s751, %s752
      %p764 = scmp.eq.s32.totalorder %s102, 1
      %p765 = por %p763, %p764
      %p767 = scmp.ne.s32.totalorder %s752, %s766
      %p768 = scmp.eq.s32.totalorder %s102, 0
      %p769 = por %p767, %p768
      %s771 = sadd.s32 %s770, 1
      %p774 = scmp.eq.s32.totalorder %s96, 1
      %p775 = scmp.ne.s32.totalorder %s770, %s772
      %p776 = scmp.eq.s32.totalorder %s96, 0
      %p777 = por %p775, %p776
      %p778 = scmp.ne.s32.totalorder %s770, %s772
      %p779 = scmp.eq.s32.totalorder %s101, 1
      %p780 = por %p778, %p779
      %p781 = scmp.ne.s32.totalorder %s772, %s773
      %p782 = scmp.eq.s32.totalorder %s101, 0
      %p783 = por %p781, %p782
      %p784 = scmp.ne.s32.totalorder %s772, %s773
      %p785 = scmp.eq.s32.totalorder %s102, 1
      %p786 = por %p784, %p785
      %p788 = scmp.ne.s32.totalorder %s773, %s787
      %p789 = scmp.eq.s32.totalorder %s102, 0
      %p790 = por %p788, %p789
      %s792 = sadd.s32 %s791, 1
      %p795 = scmp.eq.s32.totalorder %s96, 1
      %p796 = scmp.ne.s32.totalorder %s791, %s793
      %p797 = scmp.eq.s32.totalorder %s96, 0
      %p798 = por %p796, %p797
      %p799 = scmp.ne.s32.totalorder %s791, %s793
      %p800 = scmp.eq.s32.totalorder %s101, 1
      %p801 = por %p799, %p800
      %p802 = scmp.ne.s32.totalorder %s793, %s794
      %p803 = scmp.eq.s32.totalorder %s101, 0
      %p804 = por %p802, %p803
      %p805 = scmp.ne.s32.totalorder %s793, %s794
      %p806 = scmp.eq.s32.totalorder %s102, 1
      %p807 = por %p805, %p806
      %p809 = scmp.ne.s32.totalorder %s794, %s808
      %p810 = scmp.eq.s32.totalorder %s102, 0
      %p811 = por %p809, %p810
      %s813 = sadd.s32 %s812, 1
      %p816 = scmp.eq.s32.totalorder %s96, 1
      %p817 = scmp.ne.s32.totalorder %s812, %s814
      %p818 = scmp.eq.s32.totalorder %s96, 0
      %p819 = por %p817, %p818
      %p820 = scmp.ne.s32.totalorder %s812, %s814
      %p821 = scmp.eq.s32.totalorder %s101, 1
      %p822 = por %p820, %p821
      %p823 = scmp.ne.s32.totalorder %s814, %s815
      %p824 = scmp.eq.s32.totalorder %s101, 0
      %p825 = por %p823, %p824
      %p826 = scmp.ne.s32.totalorder %s814, %s815
      %p827 = scmp.eq.s32.totalorder %s102, 1
      %p828 = por %p826, %p827
      %p830 = scmp.ne.s32.totalorder %s815, %s829
      %p831 = scmp.eq.s32.totalorder %s102, 0
      %p832 = por %p830, %p831
      %s834 = sadd.s32 %s833, 1
      %p837 = scmp.eq.s32.totalorder %s96, 1
      %p838 = scmp.ne.s32.totalorder %s833, %s835
      %p839 = scmp.eq.s32.totalorder %s96, 0
      %p840 = por %p838, %p839
      %p841 = scmp.ne.s32.totalorder %s833, %s835
      %p842 = scmp.eq.s32.totalorder %s101, 1
      %p843 = por %p841, %p842
      %p844 = scmp.ne.s32.totalorder %s835, %s836
      %p845 = scmp.eq.s32.totalorder %s101, 0
      %p846 = por %p844, %p845
      %p847 = scmp.ne.s32.totalorder %s835, %s836
      %p848 = scmp.eq.s32.totalorder %s102, 1
      %p849 = por %p847, %p848
      %p851 = scmp.ne.s32.totalorder %s836, %s850
      %p852 = scmp.eq.s32.totalorder %s102, 0
      %p853 = por %p851, %p852
      %s855 = sadd.s32 %s854, 1
      %p858 = scmp.eq.s32.totalorder %s96, 1
      %p859 = scmp.ne.s32.totalorder %s854, %s856
      %p860 = scmp.eq.s32.totalorder %s96, 0
      %p861 = por %p859, %p860
      %p862 = scmp.ne.s32.totalorder %s854, %s856
      %p863 = scmp.eq.s32.totalorder %s101, 1
      %p864 = por %p862, %p863
      %p865 = scmp.ne.s32.totalorder %s856, %s857
      %p866 = scmp.eq.s32.totalorder %s101, 0
      %p867 = por %p865, %p866
      %p868 = scmp.ne.s32.totalorder %s856, %s857
      %p869 = scmp.eq.s32.totalorder %s102, 1
      %p870 = por %p868, %p869
      %p872 = scmp.ne.s32.totalorder %s857, %s871
      %p873 = scmp.eq.s32.totalorder %s102, 0
      %p874 = por %p872, %p873
      %s876 = sadd.s32 %s875, 1
      %p879 = scmp.eq.s32.totalorder %s96, 1
      %p880 = scmp.ne.s32.totalorder %s875, %s877
      %p881 = scmp.eq.s32.totalorder %s96, 0
      %p882 = por %p880, %p881
      %p883 = scmp.ne.s32.totalorder %s875, %s877
      %p884 = scmp.eq.s32.totalorder %s101, 1
      %p885 = por %p883, %p884
      %p886 = scmp.ne.s32.totalorder %s877, %s878
      %p887 = scmp.eq.s32.totalorder %s101, 0
      %p888 = por %p886, %p887
      %p889 = scmp.ne.s32.totalorder %s877, %s878
      %p890 = scmp.eq.s32.totalorder %s102, 1
      %p891 = por %p889, %p890
      %p893 = scmp.ne.s32.totalorder %s878, %s892
      %p894 = scmp.eq.s32.totalorder %s102, 0
      %p895 = por %p893, %p894
      %s897 = sadd.s32 %s896, 1
      %p900 = scmp.eq.s32.totalorder %s96, 1
      %p901 = scmp.ne.s32.totalorder %s896, %s898
      %p902 = scmp.eq.s32.totalorder %s96, 0
      %p903 = por %p901, %p902
      %p904 = scmp.ne.s32.totalorder %s896, %s898
      %p905 = scmp.eq.s32.totalorder %s101, 1
      %p906 = por %p904, %p905
      %p907 = scmp.ne.s32.totalorder %s898, %s899
      %p908 = scmp.eq.s32.totalorder %s101, 0
      %p909 = por %p907, %p908
      %p910 = scmp.ne.s32.totalorder %s898, %s899
      %p911 = scmp.eq.s32.totalorder %s102, 1
      %p912 = por %p910, %p911
      %p914 = scmp.ne.s32.totalorder %s899, %s913
      %p915 = scmp.eq.s32.totalorder %s102, 0
      %p916 = por %p914, %p915
      %s918 = sadd.s32 %s917, 1
      %p921 = scmp.eq.s32.totalorder %s96, 1
      %p922 = scmp.ne.s32.totalorder %s917, %s919
      %p923 = scmp.eq.s32.totalorder %s96, 0
      %p924 = por %p922, %p923
      %p925 = scmp.ne.s32.totalorder %s917, %s919
      %p926 = scmp.eq.s32.totalorder %s101, 1
      %p927 = por %p925, %p926
      %p928 = scmp.ne.s32.totalorder %s919, %s920
      %p929 = scmp.eq.s32.totalorder %s101, 0
      %p930 = por %p928, %p929
      %p931 = scmp.ne.s32.totalorder %s919, %s920
      %p932 = scmp.eq.s32.totalorder %s102, 1
      %p933 = por %p931, %p932
      %p935 = scmp.ne.s32.totalorder %s920, %s934
      %p936 = scmp.eq.s32.totalorder %s102, 0
      %p937 = por %p935, %p936
      %s939 = sadd.s32 %s938, 1
      %p942 = scmp.eq.s32.totalorder %s96, 1
      %p943 = scmp.ne.s32.totalorder %s938, %s940
      %p944 = scmp.eq.s32.totalorder %s96, 0
      %p945 = por %p943, %p944
      %p946 = scmp.ne.s32.totalorder %s938, %s940
      %p947 = scmp.eq.s32.totalorder %s101, 1
      %p948 = por %p946, %p947
      %p949 = scmp.ne.s32.totalorder %s940, %s941
      %p950 = scmp.eq.s32.totalorder %s101, 0
      %p951 = por %p949, %p950
      %p952 = scmp.ne.s32.totalorder %s940, %s941
      %p953 = scmp.eq.s32.totalorder %s102, 1
      %p954 = por %p952, %p953
      %p956 = scmp.ne.s32.totalorder %s941, %s955
      %p957 = scmp.eq.s32.totalorder %s102, 0
      %p958 = por %p956, %p957
      %s959 = ssub.s32 %s96, %s103
      %p960 = scmp.eq.s32.totalorder %s959, 0
      %s962 = sadd.s32 %s961, 1
      %s963 = scalar_select %p960, %s961, %s962
      %p966 = pneg %p960
      %p967 = scmp.eq.s32.totalorder %s96, 1
      %p968 = por %p966, %p967
      %p969 = scmp.ne.s32.totalorder %s961, %s964
      %p970 = scmp.eq.s32.totalorder %s96, 0
      %p971 = por %p969, %p970
      %p972 = scmp.ne.s32.totalorder %s961, %s964
      %p973 = scmp.eq.s32.totalorder %s101, 1
      %p974 = por %p972, %p973
      %p975 = scmp.ne.s32.totalorder %s964, %s965
      %p976 = scmp.eq.s32.totalorder %s101, 0
      %p977 = por %p975, %p976
      %p978 = scmp.ne.s32.totalorder %s964, %s965
      %p979 = scmp.eq.s32.totalorder %s102, 1
      %p980 = por %p978, %p979
      %p982 = scmp.ne.s32.totalorder %s965, %s981
      %p983 = scmp.eq.s32.totalorder %s102, 0
      %p984 = por %p982, %p983
      %s985 = ssub.s32 %s96, %s103
      %p986 = scmp.eq.s32.totalorder %s985, 0
      %s988 = sadd.s32 %s987, 1
      %s989 = scalar_select %p986, %s987, %s988
      %p992 = pneg %p986
      %p993 = scmp.eq.s32.totalorder %s96, 1
      %p994 = por %p992, %p993
      %p995 = scmp.ne.s32.totalorder %s987, %s990
      %p996 = scmp.eq.s32.totalorder %s96, 0
      %p997 = por %p995, %p996
      %p998 = scmp.ne.s32.totalorder %s987, %s990
      %p999 = scmp.eq.s32.totalorder %s101, 1
      %p1000 = por %p998, %p999
      %p1001 = scmp.ne.s32.totalorder %s990, %s991
      %p1002 = scmp.eq.s32.totalorder %s101, 0
      %p1003 = por %p1001, %p1002
      %p1004 = scmp.ne.s32.totalorder %s990, %s991
      %p1005 = scmp.eq.s32.totalorder %s102, 1
      %p1006 = por %p1004, %p1005
      %p1008 = scmp.ne.s32.totalorder %s991, %s1007
      %p1009 = scmp.eq.s32.totalorder %s102, 0
      %p1010 = por %p1008, %p1009
      %p1011 = scmp.le.s32.totalorder 1, %s96
      %p1012 = scmp.lt.s32.totalorder %s96, 3
      %p1013 = pnand %p1011, %p1012
      %p1014 = pneg %p1013
      // Predicated region
      $region9: #{decoder_forward.3} parent=5 // pred_check
        _
      $region10: #{decoder_forward.3} parent=5 // pred_check_branch
        %1016 = sbr.rel (%p1013) target = $region12
      $region11: #{decoder_forward.3} parent=5 // pred_region
        %s1017 = ssub.s32 %s96, 1
        // Predicated region
        $region13: #{decoder_forward.3} parent=11 // pred_check
          %p1018 = pneg %p195
        $region14: #{decoder_forward.3} parent=11 // pred_check_branch
          %1020 = sbr.rel (%p1018) target = $region16
        $region15: #{decoder_forward.3} parent=11 // pred_region
          _
        $region16: #{decoder_forward.3} parent=11 // pred_fallthru
          _
        // Predicated region
        $region17: #{decoder_forward.3} parent=11 // pred_check
          %p1021 = pneg %p216
        $region18: #{decoder_forward.3} parent=11 // pred_check_branch
          %1023 = sbr.rel (%p1021) target = $region20
        $region19: #{decoder_forward.3} parent=11 // pred_region
          _
        $region20: #{decoder_forward.3} parent=11 // pred_fallthru
          _
        // Predicated region
        $region21: #{decoder_forward.3} parent=11 // pred_check
          %p1024 = pneg %p237
        $region22: #{decoder_forward.3} parent=11 // pred_check_branch
          %1026 = sbr.rel (%p1024) target = $region24
        $region23: #{decoder_forward.3} parent=11 // pred_region
          _
        $region24: #{decoder_forward.3} parent=11 // pred_fallthru
          _
        // Predicated region
        $region25: #{decoder_forward.3} parent=11 // pred_check
          %p1027 = pneg %p258
        $region26: #{decoder_forward.3} parent=11 // pred_check_branch
          %1029 = sbr.rel (%p1027) target = $region28
        $region27: #{decoder_forward.3} parent=11 // pred_region
          _
        $region28: #{decoder_forward.3} parent=11 // pred_fallthru
          _
        // Predicated region
        $region29: #{decoder_forward.3} parent=11 // pred_check
          %p1030 = pneg %p279
        $region30: #{decoder_forward.3} parent=11 // pred_check_branch
          %1032 = sbr.rel (%p1030) target = $region32
        $region31: #{decoder_forward.3} parent=11 // pred_region
          _
        $region32: #{decoder_forward.3} parent=11 // pred_fallthru
          _
        // Predicated region
        $region33: #{decoder_forward.3} parent=11 // pred_check
          %p1033 = pneg %p300
        $region34: #{decoder_forward.3} parent=11 // pred_check_branch
          %1035 = sbr.rel (%p1033) target = $region36
        $region35: #{decoder_forward.3} parent=11 // pred_region
          _
        $region36: #{decoder_forward.3} parent=11 // pred_fallthru
          _
        // Predicated region
        $region37: #{decoder_forward.3} parent=11 // pred_check
          %p1036 = pneg %p321
        $region38: #{decoder_forward.3} parent=11 // pred_check_branch
          %1038 = sbr.rel (%p1036) target = $region40
        $region39: #{decoder_forward.3} parent=11 // pred_region
          _
        $region40: #{decoder_forward.3} parent=11 // pred_fallthru
          _
        // Predicated region
        $region41: #{decoder_forward.3} parent=11 // pred_check
          %p1039 = pneg %p342
        $region42: #{decoder_forward.3} parent=11 // pred_check_branch
          %1041 = sbr.rel (%p1039) target = $region44
        $region43: #{decoder_forward.3} parent=11 // pred_region
          _
        $region44: #{decoder_forward.3} parent=11 // pred_fallthru
          _
        // Predicated region
        $region45: #{decoder_forward.3} parent=11 // pred_check
          %p1042 = pneg %p363
        $region46: #{decoder_forward.3} parent=11 // pred_check_branch
          %1044 = sbr.rel (%p1042) target = $region48
        $region47: #{decoder_forward.3} parent=11 // pred_region
          _
        $region48: #{decoder_forward.3} parent=11 // pred_fallthru
          _
        // Predicated region
        $region49: #{decoder_forward.3} parent=11 // pred_check
          %p1045 = pneg %p384
        $region50: #{decoder_forward.3} parent=11 // pred_check_branch
          %1047 = sbr.rel (%p1045) target = $region52
        $region51: #{decoder_forward.3} parent=11 // pred_region
          _
        $region52: #{decoder_forward.3} parent=11 // pred_fallthru
          _
        // Predicated region
        $region53: #{decoder_forward.3} parent=11 // pred_check
          %p1048 = pneg %p405
        $region54: #{decoder_forward.3} parent=11 // pred_check_branch
          %1050 = sbr.rel (%p1048) target = $region56
        $region55: #{decoder_forward.3} parent=11 // pred_region
          _
        $region56: #{decoder_forward.3} parent=11 // pred_fallthru
          _
        // Predicated region
        $region57: #{decoder_forward.3} parent=11 // pred_check
          %p1051 = pneg %p426
        $region58: #{decoder_forward.3} parent=11 // pred_check_branch
          %1053 = sbr.rel (%p1051) target = $region60
        $region59: #{decoder_forward.3} parent=11 // pred_region
          _
        $region60: #{decoder_forward.3} parent=11 // pred_fallthru
          _
        // Predicated region
        $region61: #{decoder_forward.3} parent=11 // pred_check
          %p1054 = pneg %p447
        $region62: #{decoder_forward.3} parent=11 // pred_check_branch
          %1056 = sbr.rel (%p1054) target = $region64
        $region63: #{decoder_forward.3} parent=11 // pred_region
          _
        $region64: #{decoder_forward.3} parent=11 // pred_fallthru
          _
        // Predicated region
        $region65: #{decoder_forward.3} parent=11 // pred_check
          %p1057 = pneg %p468
        $region66: #{decoder_forward.3} parent=11 // pred_check_branch
          %1059 = sbr.rel (%p1057) target = $region68
        $region67: #{decoder_forward.3} parent=11 // pred_region
          _
        $region68: #{decoder_forward.3} parent=11 // pred_fallthru
          _
        // Predicated region
        $region69: #{decoder_forward.3} parent=11 // pred_check
          %p1060 = pneg %p489
        $region70: #{decoder_forward.3} parent=11 // pred_check_branch
          %1062 = sbr.rel (%p1060) target = $region72
        $region71: #{decoder_forward.3} parent=11 // pred_region
          _
        $region72: #{decoder_forward.3} parent=11 // pred_fallthru
          _
        // Predicated region
        $region73: #{decoder_forward.3} parent=11 // pred_check
          %p1063 = pneg %p510
        $region74: #{decoder_forward.3} parent=11 // pred_check_branch
          %1065 = sbr.rel (%p1063) target = $region76
        $region75: #{decoder_forward.3} parent=11 // pred_region
          _
        $region76: #{decoder_forward.3} parent=11 // pred_fallthru
          _
        // Predicated region
        $region77: #{decoder_forward.3} parent=11 // pred_check
          %p1066 = pneg %p531
        $region78: #{decoder_forward.3} parent=11 // pred_check_branch
          %1068 = sbr.rel (%p1066) target = $region80
        $region79: #{decoder_forward.3} parent=11 // pred_region
          _
        $region80: #{decoder_forward.3} parent=11 // pred_fallthru
          _
        // Predicated region
        $region81: #{decoder_forward.3} parent=11 // pred_check
          %p1069 = pneg %p552
        $region82: #{decoder_forward.3} parent=11 // pred_check_branch
          %1071 = sbr.rel (%p1069) target = $region84
        $region83: #{decoder_forward.3} parent=11 // pred_region
          _
        $region84: #{decoder_forward.3} parent=11 // pred_fallthru
          _
        // Predicated region
        $region85: #{decoder_forward.3} parent=11 // pred_check
          %p1072 = pneg %p573
        $region86: #{decoder_forward.3} parent=11 // pred_check_branch
          %1074 = sbr.rel (%p1072) target = $region88
        $region87: #{decoder_forward.3} parent=11 // pred_region
          _
        $region88: #{decoder_forward.3} parent=11 // pred_fallthru
          _
        // Predicated region
        $region89: #{decoder_forward.3} parent=11 // pred_check
          %p1075 = pneg %p594
        $region90: #{decoder_forward.3} parent=11 // pred_check_branch
          %1077 = sbr.rel (%p1075) target = $region92
        $region91: #{decoder_forward.3} parent=11 // pred_region
          _
        $region92: #{decoder_forward.3} parent=11 // pred_fallthru
          _
        // Predicated region
        $region93: #{decoder_forward.3} parent=11 // pred_check
          %p1078 = pneg %p615
        $region94: #{decoder_forward.3} parent=11 // pred_check_branch
          %1080 = sbr.rel (%p1078) target = $region96
        $region95: #{decoder_forward.3} parent=11 // pred_region
          _
        $region96: #{decoder_forward.3} parent=11 // pred_fallthru
          _
        // Predicated region
        $region97: #{decoder_forward.3} parent=11 // pred_check
          %p1081 = pneg %p636
        $region98: #{decoder_forward.3} parent=11 // pred_check_branch
          %1083 = sbr.rel (%p1081) target = $region100
        $region99: #{decoder_forward.3} parent=11 // pred_region
          _
        $region100: #{decoder_forward.3} parent=11 // pred_fallthru
          _
        // Predicated region
        $region101: #{decoder_forward.3} parent=11 // pred_check
          %p1084 = pneg %p657
        $region102: #{decoder_forward.3} parent=11 // pred_check_branch
          %1086 = sbr.rel (%p1084) target = $region104
        $region103: #{decoder_forward.3} parent=11 // pred_region
          _
        $region104: #{decoder_forward.3} parent=11 // pred_fallthru
          _
        // Predicated region
        $region105: #{decoder_forward.3} parent=11 // pred_check
          %p1087 = pneg %p678
        $region106: #{decoder_forward.3} parent=11 // pred_check_branch
          %1089 = sbr.rel (%p1087) target = $region108
        $region107: #{decoder_forward.3} parent=11 // pred_region
          _
        $region108: #{decoder_forward.3} parent=11 // pred_fallthru
          _
        // Predicated region
        $region109: #{decoder_forward.3} parent=11 // pred_check
          %p1090 = pneg %p699
        $region110: #{decoder_forward.3} parent=11 // pred_check_branch
          %1092 = sbr.rel (%p1090) target = $region112
        $region111: #{decoder_forward.3} parent=11 // pred_region
          _
        $region112: #{decoder_forward.3} parent=11 // pred_fallthru
          _
        // Predicated region
        $region113: #{decoder_forward.3} parent=11 // pred_check
          %p1093 = pneg %p720
        $region114: #{decoder_forward.3} parent=11 // pred_check_branch
          %1095 = sbr.rel (%p1093) target = $region116
        $region115: #{decoder_forward.3} parent=11 // pred_region
          _
        $region116: #{decoder_forward.3} parent=11 // pred_fallthru
          _
        // Predicated region
        $region117: #{decoder_forward.3} parent=11 // pred_check
          %p1096 = pneg %p741
        $region118: #{decoder_forward.3} parent=11 // pred_check_branch
          %1098 = sbr.rel (%p1096) target = $region120
        $region119: #{decoder_forward.3} parent=11 // pred_region
          _
        $region120: #{decoder_forward.3} parent=11 // pred_fallthru
          _
        // Predicated region
        $region121: #{decoder_forward.3} parent=11 // pred_check
          %p1099 = pneg %p762
        $region122: #{decoder_forward.3} parent=11 // pred_check_branch
          %1101 = sbr.rel (%p1099) target = $region124
        $region123: #{decoder_forward.3} parent=11 // pred_region
          _
        $region124: #{decoder_forward.3} parent=11 // pred_fallthru
          _
        // Predicated region
        $region125: #{decoder_forward.3} parent=11 // pred_check
          %p1102 = pneg %p783
        $region126: #{decoder_forward.3} parent=11 // pred_check_branch
          %1104 = sbr.rel (%p1102) target = $region128
        $region127: #{decoder_forward.3} parent=11 // pred_region
          _
        $region128: #{decoder_forward.3} parent=11 // pred_fallthru
          _
        // Predicated region
        $region129: #{decoder_forward.3} parent=11 // pred_check
          %p1105 = pneg %p804
        $region130: #{decoder_forward.3} parent=11 // pred_check_branch
          %1107 = sbr.rel (%p1105) target = $region132
        $region131: #{decoder_forward.3} parent=11 // pred_region
          _
        $region132: #{decoder_forward.3} parent=11 // pred_fallthru
          _
        // Predicated region
        $region133: #{decoder_forward.3} parent=11 // pred_check
          %p1108 = pneg %p825
        $region134: #{decoder_forward.3} parent=11 // pred_check_branch
          %1110 = sbr.rel (%p1108) target = $region136
        $region135: #{decoder_forward.3} parent=11 // pred_region
          _
        $region136: #{decoder_forward.3} parent=11 // pred_fallthru
          _
        // Predicated region
        $region137: #{decoder_forward.3} parent=11 // pred_check
          %p1111 = pneg %p846
        $region138: #{decoder_forward.3} parent=11 // pred_check_branch
          %1113 = sbr.rel (%p1111) target = $region140
        $region139: #{decoder_forward.3} parent=11 // pred_region
          _
        $region140: #{decoder_forward.3} parent=11 // pred_fallthru
          _
        // Predicated region
        $region141: #{decoder_forward.3} parent=11 // pred_check
          %p1114 = pneg %p867
        $region142: #{decoder_forward.3} parent=11 // pred_check_branch
          %1116 = sbr.rel (%p1114) target = $region144
        $region143: #{decoder_forward.3} parent=11 // pred_region
          _
        $region144: #{decoder_forward.3} parent=11 // pred_fallthru
          _
        // Predicated region
        $region145: #{decoder_forward.3} parent=11 // pred_check
          %p1117 = pneg %p888
        $region146: #{decoder_forward.3} parent=11 // pred_check_branch
          %1119 = sbr.rel (%p1117) target = $region148
        $region147: #{decoder_forward.3} parent=11 // pred_region
          _
        $region148: #{decoder_forward.3} parent=11 // pred_fallthru
          _
        // Predicated region
        $region149: #{decoder_forward.3} parent=11 // pred_check
          %p1120 = pneg %p909
        $region150: #{decoder_forward.3} parent=11 // pred_check_branch
          %1122 = sbr.rel (%p1120) target = $region152
        $region151: #{decoder_forward.3} parent=11 // pred_region
          _
        $region152: #{decoder_forward.3} parent=11 // pred_fallthru
          _
        // Predicated region
        $region153: #{decoder_forward.3} parent=11 // pred_check
          %p1123 = pneg %p930
        $region154: #{decoder_forward.3} parent=11 // pred_check_branch
          %1125 = sbr.rel (%p1123) target = $region156
        $region155: #{decoder_forward.3} parent=11 // pred_region
          _
        $region156: #{decoder_forward.3} parent=11 // pred_fallthru
          _
        // Predicated region
        $region157: #{decoder_forward.3} parent=11 // pred_check
          %p1126 = pneg %p951
        $region158: #{decoder_forward.3} parent=11 // pred_check_branch
          %1128 = sbr.rel (%p1126) target = $region160
        $region159: #{decoder_forward.3} parent=11 // pred_region
          _
        $region160: #{decoder_forward.3} parent=11 // pred_fallthru
          _
      $region12: #{decoder_forward.3} parent=5 // pred_fallthru
        _
      %p1129 = scmp.lt.s32.totalorder %s96, 2
      // Predicated region
      $region161: #{decoder_forward.3} parent=5 // pred_check
        %p1130 = pneg %p1129
      $region162: #{decoder_forward.3} parent=5 // pred_check_branch
        %1132 = sbr.rel (%p1130) target = $region164
      $region163: #{decoder_forward.3} parent=5 // pred_region
        // Predicated region
        $region165: #{decoder_forward.3} parent=163 // pred_check
          %p1133 = pneg %p116
        $region166: #{decoder_forward.3} parent=163 // pred_check_branch
          %1135 = sbr.rel (%p1133) target = $region168
        $region167: #{decoder_forward.3} parent=163 // pred_region
          %p1136 = scmp.lt.s32.totalorder %s96, 1
          %s1137 = scalar_select %p1136, %s96, 1
          %s1138 = smul.addr %s1137, 8
          %s1139 = scalar_lea.vmem %s1, %s1138
        $region168: #{decoder_forward.3} parent=163 // pred_fallthru
          _
        // Predicated region
        $region169: #{decoder_forward.3} parent=163 // pred_check
          %p1140 = pneg %p142
        $region170: #{decoder_forward.3} parent=163 // pred_check_branch
          %1142 = sbr.rel (%p1140) target = $region172
        $region171: #{decoder_forward.3} parent=163 // pred_region
          %p1143 = scmp.lt.s32.totalorder %s96, 1
          %s1144 = scalar_select %p1143, %s96, 1
          %s1145 = smul.addr %s1144, 2
          %s1146 = smul.addr %s1145, 8
          %s1147 = scalar_lea.vmem %s3, %s1146
        $region172: #{decoder_forward.3} parent=163 // pred_fallthru
          _
        // Predicated region
        $region173: #{decoder_forward.3} parent=163 // pred_check
          %p1148 = pneg %p168
        $region174: #{decoder_forward.3} parent=163 // pred_check_branch
          %1150 = sbr.rel (%p1148) target = $region176
        $region175: #{decoder_forward.3} parent=163 // pred_region
          %p1151 = scmp.lt.s32.totalorder %s96, 1
          %s1152 = scalar_select %p1151, %s96, 1
          %s1153 = smul.addr %s1152, 2
          %s1154 = smul.addr %s1153, 8
          %s1155 = scalar_lea.vmem %s5, %s1154
        $region176: #{decoder_forward.3} parent=163 // pred_fallthru
          _
      $region164: #{decoder_forward.3} parent=5 // pred_fallthru
        _
      %p1156 = scmp.le.s32.totalorder 1, %s96
      %p1157 = scmp.lt.s32.totalorder %s96, 3
      %p1158 = pnand %p1156, %p1157
      %p1159 = pneg %p1158
      // Predicated region
      $region177: #{decoder_forward.3} parent=5 // pred_check
        _
      $region178: #{decoder_forward.3} parent=5 // pred_check_branch
        %1161 = sbr.rel (%p1158) target = $region180
      $region179: #{decoder_forward.3} parent=5 // pred_region
        %s1162 = ssub.s32 %s96, 1
        %p1163 = scmp.lt.s32.totalorder %s101, 1
        %s1164 = scalar_select %p1163, %s101, 1
        %s1165 = smul.addr %s1164, 8
        %s1166 = scalar_lea.vmem %s1, %s1165
        %p1167 = pneg %p122
        %p1168 = pneg %p119
        %p1169 = scmp.lt.s32.totalorder %s101, 1
        %s1170 = scalar_select %p1169, %s101, 1
        %s1171 = smul.addr %s1170, 2
        %s1172 = smul.addr %s1171, 8
        %s1173 = scalar_lea.vmem %s3, %s1172
        %p1174 = pneg %p148
        %p1175 = pneg %p145
        %p1176 = scmp.lt.s32.totalorder %s101, 1
        %s1177 = scalar_select %p1176, %s101, 1
        %s1178 = smul.addr %s1177, 2
        %s1179 = smul.addr %s1178, 8
        %s1180 = scalar_lea.vmem %s5, %s1179
        %p1181 = pneg %p174
        %p1182 = pneg %p171
        %p1183 = pneg %p195
        %p1184 = pneg %p192
        %p1185 = pneg %p216
        %p1186 = pneg %p213
        %p1187 = pneg %p237
        %p1188 = pneg %p234
        %p1189 = pneg %p258
        %p1190 = pneg %p255
        %p1191 = pneg %p279
        %p1192 = pneg %p276
        %p1193 = pneg %p300
        %p1194 = pneg %p297
        %p1195 = pneg %p321
        %p1196 = pneg %p318
        %p1197 = pneg %p342
        %p1198 = pneg %p339
        %p1199 = pneg %p363
        %p1200 = pneg %p360
        %p1201 = pneg %p384
        %p1202 = pneg %p381
        %p1203 = pneg %p405
        %p1204 = pneg %p402
        %p1205 = pneg %p426
        %p1206 = pneg %p423
        %p1207 = pneg %p447
        %p1208 = pneg %p444
        %p1209 = pneg %p468
        %p1210 = pneg %p465
        %p1211 = pneg %p489
        %p1212 = pneg %p486
        %p1213 = pneg %p510
        %p1214 = pneg %p507
        %p1215 = pneg %p531
        %p1216 = pneg %p528
        %p1217 = pneg %p552
        %p1218 = pneg %p549
        %p1219 = pneg %p573
        %p1220 = pneg %p570
        %p1221 = pneg %p594
        %p1222 = pneg %p591
        %p1223 = pneg %p615
        %p1224 = pneg %p612
        %p1225 = pneg %p636
        %p1226 = pneg %p633
        %p1227 = pneg %p657
        %p1228 = pneg %p654
        %p1229 = pneg %p678
        %p1230 = pneg %p675
        %p1231 = pneg %p699
        %p1232 = pneg %p696
        %p1233 = pneg %p720
        %p1234 = pneg %p717
        %p1235 = pneg %p741
        %p1236 = pneg %p738
        %p1237 = pneg %p762
        %p1238 = pneg %p759
        %p1239 = pneg %p783
        %p1240 = pneg %p780
        %p1241 = pneg %p804
        %p1242 = pneg %p801
        %p1243 = pneg %p825
        %p1244 = pneg %p822
        %p1245 = pneg %p846
        %p1246 = pneg %p843
        %p1247 = pneg %p867
        %p1248 = pneg %p864
        %p1249 = pneg %p888
        %p1250 = pneg %p885
        %p1251 = pneg %p909
        %p1252 = pneg %p906
        %p1253 = pneg %p930
        %p1254 = pneg %p927
        %p1255 = pneg %p951
        %p1256 = pneg %p948
        %p1257 = pneg %p977
        %p1258 = pneg %p974
        %s1259 = sand.u32 %s964, 1
        %s1260 = scalar_lea.sflag [#allocation3], %s1259
        %s1261 = sand.u32 %s964, 1
        %s1262 = smul.addr %s1261, 8
        %s1263 = scalar_lea.vmem [#allocation2], %s1262
        %p1264 = pneg %p1003
        %p1265 = pneg %p1000
        %s1266 = sand.u32 %s990, 1
        %s1267 = scalar_lea.sflag [#allocation5], %s1266
        %s1268 = sand.u32 %s990, 1
        %s1269 = smul.addr %s1268, 8
        %s1270 = scalar_lea.vmem [#allocation4], %s1269
        %p1271 = scmp.lt.s32.totalorder %s101, 1
        %s1272 = scalar_select %p1271, %s101, 1
        %s1273 = smul.addr %s1272, 8
        %s1274 = scalar_lea.vmem %s1, %s1273
        %p1275 = scmp.lt.s32.totalorder %s101, 1
        %s1276 = scalar_select %p1275, %s101, 1
        %s1277 = smul.addr %s1276, 2
        %s1278 = smul.addr %s1277, 8
        %s1279 = scalar_lea.vmem %s3, %s1278
        %p1280 = scmp.lt.s32.totalorder %s101, 1
        %s1281 = scalar_select %p1280, %s101, 1
        %s1282 = smul.addr %s1281, 2
        %s1283 = smul.addr %s1282, 8
        %s1284 = scalar_lea.vmem %s5, %s1283
        %v1285 = vld [vmem:[%s1274] sm:$0xff]
        %v1286 = vld [vmem:[%s1279] sm:$0xff]
        %v1287 = vld [vmem:[%s1279 + $0x8] sm:$0xff]
        %v1288 = vld [vmem:[%s1284] sm:$0xff]
        %v1289 = vld [vmem:[%s1284 + $0x8] sm:$0xff]
        %v1290 = vld [vmem:[%s9] sm:$0xff]
        %v1291 = vld [vmem:[%s9 + $0x8] sm:$0xff]
        %v1292 = vld [vmem:[%s11] sm:$0x1]
        %v1294 = vlaneseq
        %v1295 = vshrl.u32 %v1294, 7
        %v1296 = vsub.s32 0, %v1295
        %v1297 = vrot.slane %v1292, %v1296
        %vm1299 = vcmask 130048
        %v1301 = vsel %vm1299, %v1285, 0
        %1303 = vmatprep.subr.mxu0 0.0
        %1304 = vmatpush1.msra.mxu0 %v1290
        %1305 = vmatprep.subr.mxu0 0.0
        %1306 = vmatpush1.msra.mxu0 %v1291
        %1307 = vmatprep.subr.mxu0 0.0
        %1308 = vmatpush1.msra.mxu0 0.0
        %1309 = vmatprep.subr.mxu0 0.0
        %1310 = vmatpush1.msra.mxu0 0.0
        %1311 = vmatprep.subr.mxu0 0.0
        %1312 = vmatpush1.msra.mxu0 0.0
        %1313 = vmatprep.subr.mxu0 0.0
        %1314 = vmatpush1.msra.mxu0 0.0
        %1315 = vmatprep.subr.mxu0 0.0
        %1316 = vmatpush1.msra.mxu0 0.0
        %1317 = vmatprep.subr.mxu0 0.0
        %1318 = vmatpush1.msra.mxu0 0.0
        %1319 = vmatprep.subr.mxu0 0.0
        %1320 = vmatpush1.msra.mxu0 0.0
        %1321 = vmatprep.subr.mxu0 0.0
        %1322 = vmatpush1.msra.mxu0 0.0
        %1323 = vmatprep.subr.mxu0 0.0
        %1324 = vmatpush1.msra.mxu0 0.0
        %1325 = vmatprep.subr.mxu0 0.0
        %1326 = vmatpush1.msra.mxu0 0.0
        %1327 = vmatprep.subr.mxu0 0.0
        %1328 = vmatpush1.msra.mxu0 0.0
        %1329 = vmatprep.subr.mxu0 0.0
        %1330 = vmatpush1.msra.mxu0 0.0
        %1331 = vmatprep.subr.mxu0 0.0
        %1332 = vmatpush1.msra.mxu0 0.0
        %1333 = vmatprep.subr.mxu0 0.0
        %1334 = vmatpush1.msra.mxu0 0.0
        %1335 = vmatprep.subr.mxu0 0.0
        %1336 = vmatpush1.msra.mxu0 0.0
        %1337 = vmatprep.subr.mxu0 0.0
        %1338 = vmatpush1.msra.mxu0 0.0
        %1339 = vmatprep.subr.mxu0 0.0
        %1340 = vmatpush1.msra.mxu0 0.0
        %1341 = vmatprep.subr.mxu0 0.0
        %1342 = vmatpush1.msra.mxu0 0.0
        %1343 = vmatprep.subr.mxu0 0.0
        %1344 = vmatpush1.msra.mxu0 0.0
        %1345 = vmatprep.subr.mxu0 0.0
        %1346 = vmatpush1.msra.mxu0 0.0
        %1347 = vmatprep.subr.mxu0 0.0
        %1348 = vmatpush1.msra.mxu0 0.0
        %1349 = vmatprep.subr.mxu0 0.0
        %1350 = vmatpush1.msra.mxu0 0.0
        %1351 = vmatprep.subr.mxu0 0.0
        %1352 = vmatpush1.msra.mxu0 0.0
        %1353 = vmatprep.subr.mxu0 0.0
        %1354 = vmatpush1.msra.mxu0 0.0
        %1355 = vmatprep.subr.mxu0 0.0
        %1356 = vmatpush1.msra.mxu0 0.0
        %1357 = vmatprep.subr.mxu0 0.0
        %1358 = vmatpush1.msra.mxu0 0.0
        %1359 = vmatprep.subr.mxu0 0.0
        %1360 = vmatpush1.msra.mxu0 0.0
        %1361 = vmatprep.subr.mxu0 0.0
        %1362 = vmatpush1.msra.mxu0 0.0
        %1363 = vmatprep.subr.mxu0 0.0
        %1364 = vmatpush1.msra.mxu0 0.0
        %1365 = vmatprep.subr.mxu0 0.0
        %1366 = vmatpush1.msra.mxu0 0.0
        %1367 = vmatprep.mubr.f32.mxu0 0.0
        %1368 = vmatmul.mubr.f32.gmra.mrb[0].mxu0 %v1301
        %v1369 = vpop.f32.mrb[0].mxu0
        %v1370 = vadd.f32 %v1297, %v1369
        %v1371 = vpop.f32.mrb[0].mxu0
        %1372 = vdwg.mxu0
        %1374 = vrot.lane.b32.xlu0 %v1370, 120
        %v1375 = vpop.permute.xlu0 %1374
        %1376 = vrot.lane.b32.xlu0 %v1370, 112
        %v1377 = vpop.permute.xlu0 %1376
        %vm1378 = vcmask 64512
        %v1379 = vsel %vm1378, %v1370, 0
        %v1381 = vsel %vm1378, %v1377, 0
        %1383 = vmatprep.subr.mxu0 0.0
        %1384 = vmatpush1.xpose.msra.mxu0 %v1381
        %1385 = vmatprep.subr.mxu0 0.0
        %1386 = vmatpush1.xpose.msra.mxu0 0.0
        %1387 = vmatprep.subr.mxu0 0.0
        %1388 = vmatpush1.xpose.msra.mxu0 0.0
        %1389 = vmatprep.subr.mxu0 0.0
        %1390 = vmatpush1.xpose.msra.mxu0 0.0
        %1391 = vmatprep.subr.mxu0 0.0
        %1392 = vmatpush1.xpose.msra.mxu0 0.0
        %1393 = vmatprep.subr.mxu0 0.0
        %1394 = vmatpush1.xpose.msra.mxu0 0.0
        %1395 = vmatprep.subr.mxu0 0.0
        %1396 = vmatpush1.xpose.msra.mxu0 0.0
        %1397 = vmatprep.subr.mxu0 0.0
        %1398 = vmatpush1.xpose.msra.mxu0 0.0
        %1399 = vmatprep.subr.mxu0 0.0
        %1400 = vmatpush1.xpose.msra.mxu0 0.0
        %1401 = vmatprep.subr.mxu0 0.0
        %1402 = vmatpush1.xpose.msra.mxu0 0.0
        %1403 = vmatprep.subr.mxu0 0.0
        %1404 = vmatpush1.xpose.msra.mxu0 0.0
        %1405 = vmatprep.subr.mxu0 0.0
        %1406 = vmatpush1.xpose.msra.mxu0 0.0
        %1407 = vmatprep.subr.mxu0 0.0
        %1408 = vmatpush1.xpose.msra.mxu0 0.0
        %1409 = vmatprep.subr.mxu0 0.0
        %1410 = vmatpush1.xpose.msra.mxu0 0.0
        %1411 = vmatprep.subr.mxu0 0.0
        %1412 = vmatpush1.xpose.msra.mxu0 0.0
        %1413 = vmatprep.subr.mxu0 0.0
        %1414 = vmatpush1.xpose.msra.mxu0 0.0
        %1415 = vmatprep.subr.mxu0 0.0
        %1416 = vmatpush1.xpose.msra.mxu0 0.0
        %1417 = vmatprep.subr.mxu0 0.0
        %1418 = vmatpush1.xpose.msra.mxu0 0.0
        %1419 = vmatprep.subr.mxu0 0.0
        %1420 = vmatpush1.xpose.msra.mxu0 0.0
        %1421 = vmatprep.subr.mxu0 0.0
        %1422 = vmatpush1.xpose.msra.mxu0 0.0
        %1423 = vmatprep.subr.mxu0 0.0
        %1424 = vmatpush1.xpose.msra.mxu0 0.0
        %1425 = vmatprep.subr.mxu0 0.0
        %1426 = vmatpush1.xpose.msra.mxu0 0.0
        %1427 = vmatprep.subr.mxu0 0.0
        %1428 = vmatpush1.xpose.msra.mxu0 0.0
        %1429 = vmatprep.subr.mxu0 0.0
        %1430 = vmatpush1.xpose.msra.mxu0 0.0
        %1431 = vmatprep.subr.mxu0 0.0
        %1432 = vmatpush1.xpose.msra.mxu0 0.0
        %1433 = vmatprep.subr.mxu0 0.0
        %1434 = vmatpush1.xpose.msra.mxu0 0.0
        %1435 = vmatprep.subr.mxu0 0.0
        %1436 = vmatpush1.xpose.msra.mxu0 0.0
        %1437 = vmatprep.subr.mxu0 0.0
        %1438 = vmatpush1.xpose.msra.mxu0 0.0
        %1439 = vmatprep.subr.mxu0 0.0
        %1440 = vmatpush1.xpose.msra.mxu0 0.0
        %1441 = vmatprep.subr.mxu0 0.0
        %1442 = vmatpush1.xpose.msra.mxu0 0.0
        %1443 = vmatprep.subr.mxu0 0.0
        %1444 = vmatpush1.xpose.msra.mxu0 0.0
        %1445 = vmatprep.subr.mxu0 0.0
        %1446 = vmatpush1.xpose.msra.mxu0 0.0
        %1447 = vmatprep.mubr.f32.mxu0 0.0
        %1448 = vmatmul.mubr.f32.gmra.mrb[0].mxu0 %v1379
        %v1449 = vpop.f32.mrb[0].mxu0
        %v1450 = vadd.f32 0.0, %v1449
        %v1451 = vpop.f32.mrb[0].mxu0
        %1452 = vdwg.mxu0
        %1453 = vrot.lane.b32.xlu0 %v1375, 112
        %v1454 = vpop.permute.xlu0 %1453
        %v1455 = vsel %vm1378, %v1375, 0
        %v1457 = vsel %vm1378, %v1454, 0
        %1459 = vmatprep.subr.mxu0 0.0
        %1460 = vmatpush1.xpose.msra.mxu0 %v1457
        %1461 = vmatprep.subr.mxu0 0.0
        %1462 = vmatpush1.xpose.msra.mxu0 0.0
        %1463 = vmatprep.subr.mxu0 0.0
        %1464 = vmatpush1.xpose.msra.mxu0 0.0
        %1465 = vmatprep.subr.mxu0 0.0
        %1466 = vmatpush1.xpose.msra.mxu0 0.0
        %1467 = vmatprep.subr.mxu0 0.0
        %1468 = vmatpush1.xpose.msra.mxu0 0.0
        %1469 = vmatprep.subr.mxu0 0.0
        %1470 = vmatpush1.xpose.msra.mxu0 0.0
        %1471 = vmatprep.subr.mxu0 0.0
        %1472 = vmatpush1.xpose.msra.mxu0 0.0
        %1473 = vmatprep.subr.mxu0 0.0
        %1474 = vmatpush1.xpose.msra.mxu0 0.0
        %1475 = vmatprep.subr.mxu0 0.0
        %1476 = vmatpush1.xpose.msra.mxu0 0.0
        %1477 = vmatprep.subr.mxu0 0.0
        %1478 = vmatpush1.xpose.msra.mxu0 0.0
        %1479 = vmatprep.subr.mxu0 0.0
        %1480 = vmatpush1.xpose.msra.mxu0 0.0
        %1481 = vmatprep.subr.mxu0 0.0
        %1482 = vmatpush1.xpose.msra.mxu0 0.0
        %1483 = vmatprep.subr.mxu0 0.0
        %1484 = vmatpush1.xpose.msra.mxu0 0.0
        %1485 = vmatprep.subr.mxu0 0.0
        %1486 = vmatpush1.xpose.msra.mxu0 0.0
        %1487 = vmatprep.subr.mxu0 0.0
        %1488 = vmatpush1.xpose.msra.mxu0 0.0
        %1489 = vmatprep.subr.mxu0 0.0
        %1490 = vmatpush1.xpose.msra.mxu0 0.0
        %1491 = vmatprep.subr.mxu0 0.0
        %1492 = vmatpush1.xpose.msra.mxu0 0.0
        %1493 = vmatprep.subr.mxu0 0.0
        %1494 = vmatpush1.xpose.msra.mxu0 0.0
        %1495 = vmatprep.subr.mxu0 0.0
        %1496 = vmatpush1.xpose.msra.mxu0 0.0
        %1497 = vmatprep.subr.mxu0 0.0
        %1498 = vmatpush1.xpose.msra.mxu0 0.0
        %1499 = vmatprep.subr.mxu0 0.0
        %1500 = vmatpush1.xpose.msra.mxu0 0.0
        %1501 = vmatprep.subr.mxu0 0.0
        %1502 = vmatpush1.xpose.msra.mxu0 0.0
        %1503 = vmatprep.subr.mxu0 0.0
        %1504 = vmatpush1.xpose.msra.mxu0 0.0
        %1505 = vmatprep.subr.mxu0 0.0
        %1506 = vmatpush1.xpose.msra.mxu0 0.0
        %1507 = vmatprep.subr.mxu0 0.0
        %1508 = vmatpush1.xpose.msra.mxu0 0.0
        %1509 = vmatprep.subr.mxu0 0.0
        %1510 = vmatpush1.xpose.msra.mxu0 0.0
        %1511 = vmatprep.subr.mxu0 0.0
        %1512 = vmatpush1.xpose.msra.mxu0 0.0
        %1513 = vmatprep.subr.mxu0 0.0
        %1514 = vmatpush1.xpose.msra.mxu0 0.0
        %1515 = vmatprep.subr.mxu0 0.0
        %1516 = vmatpush1.xpose.msra.mxu0 0.0
        %1517 = vmatprep.subr.mxu0 0.0
        %1518 = vmatpush1.xpose.msra.mxu0 0.0
        %1519 = vmatprep.subr.mxu0 0.0
        %1520 = vmatpush1.xpose.msra.mxu0 0.0
        %1521 = vmatprep.subr.mxu0 0.0
        %1522 = vmatpush1.xpose.msra.mxu0 0.0
        %1523 = vmatprep.mubr.f32.mxu0 0.0
        %1524 = vmatmul.mubr.f32.gmra.mrb[0].mxu0 %v1455
        %v1525 = vpop.f32.mrb[0].mxu0
        %v1526 = vadd.f32 0.0, %v1525
        %v1527 = vpop.f32.mrb[0].mxu0
        %1528 = vdwg.mxu0
        %v1529 = vmul.f32 %v1450, 0.35355338
        %v1530 = vmul.f32 %v1526, 0.35355338
        %v1531 = vlaneseq
        %v1532 = vshrl.u32 %v1531, 7
        %vm1533 = vcmp.ge.s32.totalorder %v1532, 2
        %v1534 = vsel %vm1533, 1, 0
        %vm1535 = vcmp.ge.s32.totalorder %v1532, 4
        %v1536 = vsel %vm1535, 1, 0
        %v1537 = vadd.s32 %v1534, %v1536
        %vm1538 = vcmp.ge.s32.totalorder %v1532, 6
        %v1539 = vsel %vm1538, 1, 0
        %v1540 = vadd.s32 %v1537, %v1539
        %v1541 = vlaneseq
        %v1542 = vand.u32 %v1541, 127
        %vm1543 = vcmp.ge.s32.totalorder %v1542, 2
        %v1544 = vsel %vm1543, 1, 0
        %vm1545 = vcmp.ge.s32.totalorder %v1542, 4
        %v1546 = vsel %vm1545, 1, 0
        %v1547 = vadd.s32 %v1544, %v1546
        %vm1548 = vcmp.ge.s32.totalorder %v1542, 6
        %v1549 = vsel %vm1548, 1, 0
        %v1550 = vadd.s32 %v1547, %v1549
        %vm1551 = vcmp.eq.s32.totalorder %v1540, %v1550
        %v1552 = vsel %vm1551, 0.0, -1e+30
        %v1553 = vadd.f32 %v1529, %v1552
        %v1554 = vadd.f32 %v1530, %v1552
        %v1555 = vsel %vm1378, %v1553, -inf
        %1556 = vmax.xlane.f32.xlu0 %v1555
        %v1557 = vpop.xlane.xlu0 %1556
        %v1558 = vsel %vm1378, %v1554, -inf
        %1559 = vmax.xlane.f32.xlu0 %v1558
        %v1560 = vpop.xlane.xlu0 %1559
        %v1561 = vsub.f32 %v1553, %v1557
        %v1562 = vsub.f32 %v1554, %v1560
        %v1563 = vmul.f32 %v1561, 1.442695
        %v1564 = vpow.pop %v1563
        %v1565 = vmul.f32 %v1562, 1.442695
        %v1566 = vpow.pop %v1565
        %v1567 = vsel %vm1378, %v1564, 0.0
        %1568 = vadd.xlane.f32.xlu0 %v1567
        %v1569 = vpop.xlane.xlu0 %1568
        %v1570 = vsel %vm1378, %v1566, 0.0
        %1571 = vadd.xlane.f32.xlu0 %v1570
        %v1572 = vpop.xlane.xlu0 %1571
        %v1573 = vrcp.pop %v1569
        %v1574 = vmul.f32 %v1564, %v1573
        %v1575 = vrcp.pop %v1572
        %v1576 = vmul.f32 %v1566, %v1575
        %1577 = vrot.lane.b32.xlu0 %v1370, 96
        %v1578 = vpop.permute.xlu0 %1577
        %v1581 = vsel %vm1378, %v1574, 0
        %1583 = vmatprep.subr.mxu0 0.0
        %1584 = vmatpush1.msra.mxu0 %v1578
        %1585 = vmatprep.subr.mxu0 0.0
        %1586 = vmatpush1.msra.mxu0 0.0
        %1587 = vmatprep.subr.mxu0 0.0
        %1588 = vmatpush1.msra.mxu0 0.0
        %1589 = vmatprep.subr.mxu0 0.0
        %1590 = vmatpush1.msra.mxu0 0.0
        %1591 = vmatprep.subr.mxu0 0.0
        %1592 = vmatpush1.msra.mxu0 0.0
        %1593 = vmatprep.subr.mxu0 0.0
        %1594 = vmatpush1.msra.mxu0 0.0
        %1595 = vmatprep.subr.mxu0 0.0
        %1596 = vmatpush1.msra.mxu0 0.0
        %1597 = vmatprep.subr.mxu0 0.0
        %1598 = vmatpush1.msra.mxu0 0.0
        %1599 = vmatprep.subr.mxu0 0.0
        %1600 = vmatpush1.msra.mxu0 0.0
        %1601 = vmatprep.subr.mxu0 0.0
        %1602 = vmatpush1.msra.mxu0 0.0
        %1603 = vmatprep.subr.mxu0 0.0
        %1604 = vmatpush1.msra.mxu0 0.0
        %1605 = vmatprep.subr.mxu0 0.0
        %1606 = vmatpush1.msra.mxu0 0.0
        %1607 = vmatprep.subr.mxu0 0.0
        %1608 = vmatpush1.msra.mxu0 0.0
        %1609 = vmatprep.subr.mxu0 0.0
        %1610 = vmatpush1.msra.mxu0 0.0
        %1611 = vmatprep.subr.mxu0 0.0
        %1612 = vmatpush1.msra.mxu0 0.0
        %1613 = vmatprep.subr.mxu0 0.0
        %1614 = vmatpush1.msra.mxu0 0.0
        %1615 = vmatprep.subr.mxu0 0.0
        %1616 = vmatpush1.msra.mxu0 0.0
        %1617 = vmatprep.subr.mxu0 0.0
        %1618 = vmatpush1.msra.mxu0 0.0
        %1619 = vmatprep.subr.mxu0 0.0
        %1620 = vmatpush1.msra.mxu0 0.0
        %1621 = vmatprep.subr.mxu0 0.0
        %1622 = vmatpush1.msra.mxu0 0.0
        %1623 = vmatprep.subr.mxu0 0.0
        %1624 = vmatpush1.msra.mxu0 0.0
        %1625 = vmatprep.subr.mxu0 0.0
        %1626 = vmatpush1.msra.mxu0 0.0
        %1627 = vmatprep.subr.mxu0 0.0
        %1628 = vmatpush1.msra.mxu0 0.0
        %1629 = vmatprep.subr.mxu0 0.0
        %1630 = vmatpush1.msra.mxu0 0.0
        %1631 = vmatprep.subr.mxu0 0.0
        %1632 = vmatpush1.msra.mxu0 0.0
        %1633 = vmatprep.subr.mxu0 0.0
        %1634 = vmatpush1.msra.mxu0 0.0
        %1635 = vmatprep.subr.mxu0 0.0
        %1636 = vmatpush1.msra.mxu0 0.0
        %1637 = vmatprep.subr.mxu0 0.0
        %1638 = vmatpush1.msra.mxu0 0.0
        %1639 = vmatprep.subr.mxu0 0.0
        %1640 = vmatpush1.msra.mxu0 0.0
        %1641 = vmatprep.subr.mxu0 0.0
        %1642 = vmatpush1.msra.mxu0 0.0
        %1643 = vmatprep.subr.mxu0 0.0
        %1644 = vmatpush1.msra.mxu0 0.0
        %1645 = vmatprep.subr.mxu0 0.0
        %1646 = vmatpush1.msra.mxu0 0.0
        %1647 = vmatprep.mubr.f32.mxu0 0.0
        %1648 = vmatmul.mubr.f32.gmra.mrb[0].mxu0 %v1581
        %v1649 = vpop.f32.mrb[0].mxu0
        %v1650 = vadd.f32 0.0, %v1649
        %v1651 = vpop.f32.mrb[0].mxu0
        %1652 = vdwg.mxu0
        %1653 = vrot.lane.b32.xlu0 %v1375, 96
        %v1654 = vpop.permute.xlu0 %1653
        %v1657 = vsel %vm1378, %v1576, 0
        %1659 = vmatprep.subr.mxu0 0.0
        %1660 = vmatpush1.msra.mxu0 %v1654
        %1661 = vmatprep.subr.mxu0 0.0
        %1662 = vmatpush1.msra.mxu0 0.0
        %1663 = vmatprep.subr.mxu0 0.0
        %1664 = vmatpush1.msra.mxu0 0.0
        %1665 = vmatprep.subr.mxu0 0.0
        %1666 = vmatpush1.msra.mxu0 0.0
        %1667 = vmatprep.subr.mxu0 0.0
        %1668 = vmatpush1.msra.mxu0 0.0
        %1669 = vmatprep.subr.mxu0 0.0
        %1670 = vmatpush1.msra.mxu0 0.0
        %1671 = vmatprep.subr.mxu0 0.0
        %1672 = vmatpush1.msra.mxu0 0.0
        %1673 = vmatprep.subr.mxu0 0.0
        %1674 = vmatpush1.msra.mxu0 0.0
        %1675 = vmatprep.subr.mxu0 0.0
        %1676 = vmatpush1.msra.mxu0 0.0
        %1677 = vmatprep.subr.mxu0 0.0
        %1678 = vmatpush1.msra.mxu0 0.0
        %1679 = vmatprep.subr.mxu0 0.0
        %1680 = vmatpush1.msra.mxu0 0.0
        %1681 = vmatprep.subr.mxu0 0.0
        %1682 = vmatpush1.msra.mxu0 0.0
        %1683 = vmatprep.subr.mxu0 0.0
        %1684 = vmatpush1.msra.mxu0 0.0
        %1685 = vmatprep.subr.mxu0 0.0
        %1686 = vmatpush1.msra.mxu0 0.0
        %1687 = vmatprep.subr.mxu0 0.0
        %1688 = vmatpush1.msra.mxu0 0.0
        %1689 = vmatprep.subr.mxu0 0.0
        %1690 = vmatpush1.msra.mxu0 0.0
        %1691 = vmatprep.subr.mxu0 0.0
        %1692 = vmatpush1.msra.mxu0 0.0
        %1693 = vmatprep.subr.mxu0 0.0
        %1694 = vmatpush1.msra.mxu0 0.0
        %1695 = vmatprep.subr.mxu0 0.0
        %1696 = vmatpush1.msra.mxu0 0.0
        %1697 = vmatprep.subr.mxu0 0.0
        %1698 = vmatpush1.msra.mxu0 0.0
        %1699 = vmatprep.subr.mxu0 0.0
        %1700 = vmatpush1.msra.mxu0 0.0
        %1701 = vmatprep.subr.mxu0 0.0
        %1702 = vmatpush1.msra.mxu0 0.0
        %1703 = vmatprep.subr.mxu0 0.0
        %1704 = vmatpush1.msra.mxu0 0.0
        %1705 = vmatprep.subr.mxu0 0.0
        %1706 = vmatpush1.msra.mxu0 0.0
        %1707 = vmatprep.subr.mxu0 0.0
        %1708 = vmatpush1.msra.mxu0 0.0
        %1709 = vmatprep.subr.mxu0 0.0
        %1710 = vmatpush1.msra.mxu0 0.0
        %1711 = vmatprep.subr.mxu0 0.0
        %1712 = vmatpush1.msra.mxu0 0.0
        %1713 = vmatprep.subr.mxu0 0.0
        %1714 = vmatpush1.msra.mxu0 0.0
        %1715 = vmatprep.subr.mxu0 0.0
        %1716 = vmatpush1.msra.mxu0 0.0
        %1717 = vmatprep.subr.mxu0 0.0
        %1718 = vmatpush1.msra.mxu0 0.0
        %1719 = vmatprep.subr.mxu0 0.0
        %1720 = vmatpush1.msra.mxu0 0.0
        %1721 = vmatprep.subr.mxu0 0.0
        %1722 = vmatpush1.msra.mxu0 0.0
        %1723 = vmatprep.mubr.f32.mxu0 0.0
        %1724 = vmatmul.mubr.f32.gmra.mrb[0].mxu0 %v1657
        %v1725 = vpop.f32.mrb[0].mxu0
        %v1726 = vadd.f32 0.0, %v1725
        %v1727 = vpop.f32.mrb[0].mxu0
        %1728 = vdwg.mxu0
        %1730 = vrot.lane.b32.xlu0 %v1726, 8
        %v1731 = vpop.permute.xlu0 %1730
        %v1733 = vsel %vm1378, %v1650, %v1731
        %v1734 = vld [vmem:[%s13] sm:$0xff]
        %v1735 = vld [vmem:[%s13 + $0x8] sm:$0xff]
        %v1736 = vld [vmem:[%s15] sm:$0x1]
        %v1738 = vlaneseq
        %v1739 = vshrl.u32 %v1738, 7
        %v1740 = vsub.s32 0, %v1739
        %v1741 = vrot.slane %v1736, %v1740
        %v1744 = vsel %vm1299, %v1733, 0
        %1746 = vmatprep.subr.mxu0 0.0
        %1747 = vmatpush1.msra.mxu0 %v1734
        %1748 = vmatprep.subr.mxu0 0.0
        %1749 = vmatpush1.msra.mxu0 %v1735
        %1750 = vmatprep.subr.mxu0 0.0
        %1751 = vmatpush1.msra.mxu0 0.0
        %1752 = vmatprep.subr.mxu0 0.0
        %1753 = vmatpush1.msra.mxu0 0.0
        %1754 = vmatprep.subr.mxu0 0.0
        %1755 = vmatpush1.msra.mxu0 0.0
        %1756 = vmatprep.subr.mxu0 0.0
        %1757 = vmatpush1.msra.mxu0 0.0
        %1758 = vmatprep.subr.mxu0 0.0
        %1759 = vmatpush1.msra.mxu0 0.0
        %1760 = vmatprep.subr.mxu0 0.0
        %1761 = vmatpush1.msra.mxu0 0.0
        %1762 = vmatprep.subr.mxu0 0.0
        %1763 = vmatpush1.msra.mxu0 0.0
        %1764 = vmatprep.subr.mxu0 0.0
        %1765 = vmatpush1.msra.mxu0 0.0
        %1766 = vmatprep.subr.mxu0 0.0
        %1767 = vmatpush1.msra.mxu0 0.0
        %1768 = vmatprep.subr.mxu0 0.0
        %1769 = vmatpush1.msra.mxu0 0.0
        %1770 = vmatprep.subr.mxu0 0.0
        %1771 = vmatpush1.msra.mxu0 0.0
        %1772 = vmatprep.subr.mxu0 0.0
        %1773 = vmatpush1.msra.mxu0 0.0
        %1774 = vmatprep.subr.mxu0 0.0
        %1775 = vmatpush1.msra.mxu0 0.0
        %1776 = vmatprep.subr.mxu0 0.0
        %1777 = vmatpush1.msra.mxu0 0.0
        %1778 = vmatprep.subr.mxu0 0.0
        %1779 = vmatpush1.msra.mxu0 0.0
        %1780 = vmatprep.subr.mxu0 0.0
        %1781 = vmatpush1.msra.mxu0 0.0
        %1782 = vmatprep.subr.mxu0 0.0
        %1783 = vmatpush1.msra.mxu0 0.0
        %1784 = vmatprep.subr.mxu0 0.0
        %1785 = vmatpush1.msra.mxu0 0.0
        %1786 = vmatprep.subr.mxu0 0.0
        %1787 = vmatpush1.msra.mxu0 0.0
        %1788 = vmatprep.subr.mxu0 0.0
        %1789 = vmatpush1.msra.mxu0 0.0
        %1790 = vmatprep.subr.mxu0 0.0
        %1791 = vmatpush1.msra.mxu0 0.0
        %1792 = vmatprep.subr.mxu0 0.0
        %1793 = vmatpush1.msra.mxu0 0.0
        %1794 = vmatprep.subr.mxu0 0.0
        %1795 = vmatpush1.msra.mxu0 0.0
        %1796 = vmatprep.subr.mxu0 0.0
        %1797 = vmatpush1.msra.mxu0 0.0
        %1798 = vmatprep.subr.mxu0 0.0
        %1799 = vmatpush1.msra.mxu0 0.0
        %1800 = vmatprep.subr.mxu0 0.0
        %1801 = vmatpush1.msra.mxu0 0.0
        %1802 = vmatprep.subr.mxu0 0.0
        %1803 = vmatpush1.msra.mxu0 0.0
        %1804 = vmatprep.subr.mxu0 0.0
        %1805 = vmatpush1.msra.mxu0 0.0
        %1806 = vmatprep.subr.mxu0 0.0
        %1807 = vmatpush1.msra.mxu0 0.0
        %1808 = vmatprep.subr.mxu0 0.0
        %1809 = vmatpush1.msra.mxu0 0.0
        %1810 = vmatprep.mubr.f32.mxu0 0.0
        %1811 = vmatmul.mubr.f32.gmra.mrb[0].mxu0 %v1744
        %v1812 = vpop.f32.mrb[0].mxu0
        %v1813 = vadd.f32 %v1741, %v1812
        %v1814 = vpop.f32.mrb[0].mxu0
        %1815 = vdwg.mxu0
        %v1816 = vadd.f32 %v1813, %v1285
        %v1817 = vld [vmem:[%s17] sm:$0x1]
        %v1818 = vld [vmem:[%s19] sm:$0x1]
        %v1819 = vsel %vm1299, %v1816, 0.0
        %1820 = vadd.xlane.f32.xlu0 %v1819
        %v1821 = vpop.xlane.xlu0 %1820
        %v1822 = vrcp.pop 16.0
        %v1823 = vmul.f32 %v1821, %v1822
        %v1824 = vsub.f32 %v1816, %v1823
        %v1825 = vmul.f32 %v1824, %v1824
        %v1826 = vsel %vm1299, %v1825, 0.0
        %1827 = vadd.xlane.f32.xlu0 %v1826
        %v1828 = vpop.xlane.xlu0 %1827
        %v1829 = vmul.f32 %v1828, %v1822
        %v1830 = vadd.f32 %v1829, 1e-05
        %v1831 = vrsqrt.pop %v1830
        %v1832 = vmul.f32 %v1824, %v1831
        %v1834 = vlaneseq
        %v1835 = vshrl.u32 %v1834, 7
        %v1836 = vsub.s32 0, %v1835
        %v1837 = vrot.slane %v1817, %v1836
        %v1839 = vmul.f32 %v1832, %v1837
        %v1841 = vlaneseq
        %v1842 = vshrl.u32 %v1841, 7
        %v1843 = vsub.s32 0, %v1842
        %v1844 = vrot.slane %v1818, %v1843
        %v1846 = vadd.f32 %v1839, %v1844
        %v1847 = vld [vmem:[%s21] sm:$0xff]
        %v1848 = vld [vmem:[%s21 + $0x8] sm:$0xff]
        %v1849 = vld [vmem:[%s23] sm:$0x1]
        %v1851 = vlaneseq
        %v1852 = vshrl.u32 %v1851, 7
        %v1853 = vsub.s32 0, %v1852
        %v1854 = vrot.slane %v1849, %v1853
        %v1857 = vsel %vm1299, %v1846, 0
        %1859 = vmatprep.subr.mxu0 0.0
        %1860 = vmatpush1.msra.mxu0 %v1847
        %1861 = vmatprep.subr.mxu0 0.0
        %1862 = vmatpush1.msra.mxu0 %v1848
        %1863 = vmatprep.subr.mxu0 0.0
        %1864 = vmatpush1.msra.mxu0 0.0
        %1865 = vmatprep.subr.mxu0 0.0
        %1866 = vmatpush1.msra.mxu0 0.0
        %1867 = vmatprep.subr.mxu0 0.0
        %1868 = vmatpush1.msra.mxu0 0.0
        %1869 = vmatprep.subr.mxu0 0.0
        %1870 = vmatpush1.msra.mxu0 0.0
        %1871 = vmatprep.subr.mxu0 0.0
        %1872 = vmatpush1.msra.mxu0 0.0
        %1873 = vmatprep.subr.mxu0 0.0
        %1874 = vmatpush1.msra.mxu0 0.0
        %1875 = vmatprep.subr.mxu0 0.0
        %1876 = vmatpush1.msra.mxu0 0.0
        %1877 = vmatprep.subr.mxu0 0.0
        %1878 = vmatpush1.msra.mxu0 0.0
        %1879 = vmatprep.subr.mxu0 0.0
        %1880 = vmatpush1.msra.mxu0 0.0
        %1881 = vmatprep.subr.mxu0 0.0
        %1882 = vmatpush1.msra.mxu0 0.0
        %1883 = vmatprep.subr.mxu0 0.0
        %1884 = vmatpush1.msra.mxu0 0.0
        %1885 = vmatprep.subr.mxu0 0.0
        %1886 = vmatpush1.msra.mxu0 0.0
        %1887 = vmatprep.subr.mxu0 0.0
        %1888 = vmatpush1.msra.mxu0 0.0
        %1889 = vmatprep.subr.mxu0 0.0
        %1890 = vmatpush1.msra.mxu0 0.0
        %1891 = vmatprep.subr.mxu0 0.0
        %1892 = vmatpush1.msra.mxu0 0.0
        %1893 = vmatprep.subr.mxu0 0.0
        %1894 = vmatpush1.msra.mxu0 0.0
        %1895 = vmatprep.subr.mxu0 0.0
        %1896 = vmatpush1.msra.mxu0 0.0
        %1897 = vmatprep.subr.mxu0 0.0
        %1898 = vmatpush1.msra.mxu0 0.0
        %1899 = vmatprep.subr.mxu0 0.0
        %1900 = vmatpush1.msra.mxu0 0.0
        %1901 = vmatprep.subr.mxu0 0.0
        %1902 = vmatpush1.msra.mxu0 0.0
        %1903 = vmatprep.subr.mxu0 0.0
        %1904 = vmatpush1.msra.mxu0 0.0
        %1905 = vmatprep.subr.mxu0 0.0
        %1906 = vmatpush1.msra.mxu0 0.0
        %1907 = vmatprep.subr.mxu0 0.0
        %1908 = vmatpush1.msra.mxu0 0.0
        %1909 = vmatprep.subr.mxu0 0.0
        %1910 = vmatpush1.msra.mxu0 0.0
        %1911 = vmatprep.subr.mxu0 0.0
        %1912 = vmatpush1.msra.mxu0 0.0
        %1913 = vmatprep.subr.mxu0 0.0
        %1914 = vmatpush1.msra.mxu0 0.0
        %1915 = vmatprep.subr.mxu0 0.0
        %1916 = vmatpush1.msra.mxu0 0.0
        %1917 = vmatprep.subr.mxu0 0.0
        %1918 = vmatpush1.msra.mxu0 0.0
        %1919 = vmatprep.subr.mxu0 0.0
        %1920 = vmatpush1.msra.mxu0 0.0
        %1921 = vmatprep.subr.mxu0 0.0
        %1922 = vmatpush1.msra.mxu0 0.0
        %1923 = vmatprep.mubr.f32.mxu0 0.0
        %1924 = vmatmul.mubr.f32.gmra.mrb[0].mxu0 %v1857
        %v1925 = vpop.f32.mrb[0].mxu0
        %v1926 = vadd.f32 %v1854, %v1925
        %v1927 = vpop.f32.mrb[0].mxu0
        %1928 = vdwg.mxu0
        %v1929 = vld [vmem:[%s25] sm:$0xff]
        %v1930 = vld [vmem:[%s25 + $0x8] sm:$0xff]
        %v1931 = vld [vmem:[%s27] sm:$0x1]
        %v1933 = vlaneseq
        %v1934 = vshrl.u32 %v1933, 7
        %v1935 = vsub.s32 0, %v1934
        %v1936 = vrot.slane %v1931, %v1935
        %v1939 = vsel %vm1299, %v1286, 0
        %v1942 = vsel %vm1299, %v1287, 0
        %1944 = vmatprep.subr.mxu0 0.0
        %1945 = vmatpush1.msra.mxu0 %v1929
        %1946 = vmatprep.subr.mxu0 0.0
        %1947 = vmatpush1.msra.mxu0 %v1930
        %1948 = vmatprep.subr.mxu0 0.0
        %1949 = vmatpush1.msra.mxu0 0.0
        %1950 = vmatprep.subr.mxu0 0.0
        %1951 = vmatpush1.msra.mxu0 0.0
        %1952 = vmatprep.subr.mxu0 0.0
        %1953 = vmatpush1.msra.mxu0 0.0
        %1954 = vmatprep.subr.mxu0 0.0
        %1955 = vmatpush1.msra.mxu0 0.0
        %1956 = vmatprep.subr.mxu0 0.0
        %1957 = vmatpush1.msra.mxu0 0.0
        %1958 = vmatprep.subr.mxu0 0.0
        %1959 = vmatpush1.msra.mxu0 0.0
        %1960 = vmatprep.subr.mxu0 0.0
        %1961 = vmatpush1.msra.mxu0 0.0
        %1962 = vmatprep.subr.mxu0 0.0
        %1963 = vmatpush1.msra.mxu0 0.0
        %1964 = vmatprep.subr.mxu0 0.0
        %1965 = vmatpush1.msra.mxu0 0.0
        %1966 = vmatprep.subr.mxu0 0.0
        %1967 = vmatpush1.msra.mxu0 0.0
        %1968 = vmatprep.subr.mxu0 0.0
        %1969 = vmatpush1.msra.mxu0 0.0
        %1970 = vmatprep.subr.mxu0 0.0
        %1971 = vmatpush1.msra.mxu0 0.0
        %1972 = vmatprep.subr.mxu0 0.0
        %1973 = vmatpush1.msra.mxu0 0.0
        %1974 = vmatprep.subr.mxu0 0.0
        %1975 = vmatpush1.msra.mxu0 0.0
        %1976 = vmatprep.subr.mxu0 0.0
        %1977 = vmatpush1.msra.mxu0 0.0
        %1978 = vmatprep.subr.mxu0 0.0
        %1979 = vmatpush1.msra.mxu0 0.0
        %1980 = vmatprep.subr.mxu0 0.0
        %1981 = vmatpush1.msra.mxu0 0.0
        %1982 = vmatprep.subr.mxu0 0.0
        %1983 = vmatpush1.msra.mxu0 0.0
        %1984 = vmatprep.subr.mxu0 0.0
        %1985 = vmatpush1.msra.mxu0 0.0
        %1986 = vmatprep.subr.mxu0 0.0
        %1987 = vmatpush1.msra.mxu0 0.0
        %1988 = vmatprep.subr.mxu0 0.0
        %1989 = vmatpush1.msra.mxu0 0.0
        %1990 = vmatprep.subr.mxu0 0.0
        %1991 = vmatpush1.msra.mxu0 0.0
        %1992 = vmatprep.subr.mxu0 0.0
        %1993 = vmatpush1.msra.mxu0 0.0
        %1994 = vmatprep.subr.mxu0 0.0
        %1995 = vmatpush1.msra.mxu0 0.0
        %1996 = vmatprep.subr.mxu0 0.0
        %1997 = vmatpush1.msra.mxu0 0.0
        %1998 = vmatprep.subr.mxu0 0.0
        %1999 = vmatpush1.msra.mxu0 0.0
        %2000 = vmatprep.subr.mxu0 0.0
        %2001 = vmatpush1.msra.mxu0 0.0
        %2002 = vmatprep.subr.mxu0 0.0
        %2003 = vmatpush1.msra.mxu0 0.0
        %2004 = vmatprep.subr.mxu0 0.0
        %2005 = vmatpush1.msra.mxu0 0.0
        %2006 = vmatprep.subr.mxu0 0.0
        %2007 = vmatpush1.msra.mxu0 0.0
        %2008 = vmatprep.mubr.f32.mxu0 0.0
        %2009 = vmatmul.mubr.f32.gmra.mrb[0].mxu0 %v1939
        %v2010 = vpop.f32.mrb[0].mxu0
        %v2011 = vadd.f32 %v1936, %v2010
        %v2012 = vpop.f32.mrb[0].mxu0
        %2013 = vmatprep.mubr.f32.mxu0 0.0
        %2014 = vmatmul.mubr.f32.gmra.mrb[0].mxu0 %v1942
        %v2015 = vpop.f32.mrb[0].mxu0
        %v2016 = vadd.f32 %v1936, %v2015
        %v2017 = vpop.f32.mrb[0].mxu0
        %2018 = vdwg.mxu0
        %v2019 = vld [vmem:[%s29] sm:$0xff]
        %v2020 = vld [vmem:[%s29 + $0x8] sm:$0xff]
        %v2021 = vld [vmem:[%s31] sm:$0x1]
        %v2023 = vlaneseq
        %v2024 = vshrl.u32 %v2023, 7
        %v2025 = vsub.s32 0, %v2024
        %v2026 = vrot.slane %v2021, %v2025
        %v2029 = vsel %vm1299, %v1288, 0
        %v2032 = vsel %vm1299, %v1289, 0
        %2034 = vmatprep.subr.mxu0 0.0
        %2035 = vmatpush1.msra.mxu0 %v2019
        %2036 = vmatprep.subr.mxu0 0.0
        %2037 = vmatpush1.msra.mxu0 %v2020
        %2038 = vmatprep.subr.mxu0 0.0
        %2039 = vmatpush1.msra.mxu0 0.0
        %2040 = vmatprep.subr.mxu0 0.0
        %2041 = vmatpush1.msra.mxu0 0.0
        %2042 = vmatprep.subr.mxu0 0.0
        %2043 = vmatpush1.msra.mxu0 0.0
        %2044 = vmatprep.subr.mxu0 0.0
        %2045 = vmatpush1.msra.mxu0 0.0
        %2046 = vmatprep.subr.mxu0 0.0
        %2047 = vmatpush1.msra.mxu0 0.0
        %2048 = vmatprep.subr.mxu0 0.0
        %2049 = vmatpush1.msra.mxu0 0.0
        %2050 = vmatprep.subr.mxu0 0.0
        %2051 = vmatpush1.msra.mxu0 0.0
        %2052 = vmatprep.subr.mxu0 0.0
        %2053 = vmatpush1.msra.mxu0 0.0
        %2054 = vmatprep.subr.mxu0 0.0
        %2055 = vmatpush1.msra.mxu0 0.0
        %2056 = vmatprep.subr.mxu0 0.0
        %2057 = vmatpush1.msra.mxu0 0.0
        %2058 = vmatprep.subr.mxu0 0.0
        %2059 = vmatpush1.msra.mxu0 0.0
        %2060 = vmatprep.subr.mxu0 0.0
        %2061 = vmatpush1.msra.mxu0 0.0
        %2062 = vmatprep.subr.mxu0 0.0
        %2063 = vmatpush1.msra.mxu0 0.0
        %2064 = vmatprep.subr.mxu0 0.0
        %2065 = vmatpush1.msra.mxu0 0.0
        %2066 = vmatprep.subr.mxu0 0.0
        %2067 = vmatpush1.msra.mxu0 0.0
        %2068 = vmatprep.subr.mxu0 0.0
        %2069 = vmatpush1.msra.mxu0 0.0
        %2070 = vmatprep.subr.mxu0 0.0
        %2071 = vmatpush1.msra.mxu0 0.0
        %2072 = vmatprep.subr.mxu0 0.0
        %2073 = vmatpush1.msra.mxu0 0.0
        %2074 = vmatprep.subr.mxu0 0.0
        %2075 = vmatpush1.msra.mxu0 0.0
        %2076 = vmatprep.subr.mxu0 0.0
        %2077 = vmatpush1.msra.mxu0 0.0
        %2078 = vmatprep.subr.mxu0 0.0
        %2079 = vmatpush1.msra.mxu0 0.0
        %2080 = vmatprep.subr.mxu0 0.0
        %2081 = vmatpush1.msra.mxu0 0.0
        %2082 = vmatprep.subr.mxu0 0.0
        %2083 = vmatpush1.msra.mxu0 0.0
        %2084 = vmatprep.subr.mxu0 0.0
        %2085 = vmatpush1.msra.mxu0 0.0
        %2086 = vmatprep.subr.mxu0 0.0
        %2087 = vmatpush1.msra.mxu0 0.0
        %2088 = vmatprep.subr.mxu0 0.0
        %2089 = vmatpush1.msra.mxu0 0.0
        %2090 = vmatprep.subr.mxu0 0.0
        %2091 = vmatpush1.msra.mxu0 0.0
        %2092 = vmatprep.subr.mxu0 0.0
        %2093 = vmatpush1.msra.mxu0 0.0
        %2094 = vmatprep.subr.mxu0 0.0
        %2095 = vmatpush1.msra.mxu0 0.0
        %2096 = vmatprep.subr.mxu0 0.0
        %2097 = vmatpush1.msra.mxu0 0.0
        %2098 = vmatprep.mubr.f32.mxu0 0.0
        %2099 = vmatmul.mubr.f32.gmra.mrb[0].mxu0 %v2029
        %v2100 = vpop.f32.mrb[0].mxu0
        %v2101 = vadd.f32 %v2026, %v2100
        %v2102 = vpop.f32.mrb[0].mxu0
        %2103 = vmatprep.mubr.f32.mxu0 0.0
        %2104 = vmatmul.mubr.f32.gmra.mrb[0].mxu0 %v2032
        %v2105 = vpop.f32.mrb[0].mxu0
        %v2106 = vadd.f32 %v2026, %v2105
        %v2107 = vpop.f32.mrb[0].mxu0
        %2108 = vdwg.mxu0
        %2110 = vrot.lane.b32.xlu0 %v1926, 120
        %v2111 = vpop.permute.xlu0 %2110
        %2114 = vrot.lane.b32.xlu0 %v2011, 120
        %v2115 = vpop.permute.xlu0 %2114
        %2116 = vrot.lane.b32.xlu0 %v2016, 120
        %v2117 = vpop.permute.xlu0 %2116
        %v2118 = vsel %vm1378, %v1926, 0
        %v2120 = vsel %vm1378, %v2011, 0
        %v2122 = vsel %vm1378, %v2016, 0
        %2124 = vmatprep.subr.mxu0 0.0
        %2125 = vmatpush1.xpose.msra.mxu0 %v2120
        %2126 = vmatprep.subr.mxu0 0.0
        %2127 = vmatpush1.xpose.msra.mxu0 %v2122
        %2128 = vmatprep.subr.mxu0 0.0
        %2129 = vmatpush1.xpose.msra.mxu0 0.0
        %2130 = vmatprep.subr.mxu0 0.0
        %2131 = vmatpush1.xpose.msra.mxu0 0.0
        %2132 = vmatprep.subr.mxu0 0.0
        %2133 = vmatpush1.xpose.msra.mxu0 0.0
        %2134 = vmatprep.subr.mxu0 0.0
        %2135 = vmatpush1.xpose.msra.mxu0 0.0
        %2136 = vmatprep.subr.mxu0 0.0
        %2137 = vmatpush1.xpose.msra.mxu0 0.0
        %2138 = vmatprep.subr.mxu0 0.0
        %2139 = vmatpush1.xpose.msra.mxu0 0.0
        %2140 = vmatprep.subr.mxu0 0.0
        %2141 = vmatpush1.xpose.msra.mxu0 0.0
        %2142 = vmatprep.subr.mxu0 0.0
        %2143 = vmatpush1.xpose.msra.mxu0 0.0
        %2144 = vmatprep.subr.mxu0 0.0
        %2145 = vmatpush1.xpose.msra.mxu0 0.0
        %2146 = vmatprep.subr.mxu0 0.0
        %2147 = vmatpush1.xpose.msra.mxu0 0.0
        %2148 = vmatprep.subr.mxu0 0.0
        %2149 = vmatpush1.xpose.msra.mxu0 0.0
        %2150 = vmatprep.subr.mxu0 0.0
        %2151 = vmatpush1.xpose.msra.mxu0 0.0
        %2152 = vmatprep.subr.mxu0 0.0
        %2153 = vmatpush1.xpose.msra.mxu0 0.0
        %2154 = vmatprep.subr.mxu0 0.0
        %2155 = vmatpush1.xpose.msra.mxu0 0.0
        %2156 = vmatprep.subr.mxu0 0.0
        %2157 = vmatpush1.xpose.msra.mxu0 0.0
        %2158 = vmatprep.subr.mxu0 0.0
        %2159 = vmatpush1.xpose.msra.mxu0 0.0
        %2160 = vmatprep.subr.mxu0 0.0
        %2161 = vmatpush1.xpose.msra.mxu0 0.0
        %2162 = vmatprep.subr.mxu0 0.0
        %2163 = vmatpush1.xpose.msra.mxu0 0.0
        %2164 = vmatprep.subr.mxu0 0.0
        %2165 = vmatpush1.xpose.msra.mxu0 0.0
        %2166 = vmatprep.subr.mxu0 0.0
        %2167 = vmatpush1.xpose.msra.mxu0 0.0
        %2168 = vmatprep.subr.mxu0 0.0
        %2169 = vmatpush1.xpose.msra.mxu0 0.0
        %2170 = vmatprep.subr.mxu0 0.0
        %2171 = vmatpush1.xpose.msra.mxu0 0.0
        %2172 = vmatprep.subr.mxu0 0.0
        %2173 = vmatpush1.xpose.msra.mxu0 0.0
        %2174 = vmatprep.subr.mxu0 0.0
        %2175 = vmatpush1.xpose.msra.mxu0 0.0
        %2176 = vmatprep.subr.mxu0 0.0
        %2177 = vmatpush1.xpose.msra.mxu0 0.0
        %2178 = vmatprep.subr.mxu0 0.0
        %2179 = vmatpush1.xpose.msra.mxu0 0.0
        %2180 = vmatprep.subr.mxu0 0.0
        %2181 = vmatpush1.xpose.msra.mxu0 0.0
        %2182 = vmatprep.subr.mxu0 0.0
        %2183 = vmatpush1.xpose.msra.mxu0 0.0
        %2184 = vmatprep.subr.mxu0 0.0
        %2185 = vmatpush1.xpose.msra.mxu0 0.0
        %2186 = vmatprep.subr.mxu0 0.0
        %2187 = vmatpush1.xpose.msra.mxu0 0.0
        %2188 = vmatprep.mubr.f32.mxu0 0.0
        %2189 = vmatmul.mubr.f32.gmra.mrb[0].mxu0 %v2118
        %v2190 = vpop.f32.mrb[0].mxu0
        %v2191 = vadd.f32 0.0, %v2190
        %v2192 = vpop.f32.mrb[0].mxu0
        %2193 = vdwg.mxu0
        %v2194 = vsel %vm1378, %v2111, 0
        %v2196 = vsel %vm1378, %v2115, 0
        %v2198 = vsel %vm1378, %v2117, 0
        %2200 = vmatprep.subr.mxu0 0.0
        %2201 = vmatpush1.xpose.msra.mxu0 %v2196
        %2202 = vmatprep.subr.mxu0 0.0
        %2203 = vmatpush1.xpose.msra.mxu0 %v2198
        %2204 = vmatprep.subr.mxu0 0.0
        %2205 = vmatpush1.xpose.msra.mxu0 0.0
        %2206 = vmatprep.subr.mxu0 0.0
        %2207 = vmatpush1.xpose.msra.mxu0 0.0
        %2208 = vmatprep.subr.mxu0 0.0
        %2209 = vmatpush1.xpose.msra.mxu0 0.0
        %2210 = vmatprep.subr.mxu0 0.0
        %2211 = vmatpush1.xpose.msra.mxu0 0.0
        %2212 = vmatprep.subr.mxu0 0.0
        %2213 = vmatpush1.xpose.msra.mxu0 0.0
        %2214 = vmatprep.subr.mxu0 0.0
        %2215 = vmatpush1.xpose.msra.mxu0 0.0
        %2216 = vmatprep.subr.mxu0 0.0
        %2217 = vmatpush1.xpose.msra.mxu0 0.0
        %2218 = vmatprep.subr.mxu0 0.0
        %2219 = vmatpush1.xpose.msra.mxu0 0.0
        %2220 = vmatprep.subr.mxu0 0.0
        %2221 = vmatpush1.xpose.msra.mxu0 0.0
        %2222 = vmatprep.subr.mxu0 0.0
        %2223 = vmatpush1.xpose.msra.mxu0 0.0
        %2224 = vmatprep.subr.mxu0 0.0
        %2225 = vmatpush1.xpose.msra.mxu0 0.0
        %2226 = vmatprep.subr.mxu0 0.0
        %2227 = vmatpush1.xpose.msra.mxu0 0.0
        %2228 = vmatprep.subr.mxu0 0.0
        %2229 = vmatpush1.xpose.msra.mxu0 0.0
        %2230 = vmatprep.subr.mxu0 0.0
        %2231 = vmatpush1.xpose.msra.mxu0 0.0
        %2232 = vmatprep.subr.mxu0 0.0
        %2233 = vmatpush1.xpose.msra.mxu0 0.0
        %2234 = vmatprep.subr.mxu0 0.0
        %2235 = vmatpush1.xpose.msra.mxu0 0.0
        %2236 = vmatprep.subr.mxu0 0.0
        %2237 = vmatpush1.xpose.msra.mxu0 0.0
        %2238 = vmatprep.subr.mxu0 0.0
        %2239 = vmatpush1.xpose.msra.mxu0 0.0
        %2240 = vmatprep.subr.mxu0 0.0
        %2241 = vmatpush1.xpose.msra.mxu0 0.0
        %2242 = vmatprep.subr.mxu0 0.0
        %2243 = vmatpush1.xpose.msra.mxu0 0.0
        %2244 = vmatprep.subr.mxu0 0.0
        %2245 = vmatpush1.xpose.msra.mxu0 0.0
        %2246 = vmatprep.subr.mxu0 0.0
        %2247 = vmatpush1.xpose.msra.mxu0 0.0
        %2248 = vmatprep.subr.mxu0 0.0
        %2249 = vmatpush1.xpose.msra.mxu0 0.0
        %2250 = vmatprep.subr.mxu0 0.0
        %2251 = vmatpush1.xpose.msra.mxu0 0.0
        %2252 = vmatprep.subr.mxu0 0.0
        %2253 = vmatpush1.xpose.msra.mxu0 0.0
        %2254 = vmatprep.subr.mxu0 0.0
        %2255 = vmatpush1.xpose.msra.mxu0 0.0
        %2256 = vmatprep.subr.mxu0 0.0
        %2257 = vmatpush1.xpose.msra.mxu0 0.0
        %2258 = vmatprep.subr.mxu0 0.0
        %2259 = vmatpush1.xpose.msra.mxu0 0.0
        %2260 = vmatprep.subr.mxu0 0.0
        %2261 = vmatpush1.xpose.msra.mxu0 0.0
        %2262 = vmatprep.subr.mxu0 0.0
        %2263 = vmatpush1.xpose.msra.mxu0 0.0
        %2264 = vmatprep.mubr.f32.mxu0 0.0
        %2265 = vmatmul.mubr.f32.gmra.mrb[0].mxu0 %v2194
        %v2266 = vpop.f32.mrb[0].mxu0
        %v2267 = vadd.f32 0.0, %v2266
        %v2268 = vpop.f32.mrb[0].mxu0
        %2269 = vdwg.mxu0
        %v2270 = vmul.f32 %v2191, 0.35355338
        %v2271 = vmul.f32 %v2267, 0.35355338
        %vm2272 = vcmp.ge.s32.totalorder %v1542, 8
        %v2273 = vsel %vm2272, 1, 0
        %v2274 = vadd.s32 %v1546, %v2273
        %vm2275 = vcmp.ge.s32.totalorder %v1542, 12
        %v2276 = vsel %vm2275, 1, 0
        %v2277 = vadd.s32 %v2274, %v2276
        %vm2278 = vcmp.eq.s32.totalorder %v1540, %v2277
        %v2279 = vsel %vm2278, 0.0, -1e+30
        %v2280 = vadd.f32 %v2270, %v2279
        %v2281 = vadd.f32 %v2271, %v2279
        %v2282 = vsel %vm1299, %v2280, -inf
        %2283 = vmax.xlane.f32.xlu0 %v2282
        %v2284 = vpop.xlane.xlu0 %2283
        %v2285 = vsel %vm1299, %v2281, -inf
        %2286 = vmax.xlane.f32.xlu0 %v2285
        %v2287 = vpop.xlane.xlu0 %2286
        %v2288 = vsub.f32 %v2280, %v2284
        %v2289 = vsub.f32 %v2281, %v2287
        %v2290 = vmul.f32 %v2288, 1.442695
        %v2291 = vpow.pop %v2290
        %v2292 = vmul.f32 %v2289, 1.442695
        %v2293 = vpow.pop %v2292
        %v2294 = vsel %vm1299, %v2291, 0.0
        %2295 = vadd.xlane.f32.xlu0 %v2294
        %v2296 = vpop.xlane.xlu0 %2295
        %v2297 = vsel %vm1299, %v2293, 0.0
        %2298 = vadd.xlane.f32.xlu0 %v2297
        %v2299 = vpop.xlane.xlu0 %2298
        %v2300 = vrcp.pop %v2296
        %v2301 = vmul.f32 %v2291, %v2300
        %v2302 = vrcp.pop %v2299
        %v2303 = vmul.f32 %v2293, %v2302
        %2304 = vrot.lane.b32.xlu0 %v2011, 112
        %v2305 = vpop.permute.xlu0 %2304
        %2306 = vrot.lane.b32.xlu0 %v2016, 112
        %v2307 = vpop.permute.xlu0 %2306
        %v2311 = vsel %vm1299, %v2301, 0
        %2313 = vmatprep.subr.mxu0 0.0
        %2314 = vmatpush1.msra.mxu0 %v2305
        %2315 = vmatprep.subr.mxu0 0.0
        %2316 = vmatpush1.msra.mxu0 %v2307
        %2317 = vmatprep.subr.mxu0 0.0
        %2318 = vmatpush1.msra.mxu0 0.0
        %2319 = vmatprep.subr.mxu0 0.0
        %2320 = vmatpush1.msra.mxu0 0.0
        %2321 = vmatprep.subr.mxu0 0.0
        %2322 = vmatpush1.msra.mxu0 0.0
        %2323 = vmatprep.subr.mxu0 0.0
        %2324 = vmatpush1.msra.mxu0 0.0
        %2325 = vmatprep.subr.mxu0 0.0
        %2326 = vmatpush1.msra.mxu0 0.0
        %2327 = vmatprep.subr.mxu0 0.0
        %2328 = vmatpush1.msra.mxu0 0.0
        %2329 = vmatprep.subr.mxu0 0.0
        %2330 = vmatpush1.msra.mxu0 0.0
        %2331 = vmatprep.subr.mxu0 0.0
        %2332 = vmatpush1.msra.mxu0 0.0
        %2333 = vmatprep.subr.mxu0 0.0
        %2334 = vmatpush1.msra.mxu0 0.0
        %2335 = vmatprep.subr.mxu0 0.0
        %2336 = vmatpush1.msra.mxu0 0.0
        %2337 = vmatprep.subr.mxu0 0.0
        %2338 = vmatpush1.msra.mxu0 0.0
        %2339 = vmatprep.subr.mxu0 0.0
        %2340 = vmatpush1.msra.mxu0 0.0
        %2341 = vmatprep.subr.mxu0 0.0
        %2342 = vmatpush1.msra.mxu0 0.0
        %2343 = vmatprep.subr.mxu0 0.0
        %2344 = vmatpush1.msra.mxu0 0.0
        %2345 = vmatprep.subr.mxu0 0.0
        %2346 = vmatpush1.msra.mxu0 0.0
        %2347 = vmatprep.subr.mxu0 0.0
        %2348 = vmatpush1.msra.mxu0 0.0
        %2349 = vmatprep.subr.mxu0 0.0
        %2350 = vmatpush1.msra.mxu0 0.0
        %2351 = vmatprep.subr.mxu0 0.0
        %2352 = vmatpush1.msra.mxu0 0.0
        %2353 = vmatprep.subr.mxu0 0.0
        %2354 = vmatpush1.msra.mxu0 0.0
        %2355 = vmatprep.subr.mxu0 0.0
        %2356 = vmatpush1.msra.mxu0 0.0
        %2357 = vmatprep.subr.mxu0 0.0
        %2358 = vmatpush1.msra.mxu0 0.0
        %2359 = vmatprep.subr.mxu0 0.0
        %2360 = vmatpush1.msra.mxu0 0.0
        %2361 = vmatprep.subr.mxu0 0.0
        %2362 = vmatpush1.msra.mxu0 0.0
        %2363 = vmatprep.subr.mxu0 0.0
        %2364 = vmatpush1.msra.mxu0 0.0
        %2365 = vmatprep.subr.mxu0 0.0
        %2366 = vmatpush1.msra.mxu0 0.0
        %2367 = vmatprep.subr.mxu0 0.0
        %2368 = vmatpush1.msra.mxu0 0.0
        %2369 = vmatprep.subr.mxu0 0.0
        %2370 = vmatpush1.msra.mxu0 0.0
        %2371 = vmatprep.subr.mxu0 0.0
        %2372 = vmatpush1.msra.mxu0 0.0
        %2373 = vmatprep.subr.mxu0 0.0
        %2374 = vmatpush1.msra.mxu0 0.0
        %2375 = vmatprep.subr.mxu0 0.0
        %2376 = vmatpush1.msra.mxu0 0.0
        %2377 = vmatprep.mubr.f32.mxu0 0.0
        %2378 = vmatmul.mubr.f32.gmra.mrb[0].mxu0 %v2311
        %v2379 = vpop.f32.mrb[0].mxu0
        %v2380 = vadd.f32 0.0, %v2379
        %v2381 = vpop.f32.mrb[0].mxu0
        %2382 = vdwg.mxu0
        %2383 = vrot.lane.b32.xlu0 %v2115, 112
        %v2384 = vpop.permute.xlu0 %2383
        %2385 = vrot.lane.b32.xlu0 %v2117, 112
        %v2386 = vpop.permute.xlu0 %2385
        %v2390 = vsel %vm1299, %v2303, 0
        %2392 = vmatprep.subr.mxu0 0.0
        %2393 = vmatpush1.msra.mxu0 %v2384
        %2394 = vmatprep.subr.mxu0 0.0
        %2395 = vmatpush1.msra.mxu0 %v2386
        %2396 = vmatprep.subr.mxu0 0.0
        %2397 = vmatpush1.msra.mxu0 0.0
        %2398 = vmatprep.subr.mxu0 0.0
        %2399 = vmatpush1.msra.mxu0 0.0
        %2400 = vmatprep.subr.mxu0 0.0
        %2401 = vmatpush1.msra.mxu0 0.0
        %2402 = vmatprep.subr.mxu0 0.0
        %2403 = vmatpush1.msra.mxu0 0.0
        %2404 = vmatprep.subr.mxu0 0.0
        %2405 = vmatpush1.msra.mxu0 0.0
        %2406 = vmatprep.subr.mxu0 0.0
        %2407 = vmatpush1.msra.mxu0 0.0
        %2408 = vmatprep.subr.mxu0 0.0
        %2409 = vmatpush1.msra.mxu0 0.0
        %2410 = vmatprep.subr.mxu0 0.0
        %2411 = vmatpush1.msra.mxu0 0.0
        %2412 = vmatprep.subr.mxu0 0.0
        %2413 = vmatpush1.msra.mxu0 0.0
        %2414 = vmatprep.subr.mxu0 0.0
        %2415 = vmatpush1.msra.mxu0 0.0
        %2416 = vmatprep.subr.mxu0 0.0
        %2417 = vmatpush1.msra.mxu0 0.0
        %2418 = vmatprep.subr.mxu0 0.0
        %2419 = vmatpush1.msra.mxu0 0.0
        %2420 = vmatprep.subr.mxu0 0.0
        %2421 = vmatpush1.msra.mxu0 0.0
        %2422 = vmatprep.subr.mxu0 0.0
        %2423 = vmatpush1.msra.mxu0 0.0
        %2424 = vmatprep.subr.mxu0 0.0
        %2425 = vmatpush1.msra.mxu0 0.0
        %2426 = vmatprep.subr.mxu0 0.0
        %2427 = vmatpush1.msra.mxu0 0.0
        %2428 = vmatprep.subr.mxu0 0.0
        %2429 = vmatpush1.msra.mxu0 0.0
        %2430 = vmatprep.subr.mxu0 0.0
        %2431 = vmatpush1.msra.mxu0 0.0
        %2432 = vmatprep.subr.mxu0 0.0
        %2433 = vmatpush1.msra.mxu0 0.0
        %2434 = vmatprep.subr.mxu0 0.0
        %2435 = vmatpush1.msra.mxu0 0.0
        %2436 = vmatprep.subr.mxu0 0.0
        %2437 = vmatpush1.msra.mxu0 0.0
        %2438 = vmatprep.subr.mxu0 0.0
        %2439 = vmatpush1.msra.mxu0 0.0
        %2440 = vmatprep.subr.mxu0 0.0
        %2441 = vmatpush1.msra.mxu0 0.0
        %2442 = vmatprep.subr.mxu0 0.0
        %2443 = vmatpush1.msra.mxu0 0.0
        %2444 = vmatprep.subr.mxu0 0.0
        %2445 = vmatpush1.msra.mxu0 0.0
        %2446 = vmatprep.subr.mxu0 0.0
        %2447 = vmatpush1.msra.mxu0 0.0
        %2448 = vmatprep.subr.mxu0 0.0
        %2449 = vmatpush1.msra.mxu0 0.0
        %2450 = vmatprep.subr.mxu0 0.0
        %2451 = vmatpush1.msra.mxu0 0.0
        %2452 = vmatprep.subr.mxu0 0.0
        %2453 = vmatpush1.msra.mxu0 0.0
        %2454 = vmatprep.subr.mxu0 0.0
        %2455 = vmatpush1.msra.mxu0 0.0
        %2456 = vmatprep.mubr.f32.mxu0 0.0
        %2457 = vmatmul.mubr.f32.gmra.mrb[0].mxu0 %v2390
        %v2458 = vpop.f32.mrb[0].mxu0
        %v2459 = vadd.f32 0.0, %v2458
        %v2460 = vpop.f32.mrb[0].mxu0
        %2461 = vdwg.mxu0
        %2463 = vrot.lane.b32.xlu0 %v2459, 8
        %v2464 = vpop.permute.xlu0 %2463
        %v2466 = vsel %vm1378, %v2380, %v2464
        %2469 = vrot.lane.b32.xlu0 %v2101, 120
        %v2470 = vpop.permute.xlu0 %2469
        %2471 = vrot.lane.b32.xlu0 %v2106, 120
        %v2472 = vpop.permute.xlu0 %2471
        %2475 = vmatprep.subr.mxu0 0.0
        %2476 = vmatpush1.msra.mxu0 %v2101
        %2477 = vmatprep.subr.mxu0 0.0
        %2478 = vmatpush1.msra.mxu0 %v2106
        %2479 = vmatprep.subr.mxu0 0.0
        %2480 = vmatpush1.msra.mxu0 0.0
        %2481 = vmatprep.subr.mxu0 0.0
        %2482 = vmatpush1.msra.mxu0 0.0
        %2483 = vmatprep.subr.mxu0 0.0
        %2484 = vmatpush1.msra.mxu0 0.0
        %2485 = vmatprep.subr.mxu0 0.0
        %2486 = vmatpush1.msra.mxu0 0.0
        %2487 = vmatprep.subr.mxu0 0.0
        %2488 = vmatpush1.msra.mxu0 0.0
        %2489 = vmatprep.subr.mxu0 0.0
        %2490 = vmatpush1.msra.mxu0 0.0
        %2491 = vmatprep.subr.mxu0 0.0
        %2492 = vmatpush1.msra.mxu0 0.0
        %2493 = vmatprep.subr.mxu0 0.0
        %2494 = vmatpush1.msra.mxu0 0.0
        %2495 = vmatprep.subr.mxu0 0.0
        %2496 = vmatpush1.msra.mxu0 0.0
        %2497 = vmatprep.subr.mxu0 0.0
        %2498 = vmatpush1.msra.mxu0 0.0
        %2499 = vmatprep.subr.mxu0 0.0
        %2500 = vmatpush1.msra.mxu0 0.0
        %2501 = vmatprep.subr.mxu0 0.0
        %2502 = vmatpush1.msra.mxu0 0.0
        %2503 = vmatprep.subr.mxu0 0.0
        %2504 = vmatpush1.msra.mxu0 0.0
        %2505 = vmatprep.subr.mxu0 0.0
        %2506 = vmatpush1.msra.mxu0 0.0
        %2507 = vmatprep.subr.mxu0 0.0
        %2508 = vmatpush1.msra.mxu0 0.0
        %2509 = vmatprep.subr.mxu0 0.0
        %2510 = vmatpush1.msra.mxu0 0.0
        %2511 = vmatprep.subr.mxu0 0.0
        %2512 = vmatpush1.msra.mxu0 0.0
        %2513 = vmatprep.subr.mxu0 0.0
        %2514 = vmatpush1.msra.mxu0 0.0
        %2515 = vmatprep.subr.mxu0 0.0
        %2516 = vmatpush1.msra.mxu0 0.0
        %2517 = vmatprep.subr.mxu0 0.0
        %2518 = vmatpush1.msra.mxu0 0.0
        %2519 = vmatprep.subr.mxu0 0.0
        %2520 = vmatpush1.msra.mxu0 0.0
        %2521 = vmatprep.subr.mxu0 0.0
        %2522 = vmatpush1.msra.mxu0 0.0
        %2523 = vmatprep.subr.mxu0 0.0
        %2524 = vmatpush1.msra.mxu0 0.0
        %2525 = vmatprep.subr.mxu0 0.0
        %2526 = vmatpush1.msra.mxu0 0.0
        %2527 = vmatprep.subr.mxu0 0.0
        %2528 = vmatpush1.msra.mxu0 0.0
        %2529 = vmatprep.subr.mxu0 0.0
        %2530 = vmatpush1.msra.mxu0 0.0
        %2531 = vmatprep.subr.mxu0 0.0
        %2532 = vmatpush1.msra.mxu0 0.0
        %2533 = vmatprep.subr.mxu0 0.0
        %2534 = vmatpush1.msra.mxu0 0.0
        %2535 = vmatprep.subr.mxu0 0.0
        %2536 = vmatpush1.msra.mxu0 0.0
        %2537 = vmatprep.subr.mxu0 0.0
        %2538 = vmatpush1.msra.mxu0 0.0
        %2539 = vmatprep.mubr.f32.mxu0 0.0
        %2540 = vmatmul.mubr.f32.gmra.mrb[0].mxu0 %v2311
        %v2541 = vpop.f32.mrb[0].mxu0
        %v2542 = vadd.f32 0.0, %v2541
        %v2543 = vpop.f32.mrb[0].mxu0
        %2544 = vdwg.mxu0
        %2545 = vmatprep.subr.mxu0 0.0
        %2546 = vmatpush1.msra.mxu0 %v2470
        %2547 = vmatprep.subr.mxu0 0.0
        %2548 = vmatpush1.msra.mxu0 %v2472
        %2549 = vmatprep.subr.mxu0 0.0
        %2550 = vmatpush1.msra.mxu0 0.0
        %2551 = vmatprep.subr.mxu0 0.0
        %2552 = vmatpush1.msra.mxu0 0.0
        %2553 = vmatprep.subr.mxu0 0.0
        %2554 = vmatpush1.msra.mxu0 0.0
        %2555 = vmatprep.subr.mxu0 0.0
        %2556 = vmatpush1.msra.mxu0 0.0
        %2557 = vmatprep.subr.mxu0 0.0
        %2558 = vmatpush1.msra.mxu0 0.0
        %2559 = vmatprep.subr.mxu0 0.0
        %2560 = vmatpush1.msra.mxu0 0.0
        %2561 = vmatprep.subr.mxu0 0.0
        %2562 = vmatpush1.msra.mxu0 0.0
        %2563 = vmatprep.subr.mxu0 0.0
        %2564 = vmatpush1.msra.mxu0 0.0
        %2565 = vmatprep.subr.mxu0 0.0
        %2566 = vmatpush1.msra.mxu0 0.0
        %2567 = vmatprep.subr.mxu0 0.0
        %2568 = vmatpush1.msra.mxu0 0.0
        %2569 = vmatprep.subr.mxu0 0.0
        %2570 = vmatpush1.msra.mxu0 0.0
        %2571 = vmatprep.subr.mxu0 0.0
        %2572 = vmatpush1.msra.mxu0 0.0
        %2573 = vmatprep.subr.mxu0 0.0
        %2574 = vmatpush1.msra.mxu0 0.0
        %2575 = vmatprep.subr.mxu0 0.0
        %2576 = vmatpush1.msra.mxu0 0.0
        %2577 = vmatprep.subr.mxu0 0.0
        %2578 = vmatpush1.msra.mxu0 0.0
        %2579 = vmatprep.subr.mxu0 0.0
        %2580 = vmatpush1.msra.mxu0 0.0
        %2581 = vmatprep.subr.mxu0 0.0
        %2582 = vmatpush1.msra.mxu0 0.0
        %2583 = vmatprep.subr.mxu0 0.0
        %2584 = vmatpush1.msra.mxu0 0.0
        %2585 = vmatprep.subr.mxu0 0.0
        %2586 = vmatpush1.msra.mxu0 0.0
        %2587 = vmatprep.subr.mxu0 0.0
        %2588 = vmatpush1.msra.mxu0 0.0
        %2589 = vmatprep.subr.mxu0 0.0
        %2590 = vmatpush1.msra.mxu0 0.0
        %2591 = vmatprep.subr.mxu0 0.0
        %2592 = vmatpush1.msra.mxu0 0.0
        %2593 = vmatprep.subr.mxu0 0.0
        %2594 = vmatpush1.msra.mxu0 0.0
        %2595 = vmatprep.subr.mxu0 0.0
        %2596 = vmatpush1.msra.mxu0 0.0
        %2597 = vmatprep.subr.mxu0 0.0
        %2598 = vmatpush1.msra.mxu0 0.0
        %2599 = vmatprep.subr.mxu0 0.0
        %2600 = vmatpush1.msra.mxu0 0.0
        %2601 = vmatprep.subr.mxu0 0.0
        %2602 = vmatpush1.msra.mxu0 0.0
        %2603 = vmatprep.subr.mxu0 0.0
        %2604 = vmatpush1.msra.mxu0 0.0
        %2605 = vmatprep.subr.mxu0 0.0
        %2606 = vmatpush1.msra.mxu0 0.0
        %2607 = vmatprep.subr.mxu0 0.0
        %2608 = vmatpush1.msra.mxu0 0.0
        %2609 = vmatprep.mubr.f32.mxu0 0.0
        %2610 = vmatmul.mubr.f32.gmra.mrb[0].mxu0 %v2390
        %v2611 = vpop.f32.mrb[0].mxu0
        %v2612 = vadd.f32 0.0, %v2611
        %v2613 = vpop.f32.mrb[0].mxu0
        %2614 = vdwg.mxu0
        %2616 = vrot.lane.b32.xlu0 %v2612, 8
        %v2617 = vpop.permute.xlu0 %2616
        %v2619 = vsel %vm1378, %v2542, %v2617
        %v2620 = vld [vmem:[%s33] sm:$0xff]
        %v2621 = vld [vmem:[%s33 + $0x8] sm:$0xff]
        %v2622 = vld [vmem:[%s35] sm:$0x1]
        %v2624 = vlaneseq
        %v2625 = vshrl.u32 %v2624, 7
        %v2626 = vsub.s32 0, %v2625
        %v2627 = vrot.slane %v2622, %v2626
        %v2630 = vsel %vm1299, %v2466, 0
        %2632 = vmatprep.subr.mxu0 0.0
        %2633 = vmatpush1.msra.mxu0 %v2620
        %2634 = vmatprep.subr.mxu0 0.0
        %2635 = vmatpush1.msra.mxu0 %v2621
        %2636 = vmatprep.subr.mxu0 0.0
        %2637 = vmatpush1.msra.mxu0 0.0
        %2638 = vmatprep.subr.mxu0 0.0
        %2639 = vmatpush1.msra.mxu0 0.0
        %2640 = vmatprep.subr.mxu0 0.0
        %2641 = vmatpush1.msra.mxu0 0.0
        %2642 = vmatprep.subr.mxu0 0.0
        %2643 = vmatpush1.msra.mxu0 0.0
        %2644 = vmatprep.subr.mxu0 0.0
        %2645 = vmatpush1.msra.mxu0 0.0
        %2646 = vmatprep.subr.mxu0 0.0
        %2647 = vmatpush1.msra.mxu0 0.0
        %2648 = vmatprep.subr.mxu0 0.0
        %2649 = vmatpush1.msra.mxu0 0.0
        %2650 = vmatprep.subr.mxu0 0.0
        %2651 = vmatpush1.msra.mxu0 0.0
        %2652 = vmatprep.subr.mxu0 0.0
        %2653 = vmatpush1.msra.mxu0 0.0
        %2654 = vmatprep.subr.mxu0 0.0
        %2655 = vmatpush1.msra.mxu0 0.0
        %2656 = vmatprep.subr.mxu0 0.0
        %2657 = vmatpush1.msra.mxu0 0.0
        %2658 = vmatprep.subr.mxu0 0.0
        %2659 = vmatpush1.msra.mxu0 0.0
        %2660 = vmatprep.subr.mxu0 0.0
        %2661 = vmatpush1.msra.mxu0 0.0
        %2662 = vmatprep.subr.mxu0 0.0
        %2663 = vmatpush1.msra.mxu0 0.0
        %2664 = vmatprep.subr.mxu0 0.0
        %2665 = vmatpush1.msra.mxu0 0.0
        %2666 = vmatprep.subr.mxu0 0.0
        %2667 = vmatpush1.msra.mxu0 0.0
        %2668 = vmatprep.subr.mxu0 0.0
        %2669 = vmatpush1.msra.mxu0 0.0
        %2670 = vmatprep.subr.mxu0 0.0
        %2671 = vmatpush1.msra.mxu0 0.0
        %2672 = vmatprep.subr.mxu0 0.0
        %2673 = vmatpush1.msra.mxu0 0.0
        %2674 = vmatprep.subr.mxu0 0.0
        %2675 = vmatpush1.msra.mxu0 0.0
        %2676 = vmatprep.subr.mxu0 0.0
        %2677 = vmatpush1.msra.mxu0 0.0
        %2678 = vmatprep.subr.mxu0 0.0
        %2679 = vmatpush1.msra.mxu0 0.0
        %2680 = vmatprep.subr.mxu0 0.0
        %2681 = vmatpush1.msra.mxu0 0.0
        %2682 = vmatprep.subr.mxu0 0.0
        %2683 = vmatpush1.msra.mxu0 0.0
        %2684 = vmatprep.subr.mxu0 0.0
        %2685 = vmatpush1.msra.mxu0 0.0
        %2686 = vmatprep.subr.mxu0 0.0
        %2687 = vmatpush1.msra.mxu0 0.0
        %2688 = vmatprep.subr.mxu0 0.0
        %2689 = vmatpush1.msra.mxu0 0.0
        %2690 = vmatprep.subr.mxu0 0.0
        %2691 = vmatpush1.msra.mxu0 0.0
        %2692 = vmatprep.subr.mxu0 0.0
        %2693 = vmatpush1.msra.mxu0 0.0
        %2694 = vmatprep.subr.mxu0 0.0
        %2695 = vmatpush1.msra.mxu0 0.0
        %2696 = vmatprep.mubr.f32.mxu0 0.0
        %2697 = vmatmul.mubr.f32.gmra.mrb[0].mxu0 %v2630
        %v2698 = vpop.f32.mrb[0].mxu0
        %v2699 = vadd.f32 %v2627, %v2698
        %v2700 = vpop.f32.mrb[0].mxu0
        %2701 = vdwg.mxu0
        %v2702 = vadd.f32 %v2699, %v1846
        %v2703 = vld [vmem:[%s37] sm:$0xff]
        %v2704 = vld [vmem:[%s37 + $0x8] sm:$0xff]
        %v2705 = vld [vmem:[%s39] sm:$0x1]
        %v2707 = vlaneseq
        %v2708 = vshrl.u32 %v2707, 7
        %v2709 = vsub.s32 0, %v2708
        %v2710 = vrot.slane %v2705, %v2709
        %v2713 = vsel %vm1299, %v2619, 0
        %2715 = vmatprep.subr.mxu0 0.0
        %2716 = vmatpush1.msra.mxu0 %v2703
        %2717 = vmatprep.subr.mxu0 0.0
        %2718 = vmatpush1.msra.mxu0 %v2704
        %2719 = vmatprep.subr.mxu0 0.0
        %2720 = vmatpush1.msra.mxu0 0.0
        %2721 = vmatprep.subr.mxu0 0.0
        %2722 = vmatpush1.msra.mxu0 0.0
        %2723 = vmatprep.subr.mxu0 0.0
        %2724 = vmatpush1.msra.mxu0 0.0
        %2725 = vmatprep.subr.mxu0 0.0
        %2726 = vmatpush1.msra.mxu0 0.0
        %2727 = vmatprep.subr.mxu0 0.0
        %2728 = vmatpush1.msra.mxu0 0.0
        %2729 = vmatprep.subr.mxu0 0.0
        %2730 = vmatpush1.msra.mxu0 0.0
        %2731 = vmatprep.subr.mxu0 0.0
        %2732 = vmatpush1.msra.mxu0 0.0
        %2733 = vmatprep.subr.mxu0 0.0
        %2734 = vmatpush1.msra.mxu0 0.0
        %2735 = vmatprep.subr.mxu0 0.0
        %2736 = vmatpush1.msra.mxu0 0.0
        %2737 = vmatprep.subr.mxu0 0.0
        %2738 = vmatpush1.msra.mxu0 0.0
        %2739 = vmatprep.subr.mxu0 0.0
        %2740 = vmatpush1.msra.mxu0 0.0
        %2741 = vmatprep.subr.mxu0 0.0
        %2742 = vmatpush1.msra.mxu0 0.0
        %2743 = vmatprep.subr.mxu0 0.0
        %2744 = vmatpush1.msra.mxu0 0.0
        %2745 = vmatprep.subr.mxu0 0.0
        %2746 = vmatpush1.msra.mxu0 0.0
        %2747 = vmatprep.subr.mxu0 0.0
        %2748 = vmatpush1.msra.mxu0 0.0
        %2749 = vmatprep.subr.mxu0 0.0
        %2750 = vmatpush1.msra.mxu0 0.0
        %2751 = vmatprep.subr.mxu0 0.0
        %2752 = vmatpush1.msra.mxu0 0.0
        %2753 = vmatprep.subr.mxu0 0.0
        %2754 = vmatpush1.msra.mxu0 0.0
        %2755 = vmatprep.subr.mxu0 0.0
        %2756 = vmatpush1.msra.mxu0 0.0
        %2757 = vmatprep.subr.mxu0 0.0
        %2758 = vmatpush1.msra.mxu0 0.0
        %2759 = vmatprep.subr.mxu0 0.0
        %2760 = vmatpush1.msra.mxu0 0.0
        %2761 = vmatprep.subr.mxu0 0.0
        %2762 = vmatpush1.msra.mxu0 0.0
        %2763 = vmatprep.subr.mxu0 0.0
        %2764 = vmatpush1.msra.mxu0 0.0
        %2765 = vmatprep.subr.mxu0 0.0
        %2766 = vmatpush1.msra.mxu0 0.0
        %2767 = vmatprep.subr.mxu0 0.0
        %2768 = vmatpush1.msra.mxu0 0.0
        %2769 = vmatprep.subr.mxu0 0.0
        %2770 = vmatpush1.msra.mxu0 0.0
        %2771 = vmatprep.subr.mxu0 0.0
        %2772 = vmatpush1.msra.mxu0 0.0
        %2773 = vmatprep.subr.mxu0 0.0
        %2774 = vmatpush1.msra.mxu0 0.0
        %2775 = vmatprep.subr.mxu0 0.0
        %2776 = vmatpush1.msra.mxu0 0.0
        %2777 = vmatprep.subr.mxu0 0.0
        %2778 = vmatpush1.msra.mxu0 0.0
        %2779 = vmatprep.mubr.f32.mxu0 0.0
        %2780 = vmatmul.mubr.f32.gmra.mrb[0].mxu0 %v2713
        %v2781 = vpop.f32.mrb[0].mxu0
        %v2782 = vadd.f32 %v2710, %v2781
        %v2783 = vpop.f32.mrb[0].mxu0
        %2784 = vdwg.mxu0
        %v2785 = vld [vmem:[%s41] sm:$0x1]
        %v2786 = vld [vmem:[%s43] sm:$0x1]
        %v2787 = vsel %vm1299, %v2702, 0.0
        %2788 = vadd.xlane.f32.xlu0 %v2787
        %v2789 = vpop.xlane.xlu0 %2788
        %v2790 = vmul.f32 %v2789, %v1822
        %v2791 = vsub.f32 %v2702, %v2790
        %v2792 = vmul.f32 %v2791, %v2791
        %v2793 = vsel %vm1299, %v2792, 0.0
        %2794 = vadd.xlane.f32.xlu0 %v2793
        %v2795 = vpop.xlane.xlu0 %2794
        %v2796 = vmul.f32 %v2795, %v1822
        %v2797 = vadd.f32 %v2796, 1e-05
        %v2798 = vrsqrt.pop %v2797
        %v2799 = vmul.f32 %v2791, %v2798
        %v2801 = vlaneseq
        %v2802 = vshrl.u32 %v2801, 7
        %v2803 = vsub.s32 0, %v2802
        %v2804 = vrot.slane %v2785, %v2803
        %v2806 = vmul.f32 %v2799, %v2804
        %v2808 = vlaneseq
        %v2809 = vshrl.u32 %v2808, 7
        %v2810 = vsub.s32 0, %v2809
        %v2811 = vrot.slane %v2786, %v2810
        %v2813 = vadd.f32 %v2806, %v2811
        %v2814 = vld [vmem:[%s45] sm:$0x1]
        %v2815 = vld [vmem:[%s47] sm:$0x1]
        %v2816 = vsel %vm1299, %v2782, 0.0
        %2817 = vadd.xlane.f32.xlu0 %v2816
        %v2818 = vpop.xlane.xlu0 %2817
        %v2819 = vmul.f32 %v2818, %v1822
        %v2820 = vsub.f32 %v2782, %v2819
        %v2821 = vmul.f32 %v2820, %v2820
        %v2822 = vsel %vm1299, %v2821, 0.0
        %2823 = vadd.xlane.f32.xlu0 %v2822
        %v2824 = vpop.xlane.xlu0 %2823
        %v2825 = vmul.f32 %v2824, %v1822
        %v2826 = vadd.f32 %v2825, 1e-05
        %v2827 = vrsqrt.pop %v2826
        %v2828 = vmul.f32 %v2820, %v2827
        %v2830 = vlaneseq
        %v2831 = vshrl.u32 %v2830, 7
        %v2832 = vsub.s32 0, %v2831
        %v2833 = vrot.slane %v2814, %v2832
        %v2835 = vmul.f32 %v2828, %v2833
        %v2837 = vlaneseq
        %v2838 = vshrl.u32 %v2837, 7
        %v2839 = vsub.s32 0, %v2838
        %v2840 = vrot.slane %v2815, %v2839
        %v2842 = vadd.f32 %v2835, %v2840
        %v2843 = vld [vmem:[%s49] sm:$0xff]
        %v2844 = vld [vmem:[%s49 + $0x8] sm:$0xff]
        %v2845 = vld [vmem:[%s51] sm:$0x1]
        %v2846 = vld [vmem:[%s53] sm:$0xff]
        %v2847 = vld [vmem:[%s53 + $0x8] sm:$0xff]
        %v2848 = vld [vmem:[%s53 + $0x10] sm:$0xff]
        %v2849 = vld [vmem:[%s53 + $0x18] sm:$0xff]
        %v2850 = vld [vmem:[%s53 + $0x20] sm:$0xff]
        %v2851 = vld [vmem:[%s53 + $0x28] sm:$0xff]
        %v2852 = vld [vmem:[%s53 + $0x30] sm:$0xff]
        %v2853 = vld [vmem:[%s53 + $0x38] sm:$0xff]
        %v2854 = vld [vmem:[%s55] sm:$0x1]
        %v2855 = vld [vmem:[%s57] sm:$0x1]
        %v2856 = vld [vmem:[%s59] sm:$0x1]
        %v2858 = vlaneseq
        %v2859 = vshrl.u32 %v2858, 7
        %v2860 = vsub.s32 0, %v2859
        %v2861 = vrot.slane %v2845, %v2860
        %v2864 = vsel %vm1299, %v2813, 0
        %2866 = vmatprep.subr.mxu0 0.0
        %2867 = vmatpush1.msra.mxu0 %v2843
        %2868 = vmatprep.subr.mxu0 0.0
        %2869 = vmatpush1.msra.mxu0 %v2844
        %2870 = vmatprep.subr.mxu0 0.0
        %2871 = vmatpush1.msra.mxu0 0.0
        %2872 = vmatprep.subr.mxu0 0.0
        %2873 = vmatpush1.msra.mxu0 0.0
        %2874 = vmatprep.subr.mxu0 0.0
        %2875 = vmatpush1.msra.mxu0 0.0
        %2876 = vmatprep.subr.mxu0 0.0
        %2877 = vmatpush1.msra.mxu0 0.0
        %2878 = vmatprep.subr.mxu0 0.0
        %2879 = vmatpush1.msra.mxu0 0.0
        %2880 = vmatprep.subr.mxu0 0.0
        %2881 = vmatpush1.msra.mxu0 0.0
        %2882 = vmatprep.subr.mxu0 0.0
        %2883 = vmatpush1.msra.mxu0 0.0
        %2884 = vmatprep.subr.mxu0 0.0
        %2885 = vmatpush1.msra.mxu0 0.0
        %2886 = vmatprep.subr.mxu0 0.0
        %2887 = vmatpush1.msra.mxu0 0.0
        %2888 = vmatprep.subr.mxu0 0.0
        %2889 = vmatpush1.msra.mxu0 0.0
        %2890 = vmatprep.subr.mxu0 0.0
        %2891 = vmatpush1.msra.mxu0 0.0
        %2892 = vmatprep.subr.mxu0 0.0
        %2893 = vmatpush1.msra.mxu0 0.0
        %2894 = vmatprep.subr.mxu0 0.0
        %2895 = vmatpush1.msra.mxu0 0.0
        %2896 = vmatprep.subr.mxu0 0.0
        %2897 = vmatpush1.msra.mxu0 0.0
        %2898 = vmatprep.subr.mxu0 0.0
        %2899 = vmatpush1.msra.mxu0 0.0
        %2900 = vmatprep.subr.mxu0 0.0
        %2901 = vmatpush1.msra.mxu0 0.0
        %2902 = vmatprep.subr.mxu0 0.0
        %2903 = vmatpush1.msra.mxu0 0.0
        %2904 = vmatprep.subr.mxu0 0.0
        %2905 = vmatpush1.msra.mxu0 0.0
        %2906 = vmatprep.subr.mxu0 0.0
        %2907 = vmatpush1.msra.mxu0 0.0
        %2908 = vmatprep.subr.mxu0 0.0
        %2909 = vmatpush1.msra.mxu0 0.0
        %2910 = vmatprep.subr.mxu0 0.0
        %2911 = vmatpush1.msra.mxu0 0.0
        %2912 = vmatprep.subr.mxu0 0.0
        %2913 = vmatpush1.msra.mxu0 0.0
        %2914 = vmatprep.subr.mxu0 0.0
        %2915 = vmatpush1.msra.mxu0 0.0
        %2916 = vmatprep.subr.mxu0 0.0
        %2917 = vmatpush1.msra.mxu0 0.0
        %2918 = vmatprep.subr.mxu0 0.0
        %2919 = vmatpush1.msra.mxu0 0.0
        %2920 = vmatprep.subr.mxu0 0.0
        %2921 = vmatpush1.msra.mxu0 0.0
        %2922 = vmatprep.subr.mxu0 0.0
        %2923 = vmatpush1.msra.mxu0 0.0
        %2924 = vmatprep.subr.mxu0 0.0
        %2925 = vmatpush1.msra.mxu0 0.0
        %2926 = vmatprep.subr.mxu0 0.0
        %2927 = vmatpush1.msra.mxu0 0.0
        %2928 = vmatprep.subr.mxu0 0.0
        %2929 = vmatpush1.msra.mxu0 0.0
        %2930 = vmatprep.mubr.f32.mxu0 0.0
        %2931 = vmatmul.mubr.f32.gmra.mrb[0].mxu0 %v2864
        %v2932 = vpop.f32.mrb[0].mxu0
        %v2933 = vadd.f32 %v2861, %v2932
        %v2934 = vpop.f32.mrb[0].mxu0
        %2935 = vdwg.mxu0
        %v2936 = vmax.f32 %v2933, 0.0
        %v2938 = vlaneseq
        %v2939 = vshrl.u32 %v2938, 7
        %v2940 = vsub.s32 0, %v2939
        %v2941 = vrot.slane %v2854, %v2940
        %vm2943 = vcmask 523264
        %v2945 = vsel %vm2943, %v2936, 0
        %2947 = vmatprep.subr.mxu0 0.0
        %2948 = vmatpush1.msra.mxu0 %v2846
        %2949 = vmatprep.subr.mxu0 0.0
        %2950 = vmatpush1.msra.mxu0 %v2847
        %2951 = vmatprep.subr.mxu0 0.0
        %2952 = vmatpush1.msra.mxu0 %v2848
        %2953 = vmatprep.subr.mxu0 0.0
        %2954 = vmatpush1.msra.mxu0 %v2849
        %2955 = vmatprep.subr.mxu0 0.0
        %2956 = vmatpush1.msra.mxu0 %v2850
        %2957 = vmatprep.subr.mxu0 0.0
        %2958 = vmatpush1.msra.mxu0 %v2851
        %2959 = vmatprep.subr.mxu0 0.0
        %2960 = vmatpush1.msra.mxu0 %v2852
        %2961 = vmatprep.subr.mxu0 0.0
        %2962 = vmatpush1.msra.mxu0 %v2853
        %2963 = vmatprep.subr.mxu0 0.0
        %2964 = vmatpush1.msra.mxu0 0.0
        %2965 = vmatprep.subr.mxu0 0.0
        %2966 = vmatpush1.msra.mxu0 0.0
        %2967 = vmatprep.subr.mxu0 0.0
        %2968 = vmatpush1.msra.mxu0 0.0
        %2969 = vmatprep.subr.mxu0 0.0
        %2970 = vmatpush1.msra.mxu0 0.0
        %2971 = vmatprep.subr.mxu0 0.0
        %2972 = vmatpush1.msra.mxu0 0.0
        %2973 = vmatprep.subr.mxu0 0.0
        %2974 = vmatpush1.msra.mxu0 0.0
        %2975 = vmatprep.subr.mxu0 0.0
        %2976 = vmatpush1.msra.mxu0 0.0
        %2977 = vmatprep.subr.mxu0 0.0
        %2978 = vmatpush1.msra.mxu0 0.0
        %2979 = vmatprep.subr.mxu0 0.0
        %2980 = vmatpush1.msra.mxu0 0.0
        %2981 = vmatprep.subr.mxu0 0.0
        %2982 = vmatpush1.msra.mxu0 0.0
        %2983 = vmatprep.subr.mxu0 0.0
        %2984 = vmatpush1.msra.mxu0 0.0
        %2985 = vmatprep.subr.mxu0 0.0
        %2986 = vmatpush1.msra.mxu0 0.0
        %2987 = vmatprep.subr.mxu0 0.0
        %2988 = vmatpush1.msra.mxu0 0.0
        %2989 = vmatprep.subr.mxu0 0.0
        %2990 = vmatpush1.msra.mxu0 0.0
        %2991 = vmatprep.subr.mxu0 0.0
        %2992 = vmatpush1.msra.mxu0 0.0
        %2993 = vmatprep.subr.mxu0 0.0
        %2994 = vmatpush1.msra.mxu0 0.0
        %2995 = vmatprep.subr.mxu0 0.0
        %2996 = vmatpush1.msra.mxu0 0.0
        %2997 = vmatprep.subr.mxu0 0.0
        %2998 = vmatpush1.msra.mxu0 0.0
        %2999 = vmatprep.subr.mxu0 0.0
        %3000 = vmatpush1.msra.mxu0 0.0
        %3001 = vmatprep.subr.mxu0 0.0
        %3002 = vmatpush1.msra.mxu0 0.0
        %3003 = vmatprep.subr.mxu0 0.0
        %3004 = vmatpush1.msra.mxu0 0.0
        %3005 = vmatprep.subr.mxu0 0.0
        %3006 = vmatpush1.msra.mxu0 0.0
        %3007 = vmatprep.subr.mxu0 0.0
        %3008 = vmatpush1.msra.mxu0 0.0
        %3009 = vmatprep.subr.mxu0 0.0
        %3010 = vmatpush1.msra.mxu0 0.0
        %3011 = vmatprep.mubr.f32.mxu0 0.0
        %3012 = vmatmul.mubr.f32.gmra.mrb[0].mxu0 %v2945
        %v3013 = vpop.f32.mrb[0].mxu0
        %v3014 = vadd.f32 %v2941, %v3013
        %v3015 = vpop.f32.mrb[0].mxu0
        %3016 = vdwg.mxu0
        %v3017 = vadd.f32 %v2813, %v3014
        %v3018 = vsel %vm1299, %v3017, 0.0
        %3019 = vadd.xlane.f32.xlu0 %v3018
        %v3020 = vpop.xlane.xlu0 %3019
        %v3021 = vmul.f32 %v3020, %v1822
        %v3022 = vsub.f32 %v3017, %v3021
        %v3023 = vmul.f32 %v3022, %v3022
        %v3024 = vsel %vm1299, %v3023, 0.0
        %3025 = vadd.xlane.f32.xlu0 %v3024
        %v3026 = vpop.xlane.xlu0 %3025
        %v3027 = vmul.f32 %v3026, %v1822
        %v3028 = vadd.f32 %v3027, 1e-05
        %v3029 = vrsqrt.pop %v3028
        %v3030 = vmul.f32 %v3022, %v3029
        %v3032 = vlaneseq
        %v3033 = vshrl.u32 %v3032, 7
        %v3034 = vsub.s32 0, %v3033
        %v3035 = vrot.slane %v2855, %v3034
        %v3037 = vmul.f32 %v3030, %v3035
        %v3039 = vlaneseq
        %v3040 = vshrl.u32 %v3039, 7
        %v3041 = vsub.s32 0, %v3040
        %v3042 = vrot.slane %v2856, %v3041
        %v3044 = vadd.f32 %v3037, %v3042
        %v3045 = vld [vmem:[%s61] sm:$0xff]
        %v3046 = vld [vmem:[%s61 + $0x8] sm:$0xff]
        %v3047 = vld [vmem:[%s63] sm:$0x1]
        %v3048 = vld [vmem:[%s65] sm:$0xff]
        %v3049 = vld [vmem:[%s65 + $0x8] sm:$0xff]
        %v3050 = vld [vmem:[%s65 + $0x10] sm:$0xff]
        %v3051 = vld [vmem:[%s65 + $0x18] sm:$0xff]
        %v3052 = vld [vmem:[%s65 + $0x20] sm:$0xff]
        %v3053 = vld [vmem:[%s65 + $0x28] sm:$0xff]
        %v3054 = vld [vmem:[%s65 + $0x30] sm:$0xff]
        %v3055 = vld [vmem:[%s65 + $0x38] sm:$0xff]
        %v3056 = vld [vmem:[%s67] sm:$0x1]
        %v3057 = vld [vmem:[%s69] sm:$0x1]
        %v3058 = vld [vmem:[%s71] sm:$0x1]
        %v3060 = vlaneseq
        %v3061 = vshrl.u32 %v3060, 7
        %v3062 = vsub.s32 0, %v3061
        %v3063 = vrot.slane %v3047, %v3062
        %v3066 = vsel %vm1299, %v2842, 0
        %3068 = vmatprep.subr.mxu0 0.0
        %3069 = vmatpush1.msra.mxu0 %v3045
        %3070 = vmatprep.subr.mxu0 0.0
        %3071 = vmatpush1.msra.mxu0 %v3046
        %3072 = vmatprep.subr.mxu0 0.0
        %3073 = vmatpush1.msra.mxu0 0.0
        %3074 = vmatprep.subr.mxu0 0.0
        %3075 = vmatpush1.msra.mxu0 0.0
        %3076 = vmatprep.subr.mxu0 0.0
        %3077 = vmatpush1.msra.mxu0 0.0
        %3078 = vmatprep.subr.mxu0 0.0
        %3079 = vmatpush1.msra.mxu0 0.0
        %3080 = vmatprep.subr.mxu0 0.0
        %3081 = vmatpush1.msra.mxu0 0.0
        %3082 = vmatprep.subr.mxu0 0.0
        %3083 = vmatpush1.msra.mxu0 0.0
        %3084 = vmatprep.subr.mxu0 0.0
        %3085 = vmatpush1.msra.mxu0 0.0
        %3086 = vmatprep.subr.mxu0 0.0
        %3087 = vmatpush1.msra.mxu0 0.0
        %3088 = vmatprep.subr.mxu0 0.0
        %3089 = vmatpush1.msra.mxu0 0.0
        %3090 = vmatprep.subr.mxu0 0.0
        %3091 = vmatpush1.msra.mxu0 0.0
        %3092 = vmatprep.subr.mxu0 0.0
        %3093 = vmatpush1.msra.mxu0 0.0
        %3094 = vmatprep.subr.mxu0 0.0
        %3095 = vmatpush1.msra.mxu0 0.0
        %3096 = vmatprep.subr.mxu0 0.0
        %3097 = vmatpush1.msra.mxu0 0.0
        %3098 = vmatprep.subr.mxu0 0.0
        %3099 = vmatpush1.msra.mxu0 0.0
        %3100 = vmatprep.subr.mxu0 0.0
        %3101 = vmatpush1.msra.mxu0 0.0
        %3102 = vmatprep.subr.mxu0 0.0
        %3103 = vmatpush1.msra.mxu0 0.0
        %3104 = vmatprep.subr.mxu0 0.0
        %3105 = vmatpush1.msra.mxu0 0.0
        %3106 = vmatprep.subr.mxu0 0.0
        %3107 = vmatpush1.msra.mxu0 0.0
        %3108 = vmatprep.subr.mxu0 0.0
        %3109 = vmatpush1.msra.mxu0 0.0
        %3110 = vmatprep.subr.mxu0 0.0
        %3111 = vmatpush1.msra.mxu0 0.0
        %3112 = vmatprep.subr.mxu0 0.0
        %3113 = vmatpush1.msra.mxu0 0.0
        %3114 = vmatprep.subr.mxu0 0.0
        %3115 = vmatpush1.msra.mxu0 0.0
        %3116 = vmatprep.subr.mxu0 0.0
        %3117 = vmatpush1.msra.mxu0 0.0
        %3118 = vmatprep.subr.mxu0 0.0
        %3119 = vmatpush1.msra.mxu0 0.0
        %3120 = vmatprep.subr.mxu0 0.0
        %3121 = vmatpush1.msra.mxu0 0.0
        %3122 = vmatprep.subr.mxu0 0.0
        %3123 = vmatpush1.msra.mxu0 0.0
        %3124 = vmatprep.subr.mxu0 0.0
        %3125 = vmatpush1.msra.mxu0 0.0
        %3126 = vmatprep.subr.mxu0 0.0
        %3127 = vmatpush1.msra.mxu0 0.0
        %3128 = vmatprep.subr.mxu0 0.0
        %3129 = vmatpush1.msra.mxu0 0.0
        %3130 = vmatprep.subr.mxu0 0.0
        %3131 = vmatpush1.msra.mxu0 0.0
        %3132 = vmatprep.mubr.f32.mxu0 0.0
        %3133 = vmatmul.mubr.f32.gmra.mrb[0].mxu0 %v3066
        %v3134 = vpop.f32.mrb[0].mxu0
        %v3135 = vadd.f32 %v3063, %v3134
        %v3136 = vpop.f32.mrb[0].mxu0
        %3137 = vdwg.mxu0
        %v3138 = vmax.f32 %v3135, 0.0
        %v3140 = vlaneseq
        %v3141 = vshrl.u32 %v3140, 7
        %v3142 = vsub.s32 0, %v3141
        %v3143 = vrot.slane %v3056, %v3142
        %v3146 = vsel %vm2943, %v3138, 0
        %3148 = vmatprep.subr.mxu0 0.0
        %3149 = vmatpush1.msra.mxu0 %v3048
        %3150 = vmatprep.subr.mxu0 0.0
        %3151 = vmatpush1.msra.mxu0 %v3049
        %3152 = vmatprep.subr.mxu0 0.0
        %3153 = vmatpush1.msra.mxu0 %v3050
        %3154 = vmatprep.subr.mxu0 0.0
        %3155 = vmatpush1.msra.mxu0 %v3051
        %3156 = vmatprep.subr.mxu0 0.0
        %3157 = vmatpush1.msra.mxu0 %v3052
        %3158 = vmatprep.subr.mxu0 0.0
        %3159 = vmatpush1.msra.mxu0 %v3053
        %3160 = vmatprep.subr.mxu0 0.0
        %3161 = vmatpush1.msra.mxu0 %v3054
        %3162 = vmatprep.subr.mxu0 0.0
        %3163 = vmatpush1.msra.mxu0 %v3055
        %3164 = vmatprep.subr.mxu0 0.0
        %3165 = vmatpush1.msra.mxu0 0.0
        %3166 = vmatprep.subr.mxu0 0.0
        %3167 = vmatpush1.msra.mxu0 0.0
        %3168 = vmatprep.subr.mxu0 0.0
        %3169 = vmatpush1.msra.mxu0 0.0
        %3170 = vmatprep.subr.mxu0 0.0
        %3171 = vmatpush1.msra.mxu0 0.0
        %3172 = vmatprep.subr.mxu0 0.0
        %3173 = vmatpush1.msra.mxu0 0.0
        %3174 = vmatprep.subr.mxu0 0.0
        %3175 = vmatpush1.msra.mxu0 0.0
        %3176 = vmatprep.subr.mxu0 0.0
        %3177 = vmatpush1.msra.mxu0 0.0
        %3178 = vmatprep.subr.mxu0 0.0
        %3179 = vmatpush1.msra.mxu0 0.0
        %3180 = vmatprep.subr.mxu0 0.0
        %3181 = vmatpush1.msra.mxu0 0.0
        %3182 = vmatprep.subr.mxu0 0.0
        %3183 = vmatpush1.msra.mxu0 0.0
        %3184 = vmatprep.subr.mxu0 0.0
        %3185 = vmatpush1.msra.mxu0 0.0
        %3186 = vmatprep.subr.mxu0 0.0
        %3187 = vmatpush1.msra.mxu0 0.0
        %3188 = vmatprep.subr.mxu0 0.0
        %3189 = vmatpush1.msra.mxu0 0.0
        %3190 = vmatprep.subr.mxu0 0.0
        %3191 = vmatpush1.msra.mxu0 0.0
        %3192 = vmatprep.subr.mxu0 0.0
        %3193 = vmatpush1.msra.mxu0 0.0
        %3194 = vmatprep.subr.mxu0 0.0
        %3195 = vmatpush1.msra.mxu0 0.0
        %3196 = vmatprep.subr.mxu0 0.0
        %3197 = vmatpush1.msra.mxu0 0.0
        %3198 = vmatprep.subr.mxu0 0.0
        %3199 = vmatpush1.msra.mxu0 0.0
        %3200 = vmatprep.subr.mxu0 0.0
        %3201 = vmatpush1.msra.mxu0 0.0
        %3202 = vmatprep.subr.mxu0 0.0
        %3203 = vmatpush1.msra.mxu0 0.0
        %3204 = vmatprep.subr.mxu0 0.0
        %3205 = vmatpush1.msra.mxu0 0.0
        %3206 = vmatprep.subr.mxu0 0.0
        %3207 = vmatpush1.msra.mxu0 0.0
        %3208 = vmatprep.subr.mxu0 0.0
        %3209 = vmatpush1.msra.mxu0 0.0
        %3210 = vmatprep.subr.mxu0 0.0
        %3211 = vmatpush1.msra.mxu0 0.0
        %3212 = vmatprep.mubr.f32.mxu0 0.0
        %3213 = vmatmul.mubr.f32.gmra.mrb[0].mxu0 %v3146
        %v3214 = vpop.f32.mrb[0].mxu0
        %v3215 = vadd.f32 %v3143, %v3214
        %v3216 = vpop.f32.mrb[0].mxu0
        %3217 = vdwg.mxu0
        %v3218 = vadd.f32 %v2842, %v3215
        %v3219 = vsel %vm1299, %v3218, 0.0
        %3220 = vadd.xlane.f32.xlu0 %v3219
        %v3221 = vpop.xlane.xlu0 %3220
        %v3222 = vmul.f32 %v3221, %v1822
        %v3223 = vsub.f32 %v3218, %v3222
        %v3224 = vmul.f32 %v3223, %v3223
        %v3225 = vsel %vm1299, %v3224, 0.0
        %3226 = vadd.xlane.f32.xlu0 %v3225
        %v3227 = vpop.xlane.xlu0 %3226
        %v3228 = vmul.f32 %v3227, %v1822
        %v3229 = vadd.f32 %v3228, 1e-05
        %v3230 = vrsqrt.pop %v3229
        %v3231 = vmul.f32 %v3223, %v3230
        %v3233 = vlaneseq
        %v3234 = vshrl.u32 %v3233, 7
        %v3235 = vsub.s32 0, %v3234
        %v3236 = vrot.slane %v3057, %v3235
        %v3238 = vmul.f32 %v3231, %v3236
        %v3240 = vlaneseq
        %v3241 = vshrl.u32 %v3240, 7
        %v3242 = vsub.s32 0, %v3241
        %v3243 = vrot.slane %v3058, %v3242
        %v3245 = vadd.f32 %v3238, %v3243
        %v3246 = vld [vmem:[%s7] sm:$0xff]
        %v3248 = vsel %vm1378, %v3246, 0
        %3250 = vmatprep.subr.mxu0 0.0
        %3251 = vmatpush1.msra.mxu0 %v3245
        %3252 = vmatprep.subr.mxu0 0.0
        %3253 = vmatpush1.msra.mxu0 0.0
        %3254 = vmatprep.subr.mxu0 0.0
        %3255 = vmatpush1.msra.mxu0 0.0
        %3256 = vmatprep.subr.mxu0 0.0
        %3257 = vmatpush1.msra.mxu0 0.0
        %3258 = vmatprep.subr.mxu0 0.0
        %3259 = vmatpush1.msra.mxu0 0.0
        %3260 = vmatprep.subr.mxu0 0.0
        %3261 = vmatpush1.msra.mxu0 0.0
        %3262 = vmatprep.subr.mxu0 0.0
        %3263 = vmatpush1.msra.mxu0 0.0
        %3264 = vmatprep.subr.mxu0 0.0
        %3265 = vmatpush1.msra.mxu0 0.0
        %3266 = vmatprep.subr.mxu0 0.0
        %3267 = vmatpush1.msra.mxu0 0.0
        %3268 = vmatprep.subr.mxu0 0.0
        %3269 = vmatpush1.msra.mxu0 0.0
        %3270 = vmatprep.subr.mxu0 0.0
        %3271 = vmatpush1.msra.mxu0 0.0
        %3272 = vmatprep.subr.mxu0 0.0
        %3273 = vmatpush1.msra.mxu0 0.0
        %3274 = vmatprep.subr.mxu0 0.0
        %3275 = vmatpush1.msra.mxu0 0.0
        %3276 = vmatprep.subr.mxu0 0.0
        %3277 = vmatpush1.msra.mxu0 0.0
        %3278 = vmatprep.subr.mxu0 0.0
        %3279 = vmatpush1.msra.mxu0 0.0
        %3280 = vmatprep.subr.mxu0 0.0
        %3281 = vmatpush1.msra.mxu0 0.0
        %3282 = vmatprep.subr.mxu0 0.0
        %3283 = vmatpush1.msra.mxu0 0.0
        %3284 = vmatprep.subr.mxu0 0.0
        %3285 = vmatpush1.msra.mxu0 0.0
        %3286 = vmatprep.subr.mxu0 0.0
        %3287 = vmatpush1.msra.mxu0 0.0
        %3288 = vmatprep.subr.mxu0 0.0
        %3289 = vmatpush1.msra.mxu0 0.0
        %3290 = vmatprep.subr.mxu0 0.0
        %3291 = vmatpush1.msra.mxu0 0.0
        %3292 = vmatprep.subr.mxu0 0.0
        %3293 = vmatpush1.msra.mxu0 0.0
        %3294 = vmatprep.subr.mxu0 0.0
        %3295 = vmatpush1.msra.mxu0 0.0
        %3296 = vmatprep.subr.mxu0 0.0
        %3297 = vmatpush1.msra.mxu0 0.0
        %3298 = vmatprep.subr.mxu0 0.0
        %3299 = vmatpush1.msra.mxu0 0.0
        %3300 = vmatprep.subr.mxu0 0.0
        %3301 = vmatpush1.msra.mxu0 0.0
        %3302 = vmatprep.subr.mxu0 0.0
        %3303 = vmatpush1.msra.mxu0 0.0
        %3304 = vmatprep.subr.mxu0 0.0
        %3305 = vmatpush1.msra.mxu0 0.0
        %3306 = vmatprep.subr.mxu0 0.0
        %3307 = vmatpush1.msra.mxu0 0.0
        %3308 = vmatprep.subr.mxu0 0.0
        %3309 = vmatpush1.msra.mxu0 0.0
        %3310 = vmatprep.subr.mxu0 0.0
        %3311 = vmatpush1.msra.mxu0 0.0
        %3312 = vmatprep.subr.mxu0 0.0
        %3313 = vmatpush1.msra.mxu0 0.0
        %3314 = vmatprep.mubr.f32.mxu0 0.0
        %3315 = vmatmul.mubr.f32.gmra.mrb[0].mxu0 %v3248
        %v3316 = vpop.f32.mrb[0].mxu0
        %v3317 = vadd.f32 0.0, %v3316
        %v3318 = vpop.f32.mrb[0].mxu0
        %3319 = vdwg.mxu0
        %3320 = vmatprep.subr.mxu0 0.0
        %3321 = vmatpush1.msra.mxu0 %v3317
        %3322 = vmatprep.subr.mxu0 0.0
        %3323 = vmatpush1.msra.mxu0 0.0
        %3324 = vmatprep.subr.mxu0 0.0
        %3325 = vmatpush1.msra.mxu0 0.0
        %3326 = vmatprep.subr.mxu0 0.0
        %3327 = vmatpush1.msra.mxu0 0.0
        %3328 = vmatprep.subr.mxu0 0.0
        %3329 = vmatpush1.msra.mxu0 0.0
        %3330 = vmatprep.subr.mxu0 0.0
        %3331 = vmatpush1.msra.mxu0 0.0
        %3332 = vmatprep.subr.mxu0 0.0
        %3333 = vmatpush1.msra.mxu0 0.0
        %3334 = vmatprep.subr.mxu0 0.0
        %3335 = vmatpush1.msra.mxu0 0.0
        %3336 = vmatprep.subr.mxu0 0.0
        %3337 = vmatpush1.msra.mxu0 0.0
        %3338 = vmatprep.subr.mxu0 0.0
        %3339 = vmatpush1.msra.mxu0 0.0
        %3340 = vmatprep.subr.mxu0 0.0
        %3341 = vmatpush1.msra.mxu0 0.0
        %3342 = vmatprep.subr.mxu0 0.0
        %3343 = vmatpush1.msra.mxu0 0.0
        %3344 = vmatprep.subr.mxu0 0.0
        %3345 = vmatpush1.msra.mxu0 0.0
        %3346 = vmatprep.subr.mxu0 0.0
        %3347 = vmatpush1.msra.mxu0 0.0
        %3348 = vmatprep.subr.mxu0 0.0
        %3349 = vmatpush1.msra.mxu0 0.0
        %3350 = vmatprep.subr.mxu0 0.0
        %3351 = vmatpush1.msra.mxu0 0.0
        %3352 = vmatprep.subr.mxu0 0.0
        %3353 = vmatpush1.msra.mxu0 0.0
        %3354 = vmatprep.subr.mxu0 0.0
        %3355 = vmatpush1.msra.mxu0 0.0
        %3356 = vmatprep.subr.mxu0 0.0
        %3357 = vmatpush1.msra.mxu0 0.0
        %3358 = vmatprep.subr.mxu0 0.0
        %3359 = vmatpush1.msra.mxu0 0.0
        %3360 = vmatprep.subr.mxu0 0.0
        %3361 = vmatpush1.msra.mxu0 0.0
        %3362 = vmatprep.subr.mxu0 0.0
        %3363 = vmatpush1.msra.mxu0 0.0
        %3364 = vmatprep.subr.mxu0 0.0
        %3365 = vmatpush1.msra.mxu0 0.0
        %3366 = vmatprep.subr.mxu0 0.0
        %3367 = vmatpush1.msra.mxu0 0.0
        %3368 = vmatprep.subr.mxu0 0.0
        %3369 = vmatpush1.msra.mxu0 0.0
        %3370 = vmatprep.subr.mxu0 0.0
        %3371 = vmatpush1.msra.mxu0 0.0
        %3372 = vmatprep.subr.mxu0 0.0
        %3373 = vmatpush1.msra.mxu0 0.0
        %3374 = vmatprep.subr.mxu0 0.0
        %3375 = vmatpush1.msra.mxu0 0.0
        %3376 = vmatprep.subr.mxu0 0.0
        %3377 = vmatpush1.msra.mxu0 0.0
        %3378 = vmatprep.subr.mxu0 0.0
        %3379 = vmatpush1.msra.mxu0 0.0
        %3380 = vmatprep.subr.mxu0 0.0
        %3381 = vmatpush1.msra.mxu0 0.0
        %3382 = vmatprep.subr.mxu0 0.0
        %3383 = vmatpush1.msra.mxu0 0.0
        %3384 = vmatprep.mubr.f32.mxu0 0.0
        %3385 = vmatmul.mubr.f32.gmra.mrb[0].mxu0 %v3248
        %v3386 = vpop.f32.mrb[0].mxu0
        %v3387 = vadd.f32 0.0, %v3386
        %v3388 = vpop.f32.mrb[0].mxu0
        %3389 = vdwg.mxu0
        %s3390 = scalar_lea.vmem %s7, 8
        %v3391 = vld [vmem:[%s3390] sm:$0xff]
        %v3393 = vsel %vm1378, %v3391, 0
        %3395 = vmatprep.subr.mxu0 0.0
        %3396 = vmatpush1.msra.mxu0 %v3245
        %3397 = vmatprep.subr.mxu0 0.0
        %3398 = vmatpush1.msra.mxu0 0.0
        %3399 = vmatprep.subr.mxu0 0.0
        %3400 = vmatpush1.msra.mxu0 0.0
        %3401 = vmatprep.subr.mxu0 0.0
        %3402 = vmatpush1.msra.mxu0 0.0
        %3403 = vmatprep.subr.mxu0 0.0
        %3404 = vmatpush1.msra.mxu0 0.0
        %3405 = vmatprep.subr.mxu0 0.0
        %3406 = vmatpush1.msra.mxu0 0.0
        %3407 = vmatprep.subr.mxu0 0.0
        %3408 = vmatpush1.msra.mxu0 0.0
        %3409 = vmatprep.subr.mxu0 0.0
        %3410 = vmatpush1.msra.mxu0 0.0
        %3411 = vmatprep.subr.mxu0 0.0
        %3412 = vmatpush1.msra.mxu0 0.0
        %3413 = vmatprep.subr.mxu0 0.0
        %3414 = vmatpush1.msra.mxu0 0.0
        %3415 = vmatprep.subr.mxu0 0.0
        %3416 = vmatpush1.msra.mxu0 0.0
        %3417 = vmatprep.subr.mxu0 0.0
        %3418 = vmatpush1.msra.mxu0 0.0
        %3419 = vmatprep.subr.mxu0 0.0
        %3420 = vmatpush1.msra.mxu0 0.0
        %3421 = vmatprep.subr.mxu0 0.0
        %3422 = vmatpush1.msra.mxu0 0.0
        %3423 = vmatprep.subr.mxu0 0.0
        %3424 = vmatpush1.msra.mxu0 0.0
        %3425 = vmatprep.subr.mxu0 0.0
        %3426 = vmatpush1.msra.mxu0 0.0
        %3427 = vmatprep.subr.mxu0 0.0
        %3428 = vmatpush1.msra.mxu0 0.0
        %3429 = vmatprep.subr.mxu0 0.0
        %3430 = vmatpush1.msra.mxu0 0.0
        %3431 = vmatprep.subr.mxu0 0.0
        %3432 = vmatpush1.msra.mxu0 0.0
        %3433 = vmatprep.subr.mxu0 0.0
        %3434 = vmatpush1.msra.mxu0 0.0
        %3435 = vmatprep.subr.mxu0 0.0
        %3436 = vmatpush1.msra.mxu0 0.0
        %3437 = vmatprep.subr.mxu0 0.0
        %3438 = vmatpush1.msra.mxu0 0.0
        %3439 = vmatprep.subr.mxu0 0.0
        %3440 = vmatpush1.msra.mxu0 0.0
        %3441 = vmatprep.subr.mxu0 0.0
        %3442 = vmatpush1.msra.mxu0 0.0
        %3443 = vmatprep.subr.mxu0 0.0
        %3444 = vmatpush1.msra.mxu0 0.0
        %3445 = vmatprep.subr.mxu0 0.0
        %3446 = vmatpush1.msra.mxu0 0.0
        %3447 = vmatprep.subr.mxu0 0.0
        %3448 = vmatpush1.msra.mxu0 0.0
        %3449 = vmatprep.subr.mxu0 0.0
        %3450 = vmatpush1.msra.mxu0 0.0
        %3451 = vmatprep.subr.mxu0 0.0
        %3452 = vmatpush1.msra.mxu0 0.0
        %3453 = vmatprep.subr.mxu0 0.0
        %3454 = vmatpush1.msra.mxu0 0.0
        %3455 = vmatprep.subr.mxu0 0.0
        %3456 = vmatpush1.msra.mxu0 0.0
        %3457 = vmatprep.subr.mxu0 0.0
        %3458 = vmatpush1.msra.mxu0 0.0
        %3459 = vmatprep.mubr.f32.mxu0 0.0
        %3460 = vmatmul.mubr.f32.gmra.mrb[0].mxu0 %v3393
        %v3461 = vpop.f32.mrb[0].mxu0
        %v3462 = vadd.f32 0.0, %v3461
        %v3463 = vpop.f32.mrb[0].mxu0
        %3464 = vdwg.mxu0
        %3465 = vmatprep.subr.mxu0 0.0
        %3466 = vmatpush1.msra.mxu0 %v3462
        %3467 = vmatprep.subr.mxu0 0.0
        %3468 = vmatpush1.msra.mxu0 0.0
        %3469 = vmatprep.subr.mxu0 0.0
        %3470 = vmatpush1.msra.mxu0 0.0
        %3471 = vmatprep.subr.mxu0 0.0
        %3472 = vmatpush1.msra.mxu0 0.0
        %3473 = vmatprep.subr.mxu0 0.0
        %3474 = vmatpush1.msra.mxu0 0.0
        %3475 = vmatprep.subr.mxu0 0.0
        %3476 = vmatpush1.msra.mxu0 0.0
        %3477 = vmatprep.subr.mxu0 0.0
        %3478 = vmatpush1.msra.mxu0 0.0
        %3479 = vmatprep.subr.mxu0 0.0
        %3480 = vmatpush1.msra.mxu0 0.0
        %3481 = vmatprep.subr.mxu0 0.0
        %3482 = vmatpush1.msra.mxu0 0.0
        %3483 = vmatprep.subr.mxu0 0.0
        %3484 = vmatpush1.msra.mxu0 0.0
        %3485 = vmatprep.subr.mxu0 0.0
        %3486 = vmatpush1.msra.mxu0 0.0
        %3487 = vmatprep.subr.mxu0 0.0
        %3488 = vmatpush1.msra.mxu0 0.0
        %3489 = vmatprep.subr.mxu0 0.0
        %3490 = vmatpush1.msra.mxu0 0.0
        %3491 = vmatprep.subr.mxu0 0.0
        %3492 = vmatpush1.msra.mxu0 0.0
        %3493 = vmatprep.subr.mxu0 0.0
        %3494 = vmatpush1.msra.mxu0 0.0
        %3495 = vmatprep.subr.mxu0 0.0
        %3496 = vmatpush1.msra.mxu0 0.0
        %3497 = vmatprep.subr.mxu0 0.0
        %3498 = vmatpush1.msra.mxu0 0.0
        %3499 = vmatprep.subr.mxu0 0.0
        %3500 = vmatpush1.msra.mxu0 0.0
        %3501 = vmatprep.subr.mxu0 0.0
        %3502 = vmatpush1.msra.mxu0 0.0
        %3503 = vmatprep.subr.mxu0 0.0
        %3504 = vmatpush1.msra.mxu0 0.0
        %3505 = vmatprep.subr.mxu0 0.0
        %3506 = vmatpush1.msra.mxu0 0.0
        %3507 = vmatprep.subr.mxu0 0.0
        %3508 = vmatpush1.msra.mxu0 0.0
        %3509 = vmatprep.subr.mxu0 0.0
        %3510 = vmatpush1.msra.mxu0 0.0
        %3511 = vmatprep.subr.mxu0 0.0
        %3512 = vmatpush1.msra.mxu0 0.0
        %3513 = vmatprep.subr.mxu0 0.0
        %3514 = vmatpush1.msra.mxu0 0.0
        %3515 = vmatprep.subr.mxu0 0.0
        %3516 = vmatpush1.msra.mxu0 0.0
        %3517 = vmatprep.subr.mxu0 0.0
        %3518 = vmatpush1.msra.mxu0 0.0
        %3519 = vmatprep.subr.mxu0 0.0
        %3520 = vmatpush1.msra.mxu0 0.0
        %3521 = vmatprep.subr.mxu0 0.0
        %3522 = vmatpush1.msra.mxu0 0.0
        %3523 = vmatprep.subr.mxu0 0.0
        %3524 = vmatpush1.msra.mxu0 0.0
        %3525 = vmatprep.subr.mxu0 0.0
        %3526 = vmatpush1.msra.mxu0 0.0
        %3527 = vmatprep.subr.mxu0 0.0
        %3528 = vmatpush1.msra.mxu0 0.0
        %3529 = vmatprep.mubr.f32.mxu0 0.0
        %3530 = vmatmul.mubr.f32.gmra.mrb[0].mxu0 %v3393
        %v3531 = vpop.f32.mrb[0].mxu0
        %v3532 = vadd.f32 0.0, %v3531
        %v3533 = vpop.f32.mrb[0].mxu0
        %3534 = vdwg.mxu0
        %s3535 = scalar_lea.vmem %s7, 16
        %v3536 = vld [vmem:[%s3535] sm:$0xff]
        %v3538 = vsel %vm1378, %v3536, 0
        %3540 = vmatprep.subr.mxu0 0.0
        %3541 = vmatpush1.msra.mxu0 %v3245
        %3542 = vmatprep.subr.mxu0 0.0
        %3543 = vmatpush1.msra.mxu0 0.0
        %3544 = vmatprep.subr.mxu0 0.0
        %3545 = vmatpush1.msra.mxu0 0.0
        %3546 = vmatprep.subr.mxu0 0.0
        %3547 = vmatpush1.msra.mxu0 0.0
        %3548 = vmatprep.subr.mxu0 0.0
        %3549 = vmatpush1.msra.mxu0 0.0
        %3550 = vmatprep.subr.mxu0 0.0
        %3551 = vmatpush1.msra.mxu0 0.0
        %3552 = vmatprep.subr.mxu0 0.0
        %3553 = vmatpush1.msra.mxu0 0.0
        %3554 = vmatprep.subr.mxu0 0.0
        %3555 = vmatpush1.msra.mxu0 0.0
        %3556 = vmatprep.subr.mxu0 0.0
        %3557 = vmatpush1.msra.mxu0 0.0
        %3558 = vmatprep.subr.mxu0 0.0
        %3559 = vmatpush1.msra.mxu0 0.0
        %3560 = vmatprep.subr.mxu0 0.0
        %3561 = vmatpush1.msra.mxu0 0.0
        %3562 = vmatprep.subr.mxu0 0.0
        %3563 = vmatpush1.msra.mxu0 0.0
        %3564 = vmatprep.subr.mxu0 0.0
        %3565 = vmatpush1.msra.mxu0 0.0
        %3566 = vmatprep.subr.mxu0 0.0
        %3567 = vmatpush1.msra.mxu0 0.0
        %3568 = vmatprep.subr.mxu0 0.0
        %3569 = vmatpush1.msra.mxu0 0.0
        %3570 = vmatprep.subr.mxu0 0.0
        %3571 = vmatpush1.msra.mxu0 0.0
        %3572 = vmatprep.subr.mxu0 0.0
        %3573 = vmatpush1.msra.mxu0 0.0
        %3574 = vmatprep.subr.mxu0 0.0
        %3575 = vmatpush1.msra.mxu0 0.0
        %3576 = vmatprep.subr.mxu0 0.0
        %3577 = vmatpush1.msra.mxu0 0.0
        %3578 = vmatprep.subr.mxu0 0.0
        %3579 = vmatpush1.msra.mxu0 0.0
        %3580 = vmatprep.subr.mxu0 0.0
        %3581 = vmatpush1.msra.mxu0 0.0
        %3582 = vmatprep.subr.mxu0 0.0
        %3583 = vmatpush1.msra.mxu0 0.0
        %3584 = vmatprep.subr.mxu0 0.0
        %3585 = vmatpush1.msra.mxu0 0.0
        %3586 = vmatprep.subr.mxu0 0.0
        %3587 = vmatpush1.msra.mxu0 0.0
        %3588 = vmatprep.subr.mxu0 0.0
        %3589 = vmatpush1.msra.mxu0 0.0
        %3590 = vmatprep.subr.mxu0 0.0
        %3591 = vmatpush1.msra.mxu0 0.0
        %3592 = vmatprep.subr.mxu0 0.0
        %3593 = vmatpush1.msra.mxu0 0.0
        %3594 = vmatprep.subr.mxu0 0.0
        %3595 = vmatpush1.msra.mxu0 0.0
        %3596 = vmatprep.subr.mxu0 0.0
        %3597 = vmatpush1.msra.mxu0 0.0
        %3598 = vmatprep.subr.mxu0 0.0
        %3599 = vmatpush1.msra.mxu0 0.0
        %3600 = vmatprep.subr.mxu0 0.0
        %3601 = vmatpush1.msra.mxu0 0.0
        %3602 = vmatprep.subr.mxu0 0.0
        %3603 = vmatpush1.msra.mxu0 0.0
        %3604 = vmatprep.mubr.f32.mxu0 0.0
        %3605 = vmatmul.mubr.f32.gmra.mrb[0].mxu0 %v3538
        %v3606 = vpop.f32.mrb[0].mxu0
        %v3607 = vadd.f32 0.0, %v3606
        %v3608 = vpop.f32.mrb[0].mxu0
        %3609 = vdwg.mxu0
        %3610 = vmatprep.subr.mxu0 0.0
        %3611 = vmatpush1.msra.mxu0 %v3607
        %3612 = vmatprep.subr.mxu0 0.0
        %3613 = vmatpush1.msra.mxu0 0.0
        %3614 = vmatprep.subr.mxu0 0.0
        %3615 = vmatpush1.msra.mxu0 0.0
        %3616 = vmatprep.subr.mxu0 0.0
        %3617 = vmatpush1.msra.mxu0 0.0
        %3618 = vmatprep.subr.mxu0 0.0
        %3619 = vmatpush1.msra.mxu0 0.0
        %3620 = vmatprep.subr.mxu0 0.0
        %3621 = vmatpush1.msra.mxu0 0.0
        %3622 = vmatprep.subr.mxu0 0.0
        %3623 = vmatpush1.msra.mxu0 0.0
        %3624 = vmatprep.subr.mxu0 0.0
        %3625 = vmatpush1.msra.mxu0 0.0
        %3626 = vmatprep.subr.mxu0 0.0
        %3627 = vmatpush1.msra.mxu0 0.0
        %3628 = vmatprep.subr.mxu0 0.0
        %3629 = vmatpush1.msra.mxu0 0.0
        %3630 = vmatprep.subr.mxu0 0.0
        %3631 = vmatpush1.msra.mxu0 0.0
        %3632 = vmatprep.subr.mxu0 0.0
        %3633 = vmatpush1.msra.mxu0 0.0
        %3634 = vmatprep.subr.mxu0 0.0
        %3635 = vmatpush1.msra.mxu0 0.0
        %3636 = vmatprep.subr.mxu0 0.0
        %3637 = vmatpush1.msra.mxu0 0.0
        %3638 = vmatprep.subr.mxu0 0.0
        %3639 = vmatpush1.msra.mxu0 0.0
        %3640 = vmatprep.subr.mxu0 0.0
        %3641 = vmatpush1.msra.mxu0 0.0
        %3642 = vmatprep.subr.mxu0 0.0
        %3643 = vmatpush1.msra.mxu0 0.0
        %3644 = vmatprep.subr.mxu0 0.0
        %3645 = vmatpush1.msra.mxu0 0.0
        %3646 = vmatprep.subr.mxu0 0.0
        %3647 = vmatpush1.msra.mxu0 0.0
        %3648 = vmatprep.subr.mxu0 0.0
        %3649 = vmatpush1.msra.mxu0 0.0
        %3650 = vmatprep.subr.mxu0 0.0
        %3651 = vmatpush1.msra.mxu0 0.0
        %3652 = vmatprep.subr.mxu0 0.0
        %3653 = vmatpush1.msra.mxu0 0.0
        %3654 = vmatprep.subr.mxu0 0.0
        %3655 = vmatpush1.msra.mxu0 0.0
        %3656 = vmatprep.subr.mxu0 0.0
        %3657 = vmatpush1.msra.mxu0 0.0
        %3658 = vmatprep.subr.mxu0 0.0
        %3659 = vmatpush1.msra.mxu0 0.0
        %3660 = vmatprep.subr.mxu0 0.0
        %3661 = vmatpush1.msra.mxu0 0.0
        %3662 = vmatprep.subr.mxu0 0.0
        %3663 = vmatpush1.msra.mxu0 0.0
        %3664 = vmatprep.subr.mxu0 0.0
        %3665 = vmatpush1.msra.mxu0 0.0
        %3666 = vmatprep.subr.mxu0 0.0
        %3667 = vmatpush1.msra.mxu0 0.0
        %3668 = vmatprep.subr.mxu0 0.0
        %3669 = vmatpush1.msra.mxu0 0.0
        %3670 = vmatprep.subr.mxu0 0.0
        %3671 = vmatpush1.msra.mxu0 0.0
        %3672 = vmatprep.subr.mxu0 0.0
        %3673 = vmatpush1.msra.mxu0 0.0
        %3674 = vmatprep.mubr.f32.mxu0 0.0
        %3675 = vmatmul.mubr.f32.gmra.mrb[0].mxu0 %v3538
        %v3676 = vpop.f32.mrb[0].mxu0
        %v3677 = vadd.f32 0.0, %v3676
        %v3678 = vpop.f32.mrb[0].mxu0
        %3679 = vdwg.mxu0
        %3681 = vrot.lane.b32.xlu0 %v3317, 16
        %v3682 = vpop.permute.xlu0 %3681
        %3685 = vrot.lane.b32.xlu0 %v3387, 32
        %v3686 = vpop.permute.xlu0 %3685
        %3689 = vrot.lane.b32.xlu0 %v3462, 48
        %v3690 = vpop.permute.xlu0 %3689
        %3693 = vrot.lane.b32.xlu0 %v3532, 64
        %v3694 = vpop.permute.xlu0 %3693
        %3697 = vrot.lane.b32.xlu0 %v3607, 80
        %v3698 = vpop.permute.xlu0 %3697
        %3701 = vrot.lane.b32.xlu0 %v3677, 96
        %v3702 = vpop.permute.xlu0 %3701
        %v3704 = vsel %vm1299, %v3245, %v3682
        %vm3705 = vcmask 261120
        %v3706 = vsel %vm3705, %v3704, %v3686
        %vm3707 = vcmask 392192
        %v3708 = vsel %vm3707, %v3706, %v3690
        %v3709 = vsel %vm2943, %v3708, %v3694
        %vm3710 = vcmask 654336
        %v3711 = vsel %vm3710, %v3709, %v3698
        %vm3712 = vcmask 785408
        %v3713 = vsel %vm3712, %v3711, %v3702
        %v3714 = vld [vmem:[%s73] sm:$0xff]
        %v3715 = vld [vmem:[%s73 + $0x8] sm:$0xff]
        %v3716 = vld [vmem:[%s73 + $0x10] sm:$0xff]
        %v3717 = vld [vmem:[%s73 + $0x18] sm:$0xff]
        %v3718 = vld [vmem:[%s73 + $0x20] sm:$0xff]
        %v3719 = vld [vmem:[%s73 + $0x28] sm:$0xff]
        %v3720 = vld [vmem:[%s73 + $0x30] sm:$0xff]
        %v3721 = vld [vmem:[%s73 + $0x38] sm:$0xff]
        %v3722 = vld [vmem:[%s73 + $0x40] sm:$0xff]
        %v3723 = vld [vmem:[%s73 + $0x48] sm:$0xff]
        %v3724 = vld [vmem:[%s73 + $0x50] sm:$0xff]
        %v3725 = vld [vmem:[%s73 + $0x58] sm:$0xff]
        %v3726 = vld [vmem:[%s73 + $0x60] sm:$0xff]
        %v3727 = vld [vmem:[%s73 + $0x68] sm:$0xff]
        %v3728 = vld [vmem:[%s75] sm:$0x1]
        %v3730 = vlaneseq
        %v3731 = vshrl.u32 %v3730, 7
        %v3732 = vsub.s32 0, %v3731
        %v3733 = vrot.slane %v3728, %v3732
        %vm3735 = vcmask 916480
        %v3737 = vsel %vm3735, %v3713, 0
        %3739 = vmatprep.subr.mxu0 0.0
        %3740 = vmatpush1.msra.mxu0 %v3714
        %3741 = vmatprep.subr.mxu0 0.0
        %3742 = vmatpush1.msra.mxu0 %v3715
        %3743 = vmatprep.subr.mxu0 0.0
        %3744 = vmatpush1.msra.mxu0 %v3716
        %3745 = vmatprep.subr.mxu0 0.0
        %3746 = vmatpush1.msra.mxu0 %v3717
        %3747 = vmatprep.subr.mxu0 0.0
        %3748 = vmatpush1.msra.mxu0 %v3718
        %3749 = vmatprep.subr.mxu0 0.0
        %3750 = vmatpush1.msra.mxu0 %v3719
        %3751 = vmatprep.subr.mxu0 0.0
        %3752 = vmatpush1.msra.mxu0 %v3720
        %3753 = vmatprep.subr.mxu0 0.0
        %3754 = vmatpush1.msra.mxu0 %v3721
        %3755 = vmatprep.subr.mxu0 0.0
        %3756 = vmatpush1.msra.mxu0 %v3722
        %3757 = vmatprep.subr.mxu0 0.0
        %3758 = vmatpush1.msra.mxu0 %v3723
        %3759 = vmatprep.subr.mxu0 0.0
        %3760 = vmatpush1.msra.mxu0 %v3724
        %3761 = vmatprep.subr.mxu0 0.0
        %3762 = vmatpush1.msra.mxu0 %v3725
        %3763 = vmatprep.subr.mxu0 0.0
        %3764 = vmatpush1.msra.mxu0 %v3726
        %3765 = vmatprep.subr.mxu0 0.0
        %3766 = vmatpush1.msra.mxu0 %v3727
        %3767 = vmatprep.subr.mxu0 0.0
        %3768 = vmatpush1.msra.mxu0 0.0
        %3769 = vmatprep.subr.mxu0 0.0
        %3770 = vmatpush1.msra.mxu0 0.0
        %3771 = vmatprep.subr.mxu0 0.0
        %3772 = vmatpush1.msra.mxu0 0.0
        %3773 = vmatprep.subr.mxu0 0.0
        %3774 = vmatpush1.msra.mxu0 0.0
        %3775 = vmatprep.subr.mxu0 0.0
        %3776 = vmatpush1.msra.mxu0 0.0
        %3777 = vmatprep.subr.mxu0 0.0
        %3778 = vmatpush1.msra.mxu0 0.0
        %3779 = vmatprep.subr.mxu0 0.0
        %3780 = vmatpush1.msra.mxu0 0.0
        %3781 = vmatprep.subr.mxu0 0.0
        %3782 = vmatpush1.msra.mxu0 0.0
        %3783 = vmatprep.subr.mxu0 0.0
        %3784 = vmatpush1.msra.mxu0 0.0
        %3785 = vmatprep.subr.mxu0 0.0
        %3786 = vmatpush1.msra.mxu0 0.0
        %3787 = vmatprep.subr.mxu0 0.0
        %3788 = vmatpush1.msra.mxu0 0.0
        %3789 = vmatprep.subr.mxu0 0.0
        %3790 = vmatpush1.msra.mxu0 0.0
        %3791 = vmatprep.subr.mxu0 0.0
        %3792 = vmatpush1.msra.mxu0 0.0
        %3793 = vmatprep.subr.mxu0 0.0
        %3794 = vmatpush1.msra.mxu0 0.0
        %3795 = vmatprep.subr.mxu0 0.0
        %3796 = vmatpush1.msra.mxu0 0.0
        %3797 = vmatprep.subr.mxu0 0.0
        %3798 = vmatpush1.msra.mxu0 0.0
        %3799 = vmatprep.subr.mxu0 0.0
        %3800 = vmatpush1.msra.mxu0 0.0
        %3801 = vmatprep.subr.mxu0 0.0
        %3802 = vmatpush1.msra.mxu0 0.0
        %3803 = vmatprep.mubr.f32.mxu0 0.0
        %3804 = vmatmul.mubr.f32.gmra.mrb[0].mxu0 %v3737
        %v3805 = vpop.f32.mrb[0].mxu0
        %v3806 = vadd.f32 %v3733, %v3805
        %v3807 = vpop.f32.mrb[0].mxu0
        %3808 = vdwg.mxu0
        %v3809 = vadd.f32 %v3245, %v3806
        %v3810 = vld [vmem:[%s77] sm:$0x1]
        %v3811 = vld [vmem:[%s79] sm:$0x1]
        %v3812 = vsel %vm1299, %v3809, 0.0
        %3813 = vadd.xlane.f32.xlu0 %v3812
        %v3814 = vpop.xlane.xlu0 %3813
        %v3815 = vmul.f32 %v3814, %v1822
        %v3816 = vsub.f32 %v3809, %v3815
        %v3817 = vmul.f32 %v3816, %v3816
        %v3818 = vsel %vm1299, %v3817, 0.0
        %3819 = vadd.xlane.f32.xlu0 %v3818
        %v3820 = vpop.xlane.xlu0 %3819
        %v3821 = vmul.f32 %v3820, %v1822
        %v3822 = vadd.f32 %v3821, 1e-05
        %v3823 = vrsqrt.pop %v3822
        %v3824 = vmul.f32 %v3816, %v3823
        %v3826 = vlaneseq
        %v3827 = vshrl.u32 %v3826, 7
        %v3828 = vsub.s32 0, %v3827
        %v3829 = vrot.slane %v3810, %v3828
        %v3831 = vmul.f32 %v3824, %v3829
        %v3833 = vlaneseq
        %v3834 = vshrl.u32 %v3833, 7
        %v3835 = vsub.s32 0, %v3834
        %v3836 = vrot.slane %v3811, %v3835
        %v3838 = vadd.f32 %v3831, %v3836
        %3839 = vst.msk [vmem:[%s1263] sm:$0xff] %vm1299, %v3044
        %3840 = vst.msk [vmem:[%s1270] sm:$0xff] %vm1299, %v3838
        %s3841 = sand.u32 %s964, 1
        %s3842 = scalar_lea.sflag [#allocation3], %s3841
        %s3843 = sand.u32 %s964, 1
        %s3844 = smul.addr %s3843, 8
        %s3845 = scalar_lea.vmem [#allocation2], %s3844
        %s3846 = sand.u32 %s990, 1
        %s3847 = scalar_lea.sflag [#allocation5], %s3846
        %s3848 = sand.u32 %s990, 1
        %s3849 = smul.addr %s3848, 8
        %s3850 = scalar_lea.vmem [#allocation4], %s3849
        // Predicated region
        $region181: #{decoder_forward.3} parent=179 // pred_check
          %p3851 = pneg %p974
        $region182: #{decoder_forward.3} parent=179 // pred_check_branch
          %3853 = sbr.rel (%p3851) target = $region184
        $region183: #{decoder_forward.3} parent=179 // pred_region
          %s3855 = ssub.s32 128, 128
          %3856 = vsyncadd %s3842, %s3855
          %s3857 = smul.addr %s101, 128
          %s3858 = scalar_lea.hbm %s81, %s3857
          %s3860 = sshll.u32 %s3845, 4
          %s3861 = int_to_ptr.vmem [resolvable:$true] %s3860
          %3863 = dma.vmem_to_hbm [thread:$0]  %s3861, 128, %s3858, %s3842
        $region184: #{decoder_forward.3} parent=179 // pred_fallthru
          _
        // Predicated region
        $region185: #{decoder_forward.3} parent=179 // pred_check
          %p3864 = pneg %p1000
        $region186: #{decoder_forward.3} parent=179 // pred_check_branch
          %3866 = sbr.rel (%p3864) target = $region188
        $region187: #{decoder_forward.3} parent=179 // pred_region
          %s3868 = ssub.s32 128, 128
          %3869 = vsyncadd %s3847, %s3868
          %s3870 = smul.addr %s101, 128
          %s3871 = scalar_lea.hbm %s83, %s3870
          %s3873 = sshll.u32 %s3850, 4
          %s3874 = int_to_ptr.vmem [resolvable:$true] %s3873
          %3876 = dma.vmem_to_hbm [thread:$0]  %s3874, 128, %s3871, %s3847
        $region188: #{decoder_forward.3} parent=179 // pred_fallthru
          _
      $region180: #{decoder_forward.3} parent=5 // pred_fallthru
        _
      %p3877 = scmp.le.s32.totalorder 2, %s96
      // Predicated region
      $region189: #{decoder_forward.3} parent=5 // pred_check
        %p3878 = pneg %p3877
      $region190: #{decoder_forward.3} parent=5 // pred_check_branch
        %3880 = sbr.rel (%p3878) target = $region192
      $region191: #{decoder_forward.3} parent=5 // pred_region
        %s3881 = ssub.s32 %s96, 2
        // Predicated region
        $region193: #{decoder_forward.3} parent=191 // pred_check
          %p3882 = pneg %p980
        $region194: #{decoder_forward.3} parent=191 // pred_check_branch
          %3884 = sbr.rel (%p3882) target = $region196
        $region195: #{decoder_forward.3} parent=191 // pred_region
          %s3885 = sand.u32 %s965, 1
          %s3886 = scalar_lea.sflag [#allocation3], %s3885
          %s3887 = sand.u32 %s965, 1
          %s3888 = smul.addr %s3887, 8
          %s3889 = scalar_lea.vmem [#allocation2], %s3888
          %3890 = dma.done %s3886, 128
        $region196: #{decoder_forward.3} parent=191 // pred_fallthru
          _
        // Predicated region
        $region197: #{decoder_forward.3} parent=191 // pred_check
          %p3891 = pneg %p1006
        $region198: #{decoder_forward.3} parent=191 // pred_check_branch
          %3893 = sbr.rel (%p3891) target = $region200
        $region199: #{decoder_forward.3} parent=191 // pred_region
          %s3894 = sand.u32 %s991, 1
          %s3895 = scalar_lea.sflag [#allocation5], %s3894
          %s3896 = sand.u32 %s991, 1
          %s3897 = smul.addr %s3896, 8
          %s3898 = scalar_lea.vmem [#allocation4], %s3897
          %3899 = dma.done %s3895, 128
        $region200: #{decoder_forward.3} parent=191 // pred_fallthru
          _
      $region192: #{decoder_forward.3} parent=5 // pred_fallthru
        _
    $region6: #{decoder_forward.3} parent=1 // loop_footer
      %s100 = sadd.s32 1, %s96
    $region7: #{decoder_forward.3} parent=1 // loop_footer_branch
      %95 = sbr.rel target = $region3
    $region8: #{decoder_forward.3} parent=1 // loop_exit
      _
    %3900 = vsyncpa [#allocation3], 1
    %s3901 = scalar_lea.sflag [#allocation3], 1
    %3902 = vsyncpa %s3901, 1
    %3903 = vsyncpa [#allocation5], 1
    %s3904 = scalar_lea.sflag [#allocation5], 1
    %3905 = vsyncpa %s3904, 1

</llo_original>
